<compile_context>
chip_gen: v5e
topology: v5e:2x2
jax: 0.10.0
libtpu: 0.0.40
codegen_flags: <defaults>
</compile_context>

<pallas_src>
import jax
import jax.numpy as jnp
from jax import lax
from jax.experimental import pallas as pl
from jax.experimental.pallas import tpu as pltpu

BN_EPS = 1e-5


# ----------------------------------------------------------------------------
# Fused kernel: conv1->bn1->relu->conv2->bn2->relu->tconv1->bn3->relu->tconv2
#               ->relu -> unrolled LSTM -> output Linear
# ----------------------------------------------------------------------------
def _fused_cnn_lstm_kernel(
        x_ref,
        w1s_ref, b1_ref, bn1_ref,
        w2s_ref, b2_ref, bn2_ref,
        wt1s_ref, bt1_ref, bn3_ref,
        wt2s_ref, bt2_ref,
        h0_ref, c0_ref,
        wih_ref, whh_ref, bg_ref,
        wo_ref, bo_ref,
        out_ref, hn_ref, cn_ref,
        hs_sc):
    f32 = jnp.float32

    def mm(a2d, w2d):
        return jnp.dot(a2d, w2d, preferred_element_type=f32)

    def conv(a, ws_ref, bref):
        # valid Conv1d, kernel 2: L -> L-1.  One matmul on tap-stacked weight
        # [W_tap0 | W_tap1], then split lanes and shift-add along length.
        bb, ll, cc = a.shape
        both = mm(a.reshape(bb * ll, cc), ws_ref[...]).reshape(bb, ll, -1)
        co = both.shape[-1] // 2
        return both[:, :-1, :co] + both[:, 1:, co:] + bref[...]

    def tconv(a, ws_ref, bref):
        # ConvTranspose1d, kernel 2: L -> L+1.  One matmul on [W_lo | W_hi],
        # then scatter the two taps to shifted positions.
        bb, ll, cc = a.shape
        both = mm(a.reshape(bb * ll, cc), ws_ref[...]).reshape(bb, ll, -1)
        co = both.shape[-1] // 2
        lo = both[:, :, :co]
        hi = both[:, :, co:]
        z = jnp.zeros((bb, 1, co), f32)
        return (jnp.concatenate([lo, z], axis=1)
                + jnp.concatenate([z, hi], axis=1) + bref[...])

    def bn_relu(a, p_ref):
        # training-mode BatchNorm1d (single-pass stats: E[x], E[x^2]) + ReLU
        gamma = p_ref[0:1, :]                       # (1, H)
        beta = p_ref[1:2, :]                        # (1, H)
        inv_n = 1.0 / (a.shape[0] * a.shape[1])
        mean = jnp.sum(a, axis=(0, 1), keepdims=True) * inv_n      # (1,1,H)
        ex2 = jnp.sum(a * a, axis=(0, 1), keepdims=True) * inv_n   # (1,1,H)
        var = ex2 - mean * mean
        scale = gamma * lax.rsqrt(var + BN_EPS)
        return jnp.maximum((a - mean) * scale + beta, 0.0)

    # ---------------- conv stack ----------------
    x = x_ref[...]                                               # (B, S, D)
    h1 = bn_relu(conv(x, w1s_ref, b1_ref), bn1_ref)              # (B, S-1, H)
    h2 = bn_relu(conv(h1, w2s_ref, b2_ref), bn2_ref)             # (B, S-2, H)
    h3 = bn_relu(tconv(h2, wt1s_ref, bt1_ref), bn3_ref)          # (B, S-1, H)
    h4 = jnp.maximum(tconv(h3, wt2s_ref, bt2_ref), 0.0)          # (B, S, H)

    # ---------------- LSTM (time axis = conv batch), fully unrolled ---------
    t_len, s_len, hid = h4.shape
    h4f = h4.reshape(t_len * s_len, hid)
    # Input contribution of every timestep for every gate: 4 matmuls total,
    # hoisted out of the recurrence.  Gate order: i, f, g, o (PyTorch).
    xg = [mm(h4f, wih_ref[k]).reshape(t_len, s_len, hid) + bg_ref[k]
          for k in range(4)]
    wh = [whh_ref[k] for k in range(4)]             # hoisted weight loads

    h = h0_ref[0]                                   # (S, H)
    c = c0_ref[0]                                   # (S, H)
    for t in range(t_len):                          # static -> full unroll
        gi = jax.nn.sigmoid(xg[0][t] + mm(h, wh[0]))
        gf = jax.nn.sigmoid(xg[1][t] + mm(h, wh[1]))
        gg = jnp.tanh(xg[2][t] + mm(h, wh[2]))
        go = jax.nn.sigmoid(xg[3][t] + mm(h, wh[3]))
        c = gf * c + gi * gg
        h = go * jnp.tanh(c)
        hs_sc[t] = h                                # stash per-step hidden

    # final states written exactly once
    hn_ref[0] = h
    cn_ref[0] = c

    # ---------------- output Linear, hoisted out of the time loop ----------
    hs = hs_sc[...]                                              # (T, S, H)
    out = mm(hs.reshape(t_len * s_len, hid), wo_ref[...]) + bo_ref[...]
    out_ref[...] = out.reshape(t_len, s_len, -1)


def cnn_lstm_forward(x, hidden_state, cell_state, kp):
    """x: (B, S, D); hidden/cell: (1, S, H).  Returns (out, h_n, c_n)."""
    B, S, _ = x.shape
    H = kp["wih"].shape[-1]
    O = kp["wo"].shape[-1]
    args = (x,
            kp["w1s"], kp["b1"], kp["bn1"],
            kp["w2s"], kp["b2"], kp["bn2"],
            kp["wt1s"], kp["bt1"], kp["bn3"],
            kp["wt2s"], kp["bt2"],
            hidden_state, cell_state,
            kp["wih"], kp["whh"], kp["bg"],
            kp["wo"], kp["bo"])
    out, hn, cn = pl.pallas_call(
        _fused_cnn_lstm_kernel,
        out_shape=(jax.ShapeDtypeStruct((B, S, O), jnp.float32),
                   jax.ShapeDtypeStruct((1, S, H), jnp.float32),
                   jax.ShapeDtypeStruct((1, S, H), jnp.float32)),
        scratch_shapes=[pltpu.VMEM((B, S, H), jnp.float32)],
    )(*args)
    return out, hn, cn


# ----------------------------------------------------------------------------
# Parameter repacking: PyTorch layout -> kernel (channels-last) layout
# ----------------------------------------------------------------------------
def prepare_params(tp):
    H = tp["conv1_w"].shape[0]
    O = tp["w_out"].shape[0]

    def conv_stacked(w):       # (Cout, Cin, 2) -> (Cin, 2*Cout)  [tap0 | tap1]
        return jnp.concatenate([w[:, :, 0].T, w[:, :, 1].T], axis=1)

    def tconv_stacked(w):      # (Cin, Cout, 2) -> (Cin, 2*Cout)  [lo | hi]
        return jnp.concatenate([w[:, :, 0], w[:, :, 1]], axis=1)

    Hh = tp["w_hh"].shape[1]
    wih = jnp.transpose(tp["w_ih"].reshape(4, Hh, Hh), (0, 2, 1))   # (4, H, H)
    whh = jnp.transpose(tp["w_hh"].reshape(4, Hh, Hh), (0, 2, 1))   # (4, H, H)
    bg = (tp["b_ih"] + tp["b_hh"]).reshape(4, 1, Hh)                # (4, 1, H)

    return {
        "w1s": conv_stacked(tp["conv1_w"]), "b1": tp["conv1_b"].reshape(1, H),
        "bn1": jnp.stack([tp["bn1_g"], tp["bn1_b"]]),
        "w2s": conv_stacked(tp["conv2_w"]), "b2": tp["conv2_b"].reshape(1, H),
        "bn2": jnp.stack([tp["bn2_g"], tp["bn2_b"]]),
        "wt1s": tconv_stacked(tp["t1_w"]), "bt1": tp["t1_b"].reshape(1, H),
        "bn3": jnp.stack([tp["bn3_g"], tp["bn3_b"]]),
        "wt2s": tconv_stacked(tp["t2_w"]), "bt2": tp["t2_b"].reshape(1, H),
        "wih": wih, "whh": whh, "bg": bg,
        "wo": tp["w_out"].T, "bo": tp["b_out"].reshape(1, O),
    }


# ----------------------------------------------------------------------------
# Pure-JAX reference using PyTorch-convention parameter shapes (for checking).
# ----------------------------------------------------------------------------
def reference_forward(x, h0, c0, tp):
    hp = "highest"

    def ref_conv(a, w, b):    # a (B,L,Cin), w (Cout,Cin,2)
        y = (jnp.einsum("blc,oc->blo", a[:, :-1], w[:, :, 0], precision=hp)
             + jnp.einsum("blc,oc->blo", a[:, 1:], w[:, :, 1], precision=hp))
        return y + b

    def ref_tconv(a, w, b):   # w (Cin,Cout,2)
        a0 = jnp.einsum("blc,co->blo", a, w[:, :, 0], precision=hp)
        a1 = jnp.einsum("blc,co->blo", a, w[:, :, 1], precision=hp)
        z = jnp.zeros_like(a0[:, :1])
        return jnp.concatenate([a0, z], 1) + jnp.concatenate([z, a1], 1) + b

    def ref_bn(h, g, bb):
        m = h.mean((0, 1), keepdims=True)
        v = ((h - m) ** 2).mean((0, 1), keepdims=True)
        return (h - m) / jnp.sqrt(v + BN_EPS) * g + bb

    relu = lambda a: jnp.maximum(a, 0.0)
    h1 = relu(ref_bn(ref_conv(x, tp["conv1_w"], tp["conv1_b"]), tp["bn1_g"], tp["bn1_b"]))
    h2 = relu(ref_bn(ref_conv(h1, tp["conv2_w"], tp["conv2_b"]), tp["bn2_g"], tp["bn2_b"]))
    h3 = relu(ref_bn(ref_tconv(h2, tp["t1_w"], tp["t1_b"]), tp["bn3_g"], tp["bn3_b"]))
    h4 = relu(ref_tconv(h3, tp["t2_w"], tp["t2_b"]))

    H = tp["w_hh"].shape[1]

    def step(carry, x_t):
        h, c = carry
        gates = (jnp.dot(x_t, tp["w_ih"].T, precision=hp)
                 + jnp.dot(h, tp["w_hh"].T, precision=hp)
                 + tp["b_ih"] + tp["b_hh"])
        i = jax.nn.sigmoid(gates[:, :H])
        f = jax.nn.sigmoid(gates[:, H:2 * H])
        g = jnp.tanh(gates[:, 2 * H:3 * H])
        o = jax.nn.sigmoid(gates[:, 3 * H:])
        c = f * c + i * g
        h = o * jnp.tanh(c)
        return (h, c), h

    (hT, cT), outs = lax.scan(step, (h0[0], c0[0]), h4)
    ref_out = jnp.dot(outs, tp["w_out"].T, precision=hp) + tp["b_out"]
    return ref_out, hT[None], cT[None]


if __name__ == "__main__":
    # Default module hyper-params: batch=12, seq=5, input_dim=6, hidden=8, out=1
    B, S, D, H, O = 12, 5, 6, 8, 1

    keys = jax.random.split(jax.random.PRNGKey(0), 18)
    init = lambda k, shape, s=0.2: jax.random.normal(k, shape, jnp.float32) * s

    # Parameters in PyTorch layout
    tp = {
        "conv1_w": init(keys[0], (H, D, 2)), "conv1_b": init(keys[1], (H,)),
        "conv2_w": init(keys[2], (H, H, 2)), "conv2_b": init(keys[3], (H,)),
        "t1_w": init(keys[4], (H, H, 2)),   "t1_b": init(keys[5], (H,)),
        "t2_w": init(keys[6], (H, H, 2)),   "t2_b": init(keys[7], (H,)),
        "bn1_g": jnp.ones((H,), jnp.float32), "bn1_b": jnp.zeros((H,), jnp.float32),
        "bn2_g": jnp.ones((H,), jnp.float32), "bn2_b": jnp.zeros((H,), jnp.float32),
        "bn3_g": jnp.ones((H,), jnp.float32), "bn3_b": jnp.zeros((H,), jnp.float32),
        "w_ih": init(keys[8], (4 * H, H)),  "w_hh": init(keys[9], (4 * H, H)),
        "b_ih": init(keys[10], (4 * H,)),   "b_hh": init(keys[11], (4 * H,)),
        "w_out": init(keys[12], (O, H)),    "b_out": init(keys[13], (O,)),
    }
    kp = prepare_params(tp)

    x = jax.random.normal(keys[14], (B, S, D), jnp.float32)
    h0 = init(keys[15], (1, S, H), 0.1)
    c0 = init(keys[16], (1, S, H), 0.1)

    out, hn, cn = cnn_lstm_forward(x, h0, c0, kp)
    jax.block_until_ready((out, hn, cn))

    assert out.shape == (B, S, O) and hn.shape == (1, S, H) and cn.shape == (1, S, H)

    ref_out, ref_hn, ref_cn = reference_forward(x, h0, c0, tp)
    assert jnp.allclose(out, ref_out, rtol=1e-3, atol=1e-3), "output mismatch"
    assert jnp.allclose(hn, ref_hn, rtol=1e-3, atol=1e-3), "hidden-state mismatch"
    assert jnp.allclose(cn, ref_cn, rtol=1e-3, atol=1e-3), "cell-state mismatch"

    print("KERNEL_OK")
</pallas_src>

<mosaic_0001>
module attributes {stable_mosaic.version = 11 : i64} {
  func.func @_fused_cnn_lstm_kernel(%arg0: memref<12x5x6xf32, #tpu.memory_space<vmem>>, %arg1: memref<6x16xf32, #tpu.memory_space<vmem>>, %arg2: memref<1x8xf32, #tpu.memory_space<vmem>>, %arg3: memref<2x8xf32, #tpu.memory_space<vmem>>, %arg4: memref<8x16xf32, #tpu.memory_space<vmem>>, %arg5: memref<1x8xf32, #tpu.memory_space<vmem>>, %arg6: memref<2x8xf32, #tpu.memory_space<vmem>>, %arg7: memref<8x16xf32, #tpu.memory_space<vmem>>, %arg8: memref<1x8xf32, #tpu.memory_space<vmem>>, %arg9: memref<2x8xf32, #tpu.memory_space<vmem>>, %arg10: memref<8x16xf32, #tpu.memory_space<vmem>>, %arg11: memref<1x8xf32, #tpu.memory_space<vmem>>, %arg12: memref<1x5x8xf32, #tpu.memory_space<vmem>>, %arg13: memref<1x5x8xf32, #tpu.memory_space<vmem>>, %arg14: memref<4x8x8xf32, #tpu.memory_space<vmem>>, %arg15: memref<4x8x8xf32, #tpu.memory_space<vmem>>, %arg16: memref<4x1x8xf32, #tpu.memory_space<vmem>>, %arg17: memref<8x1xf32, #tpu.memory_space<vmem>>, %arg18: memref<1x1xf32, #tpu.memory_space<vmem>>, %arg19: memref<12x5x1xf32, #tpu.memory_space<vmem>>, %arg20: memref<1x5x8xf32, #tpu.memory_space<vmem>>, %arg21: memref<1x5x8xf32, #tpu.memory_space<vmem>>, %arg22: memref<12x5x8xf32, #tpu.memory_space<vmem>>) attributes {dimension_semantics = [], scalar_prefetch = 0 : i64, scratch_operands = 1 : i64, tpu.core_type = #tpu.core_type<tc>} {
    %c0 = arith.constant 0 : index
    %c0_0 = arith.constant 0 : index
    %c0_1 = arith.constant 0 : index
    %0 = vector.load %arg0[%c0, %c0_0, %c0_1] : memref<12x5x6xf32, #tpu.memory_space<vmem>>, vector<12x5x6xf32>
    %1 = vector.shape_cast %0 : vector<12x5x6xf32> to vector<60x6xf32>
    %c0_2 = arith.constant 0 : index
    %c0_3 = arith.constant 0 : index
    %2 = vector.load %arg1[%c0_2, %c0_3] : memref<6x16xf32, #tpu.memory_space<vmem>>, vector<6x16xf32>
    %cst = arith.constant dense<0.000000e+00> : vector<60x16xf32>
    %3 = tpu.matmul %1, %2, %cst {dimension_numbers = #tpu.dot_dimension_numbers<[1], [0], [0], [1], [0, 0, 1, 1], [], []>} : vector<60x6xf32>, vector<6x16xf32>, vector<60x16xf32> -> vector<60x16xf32>
    %4 = vector.shape_cast %3 : vector<60x16xf32> to vector<12x5x16xf32>
    %5 = vector.extract_strided_slice %4 {offsets = [0, 0, 0], sizes = [12, 4, 8], strides = [1, 1, 1]} : vector<12x5x16xf32> to vector<12x4x8xf32>
    %6 = vector.extract_strided_slice %4 {offsets = [0, 1, 8], sizes = [12, 4, 8], strides = [1, 1, 1]} : vector<12x5x16xf32> to vector<12x4x8xf32>
    %7 = arith.addf %5, %6 : vector<12x4x8xf32>
    %c0_4 = arith.constant 0 : index
    %c0_5 = arith.constant 0 : index
    %8 = vector.load %arg2[%c0_4, %c0_5] : memref<1x8xf32, #tpu.memory_space<vmem>>, vector<1x8xf32>
    %9 = vector.shape_cast %8 : vector<1x8xf32> to vector<1x1x8xf32>
    %10 = vector.broadcast %9 : vector<1x1x8xf32> to vector<12x4x8xf32>
    %11 = arith.addf %7, %10 : vector<12x4x8xf32>
    %c0_6 = arith.constant 0 : index
    %c0_7 = arith.constant 0 : index
    %12 = vector.load %arg3[%c0_6, %c0_7] : memref<2x8xf32, #tpu.memory_space<vmem>>, vector<1x8xf32>
    %c1 = arith.constant 1 : index
    %c0_8 = arith.constant 0 : index
    %13 = vector.load %arg3[%c1, %c0_8] : memref<2x8xf32, #tpu.memory_space<vmem>>, vector<1x8xf32>
    %cst_9 = arith.constant dense<0.000000e+00> : vector<8xf32>
    %14 = vector.multi_reduction <add>, %11, %cst_9 [0, 1] : vector<12x4x8xf32> to vector<8xf32>
    %15 = vector.shape_cast %14 : vector<8xf32> to vector<1x1x8xf32>
    %cst_10 = arith.constant 0.020833334 : f32
    %16 = vector.broadcast %cst_10 : f32 to vector<1x1x8xf32>
    %17 = arith.mulf %15, %16 : vector<1x1x8xf32>
    %18 = arith.mulf %11, %11 : vector<12x4x8xf32>
    %cst_11 = arith.constant dense<0.000000e+00> : vector<8xf32>
    %19 = vector.multi_reduction <add>, %18, %cst_11 [0, 1] : vector<12x4x8xf32> to vector<8xf32>
    %20 = vector.shape_cast %19 : vector<8xf32> to vector<1x1x8xf32>
    %cst_12 = arith.constant 0.020833334 : f32
    %21 = vector.broadcast %cst_12 : f32 to vector<1x1x8xf32>
    %22 = arith.mulf %20, %21 : vector<1x1x8xf32>
    %23 = arith.mulf %17, %17 : vector<1x1x8xf32>
    %24 = arith.subf %22, %23 : vector<1x1x8xf32>
    %cst_13 = arith.constant 9.99999974E-6 : f32
    %25 = vector.broadcast %cst_13 : f32 to vector<1x1x8xf32>
    %26 = arith.addf %24, %25 : vector<1x1x8xf32>
    %27 = math.rsqrt %26 : vector<1x1x8xf32>
    %28 = vector.shape_cast %12 : vector<1x8xf32> to vector<1x1x8xf32>
    %29 = arith.mulf %28, %27 : vector<1x1x8xf32>
    %30 = vector.broadcast %17 : vector<1x1x8xf32> to vector<12x4x8xf32>
    %31 = arith.subf %11, %30 : vector<12x4x8xf32>
    %32 = vector.broadcast %29 : vector<1x1x8xf32> to vector<12x4x8xf32>
    %33 = arith.mulf %31, %32 : vector<12x4x8xf32>
    %34 = vector.shape_cast %13 : vector<1x8xf32> to vector<1x1x8xf32>
    %35 = vector.broadcast %34 : vector<1x1x8xf32> to vector<12x4x8xf32>
    %36 = arith.addf %33, %35 : vector<12x4x8xf32>
    %cst_14 = arith.constant 0.000000e+00 : f32
    %37 = vector.broadcast %cst_14 : f32 to vector<12x4x8xf32>
    %38 = arith.maximumf %36, %37 : vector<12x4x8xf32>
    %39 = vector.shape_cast %38 : vector<12x4x8xf32> to vector<48x8xf32>
    %c0_15 = arith.constant 0 : index
    %c0_16 = arith.constant 0 : index
    %40 = vector.load %arg4[%c0_15, %c0_16] : memref<8x16xf32, #tpu.memory_space<vmem>>, vector<8x16xf32>
    %cst_17 = arith.constant dense<0.000000e+00> : vector<48x16xf32>
    %41 = tpu.matmul %39, %40, %cst_17 {dimension_numbers = #tpu.dot_dimension_numbers<[1], [0], [0], [1], [0, 0, 1, 1], [], []>} : vector<48x8xf32>, vector<8x16xf32>, vector<48x16xf32> -> vector<48x16xf32>
    %42 = vector.shape_cast %41 : vector<48x16xf32> to vector<12x4x16xf32>
    %43 = vector.extract_strided_slice %42 {offsets = [0, 0, 0], sizes = [12, 3, 8], strides = [1, 1, 1]} : vector<12x4x16xf32> to vector<12x3x8xf32>
    %44 = vector.extract_strided_slice %42 {offsets = [0, 1, 8], sizes = [12, 3, 8], strides = [1, 1, 1]} : vector<12x4x16xf32> to vector<12x3x8xf32>
    %45 = arith.addf %43, %44 : vector<12x3x8xf32>
    %c0_18 = arith.constant 0 : index
    %c0_19 = arith.constant 0 : index
    %46 = vector.load %arg5[%c0_18, %c0_19] : memref<1x8xf32, #tpu.memory_space<vmem>>, vector<1x8xf32>
    %47 = vector.shape_cast %46 : vector<1x8xf32> to vector<1x1x8xf32>
    %48 = vector.broadcast %47 : vector<1x1x8xf32> to vector<12x3x8xf32>
    %49 = arith.addf %45, %48 : vector<12x3x8xf32>
    %c0_20 = arith.constant 0 : index
    %c0_21 = arith.constant 0 : index
    %50 = vector.load %arg6[%c0_20, %c0_21] : memref<2x8xf32, #tpu.memory_space<vmem>>, vector<1x8xf32>
    %c1_22 = arith.constant 1 : index
    %c0_23 = arith.constant 0 : index
    %51 = vector.load %arg6[%c1_22, %c0_23] : memref<2x8xf32, #tpu.memory_space<vmem>>, vector<1x8xf32>
    %cst_24 = arith.constant dense<0.000000e+00> : vector<8xf32>
    %52 = vector.multi_reduction <add>, %49, %cst_24 [0, 1] : vector<12x3x8xf32> to vector<8xf32>
    %53 = vector.shape_cast %52 : vector<8xf32> to vector<1x1x8xf32>
    %cst_25 = arith.constant 0.027777778 : f32
    %54 = vector.broadcast %cst_25 : f32 to vector<1x1x8xf32>
    %55 = arith.mulf %53, %54 : vector<1x1x8xf32>
    %56 = arith.mulf %49, %49 : vector<12x3x8xf32>
    %cst_26 = arith.constant dense<0.000000e+00> : vector<8xf32>
    %57 = vector.multi_reduction <add>, %56, %cst_26 [0, 1] : vector<12x3x8xf32> to vector<8xf32>
    %58 = vector.shape_cast %57 : vector<8xf32> to vector<1x1x8xf32>
    %cst_27 = arith.constant 0.027777778 : f32
    %59 = vector.broadcast %cst_27 : f32 to vector<1x1x8xf32>
    %60 = arith.mulf %58, %59 : vector<1x1x8xf32>
    %61 = arith.mulf %55, %55 : vector<1x1x8xf32>
    %62 = arith.subf %60, %61 : vector<1x1x8xf32>
    %cst_28 = arith.constant 9.99999974E-6 : f32
    %63 = vector.broadcast %cst_28 : f32 to vector<1x1x8xf32>
    %64 = arith.addf %62, %63 : vector<1x1x8xf32>
    %65 = math.rsqrt %64 : vector<1x1x8xf32>
    %66 = vector.shape_cast %50 : vector<1x8xf32> to vector<1x1x8xf32>
    %67 = arith.mulf %66, %65 : vector<1x1x8xf32>
    %68 = vector.broadcast %55 : vector<1x1x8xf32> to vector<12x3x8xf32>
    %69 = arith.subf %49, %68 : vector<12x3x8xf32>
    %70 = vector.broadcast %67 : vector<1x1x8xf32> to vector<12x3x8xf32>
    %71 = arith.mulf %69, %70 : vector<12x3x8xf32>
    %72 = vector.shape_cast %51 : vector<1x8xf32> to vector<1x1x8xf32>
    %73 = vector.broadcast %72 : vector<1x1x8xf32> to vector<12x3x8xf32>
    %74 = arith.addf %71, %73 : vector<12x3x8xf32>
    %cst_29 = arith.constant 0.000000e+00 : f32
    %75 = vector.broadcast %cst_29 : f32 to vector<12x3x8xf32>
    %76 = arith.maximumf %74, %75 : vector<12x3x8xf32>
    %77 = vector.shape_cast %76 : vector<12x3x8xf32> to vector<36x8xf32>
    %c0_30 = arith.constant 0 : index
    %c0_31 = arith.constant 0 : index
    %78 = vector.load %arg7[%c0_30, %c0_31] : memref<8x16xf32, #tpu.memory_space<vmem>>, vector<8x16xf32>
    %cst_32 = arith.constant dense<0.000000e+00> : vector<36x16xf32>
    %79 = tpu.matmul %77, %78, %cst_32 {dimension_numbers = #tpu.dot_dimension_numbers<[1], [0], [0], [1], [0, 0, 1, 1], [], []>} : vector<36x8xf32>, vector<8x16xf32>, vector<36x16xf32> -> vector<36x16xf32>
    %80 = vector.shape_cast %79 : vector<36x16xf32> to vector<12x3x16xf32>
    %81 = vector.extract_strided_slice %80 {offsets = [0, 0, 0], sizes = [12, 3, 8], strides = [1, 1, 1]} : vector<12x3x16xf32> to vector<12x3x8xf32>
    %82 = vector.extract_strided_slice %80 {offsets = [0, 0, 8], sizes = [12, 3, 8], strides = [1, 1, 1]} : vector<12x3x16xf32> to vector<12x3x8xf32>
    %cst_33 = arith.constant 0.000000e+00 : f32
    %83 = vector.broadcast %cst_33 : f32 to vector<12x1x8xf32>
    %84 = tpu.concatenate %81, %83 in 1 : vector<12x3x8xf32>, vector<12x1x8xf32> -> vector<12x4x8xf32>
    %85 = tpu.concatenate %83, %82 in 1 : vector<12x1x8xf32>, vector<12x3x8xf32> -> vector<12x4x8xf32>
    %86 = arith.addf %84, %85 : vector<12x4x8xf32>
    %c0_34 = arith.constant 0 : index
    %c0_35 = arith.constant 0 : index
    %87 = vector.load %arg8[%c0_34, %c0_35] : memref<1x8xf32, #tpu.memory_space<vmem>>, vector<1x8xf32>
    %88 = vector.shape_cast %87 : vector<1x8xf32> to vector<1x1x8xf32>
    %89 = vector.broadcast %88 : vector<1x1x8xf32> to vector<12x4x8xf32>
    %90 = arith.addf %86, %89 : vector<12x4x8xf32>
    %c0_36 = arith.constant 0 : index
    %c0_37 = arith.constant 0 : index
    %91 = vector.load %arg9[%c0_36, %c0_37] : memref<2x8xf32, #tpu.memory_space<vmem>>, vector<1x8xf32>
    %c1_38 = arith.constant 1 : index
    %c0_39 = arith.constant 0 : index
    %92 = vector.load %arg9[%c1_38, %c0_39] : memref<2x8xf32, #tpu.memory_space<vmem>>, vector<1x8xf32>
    %cst_40 = arith.constant dense<0.000000e+00> : vector<8xf32>
    %93 = vector.multi_reduction <add>, %90, %cst_40 [0, 1] : vector<12x4x8xf32> to vector<8xf32>
    %94 = vector.shape_cast %93 : vector<8xf32> to vector<1x1x8xf32>
    %cst_41 = arith.constant 0.020833334 : f32
    %95 = vector.broadcast %cst_41 : f32 to vector<1x1x8xf32>
    %96 = arith.mulf %94, %95 : vector<1x1x8xf32>
    %97 = arith.mulf %90, %90 : vector<12x4x8xf32>
    %cst_42 = arith.constant dense<0.000000e+00> : vector<8xf32>
    %98 = vector.multi_reduction <add>, %97, %cst_42 [0, 1] : vector<12x4x8xf32> to vector<8xf32>
    %99 = vector.shape_cast %98 : vector<8xf32> to vector<1x1x8xf32>
    %cst_43 = arith.constant 0.020833334 : f32
    %100 = vector.broadcast %cst_43 : f32 to vector<1x1x8xf32>
    %101 = arith.mulf %99, %100 : vector<1x1x8xf32>
    %102 = arith.mulf %96, %96 : vector<1x1x8xf32>
    %103 = arith.subf %101, %102 : vector<1x1x8xf32>
    %cst_44 = arith.constant 9.99999974E-6 : f32
    %104 = vector.broadcast %cst_44 : f32 to vector<1x1x8xf32>
    %105 = arith.addf %103, %104 : vector<1x1x8xf32>
    %106 = math.rsqrt %105 : vector<1x1x8xf32>
    %107 = vector.shape_cast %91 : vector<1x8xf32> to vector<1x1x8xf32>
    %108 = arith.mulf %107, %106 : vector<1x1x8xf32>
    %109 = vector.broadcast %96 : vector<1x1x8xf32> to vector<12x4x8xf32>
    %110 = arith.subf %90, %109 : vector<12x4x8xf32>
    %111 = vector.broadcast %108 : vector<1x1x8xf32> to vector<12x4x8xf32>
    %112 = arith.mulf %110, %111 : vector<12x4x8xf32>
    %113 = vector.shape_cast %92 : vector<1x8xf32> to vector<1x1x8xf32>
    %114 = vector.broadcast %113 : vector<1x1x8xf32> to vector<12x4x8xf32>
    %115 = arith.addf %112, %114 : vector<12x4x8xf32>
    %cst_45 = arith.constant 0.000000e+00 : f32
    %116 = vector.broadcast %cst_45 : f32 to vector<12x4x8xf32>
    %117 = arith.maximumf %115, %116 : vector<12x4x8xf32>
    %118 = vector.shape_cast %117 : vector<12x4x8xf32> to vector<48x8xf32>
    %c0_46 = arith.constant 0 : index
    %c0_47 = arith.constant 0 : index
    %119 = vector.load %arg10[%c0_46, %c0_47] : memref<8x16xf32, #tpu.memory_space<vmem>>, vector<8x16xf32>
    %cst_48 = arith.constant dense<0.000000e+00> : vector<48x16xf32>
    %120 = tpu.matmul %118, %119, %cst_48 {dimension_numbers = #tpu.dot_dimension_numbers<[1], [0], [0], [1], [0, 0, 1, 1], [], []>} : vector<48x8xf32>, vector<8x16xf32>, vector<48x16xf32> -> vector<48x16xf32>
    %121 = vector.shape_cast %120 : vector<48x16xf32> to vector<12x4x16xf32>
    %122 = vector.extract_strided_slice %121 {offsets = [0, 0, 0], sizes = [12, 4, 8], strides = [1, 1, 1]} : vector<12x4x16xf32> to vector<12x4x8xf32>
    %123 = vector.extract_strided_slice %121 {offsets = [0, 0, 8], sizes = [12, 4, 8], strides = [1, 1, 1]} : vector<12x4x16xf32> to vector<12x4x8xf32>
    %cst_49 = arith.constant 0.000000e+00 : f32
    %124 = vector.broadcast %cst_49 : f32 to vector<12x1x8xf32>
    %125 = tpu.concatenate %122, %124 in 1 : vector<12x4x8xf32>, vector<12x1x8xf32> -> vector<12x5x8xf32>
    %126 = tpu.concatenate %124, %123 in 1 : vector<12x1x8xf32>, vector<12x4x8xf32> -> vector<12x5x8xf32>
    %127 = arith.addf %125, %126 : vector<12x5x8xf32>
    %c0_50 = arith.constant 0 : index
    %c0_51 = arith.constant 0 : index
    %128 = vector.load %arg11[%c0_50, %c0_51] : memref<1x8xf32, #tpu.memory_space<vmem>>, vector<1x8xf32>
    %129 = vector.shape_cast %128 : vector<1x8xf32> to vector<1x1x8xf32>
    %130 = vector.broadcast %129 : vector<1x1x8xf32> to vector<12x5x8xf32>
    %131 = arith.addf %127, %130 : vector<12x5x8xf32>
    %cst_52 = arith.constant 0.000000e+00 : f32
    %132 = vector.broadcast %cst_52 : f32 to vector<12x5x8xf32>
    %133 = arith.maximumf %131, %132 : vector<12x5x8xf32>
    %134 = vector.shape_cast %133 : vector<12x5x8xf32> to vector<60x8xf32>
    %c0_53 = arith.constant 0 : index
    %c0_54 = arith.constant 0 : index
    %c0_55 = arith.constant 0 : index
    %135 = vector.load %arg14[%c0_53, %c0_54, %c0_55] : memref<4x8x8xf32, #tpu.memory_space<vmem>>, vector<1x8x8xf32>
    %136 = vector.shape_cast %135 : vector<1x8x8xf32> to vector<8x8xf32>
    %cst_56 = arith.constant dense<0.000000e+00> : vector<60x8xf32>
    %137 = tpu.matmul %134, %136, %cst_56 {dimension_numbers = #tpu.dot_dimension_numbers<[1], [0], [0], [1], [0, 0, 1, 1], [], []>} : vector<60x8xf32>, vector<8x8xf32>, vector<60x8xf32> -> vector<60x8xf32>
    %138 = vector.shape_cast %137 : vector<60x8xf32> to vector<12x5x8xf32>
    %c0_57 = arith.constant 0 : index
    %c0_58 = arith.constant 0 : index
    %c0_59 = arith.constant 0 : index
    %139 = vector.load %arg16[%c0_57, %c0_58, %c0_59] : memref<4x1x8xf32, #tpu.memory_space<vmem>>, vector<1x1x8xf32>
    %140 = vector.shape_cast %139 : vector<1x1x8xf32> to vector<1x8xf32>
    %141 = vector.shape_cast %140 : vector<1x8xf32> to vector<1x1x8xf32>
    %142 = vector.broadcast %141 : vector<1x1x8xf32> to vector<12x5x8xf32>
    %143 = arith.addf %138, %142 : vector<12x5x8xf32>
    %c1_60 = arith.constant 1 : index
    %c0_61 = arith.constant 0 : index
    %c0_62 = arith.constant 0 : index
    %144 = vector.load %arg14[%c1_60, %c0_61, %c0_62] : memref<4x8x8xf32, #tpu.memory_space<vmem>>, vector<1x8x8xf32>
    %145 = vector.shape_cast %144 : vector<1x8x8xf32> to vector<8x8xf32>
    %cst_63 = arith.constant dense<0.000000e+00> : vector<60x8xf32>
    %146 = tpu.matmul %134, %145, %cst_63 {dimension_numbers = #tpu.dot_dimension_numbers<[1], [0], [0], [1], [0, 0, 1, 1], [], []>} : vector<60x8xf32>, vector<8x8xf32>, vector<60x8xf32> -> vector<60x8xf32>
    %147 = vector.shape_cast %146 : vector<60x8xf32> to vector<12x5x8xf32>
    %c1_64 = arith.constant 1 : index
    %c0_65 = arith.constant 0 : index
    %c0_66 = arith.constant 0 : index
    %148 = vector.load %arg16[%c1_64, %c0_65, %c0_66] : memref<4x1x8xf32, #tpu.memory_space<vmem>>, vector<1x1x8xf32>
    %149 = vector.shape_cast %148 : vector<1x1x8xf32> to vector<1x8xf32>
    %150 = vector.shape_cast %149 : vector<1x8xf32> to vector<1x1x8xf32>
    %151 = vector.broadcast %150 : vector<1x1x8xf32> to vector<12x5x8xf32>
    %152 = arith.addf %147, %151 : vector<12x5x8xf32>
    %c2 = arith.constant 2 : index
    %c0_67 = arith.constant 0 : index
    %c0_68 = arith.constant 0 : index
    %153 = vector.load %arg14[%c2, %c0_67, %c0_68] : memref<4x8x8xf32, #tpu.memory_space<vmem>>, vector<1x8x8xf32>
    %154 = vector.shape_cast %153 : vector<1x8x8xf32> to vector<8x8xf32>
    %cst_69 = arith.constant dense<0.000000e+00> : vector<60x8xf32>
    %155 = tpu.matmul %134, %154, %cst_69 {dimension_numbers = #tpu.dot_dimension_numbers<[1], [0], [0], [1], [0, 0, 1, 1], [], []>} : vector<60x8xf32>, vector<8x8xf32>, vector<60x8xf32> -> vector<60x8xf32>
    %156 = vector.shape_cast %155 : vector<60x8xf32> to vector<12x5x8xf32>
    %c2_70 = arith.constant 2 : index
    %c0_71 = arith.constant 0 : index
    %c0_72 = arith.constant 0 : index
    %157 = vector.load %arg16[%c2_70, %c0_71, %c0_72] : memref<4x1x8xf32, #tpu.memory_space<vmem>>, vector<1x1x8xf32>
    %158 = vector.shape_cast %157 : vector<1x1x8xf32> to vector<1x8xf32>
    %159 = vector.shape_cast %158 : vector<1x8xf32> to vector<1x1x8xf32>
    %160 = vector.broadcast %159 : vector<1x1x8xf32> to vector<12x5x8xf32>
    %161 = arith.addf %156, %160 : vector<12x5x8xf32>
    %c3 = arith.constant 3 : index
    %c0_73 = arith.constant 0 : index
    %c0_74 = arith.constant 0 : index
    %162 = vector.load %arg14[%c3, %c0_73, %c0_74] : memref<4x8x8xf32, #tpu.memory_space<vmem>>, vector<1x8x8xf32>
    %163 = vector.shape_cast %162 : vector<1x8x8xf32> to vector<8x8xf32>
    %cst_75 = arith.constant dense<0.000000e+00> : vector<60x8xf32>
    %164 = tpu.matmul %134, %163, %cst_75 {dimension_numbers = #tpu.dot_dimension_numbers<[1], [0], [0], [1], [0, 0, 1, 1], [], []>} : vector<60x8xf32>, vector<8x8xf32>, vector<60x8xf32> -> vector<60x8xf32>
    %165 = vector.shape_cast %164 : vector<60x8xf32> to vector<12x5x8xf32>
    %c3_76 = arith.constant 3 : index
    %c0_77 = arith.constant 0 : index
    %c0_78 = arith.constant 0 : index
    %166 = vector.load %arg16[%c3_76, %c0_77, %c0_78] : memref<4x1x8xf32, #tpu.memory_space<vmem>>, vector<1x1x8xf32>
    %167 = vector.shape_cast %166 : vector<1x1x8xf32> to vector<1x8xf32>
    %168 = vector.shape_cast %167 : vector<1x8xf32> to vector<1x1x8xf32>
    %169 = vector.broadcast %168 : vector<1x1x8xf32> to vector<12x5x8xf32>
    %170 = arith.addf %165, %169 : vector<12x5x8xf32>
    %c0_79 = arith.constant 0 : index
    %c0_80 = arith.constant 0 : index
    %c0_81 = arith.constant 0 : index
    %171 = vector.load %arg15[%c0_79, %c0_80, %c0_81] : memref<4x8x8xf32, #tpu.memory_space<vmem>>, vector<1x8x8xf32>
    %172 = vector.shape_cast %171 : vector<1x8x8xf32> to vector<8x8xf32>
    %c1_82 = arith.constant 1 : index
    %c0_83 = arith.constant 0 : index
    %c0_84 = arith.constant 0 : index
    %173 = vector.load %arg15[%c1_82, %c0_83, %c0_84] : memref<4x8x8xf32, #tpu.memory_space<vmem>>, vector<1x8x8xf32>
    %174 = vector.shape_cast %173 : vector<1x8x8xf32> to vector<8x8xf32>
    %c2_85 = arith.constant 2 : index
    %c0_86 = arith.constant 0 : index
    %c0_87 = arith.constant 0 : index
    %175 = vector.load %arg15[%c2_85, %c0_86, %c0_87] : memref<4x8x8xf32, #tpu.memory_space<vmem>>, vector<1x8x8xf32>
    %176 = vector.shape_cast %175 : vector<1x8x8xf32> to vector<8x8xf32>
    %c3_88 = arith.constant 3 : index
    %c0_89 = arith.constant 0 : index
    %c0_90 = arith.constant 0 : index
    %177 = vector.load %arg15[%c3_88, %c0_89, %c0_90] : memref<4x8x8xf32, #tpu.memory_space<vmem>>, vector<1x8x8xf32>
    %178 = vector.shape_cast %177 : vector<1x8x8xf32> to vector<8x8xf32>
    %c0_91 = arith.constant 0 : index
    %c0_92 = arith.constant 0 : index
    %c0_93 = arith.constant 0 : index
    %179 = vector.load %arg12[%c0_91, %c0_92, %c0_93] : memref<1x5x8xf32, #tpu.memory_space<vmem>>, vector<1x5x8xf32>
    %180 = vector.shape_cast %179 : vector<1x5x8xf32> to vector<5x8xf32>
    %c0_94 = arith.constant 0 : index
    %c0_95 = arith.constant 0 : index
    %c0_96 = arith.constant 0 : index
    %181 = vector.load %arg13[%c0_94, %c0_95, %c0_96] : memref<1x5x8xf32, #tpu.memory_space<vmem>>, vector<1x5x8xf32>
    %182 = vector.shape_cast %181 : vector<1x5x8xf32> to vector<5x8xf32>
    %183 = vector.extract_strided_slice %143 {offsets = [0, 0, 0], sizes = [1, 5, 8], strides = [1, 1, 1]} : vector<12x5x8xf32> to vector<1x5x8xf32>
    %184 = vector.shape_cast %183 : vector<1x5x8xf32> to vector<5x8xf32>
    %cst_97 = arith.constant dense<0.000000e+00> : vector<5x8xf32>
    %185 = tpu.matmul %180, %172, %cst_97 {dimension_numbers = #tpu.dot_dimension_numbers<[1], [0], [0], [1], [0, 0, 1, 1], [], []>} : vector<5x8xf32>, vector<8x8xf32>, vector<5x8xf32> -> vector<5x8xf32>
    %186 = arith.addf %184, %185 : vector<5x8xf32>
    %187 = arith.negf %186 : vector<5x8xf32>
    %188 = math.exp %187 : vector<5x8xf32>
    %cst_98 = arith.constant 1.000000e+00 : f32
    %189 = vector.broadcast %cst_98 : f32 to vector<5x8xf32>
    %190 = arith.addf %189, %188 : vector<5x8xf32>
    %191 = arith.divf %189, %190 : vector<5x8xf32>
    %192 = vector.extract_strided_slice %152 {offsets = [0, 0, 0], sizes = [1, 5, 8], strides = [1, 1, 1]} : vector<12x5x8xf32> to vector<1x5x8xf32>
    %193 = vector.shape_cast %192 : vector<1x5x8xf32> to vector<5x8xf32>
    %cst_99 = arith.constant dense<0.000000e+00> : vector<5x8xf32>
    %194 = tpu.matmul %180, %174, %cst_99 {dimension_numbers = #tpu.dot_dimension_numbers<[1], [0], [0], [1], [0, 0, 1, 1], [], []>} : vector<5x8xf32>, vector<8x8xf32>, vector<5x8xf32> -> vector<5x8xf32>
    %195 = arith.addf %193, %194 : vector<5x8xf32>
    %196 = arith.negf %195 : vector<5x8xf32>
    %197 = math.exp %196 : vector<5x8xf32>
    %cst_100 = arith.constant 1.000000e+00 : f32
    %198 = vector.broadcast %cst_100 : f32 to vector<5x8xf32>
    %199 = arith.addf %198, %197 : vector<5x8xf32>
    %200 = arith.divf %198, %199 : vector<5x8xf32>
    %201 = vector.extract_strided_slice %161 {offsets = [0, 0, 0], sizes = [1, 5, 8], strides = [1, 1, 1]} : vector<12x5x8xf32> to vector<1x5x8xf32>
    %202 = vector.shape_cast %201 : vector<1x5x8xf32> to vector<5x8xf32>
    %cst_101 = arith.constant dense<0.000000e+00> : vector<5x8xf32>
    %203 = tpu.matmul %180, %176, %cst_101 {dimension_numbers = #tpu.dot_dimension_numbers<[1], [0], [0], [1], [0, 0, 1, 1], [], []>} : vector<5x8xf32>, vector<8x8xf32>, vector<5x8xf32> -> vector<5x8xf32>
    %204 = arith.addf %202, %203 : vector<5x8xf32>
    %205 = math.tanh %204 : vector<5x8xf32>
    %206 = vector.extract_strided_slice %170 {offsets = [0, 0, 0], sizes = [1, 5, 8], strides = [1, 1, 1]} : vector<12x5x8xf32> to vector<1x5x8xf32>
    %207 = vector.shape_cast %206 : vector<1x5x8xf32> to vector<5x8xf32>
    %cst_102 = arith.constant dense<0.000000e+00> : vector<5x8xf32>
    %208 = tpu.matmul %180, %178, %cst_102 {dimension_numbers = #tpu.dot_dimension_numbers<[1], [0], [0], [1], [0, 0, 1, 1], [], []>} : vector<5x8xf32>, vector<8x8xf32>, vector<5x8xf32> -> vector<5x8xf32>
    %209 = arith.addf %207, %208 : vector<5x8xf32>
    %210 = arith.negf %209 : vector<5x8xf32>
    %211 = math.exp %210 : vector<5x8xf32>
    %cst_103 = arith.constant 1.000000e+00 : f32
    %212 = vector.broadcast %cst_103 : f32 to vector<5x8xf32>
    %213 = arith.addf %212, %211 : vector<5x8xf32>
    %214 = arith.divf %212, %213 : vector<5x8xf32>
    %215 = arith.mulf %200, %182 : vector<5x8xf32>
    %216 = arith.mulf %191, %205 : vector<5x8xf32>
    %217 = arith.addf %215, %216 : vector<5x8xf32>
    %218 = math.tanh %217 : vector<5x8xf32>
    %219 = arith.mulf %214, %218 : vector<5x8xf32>
    %c0_104 = arith.constant 0 : index
    %c0_105 = arith.constant 0 : index
    %c0_106 = arith.constant 0 : index
    %220 = vector.load %arg22[%c0_104, %c0_105, %c0_106] : memref<12x5x8xf32, #tpu.memory_space<vmem>>, vector<1x5x8xf32>
    %221 = vector.shape_cast %220 : vector<1x5x8xf32> to vector<5x8xf32>
    %222 = vector.shape_cast %219 : vector<5x8xf32> to vector<1x5x8xf32>
    tpu.vector_store %arg22[%c0_104, %c0_105, %c0_106], %222 {strides = array<i32>} : memref<12x5x8xf32, #tpu.memory_space<vmem>>, vector<1x5x8xf32>,
    %223 = vector.extract_strided_slice %143 {offsets = [1, 0, 0], sizes = [1, 5, 8], strides = [1, 1, 1]} : vector<12x5x8xf32> to vector<1x5x8xf32>
    %224 = vector.shape_cast %223 : vector<1x5x8xf32> to vector<5x8xf32>
    %cst_107 = arith.constant dense<0.000000e+00> : vector<5x8xf32>
    %225 = tpu.matmul %219, %172, %cst_107 {dimension_numbers = #tpu.dot_dimension_numbers<[1], [0], [0], [1], [0, 0, 1, 1], [], []>} : vector<5x8xf32>, vector<8x8xf32>, vector<5x8xf32> -> vector<5x8xf32>
    %226 = arith.addf %224, %225 : vector<5x8xf32>
    %227 = arith.negf %226 : vector<5x8xf32>
    %228 = math.exp %227 : vector<5x8xf32>
    %cst_108 = arith.constant 1.000000e+00 : f32
    %229 = vector.broadcast %cst_108 : f32 to vector<5x8xf32>
    %230 = arith.addf %229, %228 : vector<5x8xf32>
    %231 = arith.divf %229, %230 : vector<5x8xf32>
    %232 = vector.extract_strided_slice %152 {offsets = [1, 0, 0], sizes = [1, 5, 8], strides = [1, 1, 1]} : vector<12x5x8xf32> to vector<1x5x8xf32>
    %233 = vector.shape_cast %232 : vector<1x5x8xf32> to vector<5x8xf32>
    %cst_109 = arith.constant dense<0.000000e+00> : vector<5x8xf32>
    %234 = tpu.matmul %219, %174, %cst_109 {dimension_numbers = #tpu.dot_dimension_numbers<[1], [0], [0], [1], [0, 0, 1, 1], [], []>} : vector<5x8xf32>, vector<8x8xf32>, vector<5x8xf32> -> vector<5x8xf32>
    %235 = arith.addf %233, %234 : vector<5x8xf32>
    %236 = arith.negf %235 : vector<5x8xf32>
    %237 = math.exp %236 : vector<5x8xf32>
    %cst_110 = arith.constant 1.000000e+00 : f32
    %238 = vector.broadcast %cst_110 : f32 to vector<5x8xf32>
    %239 = arith.addf %238, %237 : vector<5x8xf32>
    %240 = arith.divf %238, %239 : vector<5x8xf32>
    %241 = vector.extract_strided_slice %161 {offsets = [1, 0, 0], sizes = [1, 5, 8], strides = [1, 1, 1]} : vector<12x5x8xf32> to vector<1x5x8xf32>
    %242 = vector.shape_cast %241 : vector<1x5x8xf32> to vector<5x8xf32>
    %cst_111 = arith.constant dense<0.000000e+00> : vector<5x8xf32>
    %243 = tpu.matmul %219, %176, %cst_111 {dimension_numbers = #tpu.dot_dimension_numbers<[1], [0], [0], [1], [0, 0, 1, 1], [], []>} : vector<5x8xf32>, vector<8x8xf32>, vector<5x8xf32> -> vector<5x8xf32>
    %244 = arith.addf %242, %243 : vector<5x8xf32>
    %245 = math.tanh %244 : vector<5x8xf32>
    %246 = vector.extract_strided_slice %170 {offsets = [1, 0, 0], sizes = [1, 5, 8], strides = [1, 1, 1]} : vector<12x5x8xf32> to vector<1x5x8xf32>
    %247 = vector.shape_cast %246 : vector<1x5x8xf32> to vector<5x8xf32>
    %cst_112 = arith.constant dense<0.000000e+00> : vector<5x8xf32>
    %248 = tpu.matmul %219, %178, %cst_112 {dimension_numbers = #tpu.dot_dimension_numbers<[1], [0], [0], [1], [0, 0, 1, 1], [], []>} : vector<5x8xf32>, vector<8x8xf32>, vector<5x8xf32> -> vector<5x8xf32>
    %249 = arith.addf %247, %248 : vector<5x8xf32>
    %250 = arith.negf %249 : vector<5x8xf32>
    %251 = math.exp %250 : vector<5x8xf32>
    %cst_113 = arith.constant 1.000000e+00 : f32
    %252 = vector.broadcast %cst_113 : f32 to vector<5x8xf32>
    %253 = arith.addf %252, %251 : vector<5x8xf32>
    %254 = arith.divf %252, %253 : vector<5x8xf32>
    %255 = arith.mulf %240, %217 : vector<5x8xf32>
    %256 = arith.mulf %231, %245 : vector<5x8xf32>
    %257 = arith.addf %255, %256 : vector<5x8xf32>
    %258 = math.tanh %257 : vector<5x8xf32>
    %259 = arith.mulf %254, %258 : vector<5x8xf32>
    %c1_114 = arith.constant 1 : index
    %c0_115 = arith.constant 0 : index
    %c0_116 = arith.constant 0 : index
    %260 = vector.load %arg22[%c1_114, %c0_115, %c0_116] : memref<12x5x8xf32, #tpu.memory_space<vmem>>, vector<1x5x8xf32>
    %261 = vector.shape_cast %260 : vector<1x5x8xf32> to vector<5x8xf32>
    %262 = vector.shape_cast %259 : vector<5x8xf32> to vector<1x5x8xf32>
    tpu.vector_store %arg22[%c1_114, %c0_115, %c0_116], %262 {strides = array<i32>} : memref<12x5x8xf32, #tpu.memory_space<vmem>>, vector<1x5x8xf32>,
    %263 = vector.extract_strided_slice %143 {offsets = [2, 0, 0], sizes = [1, 5, 8], strides = [1, 1, 1]} : vector<12x5x8xf32> to vector<1x5x8xf32>
    %264 = vector.shape_cast %263 : vector<1x5x8xf32> to vector<5x8xf32>
    %cst_117 = arith.constant dense<0.000000e+00> : vector<5x8xf32>
    %265 = tpu.matmul %259, %172, %cst_117 {dimension_numbers = #tpu.dot_dimension_numbers<[1], [0], [0], [1], [0, 0, 1, 1], [], []>} : vector<5x8xf32>, vector<8x8xf32>, vector<5x8xf32> -> vector<5x8xf32>
    %266 = arith.addf %264, %265 : vector<5x8xf32>
    %267 = arith.negf %266 : vector<5x8xf32>
    %268 = math.exp %267 : vector<5x8xf32>
    %cst_118 = arith.constant 1.000000e+00 : f32
    %269 = vector.broadcast %cst_118 : f32 to vector<5x8xf32>
    %270 = arith.addf %269, %268 : vector<5x8xf32>
    %271 = arith.divf %269, %270 : vector<5x8xf32>
    %272 = vector.extract_strided_slice %152 {offsets = [2, 0, 0], sizes = [1, 5, 8], strides = [1, 1, 1]} : vector<12x5x8xf32> to vector<1x5x8xf32>
    %273 = vector.shape_cast %272 : vector<1x5x8xf32> to vector<5x8xf32>
    %cst_119 = arith.constant dense<0.000000e+00> : vector<5x8xf32>
    %274 = tpu.matmul %259, %174, %cst_119 {dimension_numbers = #tpu.dot_dimension_numbers<[1], [0], [0], [1], [0, 0, 1, 1], [], []>} : vector<5x8xf32>, vector<8x8xf32>, vector<5x8xf32> -> vector<5x8xf32>
    %275 = arith.addf %273, %274 : vector<5x8xf32>
    %276 = arith.negf %275 : vector<5x8xf32>
    %277 = math.exp %276 : vector<5x8xf32>
    %cst_120 = arith.constant 1.000000e+00 : f32
    %278 = vector.broadcast %cst_120 : f32 to vector<5x8xf32>
    %279 = arith.addf %278, %277 : vector<5x8xf32>
    %280 = arith.divf %278, %279 : vector<5x8xf32>
    %281 = vector.extract_strided_slice %161 {offsets = [2, 0, 0], sizes = [1, 5, 8], strides = [1, 1, 1]} : vector<12x5x8xf32> to vector<1x5x8xf32>
    %282 = vector.shape_cast %281 : vector<1x5x8xf32> to vector<5x8xf32>
    %cst_121 = arith.constant dense<0.000000e+00> : vector<5x8xf32>
    %283 = tpu.matmul %259, %176, %cst_121 {dimension_numbers = #tpu.dot_dimension_numbers<[1], [0], [0], [1], [0, 0, 1, 1], [], []>} : vector<5x8xf32>, vector<8x8xf32>, vector<5x8xf32> -> vector<5x8xf32>
    %284 = arith.addf %282, %283 : vector<5x8xf32>
    %285 = math.tanh %284 : vector<5x8xf32>
    %286 = vector.extract_strided_slice %170 {offsets = [2, 0, 0], sizes = [1, 5, 8], strides = [1, 1, 1]} : vector<12x5x8xf32> to vector<1x5x8xf32>
    %287 = vector.shape_cast %286 : vector<1x5x8xf32> to vector<5x8xf32>
    %cst_122 = arith.constant dense<0.000000e+00> : vector<5x8xf32>
    %288 = tpu.matmul %259, %178, %cst_122 {dimension_numbers = #tpu.dot_dimension_numbers<[1], [0], [0], [1], [0, 0, 1, 1], [], []>} : vector<5x8xf32>, vector<8x8xf32>, vector<5x8xf32> -> vector<5x8xf32>
    %289 = arith.addf %287, %288 : vector<5x8xf32>
    %290 = arith.negf %289 : vector<5x8xf32>
    %291 = math.exp %290 : vector<5x8xf32>
    %cst_123 = arith.constant 1.000000e+00 : f32
    %292 = vector.broadcast %cst_123 : f32 to vector<5x8xf32>
    %293 = arith.addf %292, %291 : vector<5x8xf32>
    %294 = arith.divf %292, %293 : vector<5x8xf32>
    %295 = arith.mulf %280, %257 : vector<5x8xf32>
    %296 = arith.mulf %271, %285 : vector<5x8xf32>
    %297 = arith.addf %295, %296 : vector<5x8xf32>
    %298 = math.tanh %297 : vector<5x8xf32>
    %299 = arith.mulf %294, %298 : vector<5x8xf32>
    %c2_124 = arith.constant 2 : index
    %c0_125 = arith.constant 0 : index
    %c0_126 = arith.constant 0 : index
    %300 = vector.load %arg22[%c2_124, %c0_125, %c0_126] : memref<12x5x8xf32, #tpu.memory_space<vmem>>, vector<1x5x8xf32>
    %301 = vector.shape_cast %300 : vector<1x5x8xf32> to vector<5x8xf32>
    %302 = vector.shape_cast %299 : vector<5x8xf32> to vector<1x5x8xf32>
    tpu.vector_store %arg22[%c2_124, %c0_125, %c0_126], %302 {strides = array<i32>} : memref<12x5x8xf32, #tpu.memory_space<vmem>>, vector<1x5x8xf32>,
    %303 = vector.extract_strided_slice %143 {offsets = [3, 0, 0], sizes = [1, 5, 8], strides = [1, 1, 1]} : vector<12x5x8xf32> to vector<1x5x8xf32>
    %304 = vector.shape_cast %303 : vector<1x5x8xf32> to vector<5x8xf32>
    %cst_127 = arith.constant dense<0.000000e+00> : vector<5x8xf32>
    %305 = tpu.matmul %299, %172, %cst_127 {dimension_numbers = #tpu.dot_dimension_numbers<[1], [0], [0], [1], [0, 0, 1, 1], [], []>} : vector<5x8xf32>, vector<8x8xf32>, vector<5x8xf32> -> vector<5x8xf32>
    %306 = arith.addf %304, %305 : vector<5x8xf32>
    %307 = arith.negf %306 : vector<5x8xf32>
    %308 = math.exp %307 : vector<5x8xf32>
    %cst_128 = arith.constant 1.000000e+00 : f32
    %309 = vector.broadcast %cst_128 : f32 to vector<5x8xf32>
    %310 = arith.addf %309, %308 : vector<5x8xf32>
    %311 = arith.divf %309, %310 : vector<5x8xf32>
    %312 = vector.extract_strided_slice %152 {offsets = [3, 0, 0], sizes = [1, 5, 8], strides = [1, 1, 1]} : vector<12x5x8xf32> to vector<1x5x8xf32>
    %313 = vector.shape_cast %312 : vector<1x5x8xf32> to vector<5x8xf32>
    %cst_129 = arith.constant dense<0.000000e+00> : vector<5x8xf32>
    %314 = tpu.matmul %299, %174, %cst_129 {dimension_numbers = #tpu.dot_dimension_numbers<[1], [0], [0], [1], [0, 0, 1, 1], [], []>} : vector<5x8xf32>, vector<8x8xf32>, vector<5x8xf32> -> vector<5x8xf32>
    %315 = arith.addf %313, %314 : vector<5x8xf32>
    %316 = arith.negf %315 : vector<5x8xf32>
    %317 = math.exp %316 : vector<5x8xf32>
    %cst_130 = arith.constant 1.000000e+00 : f32
    %318 = vector.broadcast %cst_130 : f32 to vector<5x8xf32>
    %319 = arith.addf %318, %317 : vector<5x8xf32>
    %320 = arith.divf %318, %319 : vector<5x8xf32>
    %321 = vector.extract_strided_slice %161 {offsets = [3, 0, 0], sizes = [1, 5, 8], strides = [1, 1, 1]} : vector<12x5x8xf32> to vector<1x5x8xf32>
    %322 = vector.shape_cast %321 : vector<1x5x8xf32> to vector<5x8xf32>
    %cst_131 = arith.constant dense<0.000000e+00> : vector<5x8xf32>
    %323 = tpu.matmul %299, %176, %cst_131 {dimension_numbers = #tpu.dot_dimension_numbers<[1], [0], [0], [1], [0, 0, 1, 1], [], []>} : vector<5x8xf32>, vector<8x8xf32>, vector<5x8xf32> -> vector<5x8xf32>
    %324 = arith.addf %322, %323 : vector<5x8xf32>
    %325 = math.tanh %324 : vector<5x8xf32>
    %326 = vector.extract_strided_slice %170 {offsets = [3, 0, 0], sizes = [1, 5, 8], strides = [1, 1, 1]} : vector<12x5x8xf32> to vector<1x5x8xf32>
    %327 = vector.shape_cast %326 : vector<1x5x8xf32> to vector<5x8xf32>
    %cst_132 = arith.constant dense<0.000000e+00> : vector<5x8xf32>
    %328 = tpu.matmul %299, %178, %cst_132 {dimension_numbers = #tpu.dot_dimension_numbers<[1], [0], [0], [1], [0, 0, 1, 1], [], []>} : vector<5x8xf32>, vector<8x8xf32>, vector<5x8xf32> -> vector<5x8xf32>
    %329 = arith.addf %327, %328 : vector<5x8xf32>
    %330 = arith.negf %329 : vector<5x8xf32>
    %331 = math.exp %330 : vector<5x8xf32>
    %cst_133 = arith.constant 1.000000e+00 : f32
    %332 = vector.broadcast %cst_133 : f32 to vector<5x8xf32>
    %333 = arith.addf %332, %331 : vector<5x8xf32>
    %334 = arith.divf %332, %333 : vector<5x8xf32>
    %335 = arith.mulf %320, %297 : vector<5x8xf32>
    %336 = arith.mulf %311, %325 : vector<5x8xf32>
    %337 = arith.addf %335, %336 : vector<5x8xf32>
    %338 = math.tanh %337 : vector<5x8xf32>
    %339 = arith.mulf %334, %338 : vector<5x8xf32>
    %c3_134 = arith.constant 3 : index
    %c0_135 = arith.constant 0 : index
    %c0_136 = arith.constant 0 : index
    %340 = vector.load %arg22[%c3_134, %c0_135, %c0_136] : memref<12x5x8xf32, #tpu.memory_space<vmem>>, vector<1x5x8xf32>
    %341 = vector.shape_cast %340 : vector<1x5x8xf32> to vector<5x8xf32>
    %342 = vector.shape_cast %339 : vector<5x8xf32> to vector<1x5x8xf32>
    tpu.vector_store %arg22[%c3_134, %c0_135, %c0_136], %342 {strides = array<i32>} : memref<12x5x8xf32, #tpu.memory_space<vmem>>, vector<1x5x8xf32>,
    %343 = vector.extract_strided_slice %143 {offsets = [4, 0, 0], sizes = [1, 5, 8], strides = [1, 1, 1]} : vector<12x5x8xf32> to vector<1x5x8xf32>
    %344 = vector.shape_cast %343 : vector<1x5x8xf32> to vector<5x8xf32>
    %cst_137 = arith.constant dense<0.000000e+00> : vector<5x8xf32>
    %345 = tpu.matmul %339, %172, %cst_137 {dimension_numbers = #tpu.dot_dimension_numbers<[1], [0], [0], [1], [0, 0, 1, 1], [], []>} : vector<5x8xf32>, vector<8x8xf32>, vector<5x8xf32> -> vector<5x8xf32>
    %346 = arith.addf %344, %345 : vector<5x8xf32>
    %347 = arith.negf %346 : vector<5x8xf32>
    %348 = math.exp %347 : vector<5x8xf32>
    %cst_138 = arith.constant 1.000000e+00 : f32
    %349 = vector.broadcast %cst_138 : f32 to vector<5x8xf32>
    %350 = arith.addf %349, %348 : vector<5x8xf32>
    %351 = arith.divf %349, %350 : vector<5x8xf32>
    %352 = vector.extract_strided_slice %152 {offsets = [4, 0, 0], sizes = [1, 5, 8], strides = [1, 1, 1]} : vector<12x5x8xf32> to vector<1x5x8xf32>
    %353 = vector.shape_cast %352 : vector<1x5x8xf32> to vector<5x8xf32>
    %cst_139 = arith.constant dense<0.000000e+00> : vector<5x8xf32>
    %354 = tpu.matmul %339, %174, %cst_139 {dimension_numbers = #tpu.dot_dimension_numbers<[1], [0], [0], [1], [0, 0, 1, 1], [], []>} : vector<5x8xf32>, vector<8x8xf32>, vector<5x8xf32> -> vector<5x8xf32>
    %355 = arith.addf %353, %354 : vector<5x8xf32>
    %356 = arith.negf %355 : vector<5x8xf32>
    %357 = math.exp %356 : vector<5x8xf32>
    %cst_140 = arith.constant 1.000000e+00 : f32
    %358 = vector.broadcast %cst_140 : f32 to vector<5x8xf32>
    %359 = arith.addf %358, %357 : vector<5x8xf32>
    %360 = arith.divf %358, %359 : vector<5x8xf32>
    %361 = vector.extract_strided_slice %161 {offsets = [4, 0, 0], sizes = [1, 5, 8], strides = [1, 1, 1]} : vector<12x5x8xf32> to vector<1x5x8xf32>
    %362 = vector.shape_cast %361 : vector<1x5x8xf32> to vector<5x8xf32>
    %cst_141 = arith.constant dense<0.000000e+00> : vector<5x8xf32>
    %363 = tpu.matmul %339, %176, %cst_141 {dimension_numbers = #tpu.dot_dimension_numbers<[1], [0], [0], [1], [0, 0, 1, 1], [], []>} : vector<5x8xf32>, vector<8x8xf32>, vector<5x8xf32> -> vector<5x8xf32>
    %364 = arith.addf %362, %363 : vector<5x8xf32>
    %365 = math.tanh %364 : vector<5x8xf32>
    %366 = vector.extract_strided_slice %170 {offsets = [4, 0, 0], sizes = [1, 5, 8], strides = [1, 1, 1]} : vector<12x5x8xf32> to vector<1x5x8xf32>
    %367 = vector.shape_cast %366 : vector<1x5x8xf32> to vector<5x8xf32>
    %cst_142 = arith.constant dense<0.000000e+00> : vector<5x8xf32>
    %368 = tpu.matmul %339, %178, %cst_142 {dimension_numbers = #tpu.dot_dimension_numbers<[1], [0], [0], [1], [0, 0, 1, 1], [], []>} : vector<5x8xf32>, vector<8x8xf32>, vector<5x8xf32> -> vector<5x8xf32>
    %369 = arith.addf %367, %368 : vector<5x8xf32>
    %370 = arith.negf %369 : vector<5x8xf32>
    %371 = math.exp %370 : vector<5x8xf32>
    %cst_143 = arith.constant 1.000000e+00 : f32
    %372 = vector.broadcast %cst_143 : f32 to vector<5x8xf32>
    %373 = arith.addf %372, %371 : vector<5x8xf32>
    %374 = arith.divf %372, %373 : vector<5x8xf32>
    %375 = arith.mulf %360, %337 : vector<5x8xf32>
    %376 = arith.mulf %351, %365 : vector<5x8xf32>
    %377 = arith.addf %375, %376 : vector<5x8xf32>
    %378 = math.tanh %377 : vector<5x8xf32>
    %379 = arith.mulf %374, %378 : vector<5x8xf32>
    %c4 = arith.constant 4 : index
    %c0_144 = arith.constant 0 : index
    %c0_145 = arith.constant 0 : index
    %380 = vector.load %arg22[%c4, %c0_144, %c0_145] : memref<12x5x8xf32, #tpu.memory_space<vmem>>, vector<1x5x8xf32>
    %381 = vector.shape_cast %380 : vector<1x5x8xf32> to vector<5x8xf32>
    %382 = vector.shape_cast %379 : vector<5x8xf32> to vector<1x5x8xf32>
    tpu.vector_store %arg22[%c4, %c0_144, %c0_145], %382 {strides = array<i32>} : memref<12x5x8xf32, #tpu.memory_space<vmem>>, vector<1x5x8xf32>,
    %383 = vector.extract_strided_slice %143 {offsets = [5, 0, 0], sizes = [1, 5, 8], strides = [1, 1, 1]} : vector<12x5x8xf32> to vector<1x5x8xf32>
    %384 = vector.shape_cast %383 : vector<1x5x8xf32> to vector<5x8xf32>
    %cst_146 = arith.constant dense<0.000000e+00> : vector<5x8xf32>
    %385 = tpu.matmul %379, %172, %cst_146 {dimension_numbers = #tpu.dot_dimension_numbers<[1], [0], [0], [1], [0, 0, 1, 1], [], []>} : vector<5x8xf32>, vector<8x8xf32>, vector<5x8xf32> -> vector<5x8xf32>
    %386 = arith.addf %384, %385 : vector<5x8xf32>
    %387 = arith.negf %386 : vector<5x8xf32>
    %388 = math.exp %387 : vector<5x8xf32>
    %cst_147 = arith.constant 1.000000e+00 : f32
    %389 = vector.broadcast %cst_147 : f32 to vector<5x8xf32>
    %390 = arith.addf %389, %388 : vector<5x8xf32>
    %391 = arith.divf %389, %390 : vector<5x8xf32>
    %392 = vector.extract_strided_slice %152 {offsets = [5, 0, 0], sizes = [1, 5, 8], strides = [1, 1, 1]} : vector<12x5x8xf32> to vector<1x5x8xf32>
    %393 = vector.shape_cast %392 : vector<1x5x8xf32> to vector<5x8xf32>
    %cst_148 = arith.constant dense<0.000000e+00> : vector<5x8xf32>
    %394 = tpu.matmul %379, %174, %cst_148 {dimension_numbers = #tpu.dot_dimension_numbers<[1], [0], [0], [1], [0, 0, 1, 1], [], []>} : vector<5x8xf32>, vector<8x8xf32>, vector<5x8xf32> -> vector<5x8xf32>
    %395 = arith.addf %393, %394 : vector<5x8xf32>
    %396 = arith.negf %395 : vector<5x8xf32>
    %397 = math.exp %396 : vector<5x8xf32>
    %cst_149 = arith.constant 1.000000e+00 : f32
    %398 = vector.broadcast %cst_149 : f32 to vector<5x8xf32>
    %399 = arith.addf %398, %397 : vector<5x8xf32>
    %400 = arith.divf %398, %399 : vector<5x8xf32>
    %401 = vector.extract_strided_slice %161 {offsets = [5, 0, 0], sizes = [1, 5, 8], strides = [1, 1, 1]} : vector<12x5x8xf32> to vector<1x5x8xf32>
    %402 = vector.shape_cast %401 : vector<1x5x8xf32> to vector<5x8xf32>
    %cst_150 = arith.constant dense<0.000000e+00> : vector<5x8xf32>
    %403 = tpu.matmul %379, %176, %cst_150 {dimension_numbers = #tpu.dot_dimension_numbers<[1], [0], [0], [1], [0, 0, 1, 1], [], []>} : vector<5x8xf32>, vector<8x8xf32>, vector<5x8xf32> -> vector<5x8xf32>
    %404 = arith.addf %402, %403 : vector<5x8xf32>
    %405 = math.tanh %404 : vector<5x8xf32>
    %406 = vector.extract_strided_slice %170 {offsets = [5, 0, 0], sizes = [1, 5, 8], strides = [1, 1, 1]} : vector<12x5x8xf32> to vector<1x5x8xf32>
    %407 = vector.shape_cast %406 : vector<1x5x8xf32> to vector<5x8xf32>
    %cst_151 = arith.constant dense<0.000000e+00> : vector<5x8xf32>
    %408 = tpu.matmul %379, %178, %cst_151 {dimension_numbers = #tpu.dot_dimension_numbers<[1], [0], [0], [1], [0, 0, 1, 1], [], []>} : vector<5x8xf32>, vector<8x8xf32>, vector<5x8xf32> -> vector<5x8xf32>
    %409 = arith.addf %407, %408 : vector<5x8xf32>
    %410 = arith.negf %409 : vector<5x8xf32>
    %411 = math.exp %410 : vector<5x8xf32>
    %cst_152 = arith.constant 1.000000e+00 : f32
    %412 = vector.broadcast %cst_152 : f32 to vector<5x8xf32>
    %413 = arith.addf %412, %411 : vector<5x8xf32>
    %414 = arith.divf %412, %413 : vector<5x8xf32>
    %415 = arith.mulf %400, %377 : vector<5x8xf32>
    %416 = arith.mulf %391, %405 : vector<5x8xf32>
    %417 = arith.addf %415, %416 : vector<5x8xf32>
    %418 = math.tanh %417 : vector<5x8xf32>
    %419 = arith.mulf %414, %418 : vector<5x8xf32>
    %c5 = arith.constant 5 : index
    %c0_153 = arith.constant 0 : index
    %c0_154 = arith.constant 0 : index
    %420 = vector.load %arg22[%c5, %c0_153, %c0_154] : memref<12x5x8xf32, #tpu.memory_space<vmem>>, vector<1x5x8xf32>
    %421 = vector.shape_cast %420 : vector<1x5x8xf32> to vector<5x8xf32>
    %422 = vector.shape_cast %419 : vector<5x8xf32> to vector<1x5x8xf32>
    tpu.vector_store %arg22[%c5, %c0_153, %c0_154], %422 {strides = array<i32>} : memref<12x5x8xf32, #tpu.memory_space<vmem>>, vector<1x5x8xf32>,
    %423 = vector.extract_strided_slice %143 {offsets = [6, 0, 0], sizes = [1, 5, 8], strides = [1, 1, 1]} : vector<12x5x8xf32> to vector<1x5x8xf32>
    %424 = vector.shape_cast %423 : vector<1x5x8xf32> to vector<5x8xf32>
    %cst_155 = arith.constant dense<0.000000e+00> : vector<5x8xf32>
    %425 = tpu.matmul %419, %172, %cst_155 {dimension_numbers = #tpu.dot_dimension_numbers<[1], [0], [0], [1], [0, 0, 1, 1], [], []>} : vector<5x8xf32>, vector<8x8xf32>, vector<5x8xf32> -> vector<5x8xf32>
    %426 = arith.addf %424, %425 : vector<5x8xf32>
    %427 = arith.negf %426 : vector<5x8xf32>
    %428 = math.exp %427 : vector<5x8xf32>
    %cst_156 = arith.constant 1.000000e+00 : f32
    %429 = vector.broadcast %cst_156 : f32 to vector<5x8xf32>
    %430 = arith.addf %429, %428 : vector<5x8xf32>
    %431 = arith.divf %429, %430 : vector<5x8xf32>
    %432 = vector.extract_strided_slice %152 {offsets = [6, 0, 0], sizes = [1, 5, 8], strides = [1, 1, 1]} : vector<12x5x8xf32> to vector<1x5x8xf32>
    %433 = vector.shape_cast %432 : vector<1x5x8xf32> to vector<5x8xf32>
    %cst_157 = arith.constant dense<0.000000e+00> : vector<5x8xf32>
    %434 = tpu.matmul %419, %174, %cst_157 {dimension_numbers = #tpu.dot_dimension_numbers<[1], [0], [0], [1], [0, 0, 1, 1], [], []>} : vector<5x8xf32>, vector<8x8xf32>, vector<5x8xf32> -> vector<5x8xf32>
    %435 = arith.addf %433, %434 : vector<5x8xf32>
    %436 = arith.negf %435 : vector<5x8xf32>
    %437 = math.exp %436 : vector<5x8xf32>
    %cst_158 = arith.constant 1.000000e+00 : f32
    %438 = vector.broadcast %cst_158 : f32 to vector<5x8xf32>
    %439 = arith.addf %438, %437 : vector<5x8xf32>
    %440 = arith.divf %438, %439 : vector<5x8xf32>
    %441 = vector.extract_strided_slice %161 {offsets = [6, 0, 0], sizes = [1, 5, 8], strides = [1, 1, 1]} : vector<12x5x8xf32> to vector<1x5x8xf32>
    %442 = vector.shape_cast %441 : vector<1x5x8xf32> to vector<5x8xf32>
    %cst_159 = arith.constant dense<0.000000e+00> : vector<5x8xf32>
    %443 = tpu.matmul %419, %176, %cst_159 {dimension_numbers = #tpu.dot_dimension_numbers<[1], [0], [0], [1], [0, 0, 1, 1], [], []>} : vector<5x8xf32>, vector<8x8xf32>, vector<5x8xf32> -> vector<5x8xf32>
    %444 = arith.addf %442, %443 : vector<5x8xf32>
    %445 = math.tanh %444 : vector<5x8xf32>
    %446 = vector.extract_strided_slice %170 {offsets = [6, 0, 0], sizes = [1, 5, 8], strides = [1, 1, 1]} : vector<12x5x8xf32> to vector<1x5x8xf32>
    %447 = vector.shape_cast %446 : vector<1x5x8xf32> to vector<5x8xf32>
    %cst_160 = arith.constant dense<0.000000e+00> : vector<5x8xf32>
    %448 = tpu.matmul %419, %178, %cst_160 {dimension_numbers = #tpu.dot_dimension_numbers<[1], [0], [0], [1], [0, 0, 1, 1], [], []>} : vector<5x8xf32>, vector<8x8xf32>, vector<5x8xf32> -> vector<5x8xf32>
    %449 = arith.addf %447, %448 : vector<5x8xf32>
    %450 = arith.negf %449 : vector<5x8xf32>
    %451 = math.exp %450 : vector<5x8xf32>
    %cst_161 = arith.constant 1.000000e+00 : f32
    %452 = vector.broadcast %cst_161 : f32 to vector<5x8xf32>
    %453 = arith.addf %452, %451 : vector<5x8xf32>
    %454 = arith.divf %452, %453 : vector<5x8xf32>
    %455 = arith.mulf %440, %417 : vector<5x8xf32>
    %456 = arith.mulf %431, %445 : vector<5x8xf32>
    %457 = arith.addf %455, %456 : vector<5x8xf32>
    %458 = math.tanh %457 : vector<5x8xf32>
    %459 = arith.mulf %454, %458 : vector<5x8xf32>
    %c6 = arith.constant 6 : index
    %c0_162 = arith.constant 0 : index
    %c0_163 = arith.constant 0 : index
    %460 = vector.load %arg22[%c6, %c0_162, %c0_163] : memref<12x5x8xf32, #tpu.memory_space<vmem>>, vector<1x5x8xf32>
    %461 = vector.shape_cast %460 : vector<1x5x8xf32> to vector<5x8xf32>
    %462 = vector.shape_cast %459 : vector<5x8xf32> to vector<1x5x8xf32>
    tpu.vector_store %arg22[%c6, %c0_162, %c0_163], %462 {strides = array<i32>} : memref<12x5x8xf32, #tpu.memory_space<vmem>>, vector<1x5x8xf32>,
    %463 = vector.extract_strided_slice %143 {offsets = [7, 0, 0], sizes = [1, 5, 8], strides = [1, 1, 1]} : vector<12x5x8xf32> to vector<1x5x8xf32>
    %464 = vector.shape_cast %463 : vector<1x5x8xf32> to vector<5x8xf32>
    %cst_164 = arith.constant dense<0.000000e+00> : vector<5x8xf32>
    %465 = tpu.matmul %459, %172, %cst_164 {dimension_numbers = #tpu.dot_dimension_numbers<[1], [0], [0], [1], [0, 0, 1, 1], [], []>} : vector<5x8xf32>, vector<8x8xf32>, vector<5x8xf32> -> vector<5x8xf32>
    %466 = arith.addf %464, %465 : vector<5x8xf32>
    %467 = arith.negf %466 : vector<5x8xf32>
    %468 = math.exp %467 : vector<5x8xf32>
    %cst_165 = arith.constant 1.000000e+00 : f32
    %469 = vector.broadcast %cst_165 : f32 to vector<5x8xf32>
    %470 = arith.addf %469, %468 : vector<5x8xf32>
    %471 = arith.divf %469, %470 : vector<5x8xf32>
    %472 = vector.extract_strided_slice %152 {offsets = [7, 0, 0], sizes = [1, 5, 8], strides = [1, 1, 1]} : vector<12x5x8xf32> to vector<1x5x8xf32>
    %473 = vector.shape_cast %472 : vector<1x5x8xf32> to vector<5x8xf32>
    %cst_166 = arith.constant dense<0.000000e+00> : vector<5x8xf32>
    %474 = tpu.matmul %459, %174, %cst_166 {dimension_numbers = #tpu.dot_dimension_numbers<[1], [0], [0], [1], [0, 0, 1, 1], [], []>} : vector<5x8xf32>, vector<8x8xf32>, vector<5x8xf32> -> vector<5x8xf32>
    %475 = arith.addf %473, %474 : vector<5x8xf32>
    %476 = arith.negf %475 : vector<5x8xf32>
    %477 = math.exp %476 : vector<5x8xf32>
    %cst_167 = arith.constant 1.000000e+00 : f32
    %478 = vector.broadcast %cst_167 : f32 to vector<5x8xf32>
    %479 = arith.addf %478, %477 : vector<5x8xf32>
    %480 = arith.divf %478, %479 : vector<5x8xf32>
    %481 = vector.extract_strided_slice %161 {offsets = [7, 0, 0], sizes = [1, 5, 8], strides = [1, 1, 1]} : vector<12x5x8xf32> to vector<1x5x8xf32>
    %482 = vector.shape_cast %481 : vector<1x5x8xf32> to vector<5x8xf32>
    %cst_168 = arith.constant dense<0.000000e+00> : vector<5x8xf32>
    %483 = tpu.matmul %459, %176, %cst_168 {dimension_numbers = #tpu.dot_dimension_numbers<[1], [0], [0], [1], [0, 0, 1, 1], [], []>} : vector<5x8xf32>, vector<8x8xf32>, vector<5x8xf32> -> vector<5x8xf32>
    %484 = arith.addf %482, %483 : vector<5x8xf32>
    %485 = math.tanh %484 : vector<5x8xf32>
    %486 = vector.extract_strided_slice %170 {offsets = [7, 0, 0], sizes = [1, 5, 8], strides = [1, 1, 1]} : vector<12x5x8xf32> to vector<1x5x8xf32>
    %487 = vector.shape_cast %486 : vector<1x5x8xf32> to vector<5x8xf32>
    %cst_169 = arith.constant dense<0.000000e+00> : vector<5x8xf32>
    %488 = tpu.matmul %459, %178, %cst_169 {dimension_numbers = #tpu.dot_dimension_numbers<[1], [0], [0], [1], [0, 0, 1, 1], [], []>} : vector<5x8xf32>, vector<8x8xf32>, vector<5x8xf32> -> vector<5x8xf32>
    %489 = arith.addf %487, %488 : vector<5x8xf32>
    %490 = arith.negf %489 : vector<5x8xf32>
    %491 = math.exp %490 : vector<5x8xf32>
    %cst_170 = arith.constant 1.000000e+00 : f32
    %492 = vector.broadcast %cst_170 : f32 to vector<5x8xf32>
    %493 = arith.addf %492, %491 : vector<5x8xf32>
    %494 = arith.divf %492, %493 : vector<5x8xf32>
    %495 = arith.mulf %480, %457 : vector<5x8xf32>
    %496 = arith.mulf %471, %485 : vector<5x8xf32>
    %497 = arith.addf %495, %496 : vector<5x8xf32>
    %498 = math.tanh %497 : vector<5x8xf32>
    %499 = arith.mulf %494, %498 : vector<5x8xf32>
    %c7 = arith.constant 7 : index
    %c0_171 = arith.constant 0 : index
    %c0_172 = arith.constant 0 : index
    %500 = vector.load %arg22[%c7, %c0_171, %c0_172] : memref<12x5x8xf32, #tpu.memory_space<vmem>>, vector<1x5x8xf32>
    %501 = vector.shape_cast %500 : vector<1x5x8xf32> to vector<5x8xf32>
    %502 = vector.shape_cast %499 : vector<5x8xf32> to vector<1x5x8xf32>
    tpu.vector_store %arg22[%c7, %c0_171, %c0_172], %502 {strides = array<i32>} : memref<12x5x8xf32, #tpu.memory_space<vmem>>, vector<1x5x8xf32>,
    %503 = vector.extract_strided_slice %143 {offsets = [8, 0, 0], sizes = [1, 5, 8], strides = [1, 1, 1]} : vector<12x5x8xf32> to vector<1x5x8xf32>
    %504 = vector.shape_cast %503 : vector<1x5x8xf32> to vector<5x8xf32>
    %cst_173 = arith.constant dense<0.000000e+00> : vector<5x8xf32>
    %505 = tpu.matmul %499, %172, %cst_173 {dimension_numbers = #tpu.dot_dimension_numbers<[1], [0], [0], [1], [0, 0, 1, 1], [], []>} : vector<5x8xf32>, vector<8x8xf32>, vector<5x8xf32> -> vector<5x8xf32>
    %506 = arith.addf %504, %505 : vector<5x8xf32>
    %507 = arith.negf %506 : vector<5x8xf32>
    %508 = math.exp %507 : vector<5x8xf32>
    %cst_174 = arith.constant 1.000000e+00 : f32
    %509 = vector.broadcast %cst_174 : f32 to vector<5x8xf32>
    %510 = arith.addf %509, %508 : vector<5x8xf32>
    %511 = arith.divf %509, %510 : vector<5x8xf32>
    %512 = vector.extract_strided_slice %152 {offsets = [8, 0, 0], sizes = [1, 5, 8], strides = [1, 1, 1]} : vector<12x5x8xf32> to vector<1x5x8xf32>
    %513 = vector.shape_cast %512 : vector<1x5x8xf32> to vector<5x8xf32>
    %cst_175 = arith.constant dense<0.000000e+00> : vector<5x8xf32>
    %514 = tpu.matmul %499, %174, %cst_175 {dimension_numbers = #tpu.dot_dimension_numbers<[1], [0], [0], [1], [0, 0, 1, 1], [], []>} : vector<5x8xf32>, vector<8x8xf32>, vector<5x8xf32> -> vector<5x8xf32>
    %515 = arith.addf %513, %514 : vector<5x8xf32>
    %516 = arith.negf %515 : vector<5x8xf32>
    %517 = math.exp %516 : vector<5x8xf32>
    %cst_176 = arith.constant 1.000000e+00 : f32
    %518 = vector.broadcast %cst_176 : f32 to vector<5x8xf32>
    %519 = arith.addf %518, %517 : vector<5x8xf32>
    %520 = arith.divf %518, %519 : vector<5x8xf32>
    %521 = vector.extract_strided_slice %161 {offsets = [8, 0, 0], sizes = [1, 5, 8], strides = [1, 1, 1]} : vector<12x5x8xf32> to vector<1x5x8xf32>
    %522 = vector.shape_cast %521 : vector<1x5x8xf32> to vector<5x8xf32>
    %cst_177 = arith.constant dense<0.000000e+00> : vector<5x8xf32>
    %523 = tpu.matmul %499, %176, %cst_177 {dimension_numbers = #tpu.dot_dimension_numbers<[1], [0], [0], [1], [0, 0, 1, 1], [], []>} : vector<5x8xf32>, vector<8x8xf32>, vector<5x8xf32> -> vector<5x8xf32>
    %524 = arith.addf %522, %523 : vector<5x8xf32>
    %525 = math.tanh %524 : vector<5x8xf32>
    %526 = vector.extract_strided_slice %170 {offsets = [8, 0, 0], sizes = [1, 5, 8], strides = [1, 1, 1]} : vector<12x5x8xf32> to vector<1x5x8xf32>
    %527 = vector.shape_cast %526 : vector<1x5x8xf32> to vector<5x8xf32>
    %cst_178 = arith.constant dense<0.000000e+00> : vector<5x8xf32>
    %528 = tpu.matmul %499, %178, %cst_178 {dimension_numbers = #tpu.dot_dimension_numbers<[1], [0], [0], [1], [0, 0, 1, 1], [], []>} : vector<5x8xf32>, vector<8x8xf32>, vector<5x8xf32> -> vector<5x8xf32>
    %529 = arith.addf %527, %528 : vector<5x8xf32>
    %530 = arith.negf %529 : vector<5x8xf32>
    %531 = math.exp %530 : vector<5x8xf32>
    %cst_179 = arith.constant 1.000000e+00 : f32
    %532 = vector.broadcast %cst_179 : f32 to vector<5x8xf32>
    %533 = arith.addf %532, %531 : vector<5x8xf32>
    %534 = arith.divf %532, %533 : vector<5x8xf32>
    %535 = arith.mulf %520, %497 : vector<5x8xf32>
    %536 = arith.mulf %511, %525 : vector<5x8xf32>
    %537 = arith.addf %535, %536 : vector<5x8xf32>
    %538 = math.tanh %537 : vector<5x8xf32>
    %539 = arith.mulf %534, %538 : vector<5x8xf32>
    %c8 = arith.constant 8 : index
    %c0_180 = arith.constant 0 : index
    %c0_181 = arith.constant 0 : index
    %540 = vector.load %arg22[%c8, %c0_180, %c0_181] : memref<12x5x8xf32, #tpu.memory_space<vmem>>, vector<1x5x8xf32>
    %541 = vector.shape_cast %540 : vector<1x5x8xf32> to vector<5x8xf32>
    %542 = vector.shape_cast %539 : vector<5x8xf32> to vector<1x5x8xf32>
    tpu.vector_store %arg22[%c8, %c0_180, %c0_181], %542 {strides = array<i32>} : memref<12x5x8xf32, #tpu.memory_space<vmem>>, vector<1x5x8xf32>,
    %543 = vector.extract_strided_slice %143 {offsets = [9, 0, 0], sizes = [1, 5, 8], strides = [1, 1, 1]} : vector<12x5x8xf32> to vector<1x5x8xf32>
    %544 = vector.shape_cast %543 : vector<1x5x8xf32> to vector<5x8xf32>
    %cst_182 = arith.constant dense<0.000000e+00> : vector<5x8xf32>
    %545 = tpu.matmul %539, %172, %cst_182 {dimension_numbers = #tpu.dot_dimension_numbers<[1], [0], [0], [1], [0, 0, 1, 1], [], []>} : vector<5x8xf32>, vector<8x8xf32>, vector<5x8xf32> -> vector<5x8xf32>
    %546 = arith.addf %544, %545 : vector<5x8xf32>
    %547 = arith.negf %546 : vector<5x8xf32>
    %548 = math.exp %547 : vector<5x8xf32>
    %cst_183 = arith.constant 1.000000e+00 : f32
    %549 = vector.broadcast %cst_183 : f32 to vector<5x8xf32>
    %550 = arith.addf %549, %548 : vector<5x8xf32>
    %551 = arith.divf %549, %550 : vector<5x8xf32>
    %552 = vector.extract_strided_slice %152 {offsets = [9, 0, 0], sizes = [1, 5, 8], strides = [1, 1, 1]} : vector<12x5x8xf32> to vector<1x5x8xf32>
    %553 = vector.shape_cast %552 : vector<1x5x8xf32> to vector<5x8xf32>
    %cst_184 = arith.constant dense<0.000000e+00> : vector<5x8xf32>
    %554 = tpu.matmul %539, %174, %cst_184 {dimension_numbers = #tpu.dot_dimension_numbers<[1], [0], [0], [1], [0, 0, 1, 1], [], []>} : vector<5x8xf32>, vector<8x8xf32>, vector<5x8xf32> -> vector<5x8xf32>
    %555 = arith.addf %553, %554 : vector<5x8xf32>
    %556 = arith.negf %555 : vector<5x8xf32>
    %557 = math.exp %556 : vector<5x8xf32>
    %cst_185 = arith.constant 1.000000e+00 : f32
    %558 = vector.broadcast %cst_185 : f32 to vector<5x8xf32>
    %559 = arith.addf %558, %557 : vector<5x8xf32>
    %560 = arith.divf %558, %559 : vector<5x8xf32>
    %561 = vector.extract_strided_slice %161 {offsets = [9, 0, 0], sizes = [1, 5, 8], strides = [1, 1, 1]} : vector<12x5x8xf32> to vector<1x5x8xf32>
    %562 = vector.shape_cast %561 : vector<1x5x8xf32> to vector<5x8xf32>
    %cst_186 = arith.constant dense<0.000000e+00> : vector<5x8xf32>
    %563 = tpu.matmul %539, %176, %cst_186 {dimension_numbers = #tpu.dot_dimension_numbers<[1], [0], [0], [1], [0, 0, 1, 1], [], []>} : vector<5x8xf32>, vector<8x8xf32>, vector<5x8xf32> -> vector<5x8xf32>
    %564 = arith.addf %562, %563 : vector<5x8xf32>
    %565 = math.tanh %564 : vector<5x8xf32>
    %566 = vector.extract_strided_slice %170 {offsets = [9, 0, 0], sizes = [1, 5, 8], strides = [1, 1, 1]} : vector<12x5x8xf32> to vector<1x5x8xf32>
    %567 = vector.shape_cast %566 : vector<1x5x8xf32> to vector<5x8xf32>
    %cst_187 = arith.constant dense<0.000000e+00> : vector<5x8xf32>
    %568 = tpu.matmul %539, %178, %cst_187 {dimension_numbers = #tpu.dot_dimension_numbers<[1], [0], [0], [1], [0, 0, 1, 1], [], []>} : vector<5x8xf32>, vector<8x8xf32>, vector<5x8xf32> -> vector<5x8xf32>
    %569 = arith.addf %567, %568 : vector<5x8xf32>
    %570 = arith.negf %569 : vector<5x8xf32>
    %571 = math.exp %570 : vector<5x8xf32>
    %cst_188 = arith.constant 1.000000e+00 : f32
    %572 = vector.broadcast %cst_188 : f32 to vector<5x8xf32>
    %573 = arith.addf %572, %571 : vector<5x8xf32>
    %574 = arith.divf %572, %573 : vector<5x8xf32>
    %575 = arith.mulf %560, %537 : vector<5x8xf32>
    %576 = arith.mulf %551, %565 : vector<5x8xf32>
    %577 = arith.addf %575, %576 : vector<5x8xf32>
    %578 = math.tanh %577 : vector<5x8xf32>
    %579 = arith.mulf %574, %578 : vector<5x8xf32>
    %c9 = arith.constant 9 : index
    %c0_189 = arith.constant 0 : index
    %c0_190 = arith.constant 0 : index
    %580 = vector.load %arg22[%c9, %c0_189, %c0_190] : memref<12x5x8xf32, #tpu.memory_space<vmem>>, vector<1x5x8xf32>
    %581 = vector.shape_cast %580 : vector<1x5x8xf32> to vector<5x8xf32>
    %582 = vector.shape_cast %579 : vector<5x8xf32> to vector<1x5x8xf32>
    tpu.vector_store %arg22[%c9, %c0_189, %c0_190], %582 {strides = array<i32>} : memref<12x5x8xf32, #tpu.memory_space<vmem>>, vector<1x5x8xf32>,
    %583 = vector.extract_strided_slice %143 {offsets = [10, 0, 0], sizes = [1, 5, 8], strides = [1, 1, 1]} : vector<12x5x8xf32> to vector<1x5x8xf32>
    %584 = vector.shape_cast %583 : vector<1x5x8xf32> to vector<5x8xf32>
    %cst_191 = arith.constant dense<0.000000e+00> : vector<5x8xf32>
    %585 = tpu.matmul %579, %172, %cst_191 {dimension_numbers = #tpu.dot_dimension_numbers<[1], [0], [0], [1], [0, 0, 1, 1], [], []>} : vector<5x8xf32>, vector<8x8xf32>, vector<5x8xf32> -> vector<5x8xf32>
    %586 = arith.addf %584, %585 : vector<5x8xf32>
    %587 = arith.negf %586 : vector<5x8xf32>
    %588 = math.exp %587 : vector<5x8xf32>
    %cst_192 = arith.constant 1.000000e+00 : f32
    %589 = vector.broadcast %cst_192 : f32 to vector<5x8xf32>
    %590 = arith.addf %589, %588 : vector<5x8xf32>
    %591 = arith.divf %589, %590 : vector<5x8xf32>
    %592 = vector.extract_strided_slice %152 {offsets = [10, 0, 0], sizes = [1, 5, 8], strides = [1, 1, 1]} : vector<12x5x8xf32> to vector<1x5x8xf32>
    %593 = vector.shape_cast %592 : vector<1x5x8xf32> to vector<5x8xf32>
    %cst_193 = arith.constant dense<0.000000e+00> : vector<5x8xf32>
    %594 = tpu.matmul %579, %174, %cst_193 {dimension_numbers = #tpu.dot_dimension_numbers<[1], [0], [0], [1], [0, 0, 1, 1], [], []>} : vector<5x8xf32>, vector<8x8xf32>, vector<5x8xf32> -> vector<5x8xf32>
    %595 = arith.addf %593, %594 : vector<5x8xf32>
    %596 = arith.negf %595 : vector<5x8xf32>
    %597 = math.exp %596 : vector<5x8xf32>
    %cst_194 = arith.constant 1.000000e+00 : f32
    %598 = vector.broadcast %cst_194 : f32 to vector<5x8xf32>
    %599 = arith.addf %598, %597 : vector<5x8xf32>
    %600 = arith.divf %598, %599 : vector<5x8xf32>
    %601 = vector.extract_strided_slice %161 {offsets = [10, 0, 0], sizes = [1, 5, 8], strides = [1, 1, 1]} : vector<12x5x8xf32> to vector<1x5x8xf32>
    %602 = vector.shape_cast %601 : vector<1x5x8xf32> to vector<5x8xf32>
    %cst_195 = arith.constant dense<0.000000e+00> : vector<5x8xf32>
    %603 = tpu.matmul %579, %176, %cst_195 {dimension_numbers = #tpu.dot_dimension_numbers<[1], [0], [0], [1], [0, 0, 1, 1], [], []>} : vector<5x8xf32>, vector<8x8xf32>, vector<5x8xf32> -> vector<5x8xf32>
    %604 = arith.addf %602, %603 : vector<5x8xf32>
    %605 = math.tanh %604 : vector<5x8xf32>
    %606 = vector.extract_strided_slice %170 {offsets = [10, 0, 0], sizes = [1, 5, 8], strides = [1, 1, 1]} : vector<12x5x8xf32> to vector<1x5x8xf32>
    %607 = vector.shape_cast %606 : vector<1x5x8xf32> to vector<5x8xf32>
    %cst_196 = arith.constant dense<0.000000e+00> : vector<5x8xf32>
    %608 = tpu.matmul %579, %178, %cst_196 {dimension_numbers = #tpu.dot_dimension_numbers<[1], [0], [0], [1], [0, 0, 1, 1], [], []>} : vector<5x8xf32>, vector<8x8xf32>, vector<5x8xf32> -> vector<5x8xf32>
    %609 = arith.addf %607, %608 : vector<5x8xf32>
    %610 = arith.negf %609 : vector<5x8xf32>
    %611 = math.exp %610 : vector<5x8xf32>
    %cst_197 = arith.constant 1.000000e+00 : f32
    %612 = vector.broadcast %cst_197 : f32 to vector<5x8xf32>
    %613 = arith.addf %612, %611 : vector<5x8xf32>
    %614 = arith.divf %612, %613 : vector<5x8xf32>
    %615 = arith.mulf %600, %577 : vector<5x8xf32>
    %616 = arith.mulf %591, %605 : vector<5x8xf32>
    %617 = arith.addf %615, %616 : vector<5x8xf32>
    %618 = math.tanh %617 : vector<5x8xf32>
    %619 = arith.mulf %614, %618 : vector<5x8xf32>
    %c10 = arith.constant 10 : index
    %c0_198 = arith.constant 0 : index
    %c0_199 = arith.constant 0 : index
    %620 = vector.load %arg22[%c10, %c0_198, %c0_199] : memref<12x5x8xf32, #tpu.memory_space<vmem>>, vector<1x5x8xf32>
    %621 = vector.shape_cast %620 : vector<1x5x8xf32> to vector<5x8xf32>
    %622 = vector.shape_cast %619 : vector<5x8xf32> to vector<1x5x8xf32>
    tpu.vector_store %arg22[%c10, %c0_198, %c0_199], %622 {strides = array<i32>} : memref<12x5x8xf32, #tpu.memory_space<vmem>>, vector<1x5x8xf32>,
    %623 = vector.extract_strided_slice %143 {offsets = [11, 0, 0], sizes = [1, 5, 8], strides = [1, 1, 1]} : vector<12x5x8xf32> to vector<1x5x8xf32>
    %624 = vector.shape_cast %623 : vector<1x5x8xf32> to vector<5x8xf32>
    %cst_200 = arith.constant dense<0.000000e+00> : vector<5x8xf32>
    %625 = tpu.matmul %619, %172, %cst_200 {dimension_numbers = #tpu.dot_dimension_numbers<[1], [0], [0], [1], [0, 0, 1, 1], [], []>} : vector<5x8xf32>, vector<8x8xf32>, vector<5x8xf32> -> vector<5x8xf32>
    %626 = arith.addf %624, %625 : vector<5x8xf32>
    %627 = arith.negf %626 : vector<5x8xf32>
    %628 = math.exp %627 : vector<5x8xf32>
    %cst_201 = arith.constant 1.000000e+00 : f32
    %629 = vector.broadcast %cst_201 : f32 to vector<5x8xf32>
    %630 = arith.addf %629, %628 : vector<5x8xf32>
    %631 = arith.divf %629, %630 : vector<5x8xf32>
    %632 = vector.extract_strided_slice %152 {offsets = [11, 0, 0], sizes = [1, 5, 8], strides = [1, 1, 1]} : vector<12x5x8xf32> to vector<1x5x8xf32>
    %633 = vector.shape_cast %632 : vector<1x5x8xf32> to vector<5x8xf32>
    %cst_202 = arith.constant dense<0.000000e+00> : vector<5x8xf32>
    %634 = tpu.matmul %619, %174, %cst_202 {dimension_numbers = #tpu.dot_dimension_numbers<[1], [0], [0], [1], [0, 0, 1, 1], [], []>} : vector<5x8xf32>, vector<8x8xf32>, vector<5x8xf32> -> vector<5x8xf32>
    %635 = arith.addf %633, %634 : vector<5x8xf32>
    %636 = arith.negf %635 : vector<5x8xf32>
    %637 = math.exp %636 : vector<5x8xf32>
    %cst_203 = arith.constant 1.000000e+00 : f32
    %638 = vector.broadcast %cst_203 : f32 to vector<5x8xf32>
    %639 = arith.addf %638, %637 : vector<5x8xf32>
    %640 = arith.divf %638, %639 : vector<5x8xf32>
    %641 = vector.extract_strided_slice %161 {offsets = [11, 0, 0], sizes = [1, 5, 8], strides = [1, 1, 1]} : vector<12x5x8xf32> to vector<1x5x8xf32>
    %642 = vector.shape_cast %641 : vector<1x5x8xf32> to vector<5x8xf32>
    %cst_204 = arith.constant dense<0.000000e+00> : vector<5x8xf32>
    %643 = tpu.matmul %619, %176, %cst_204 {dimension_numbers = #tpu.dot_dimension_numbers<[1], [0], [0], [1], [0, 0, 1, 1], [], []>} : vector<5x8xf32>, vector<8x8xf32>, vector<5x8xf32> -> vector<5x8xf32>
    %644 = arith.addf %642, %643 : vector<5x8xf32>
    %645 = math.tanh %644 : vector<5x8xf32>
    %646 = vector.extract_strided_slice %170 {offsets = [11, 0, 0], sizes = [1, 5, 8], strides = [1, 1, 1]} : vector<12x5x8xf32> to vector<1x5x8xf32>
    %647 = vector.shape_cast %646 : vector<1x5x8xf32> to vector<5x8xf32>
    %cst_205 = arith.constant dense<0.000000e+00> : vector<5x8xf32>
    %648 = tpu.matmul %619, %178, %cst_205 {dimension_numbers = #tpu.dot_dimension_numbers<[1], [0], [0], [1], [0, 0, 1, 1], [], []>} : vector<5x8xf32>, vector<8x8xf32>, vector<5x8xf32> -> vector<5x8xf32>
    %649 = arith.addf %647, %648 : vector<5x8xf32>
    %650 = arith.negf %649 : vector<5x8xf32>
    %651 = math.exp %650 : vector<5x8xf32>
    %cst_206 = arith.constant 1.000000e+00 : f32
    %652 = vector.broadcast %cst_206 : f32 to vector<5x8xf32>
    %653 = arith.addf %652, %651 : vector<5x8xf32>
    %654 = arith.divf %652, %653 : vector<5x8xf32>
    %655 = arith.mulf %640, %617 : vector<5x8xf32>
    %656 = arith.mulf %631, %645 : vector<5x8xf32>
    %657 = arith.addf %655, %656 : vector<5x8xf32>
    %658 = math.tanh %657 : vector<5x8xf32>
    %659 = arith.mulf %654, %658 : vector<5x8xf32>
    %c11 = arith.constant 11 : index
    %c0_207 = arith.constant 0 : index
    %c0_208 = arith.constant 0 : index
    %660 = vector.load %arg22[%c11, %c0_207, %c0_208] : memref<12x5x8xf32, #tpu.memory_space<vmem>>, vector<1x5x8xf32>
    %661 = vector.shape_cast %660 : vector<1x5x8xf32> to vector<5x8xf32>
    %662 = vector.shape_cast %659 : vector<5x8xf32> to vector<1x5x8xf32>
    tpu.vector_store %arg22[%c11, %c0_207, %c0_208], %662 {strides = array<i32>} : memref<12x5x8xf32, #tpu.memory_space<vmem>>, vector<1x5x8xf32>,
    %c0_209 = arith.constant 0 : index
    %c0_210 = arith.constant 0 : index
    %c0_211 = arith.constant 0 : index
    %663 = vector.load %arg20[%c0_209, %c0_210, %c0_211] : memref<1x5x8xf32, #tpu.memory_space<vmem>>, vector<1x5x8xf32>
    %664 = vector.shape_cast %663 : vector<1x5x8xf32> to vector<5x8xf32>
    %665 = vector.shape_cast %659 : vector<5x8xf32> to vector<1x5x8xf32>
    tpu.vector_store %arg20[%c0_209, %c0_210, %c0_211], %665 {strides = array<i32>} : memref<1x5x8xf32, #tpu.memory_space<vmem>>, vector<1x5x8xf32>,
    %c0_212 = arith.constant 0 : index
    %c0_213 = arith.constant 0 : index
    %c0_214 = arith.constant 0 : index
    %666 = vector.load %arg21[%c0_212, %c0_213, %c0_214] : memref<1x5x8xf32, #tpu.memory_space<vmem>>, vector<1x5x8xf32>
    %667 = vector.shape_cast %666 : vector<1x5x8xf32> to vector<5x8xf32>
    %668 = vector.shape_cast %657 : vector<5x8xf32> to vector<1x5x8xf32>
    tpu.vector_store %arg21[%c0_212, %c0_213, %c0_214], %668 {strides = array<i32>} : memref<1x5x8xf32, #tpu.memory_space<vmem>>, vector<1x5x8xf32>,
    %c0_215 = arith.constant 0 : index
    %c0_216 = arith.constant 0 : index
    %c0_217 = arith.constant 0 : index
    %669 = vector.load %arg22[%c0_215, %c0_216, %c0_217] : memref<12x5x8xf32, #tpu.memory_space<vmem>>, vector<12x5x8xf32>
    %670 = vector.shape_cast %669 : vector<12x5x8xf32> to vector<60x8xf32>
    %c0_218 = arith.constant 0 : index
    %c0_219 = arith.constant 0 : index
    %671 = vector.load %arg17[%c0_218, %c0_219] : memref<8x1xf32, #tpu.memory_space<vmem>>, vector<8x1xf32>
    %cst_220 = arith.constant dense<0.000000e+00> : vector<60x1xf32>
    %672 = tpu.matmul %670, %671, %cst_220 {dimension_numbers = #tpu.dot_dimension_numbers<[1], [0], [0], [1], [0, 0, 1, 1], [], []>} : vector<60x8xf32>, vector<8x1xf32>, vector<60x1xf32> -> vector<60x1xf32>
    %c0_221 = arith.constant 0 : index
    %c0_222 = arith.constant 0 : index
    %673 = vector.load %arg18[%c0_221, %c0_222] : memref<1x1xf32, #tpu.memory_space<vmem>>, vector<1x1xf32>
    %674 = vector.broadcast %673 : vector<1x1xf32> to vector<60x1xf32>
    %675 = arith.addf %672, %674 : vector<60x1xf32>
    %676 = vector.shape_cast %675 : vector<60x1xf32> to vector<12x5x1xf32>
    %c0_223 = arith.constant 0 : index
    %c0_224 = arith.constant 0 : index
    %c0_225 = arith.constant 0 : index
    %677 = vector.load %arg19[%c0_223, %c0_224, %c0_225] : memref<12x5x1xf32, #tpu.memory_space<vmem>>, vector<12x5x1xf32>
    tpu.vector_store %arg19[%c0_223, %c0_224, %c0_225], %676 {strides = array<i32>} : memref<12x5x1xf32, #tpu.memory_space<vmem>>, vector<12x5x1xf32>,
    return
  }
}

</mosaic_0001>

<llo_original>
// kernel: tpu_custom_call.1
$region0: #{tpu_custom_call.1}
  #allocation0 [shape = 'u32[]', space=smem, size = 0x4, offset = 0x4, fixed_abs, tag = 'smem constant byte address 0x4 - core index']
  #allocation1 [shape = 'u32[72,128]{1,0:T(1,128)}', space=vmem, size = 0x9000, scoped, tag = 'internal scratch']
  #allocation2 [shape = 'f32[12,5,8]{2,1,0:T(8,128)}', space=vmem, size = 0xc000, scoped, tag = 'scratch operand']
  #allocation3 [shape = 'f32[1,1]{1,0:T(1,128)S(1)}', space=vmem, size = 0x200, scoped, tag = 'scoped memory for tpu_custom_call.1']
  %s0 = inlined_call_operand.vmem [shape: f32[12,5,6], index: 0, kind: input, shape index: {}]
  %s1 = inlined_call_operand.vmem [shape: f32[6,16], index: 1, kind: input, shape index: {}]
  %s2 = inlined_call_operand.vmem [shape: f32[1,8], index: 2, kind: input, shape index: {}]
  %s3 = inlined_call_operand.vmem [shape: f32[2,8], index: 3, kind: input, shape index: {}]
  %s4 = inlined_call_operand.vmem [shape: f32[8,16], index: 4, kind: input, shape index: {}]
  %s5 = inlined_call_operand.vmem [shape: f32[1,8], index: 5, kind: input, shape index: {}]
  %s6 = inlined_call_operand.vmem [shape: f32[2,8], index: 6, kind: input, shape index: {}]
  %s7 = inlined_call_operand.vmem [shape: f32[8,16], index: 7, kind: input, shape index: {}]
  %s8 = inlined_call_operand.vmem [shape: f32[1,8], index: 8, kind: input, shape index: {}]
  %s9 = inlined_call_operand.vmem [shape: f32[2,8], index: 9, kind: input, shape index: {}]
  %s10 = inlined_call_operand.vmem [shape: f32[8,16], index: 10, kind: input, shape index: {}]
  %s11 = inlined_call_operand.vmem [shape: f32[1,8], index: 11, kind: input, shape index: {}]
  %s12 = inlined_call_operand.vmem [shape: f32[1,5,8], index: 12, kind: input, shape index: {}]
  %s13 = inlined_call_operand.vmem [shape: f32[1,5,8], index: 13, kind: input, shape index: {}]
  %s14 = inlined_call_operand.vmem [shape: f32[4,8,8], index: 14, kind: input, shape index: {}]
  %s15 = inlined_call_operand.vmem [shape: f32[4,8,8], index: 15, kind: input, shape index: {}]
  %s16 = inlined_call_operand.vmem [shape: f32[4,1,8], index: 16, kind: input, shape index: {}]
  %s17 = inlined_call_operand.vmem [shape: f32[8,1], index: 17, kind: input, shape index: {}]
  %s18 = inlined_call_operand.<no memory space> [shape: f32[1,1], index: 18, kind: input, shape index: {}]
  %s19 = inlined_call_operand.vmem [shape: f32[12,5,1], index: 19, kind: output, shape index: {0}]
  %s20 = inlined_call_operand.vmem [shape: f32[1,5,8], index: 20, kind: output, shape index: {1}]
  %s21 = inlined_call_operand.vmem [shape: f32[1,5,8], index: 21, kind: output, shape index: {2}]
  %22 = xla_tuple %s19, %s20, %s21
  %s23 = sld [smem:[#allocation0]]
  $region102: #{tpu_custom_call.1} parent=0
    _
  %s25 = ssub.s32 1, %s23
  %s26 = scalar_select 0, %s25, %s23
  %v27 = vstv %s18
  %28 = vst [vmem:[#allocation3] sm:$0x1] %v27
  // Predicated region
  $region2: #{tpu_custom_call.1} parent=0 // pred_check
    _
  $region3: #{tpu_custom_call.1} parent=0 // pred_check_branch
    %30 = sbr.rel (0) target = $region5
  $region4: #{tpu_custom_call.1} parent=0 // pred_region
    _
  $region5: #{tpu_custom_call.1} parent=0 // pred_fallthru
    _
  // Predicated region
  $region6: #{tpu_custom_call.1} parent=0 // pred_check
    _
  $region7: #{tpu_custom_call.1} parent=0 // pred_check_branch
    %32 = sbr.rel (0) target = $region9
  $region8: #{tpu_custom_call.1} parent=0 // pred_region
    _
  $region9: #{tpu_custom_call.1} parent=0 // pred_fallthru
    _
  // Predicated region
  $region10: #{tpu_custom_call.1} parent=0 // pred_check
    _
  $region11: #{tpu_custom_call.1} parent=0 // pred_check_branch
    %34 = sbr.rel (0) target = $region13
  $region12: #{tpu_custom_call.1} parent=0 // pred_region
    _
  $region13: #{tpu_custom_call.1} parent=0 // pred_fallthru
    _
  // Predicated region
  $region14: #{tpu_custom_call.1} parent=0 // pred_check
    _
  $region15: #{tpu_custom_call.1} parent=0 // pred_check_branch
    %36 = sbr.rel (0) target = $region17
  $region16: #{tpu_custom_call.1} parent=0 // pred_region
    _
  $region17: #{tpu_custom_call.1} parent=0 // pred_fallthru
    _
  // Predicated region
  $region18: #{tpu_custom_call.1} parent=0 // pred_check
    _
  $region19: #{tpu_custom_call.1} parent=0 // pred_check_branch
    %38 = sbr.rel (0) target = $region21
  $region20: #{tpu_custom_call.1} parent=0 // pred_region
    _
  $region21: #{tpu_custom_call.1} parent=0 // pred_fallthru
    _
  // Predicated region
  $region22: #{tpu_custom_call.1} parent=0 // pred_check
    _
  $region23: #{tpu_custom_call.1} parent=0 // pred_check_branch
    %40 = sbr.rel (0) target = $region25
  $region24: #{tpu_custom_call.1} parent=0 // pred_region
    _
  $region25: #{tpu_custom_call.1} parent=0 // pred_fallthru
    _
  // Predicated region
  $region26: #{tpu_custom_call.1} parent=0 // pred_check
    _
  $region27: #{tpu_custom_call.1} parent=0 // pred_check_branch
    %42 = sbr.rel (0) target = $region29
  $region28: #{tpu_custom_call.1} parent=0 // pred_region
    _
  $region29: #{tpu_custom_call.1} parent=0 // pred_fallthru
    _
  // Predicated region
  $region30: #{tpu_custom_call.1} parent=0 // pred_check
    _
  $region31: #{tpu_custom_call.1} parent=0 // pred_check_branch
    %44 = sbr.rel (0) target = $region33
  $region32: #{tpu_custom_call.1} parent=0 // pred_region
    _
  $region33: #{tpu_custom_call.1} parent=0 // pred_fallthru
    _
  // Predicated region
  $region34: #{tpu_custom_call.1} parent=0 // pred_check
    _
  $region35: #{tpu_custom_call.1} parent=0 // pred_check_branch
    %46 = sbr.rel (0) target = $region37
  $region36: #{tpu_custom_call.1} parent=0 // pred_region
    _
  $region37: #{tpu_custom_call.1} parent=0 // pred_fallthru
    _
  // Predicated region
  $region38: #{tpu_custom_call.1} parent=0 // pred_check
    _
  $region39: #{tpu_custom_call.1} parent=0 // pred_check_branch
    %48 = sbr.rel (0) target = $region41
  $region40: #{tpu_custom_call.1} parent=0 // pred_region
    _
  $region41: #{tpu_custom_call.1} parent=0 // pred_fallthru
    _
  // Predicated region
  $region42: #{tpu_custom_call.1} parent=0 // pred_check
    _
  $region43: #{tpu_custom_call.1} parent=0 // pred_check_branch
    %50 = sbr.rel (0) target = $region45
  $region44: #{tpu_custom_call.1} parent=0 // pred_region
    _
  $region45: #{tpu_custom_call.1} parent=0 // pred_fallthru
    _
  // Predicated region
  $region46: #{tpu_custom_call.1} parent=0 // pred_check
    _
  $region47: #{tpu_custom_call.1} parent=0 // pred_check_branch
    %52 = sbr.rel (0) target = $region49
  $region48: #{tpu_custom_call.1} parent=0 // pred_region
    _
  $region49: #{tpu_custom_call.1} parent=0 // pred_fallthru
    _
  // Predicated region
  $region50: #{tpu_custom_call.1} parent=0 // pred_check
    _
  $region51: #{tpu_custom_call.1} parent=0 // pred_check_branch
    %54 = sbr.rel (0) target = $region53
  $region52: #{tpu_custom_call.1} parent=0 // pred_region
    _
  $region53: #{tpu_custom_call.1} parent=0 // pred_fallthru
    _
  // Predicated region
  $region54: #{tpu_custom_call.1} parent=0 // pred_check
    _
  $region55: #{tpu_custom_call.1} parent=0 // pred_check_branch
    %56 = sbr.rel (0) target = $region57
  $region56: #{tpu_custom_call.1} parent=0 // pred_region
    _
  $region57: #{tpu_custom_call.1} parent=0 // pred_fallthru
    _
  // Predicated region
  $region58: #{tpu_custom_call.1} parent=0 // pred_check
    _
  $region59: #{tpu_custom_call.1} parent=0 // pred_check_branch
    %58 = sbr.rel (0) target = $region61
  $region60: #{tpu_custom_call.1} parent=0 // pred_region
    _
  $region61: #{tpu_custom_call.1} parent=0 // pred_fallthru
    _
  // Predicated region
  $region62: #{tpu_custom_call.1} parent=0 // pred_check
    _
  $region63: #{tpu_custom_call.1} parent=0 // pred_check_branch
    %60 = sbr.rel (0) target = $region65
  $region64: #{tpu_custom_call.1} parent=0 // pred_region
    _
  $region65: #{tpu_custom_call.1} parent=0 // pred_fallthru
    _
  // Predicated region
  $region66: #{tpu_custom_call.1} parent=0 // pred_check
    _
  $region67: #{tpu_custom_call.1} parent=0 // pred_check_branch
    %62 = sbr.rel (0) target = $region69
  $region68: #{tpu_custom_call.1} parent=0 // pred_region
    _
  $region69: #{tpu_custom_call.1} parent=0 // pred_fallthru
    _
  // Predicated region
  $region70: #{tpu_custom_call.1} parent=0 // pred_check
    _
  $region71: #{tpu_custom_call.1} parent=0 // pred_check_branch
    %64 = sbr.rel (0) target = $region73
  $region72: #{tpu_custom_call.1} parent=0 // pred_region
    _
  $region73: #{tpu_custom_call.1} parent=0 // pred_fallthru
    _
  // Predicated region
  $region74: #{tpu_custom_call.1} parent=0 // pred_check
    _
  $region75: #{tpu_custom_call.1} parent=0 // pred_check_branch
    %66 = sbr.rel (0) target = $region77
  $region76: #{tpu_custom_call.1} parent=0 // pred_region
    _
  $region77: #{tpu_custom_call.1} parent=0 // pred_fallthru
    _
  %v67 = vld [vmem:[%s0] sm:$0x1f]
  %v68 = vld [vmem:[%s0 + $0x8] sm:$0x1f]
  %v69 = vld [vmem:[%s0 + $0x10] sm:$0x1f]
  %v70 = vld [vmem:[%s0 + $0x18] sm:$0x1f]
  %v71 = vld [vmem:[%s0 + $0x20] sm:$0x1f]
  %v72 = vld [vmem:[%s0 + $0x28] sm:$0x1f]
  %v73 = vld [vmem:[%s0 + $0x30] sm:$0x1f]
  %v74 = vld [vmem:[%s0 + $0x38] sm:$0x1f]
  %v75 = vld [vmem:[%s0 + $0x40] sm:$0x1f]
  %v76 = vld [vmem:[%s0 + $0x48] sm:$0x1f]
  %v77 = vld [vmem:[%s0 + $0x50] sm:$0x1f]
  %v78 = vld [vmem:[%s0 + $0x58] sm:$0x1f]
  %v91 = vrot.slane %v67, 1
  %v92 = vrot.slane %v67, 2
  %v93 = vrot.slane %v67, 3
  %v94 = vrot.slane %v67, 4
  %v95 = vrot.slane %v68, 1
  %v96 = vrot.slane %v68, 2
  %v97 = vrot.slane %v68, 3
  %v98 = vrot.slane %v68, 4
  %v99 = vrot.slane %v69, 1
  %v100 = vrot.slane %v69, 2
  %v101 = vrot.slane %v69, 3
  %v102 = vrot.slane %v69, 4
  %v103 = vrot.slane %v70, 1
  %v104 = vrot.slane %v70, 2
  %v105 = vrot.slane %v70, 3
  %v106 = vrot.slane %v70, 4
  %v107 = vrot.slane %v71, 1
  %v108 = vrot.slane %v71, 2
  %v109 = vrot.slane %v71, 3
  %v110 = vrot.slane %v71, 4
  %v111 = vrot.slane %v72, 1
  %v112 = vrot.slane %v72, 2
  %v113 = vrot.slane %v72, 3
  %v114 = vrot.slane %v72, 4
  %v115 = vrot.slane %v73, 1
  %v116 = vrot.slane %v73, 2
  %v117 = vrot.slane %v73, 3
  %v118 = vrot.slane %v73, 4
  %v119 = vrot.slane %v74, 1
  %v120 = vrot.slane %v74, 2
  %v121 = vrot.slane %v74, 3
  %v122 = vrot.slane %v74, 4
  %v123 = vrot.slane %v75, 1
  %v124 = vrot.slane %v75, 2
  %v125 = vrot.slane %v75, 3
  %v126 = vrot.slane %v75, 4
  %v127 = vrot.slane %v76, 1
  %v128 = vrot.slane %v76, 2
  %v129 = vrot.slane %v76, 3
  %v130 = vrot.slane %v76, 4
  %v131 = vrot.slane %v77, 1
  %v132 = vrot.slane %v77, 2
  %v133 = vrot.slane %v77, 3
  %v134 = vrot.slane %v77, 4
  %v135 = vrot.slane %v78, 1
  %v136 = vrot.slane %v78, 2
  %v137 = vrot.slane %v78, 3
  %v138 = vrot.slane %v78, 4
  %v139 = vld [vmem:[%s1] sm:$0x3f]
  %140 = vst [vmem:[#allocation1] ss:$9 sm:$0xff] %v67
  %s141 = scalar_lea.vmem [#allocation1], 1
  %142 = vst [vmem:[%s141] ss:$9 sm:$0xff] %v91
  %s143 = scalar_lea.vmem [#allocation1], 2
  %144 = vst [vmem:[%s143] ss:$9 sm:$0xff] %v92
  %s145 = scalar_lea.vmem [#allocation1], 3
  %146 = vst [vmem:[%s145] ss:$9 sm:$0xff] %v93
  %s147 = scalar_lea.vmem [#allocation1], 4
  %148 = vst [vmem:[%s147] ss:$9 sm:$0xff] %v94
  %s149 = scalar_lea.vmem [#allocation1], 5
  %150 = vst [vmem:[%s149] ss:$9 sm:$0xff] %v68
  %s151 = scalar_lea.vmem [#allocation1], 6
  %152 = vst [vmem:[%s151] ss:$9 sm:$0xff] %v95
  %s153 = scalar_lea.vmem [#allocation1], 7
  %154 = vst [vmem:[%s153] ss:$9 sm:$0xff] %v96
  %v155 = vld [vmem:[#allocation1] sm:$0xff]
  %156 = vst [vmem:[#allocation1] ss:$9 sm:$0xff] %v97
  %157 = vst [vmem:[%s141] ss:$9 sm:$0xff] %v98
  %158 = vst [vmem:[%s143] ss:$9 sm:$0xff] %v69
  %159 = vst [vmem:[%s145] ss:$9 sm:$0xff] %v99
  %160 = vst [vmem:[%s147] ss:$9 sm:$0xff] %v100
  %161 = vst [vmem:[%s149] ss:$9 sm:$0xff] %v101
  %162 = vst [vmem:[%s151] ss:$9 sm:$0xff] %v102
  %163 = vst [vmem:[%s153] ss:$9 sm:$0xff] %v70
  %v164 = vld [vmem:[#allocation1] sm:$0xff]
  %165 = vst [vmem:[#allocation1] ss:$9 sm:$0xff] %v103
  %166 = vst [vmem:[%s141] ss:$9 sm:$0xff] %v104
  %167 = vst [vmem:[%s143] ss:$9 sm:$0xff] %v105
  %168 = vst [vmem:[%s145] ss:$9 sm:$0xff] %v106
  %169 = vst [vmem:[%s147] ss:$9 sm:$0xff] %v71
  %170 = vst [vmem:[%s149] ss:$9 sm:$0xff] %v107
  %171 = vst [vmem:[%s151] ss:$9 sm:$0xff] %v108
  %172 = vst [vmem:[%s153] ss:$9 sm:$0xff] %v109
  %v173 = vld [vmem:[#allocation1] sm:$0xff]
  %174 = vst [vmem:[#allocation1] ss:$9 sm:$0xff] %v110
  %175 = vst [vmem:[%s141] ss:$9 sm:$0xff] %v72
  %176 = vst [vmem:[%s143] ss:$9 sm:$0xff] %v111
  %177 = vst [vmem:[%s145] ss:$9 sm:$0xff] %v112
  %178 = vst [vmem:[%s147] ss:$9 sm:$0xff] %v113
  %179 = vst [vmem:[%s149] ss:$9 sm:$0xff] %v114
  %180 = vst [vmem:[%s151] ss:$9 sm:$0xff] %v73
  %181 = vst [vmem:[%s153] ss:$9 sm:$0xff] %v115
  %v182 = vld [vmem:[#allocation1] sm:$0xff]
  %183 = vst [vmem:[#allocation1] ss:$9 sm:$0xff] %v116
  %184 = vst [vmem:[%s141] ss:$9 sm:$0xff] %v117
  %185 = vst [vmem:[%s143] ss:$9 sm:$0xff] %v118
  %186 = vst [vmem:[%s145] ss:$9 sm:$0xff] %v74
  %187 = vst [vmem:[%s147] ss:$9 sm:$0xff] %v119
  %188 = vst [vmem:[%s149] ss:$9 sm:$0xff] %v120
  %189 = vst [vmem:[%s151] ss:$9 sm:$0xff] %v121
  %190 = vst [vmem:[%s153] ss:$9 sm:$0xff] %v122
  %v191 = vld [vmem:[#allocation1] sm:$0xff]
  %192 = vst [vmem:[#allocation1] ss:$9 sm:$0xff] %v75
  %193 = vst [vmem:[%s141] ss:$9 sm:$0xff] %v123
  %194 = vst [vmem:[%s143] ss:$9 sm:$0xff] %v124
  %195 = vst [vmem:[%s145] ss:$9 sm:$0xff] %v125
  %196 = vst [vmem:[%s147] ss:$9 sm:$0xff] %v126
  %197 = vst [vmem:[%s149] ss:$9 sm:$0xff] %v76
  %198 = vst [vmem:[%s151] ss:$9 sm:$0xff] %v127
  %199 = vst [vmem:[%s153] ss:$9 sm:$0xff] %v128
  %v200 = vld [vmem:[#allocation1] sm:$0xff]
  %201 = vst [vmem:[#allocation1] ss:$9 sm:$0xff] %v129
  %202 = vst [vmem:[%s141] ss:$9 sm:$0xff] %v130
  %203 = vst [vmem:[%s143] ss:$9 sm:$0xff] %v77
  %204 = vst [vmem:[%s145] ss:$9 sm:$0xff] %v131
  %205 = vst [vmem:[%s147] ss:$9 sm:$0xff] %v132
  %206 = vst [vmem:[%s149] ss:$9 sm:$0xff] %v133
  %207 = vst [vmem:[%s151] ss:$9 sm:$0xff] %v134
  %208 = vst [vmem:[%s153] ss:$9 sm:$0xff] %v78
  %v209 = vld [vmem:[#allocation1] sm:$0xff]
  %210 = vst [vmem:[#allocation1] ss:$9 sm:$0xff] %v135
  %211 = vst [vmem:[%s141] ss:$9 sm:$0xff] %v136
  %212 = vst [vmem:[%s143] ss:$9 sm:$0xff] %v137
  %213 = vst [vmem:[%s145] ss:$9 sm:$0xff] %v138
  %v214 = vld [vmem:[#allocation1] sm:$0xff]
  %vm215 = vcmask 48128
  %v216 = vsel %vm215, %v155, 0
  %v218 = vsel %vm215, %v164, 0
  %v220 = vsel %vm215, %v173, 0
  %v222 = vsel %vm215, %v182, 0
  %v224 = vsel %vm215, %v191, 0
  %v226 = vsel %vm215, %v200, 0
  %v228 = vsel %vm215, %v209, 0
  %v230 = vsel %vm215, %v214, 0
  %vm232 = vcmask 1045504
  %v234 = vsel %vm232, %v139, 0
  %236 = vmatpush.msra.mxu0 0.0
  %237 = vmatpush.msra.mxu0 0.0
  %238 = vmatpush.msra.mxu0 0.0
  %239 = vmatpush.msra.mxu0 0.0
  %240 = vmatpush.msra.mxu0 0.0
  %241 = vmatpush.msra.mxu0 0.0
  %242 = vmatpush.msra.mxu0 0.0
  %243 = vmatpush.msra.mxu0 0.0
  %244 = vmatpush.msra.mxu0 0.0
  %245 = vmatpush.msra.mxu0 0.0
  %246 = vmatpush.msra.mxu0 0.0
  %247 = vmatpush.msra.mxu0 0.0
  %248 = vmatpush.msra.mxu0 0.0
  %249 = vmatpush.msra.mxu0 0.0
  %250 = vmatpush.msra.mxu0 0.0
  %251 = vmatpush.msra.mxu0 %v234
  %252 = vmatmul.f32.gmra.mxu0 %v216
  %v253 = vpop.f32.mrf.mxu0
  %v254 = vadd.f32 0.0, %v253
  %255 = vmatmul.f32.gmra.mxu0 %v218
  %v256 = vpop.f32.mrf.mxu0
  %v257 = vadd.f32 0.0, %v256
  %258 = vmatmul.f32.gmra.mxu0 %v220
  %v259 = vpop.f32.mrf.mxu0
  %v260 = vadd.f32 0.0, %v259
  %261 = vmatmul.f32.gmra.mxu0 %v222
  %v262 = vpop.f32.mrf.mxu0
  %v263 = vadd.f32 0.0, %v262
  %264 = vmatmul.f32.gmra.mxu0 %v224
  %v265 = vpop.f32.mrf.mxu0
  %v266 = vadd.f32 0.0, %v265
  %267 = vmatmul.f32.gmra.mxu0 %v226
  %v268 = vpop.f32.mrf.mxu0
  %v269 = vadd.f32 0.0, %v268
  %270 = vmatmul.f32.gmra.mxu0 %v228
  %v271 = vpop.f32.mrf.mxu0
  %v272 = vadd.f32 0.0, %v271
  %273 = vmatmul.f32.gmra.mxu0 %v230
  %v274 = vpop.f32.mrf.mxu0
  %v275 = vadd.f32 0.0, %v274
  %276 = vdwg.mxu0
  %v285 = vrot.slane %v254, 1
  %v286 = vrot.slane %v254, 2
  %v287 = vrot.slane %v254, 3
  %v288 = vrot.slane %v254, 4
  %v289 = vrot.slane %v254, 5
  %v290 = vrot.slane %v254, 6
  %v291 = vrot.slane %v254, 7
  %v292 = vrot.slane %v257, 1
  %v293 = vrot.slane %v257, 2
  %v294 = vrot.slane %v257, 3
  %v295 = vrot.slane %v257, 4
  %v296 = vrot.slane %v257, 5
  %v297 = vrot.slane %v257, 6
  %v298 = vrot.slane %v257, 7
  %v299 = vrot.slane %v260, 1
  %v300 = vrot.slane %v260, 2
  %v301 = vrot.slane %v260, 3
  %v302 = vrot.slane %v260, 4
  %v303 = vrot.slane %v260, 5
  %v304 = vrot.slane %v260, 6
  %v305 = vrot.slane %v260, 7
  %v306 = vrot.slane %v263, 1
  %v307 = vrot.slane %v263, 2
  %v308 = vrot.slane %v263, 3
  %v309 = vrot.slane %v263, 4
  %v310 = vrot.slane %v263, 5
  %v311 = vrot.slane %v263, 6
  %v312 = vrot.slane %v263, 7
  %v313 = vrot.slane %v266, 1
  %v314 = vrot.slane %v266, 2
  %v315 = vrot.slane %v266, 3
  %v316 = vrot.slane %v266, 4
  %v317 = vrot.slane %v266, 5
  %v318 = vrot.slane %v266, 6
  %v319 = vrot.slane %v266, 7
  %v320 = vrot.slane %v269, 1
  %v321 = vrot.slane %v269, 2
  %v322 = vrot.slane %v269, 3
  %v323 = vrot.slane %v269, 4
  %v324 = vrot.slane %v269, 5
  %v325 = vrot.slane %v269, 6
  %v326 = vrot.slane %v269, 7
  %v327 = vrot.slane %v272, 1
  %v328 = vrot.slane %v272, 2
  %v329 = vrot.slane %v272, 3
  %v330 = vrot.slane %v272, 4
  %v331 = vrot.slane %v272, 5
  %v332 = vrot.slane %v272, 6
  %v333 = vrot.slane %v272, 7
  %v334 = vrot.slane %v275, 1
  %v335 = vrot.slane %v275, 2
  %v336 = vrot.slane %v275, 3
  %378 = vrot.lane.b32.xlu0 %v285, 120
  %v379 = vpop.permute.xlu0 %378
  %380 = vrot.lane.b32.xlu0 %v286, 120
  %v381 = vpop.permute.xlu0 %380
  %382 = vrot.lane.b32.xlu0 %v287, 120
  %v383 = vpop.permute.xlu0 %382
  %384 = vrot.lane.b32.xlu0 %v288, 120
  %v385 = vpop.permute.xlu0 %384
  %386 = vrot.lane.b32.xlu0 %v290, 120
  %v387 = vpop.permute.xlu0 %386
  %388 = vrot.lane.b32.xlu0 %v291, 120
  %v389 = vpop.permute.xlu0 %388
  %390 = vrot.lane.b32.xlu0 %v257, 120
  %v391 = vpop.permute.xlu0 %390
  %392 = vrot.lane.b32.xlu0 %v292, 120
  %v393 = vpop.permute.xlu0 %392
  %394 = vrot.lane.b32.xlu0 %v294, 120
  %v395 = vpop.permute.xlu0 %394
  %396 = vrot.lane.b32.xlu0 %v295, 120
  %v397 = vpop.permute.xlu0 %396
  %398 = vrot.lane.b32.xlu0 %v296, 120
  %v399 = vpop.permute.xlu0 %398
  %400 = vrot.lane.b32.xlu0 %v297, 120
  %v401 = vpop.permute.xlu0 %400
  %402 = vrot.lane.b32.xlu0 %v260, 120
  %v403 = vpop.permute.xlu0 %402
  %404 = vrot.lane.b32.xlu0 %v299, 120
  %v405 = vpop.permute.xlu0 %404
  %406 = vrot.lane.b32.xlu0 %v300, 120
  %v407 = vpop.permute.xlu0 %406
  %408 = vrot.lane.b32.xlu0 %v301, 120
  %v409 = vpop.permute.xlu0 %408
  %410 = vrot.lane.b32.xlu0 %v303, 120
  %v411 = vpop.permute.xlu0 %410
  %412 = vrot.lane.b32.xlu0 %v304, 120
  %v413 = vpop.permute.xlu0 %412
  %414 = vrot.lane.b32.xlu0 %v305, 120
  %v415 = vpop.permute.xlu0 %414
  %416 = vrot.lane.b32.xlu0 %v263, 120
  %v417 = vpop.permute.xlu0 %416
  %418 = vrot.lane.b32.xlu0 %v307, 120
  %v419 = vpop.permute.xlu0 %418
  %420 = vrot.lane.b32.xlu0 %v308, 120
  %v421 = vpop.permute.xlu0 %420
  %422 = vrot.lane.b32.xlu0 %v309, 120
  %v423 = vpop.permute.xlu0 %422
  %424 = vrot.lane.b32.xlu0 %v310, 120
  %v425 = vpop.permute.xlu0 %424
  %426 = vrot.lane.b32.xlu0 %v312, 120
  %v427 = vpop.permute.xlu0 %426
  %428 = vrot.lane.b32.xlu0 %v266, 120
  %v429 = vpop.permute.xlu0 %428
  %430 = vrot.lane.b32.xlu0 %v313, 120
  %v431 = vpop.permute.xlu0 %430
  %432 = vrot.lane.b32.xlu0 %v314, 120
  %v433 = vpop.permute.xlu0 %432
  %434 = vrot.lane.b32.xlu0 %v316, 120
  %v435 = vpop.permute.xlu0 %434
  %436 = vrot.lane.b32.xlu0 %v317, 120
  %v437 = vpop.permute.xlu0 %436
  %438 = vrot.lane.b32.xlu0 %v318, 120
  %v439 = vpop.permute.xlu0 %438
  %440 = vrot.lane.b32.xlu0 %v319, 120
  %v441 = vpop.permute.xlu0 %440
  %442 = vrot.lane.b32.xlu0 %v320, 120
  %v443 = vpop.permute.xlu0 %442
  %444 = vrot.lane.b32.xlu0 %v321, 120
  %v445 = vpop.permute.xlu0 %444
  %446 = vrot.lane.b32.xlu0 %v322, 120
  %v447 = vpop.permute.xlu0 %446
  %448 = vrot.lane.b32.xlu0 %v323, 120
  %v449 = vpop.permute.xlu0 %448
  %450 = vrot.lane.b32.xlu0 %v325, 120
  %v451 = vpop.permute.xlu0 %450
  %452 = vrot.lane.b32.xlu0 %v326, 120
  %v453 = vpop.permute.xlu0 %452
  %454 = vrot.lane.b32.xlu0 %v272, 120
  %v455 = vpop.permute.xlu0 %454
  %456 = vrot.lane.b32.xlu0 %v327, 120
  %v457 = vpop.permute.xlu0 %456
  %458 = vrot.lane.b32.xlu0 %v329, 120
  %v459 = vpop.permute.xlu0 %458
  %460 = vrot.lane.b32.xlu0 %v330, 120
  %v461 = vpop.permute.xlu0 %460
  %462 = vrot.lane.b32.xlu0 %v331, 120
  %v463 = vpop.permute.xlu0 %462
  %464 = vrot.lane.b32.xlu0 %v332, 120
  %v465 = vpop.permute.xlu0 %464
  %466 = vrot.lane.b32.xlu0 %v275, 120
  %v467 = vpop.permute.xlu0 %466
  %468 = vrot.lane.b32.xlu0 %v334, 120
  %v469 = vpop.permute.xlu0 %468
  %470 = vrot.lane.b32.xlu0 %v335, 120
  %v471 = vpop.permute.xlu0 %470
  %472 = vrot.lane.b32.xlu0 %v336, 120
  %v473 = vpop.permute.xlu0 %472
  %v522 = vadd.f32 %v254, %v379
  %v523 = vadd.f32 %v285, %v381
  %v524 = vadd.f32 %v286, %v383
  %v525 = vadd.f32 %v287, %v385
  %v526 = vadd.f32 %v289, %v387
  %v527 = vadd.f32 %v290, %v389
  %v528 = vadd.f32 %v291, %v391
  %v529 = vadd.f32 %v257, %v393
  %v530 = vadd.f32 %v293, %v395
  %v531 = vadd.f32 %v294, %v397
  %v532 = vadd.f32 %v295, %v399
  %v533 = vadd.f32 %v296, %v401
  %v534 = vadd.f32 %v298, %v403
  %v535 = vadd.f32 %v260, %v405
  %v536 = vadd.f32 %v299, %v407
  %v537 = vadd.f32 %v300, %v409
  %v538 = vadd.f32 %v302, %v411
  %v539 = vadd.f32 %v303, %v413
  %v540 = vadd.f32 %v304, %v415
  %v541 = vadd.f32 %v305, %v417
  %v542 = vadd.f32 %v306, %v419
  %v543 = vadd.f32 %v307, %v421
  %v544 = vadd.f32 %v308, %v423
  %v545 = vadd.f32 %v309, %v425
  %v546 = vadd.f32 %v311, %v427
  %v547 = vadd.f32 %v312, %v429
  %v548 = vadd.f32 %v266, %v431
  %v549 = vadd.f32 %v313, %v433
  %v550 = vadd.f32 %v315, %v435
  %v551 = vadd.f32 %v316, %v437
  %v552 = vadd.f32 %v317, %v439
  %v553 = vadd.f32 %v318, %v441
  %v554 = vadd.f32 %v269, %v443
  %v555 = vadd.f32 %v320, %v445
  %v556 = vadd.f32 %v321, %v447
  %v557 = vadd.f32 %v322, %v449
  %v558 = vadd.f32 %v324, %v451
  %v559 = vadd.f32 %v325, %v453
  %v560 = vadd.f32 %v326, %v455
  %v561 = vadd.f32 %v272, %v457
  %v562 = vadd.f32 %v328, %v459
  %v563 = vadd.f32 %v329, %v461
  %v564 = vadd.f32 %v330, %v463
  %v565 = vadd.f32 %v331, %v465
  %v566 = vadd.f32 %v333, %v467
  %v567 = vadd.f32 %v275, %v469
  %v568 = vadd.f32 %v334, %v471
  %v569 = vadd.f32 %v335, %v473
  %v570 = vld [vmem:[%s2] sm:$0x1]
  %v572 = vperm.slane %v570, 0
  %v574 = vrot.slane %v572, 1
  %v575 = vrot.slane %v572, 2
  %v576 = vrot.slane %v572, 3
  %v580 = vadd.f32 %v522, %v572
  %v581 = vadd.f32 %v523, %v574
  %v582 = vadd.f32 %v524, %v575
  %v583 = vadd.f32 %v525, %v576
  %v584 = vadd.f32 %v526, %v572
  %v585 = vadd.f32 %v527, %v574
  %v586 = vadd.f32 %v528, %v575
  %v587 = vadd.f32 %v529, %v576
  %v588 = vadd.f32 %v530, %v572
  %v589 = vadd.f32 %v531, %v574
  %v590 = vadd.f32 %v532, %v575
  %v591 = vadd.f32 %v533, %v576
  %v592 = vadd.f32 %v534, %v572
  %v593 = vadd.f32 %v535, %v574
  %v594 = vadd.f32 %v536, %v575
  %v595 = vadd.f32 %v537, %v576
  %v596 = vadd.f32 %v538, %v572
  %v597 = vadd.f32 %v539, %v574
  %v598 = vadd.f32 %v540, %v575
  %v599 = vadd.f32 %v541, %v576
  %v600 = vadd.f32 %v542, %v572
  %v601 = vadd.f32 %v543, %v574
  %v602 = vadd.f32 %v544, %v575
  %v603 = vadd.f32 %v545, %v576
  %v604 = vadd.f32 %v546, %v572
  %v605 = vadd.f32 %v547, %v574
  %v606 = vadd.f32 %v548, %v575
  %v607 = vadd.f32 %v549, %v576
  %v608 = vadd.f32 %v550, %v572
  %v609 = vadd.f32 %v551, %v574
  %v610 = vadd.f32 %v552, %v575
  %v611 = vadd.f32 %v553, %v576
  %v612 = vadd.f32 %v554, %v572
  %v613 = vadd.f32 %v555, %v574
  %v614 = vadd.f32 %v556, %v575
  %v615 = vadd.f32 %v557, %v576
  %v616 = vadd.f32 %v558, %v572
  %v617 = vadd.f32 %v559, %v574
  %v618 = vadd.f32 %v560, %v575
  %v619 = vadd.f32 %v561, %v576
  %v620 = vadd.f32 %v562, %v572
  %v621 = vadd.f32 %v563, %v574
  %v622 = vadd.f32 %v564, %v575
  %v623 = vadd.f32 %v565, %v576
  %v624 = vadd.f32 %v566, %v572
  %v625 = vadd.f32 %v567, %v574
  %v626 = vadd.f32 %v568, %v575
  %v627 = vadd.f32 %v569, %v576
  %v628 = vld [vmem:[%s3] sm:$0x1]
  %v629 = vld [vmem:[%s3 + $0x1] sm:$0x1]
  %678 = vst [vmem:[#allocation1] ss:$9 sm:$0xff] %v580
  %s679 = scalar_lea.vmem [#allocation1], 1
  %680 = vst [vmem:[%s679] ss:$9 sm:$0xff] %v581
  %s681 = scalar_lea.vmem [#allocation1], 2
  %682 = vst [vmem:[%s681] ss:$9 sm:$0xff] %v582
  %s683 = scalar_lea.vmem [#allocation1], 3
  %684 = vst [vmem:[%s683] ss:$9 sm:$0xff] %v583
  %v685 = vld [vmem:[#allocation1] sm:$0xff]
  %686 = vst [vmem:[#allocation1] ss:$9 sm:$0xff] %v584
  %687 = vst [vmem:[%s679] ss:$9 sm:$0xff] %v585
  %688 = vst [vmem:[%s681] ss:$9 sm:$0xff] %v586
  %689 = vst [vmem:[%s683] ss:$9 sm:$0xff] %v587
  %v690 = vld [vmem:[#allocation1] sm:$0xff]
  %691 = vst [vmem:[#allocation1] ss:$9 sm:$0xff] %v588
  %692 = vst [vmem:[%s679] ss:$9 sm:$0xff] %v589
  %693 = vst [vmem:[%s681] ss:$9 sm:$0xff] %v590
  %694 = vst [vmem:[%s683] ss:$9 sm:$0xff] %v591
  %v695 = vld [vmem:[#allocation1] sm:$0xff]
  %696 = vst [vmem:[#allocation1] ss:$9 sm:$0xff] %v592
  %697 = vst [vmem:[%s679] ss:$9 sm:$0xff] %v593
  %698 = vst [vmem:[%s681] ss:$9 sm:$0xff] %v594
  %699 = vst [vmem:[%s683] ss:$9 sm:$0xff] %v595
  %v700 = vld [vmem:[#allocation1] sm:$0xff]
  %701 = vst [vmem:[#allocation1] ss:$9 sm:$0xff] %v596
  %702 = vst [vmem:[%s679] ss:$9 sm:$0xff] %v597
  %703 = vst [vmem:[%s681] ss:$9 sm:$0xff] %v598
  %704 = vst [vmem:[%s683] ss:$9 sm:$0xff] %v599
  %v705 = vld [vmem:[#allocation1] sm:$0xff]
  %706 = vst [vmem:[#allocation1] ss:$9 sm:$0xff] %v600
  %707 = vst [vmem:[%s679] ss:$9 sm:$0xff] %v601
  %708 = vst [vmem:[%s681] ss:$9 sm:$0xff] %v602
  %709 = vst [vmem:[%s683] ss:$9 sm:$0xff] %v603
  %v710 = vld [vmem:[#allocation1] sm:$0xff]
  %711 = vst [vmem:[#allocation1] ss:$9 sm:$0xff] %v604
  %712 = vst [vmem:[%s679] ss:$9 sm:$0xff] %v605
  %713 = vst [vmem:[%s681] ss:$9 sm:$0xff] %v606
  %714 = vst [vmem:[%s683] ss:$9 sm:$0xff] %v607
  %v715 = vld [vmem:[#allocation1] sm:$0xff]
  %716 = vst [vmem:[#allocation1] ss:$9 sm:$0xff] %v608
  %717 = vst [vmem:[%s679] ss:$9 sm:$0xff] %v609
  %718 = vst [vmem:[%s681] ss:$9 sm:$0xff] %v610
  %719 = vst [vmem:[%s683] ss:$9 sm:$0xff] %v611
  %v720 = vld [vmem:[#allocation1] sm:$0xff]
  %721 = vst [vmem:[#allocation1] ss:$9 sm:$0xff] %v612
  %722 = vst [vmem:[%s679] ss:$9 sm:$0xff] %v613
  %723 = vst [vmem:[%s681] ss:$9 sm:$0xff] %v614
  %724 = vst [vmem:[%s683] ss:$9 sm:$0xff] %v615
  %v725 = vld [vmem:[#allocation1] sm:$0xff]
  %726 = vst [vmem:[#allocation1] ss:$9 sm:$0xff] %v616
  %727 = vst [vmem:[%s679] ss:$9 sm:$0xff] %v617
  %728 = vst [vmem:[%s681] ss:$9 sm:$0xff] %v618
  %729 = vst [vmem:[%s683] ss:$9 sm:$0xff] %v619
  %v730 = vld [vmem:[#allocation1] sm:$0xff]
  %731 = vst [vmem:[#allocation1] ss:$9 sm:$0xff] %v620
  %732 = vst [vmem:[%s679] ss:$9 sm:$0xff] %v621
  %733 = vst [vmem:[%s681] ss:$9 sm:$0xff] %v622
  %734 = vst [vmem:[%s683] ss:$9 sm:$0xff] %v623
  %v735 = vld [vmem:[#allocation1] sm:$0xff]
  %736 = vst [vmem:[#allocation1] ss:$9 sm:$0xff] %v624
  %737 = vst [vmem:[%s679] ss:$9 sm:$0xff] %v625
  %738 = vst [vmem:[%s681] ss:$9 sm:$0xff] %v626
  %739 = vst [vmem:[%s683] ss:$9 sm:$0xff] %v627
  %v740 = vld [vmem:[#allocation1] sm:$0xff]
  %vm753 = vcmask 60416
  %v754 = vsel %vm753, %v685, 0.0
  %v755 = vsel %vm753, %v690, 0.0
  %v756 = vadd.f32 %v754, %v755
  %v757 = vsel %vm753, %v695, 0.0
  %v758 = vadd.f32 %v756, %v757
  %v759 = vsel %vm753, %v700, 0.0
  %v760 = vadd.f32 %v758, %v759
  %v761 = vsel %vm753, %v705, 0.0
  %v762 = vadd.f32 %v760, %v761
  %v763 = vsel %vm753, %v710, 0.0
  %v764 = vadd.f32 %v762, %v763
  %v765 = vsel %vm753, %v715, 0.0
  %v766 = vadd.f32 %v764, %v765
  %v767 = vsel %vm753, %v720, 0.0
  %v768 = vadd.f32 %v766, %v767
  %v769 = vsel %vm753, %v725, 0.0
  %v770 = vadd.f32 %v768, %v769
  %v771 = vsel %vm753, %v730, 0.0
  %v772 = vadd.f32 %v770, %v771
  %v773 = vsel %vm753, %v735, 0.0
  %v774 = vadd.f32 %v772, %v773
  %v775 = vsel %vm753, %v740, 0.0
  %v776 = vadd.f32 %v774, %v775
  %v777 = vrot.slane %v776, 4
  %v778 = vadd.f32 %v776, %v777
  %v779 = vrot.slane %v778, 2
  %v780 = vadd.f32 %v778, %v779
  %v781 = vrot.slane %v780, 1
  %v782 = vadd.f32 %v780, %v781
  %v783 = vmul.f32 %v782, 0.020833334
  %v784 = vmul.f32 %v580, %v580
  %v785 = vmul.f32 %v581, %v581
  %v786 = vmul.f32 %v582, %v582
  %v787 = vmul.f32 %v583, %v583
  %v788 = vmul.f32 %v584, %v584
  %v789 = vmul.f32 %v585, %v585
  %v790 = vmul.f32 %v586, %v586
  %v791 = vmul.f32 %v587, %v587
  %v792 = vmul.f32 %v588, %v588
  %v793 = vmul.f32 %v589, %v589
  %v794 = vmul.f32 %v590, %v590
  %v795 = vmul.f32 %v591, %v591
  %v796 = vmul.f32 %v592, %v592
  %v797 = vmul.f32 %v593, %v593
  %v798 = vmul.f32 %v594, %v594
  %v799 = vmul.f32 %v595, %v595
  %v800 = vmul.f32 %v596, %v596
  %v801 = vmul.f32 %v597, %v597
  %v802 = vmul.f32 %v598, %v598
  %v803 = vmul.f32 %v599, %v599
  %v804 = vmul.f32 %v600, %v600
  %v805 = vmul.f32 %v601, %v601
  %v806 = vmul.f32 %v602, %v602
  %v807 = vmul.f32 %v603, %v603
  %v808 = vmul.f32 %v604, %v604
  %v809 = vmul.f32 %v605, %v605
  %v810 = vmul.f32 %v606, %v606
  %v811 = vmul.f32 %v607, %v607
  %v812 = vmul.f32 %v608, %v608
  %v813 = vmul.f32 %v609, %v609
  %v814 = vmul.f32 %v610, %v610
  %v815 = vmul.f32 %v611, %v611
  %v816 = vmul.f32 %v612, %v612
  %v817 = vmul.f32 %v613, %v613
  %v818 = vmul.f32 %v614, %v614
  %v819 = vmul.f32 %v615, %v615
  %v820 = vmul.f32 %v616, %v616
  %v821 = vmul.f32 %v617, %v617
  %v822 = vmul.f32 %v618, %v618
  %v823 = vmul.f32 %v619, %v619
  %v824 = vmul.f32 %v620, %v620
  %v825 = vmul.f32 %v621, %v621
  %v826 = vmul.f32 %v622, %v622
  %v827 = vmul.f32 %v623, %v623
  %v828 = vmul.f32 %v624, %v624
  %v829 = vmul.f32 %v625, %v625
  %v830 = vmul.f32 %v626, %v626
  %v831 = vmul.f32 %v627, %v627
  %880 = vst [vmem:[#allocation1] ss:$9 sm:$0xff] %v784
  %s881 = scalar_lea.vmem [#allocation1], 1
  %882 = vst [vmem:[%s881] ss:$9 sm:$0xff] %v785
  %s883 = scalar_lea.vmem [#allocation1], 2
  %884 = vst [vmem:[%s883] ss:$9 sm:$0xff] %v786
  %s885 = scalar_lea.vmem [#allocation1], 3
  %886 = vst [vmem:[%s885] ss:$9 sm:$0xff] %v787
  %v887 = vld [vmem:[#allocation1] sm:$0xff]
  %888 = vst [vmem:[#allocation1] ss:$9 sm:$0xff] %v788
  %889 = vst [vmem:[%s881] ss:$9 sm:$0xff] %v789
  %890 = vst [vmem:[%s883] ss:$9 sm:$0xff] %v790
  %891 = vst [vmem:[%s885] ss:$9 sm:$0xff] %v791
  %v892 = vld [vmem:[#allocation1] sm:$0xff]
  %893 = vst [vmem:[#allocation1] ss:$9 sm:$0xff] %v792
  %894 = vst [vmem:[%s881] ss:$9 sm:$0xff] %v793
  %895 = vst [vmem:[%s883] ss:$9 sm:$0xff] %v794
  %896 = vst [vmem:[%s885] ss:$9 sm:$0xff] %v795
  %v897 = vld [vmem:[#allocation1] sm:$0xff]
  %898 = vst [vmem:[#allocation1] ss:$9 sm:$0xff] %v796
  %899 = vst [vmem:[%s881] ss:$9 sm:$0xff] %v797
  %900 = vst [vmem:[%s883] ss:$9 sm:$0xff] %v798
  %901 = vst [vmem:[%s885] ss:$9 sm:$0xff] %v799
  %v902 = vld [vmem:[#allocation1] sm:$0xff]
  %903 = vst [vmem:[#allocation1] ss:$9 sm:$0xff] %v800
  %904 = vst [vmem:[%s881] ss:$9 sm:$0xff] %v801
  %905 = vst [vmem:[%s883] ss:$9 sm:$0xff] %v802
  %906 = vst [vmem:[%s885] ss:$9 sm:$0xff] %v803
  %v907 = vld [vmem:[#allocation1] sm:$0xff]
  %908 = vst [vmem:[#allocation1] ss:$9 sm:$0xff] %v804
  %909 = vst [vmem:[%s881] ss:$9 sm:$0xff] %v805
  %910 = vst [vmem:[%s883] ss:$9 sm:$0xff] %v806
  %911 = vst [vmem:[%s885] ss:$9 sm:$0xff] %v807
  %v912 = vld [vmem:[#allocation1] sm:$0xff]
  %913 = vst [vmem:[#allocation1] ss:$9 sm:$0xff] %v808
  %914 = vst [vmem:[%s881] ss:$9 sm:$0xff] %v809
  %915 = vst [vmem:[%s883] ss:$9 sm:$0xff] %v810
  %916 = vst [vmem:[%s885] ss:$9 sm:$0xff] %v811
  %v917 = vld [vmem:[#allocation1] sm:$0xff]
  %918 = vst [vmem:[#allocation1] ss:$9 sm:$0xff] %v812
  %919 = vst [vmem:[%s881] ss:$9 sm:$0xff] %v813
  %920 = vst [vmem:[%s883] ss:$9 sm:$0xff] %v814
  %921 = vst [vmem:[%s885] ss:$9 sm:$0xff] %v815
  %v922 = vld [vmem:[#allocation1] sm:$0xff]
  %923 = vst [vmem:[#allocation1] ss:$9 sm:$0xff] %v816
  %924 = vst [vmem:[%s881] ss:$9 sm:$0xff] %v817
  %925 = vst [vmem:[%s883] ss:$9 sm:$0xff] %v818
  %926 = vst [vmem:[%s885] ss:$9 sm:$0xff] %v819
  %v927 = vld [vmem:[#allocation1] sm:$0xff]
  %928 = vst [vmem:[#allocation1] ss:$9 sm:$0xff] %v820
  %929 = vst [vmem:[%s881] ss:$9 sm:$0xff] %v821
  %930 = vst [vmem:[%s883] ss:$9 sm:$0xff] %v822
  %931 = vst [vmem:[%s885] ss:$9 sm:$0xff] %v823
  %v932 = vld [vmem:[#allocation1] sm:$0xff]
  %933 = vst [vmem:[#allocation1] ss:$9 sm:$0xff] %v824
  %934 = vst [vmem:[%s881] ss:$9 sm:$0xff] %v825
  %935 = vst [vmem:[%s883] ss:$9 sm:$0xff] %v826
  %936 = vst [vmem:[%s885] ss:$9 sm:$0xff] %v827
  %v937 = vld [vmem:[#allocation1] sm:$0xff]
  %938 = vst [vmem:[#allocation1] ss:$9 sm:$0xff] %v828
  %939 = vst [vmem:[%s881] ss:$9 sm:$0xff] %v829
  %940 = vst [vmem:[%s883] ss:$9 sm:$0xff] %v830
  %941 = vst [vmem:[%s885] ss:$9 sm:$0xff] %v831
  %v942 = vld [vmem:[#allocation1] sm:$0xff]
  %v955 = vsel %vm753, %v887, 0.0
  %v956 = vsel %vm753, %v892, 0.0
  %v957 = vadd.f32 %v955, %v956
  %v958 = vsel %vm753, %v897, 0.0
  %v959 = vadd.f32 %v957, %v958
  %v960 = vsel %vm753, %v902, 0.0
  %v961 = vadd.f32 %v959, %v960
  %v962 = vsel %vm753, %v907, 0.0
  %v963 = vadd.f32 %v961, %v962
  %v964 = vsel %vm753, %v912, 0.0
  %v965 = vadd.f32 %v963, %v964
  %v966 = vsel %vm753, %v917, 0.0
  %v967 = vadd.f32 %v965, %v966
  %v968 = vsel %vm753, %v922, 0.0
  %v969 = vadd.f32 %v967, %v968
  %v970 = vsel %vm753, %v927, 0.0
  %v971 = vadd.f32 %v969, %v970
  %v972 = vsel %vm753, %v932, 0.0
  %v973 = vadd.f32 %v971, %v972
  %v974 = vsel %vm753, %v937, 0.0
  %v975 = vadd.f32 %v973, %v974
  %v976 = vsel %vm753, %v942, 0.0
  %v977 = vadd.f32 %v975, %v976
  %v978 = vrot.slane %v977, 4
  %v979 = vadd.f32 %v977, %v978
  %v980 = vrot.slane %v979, 2
  %v981 = vadd.f32 %v979, %v980
  %v982 = vrot.slane %v981, 1
  %v983 = vadd.f32 %v981, %v982
  %v984 = vmul.f32 %v983, 0.020833334
  %v985 = vmul.f32 %v783, %v783
  %v986 = vsub.f32 %v984, %v985
  %v987 = vadd.f32 %v986, 1e-05
  %v988 = vrsqrt.pop %v987
  %v989 = vmul.f32 %v988, %v987
  %v990 = vmul.f32 %v989, %v988
  %v991 = vmul.f32 0.5, %v990
  %v992 = vsub.f32 1.5, %v991
  %v993 = vmul.f32 %v988, %v992
  %vm994 = vweird.f32 %v987
  %vm995 = vweird.f32 %v988
  %vm996 = vmor %vm994, %vm995
  %v997 = vsel %vm996, %v988, %v993
  %v998 = vmul.f32 %v628, %v997
  %v1000 = vrot.slane %v783, 1
  %v1001 = vrot.slane %v783, 2
  %v1002 = vrot.slane %v783, 3
  %v1006 = vsub.f32 %v580, %v783
  %v1007 = vsub.f32 %v581, %v1000
  %v1008 = vsub.f32 %v582, %v1001
  %v1009 = vsub.f32 %v583, %v1002
  %v1010 = vsub.f32 %v584, %v783
  %v1011 = vsub.f32 %v585, %v1000
  %v1012 = vsub.f32 %v586, %v1001
  %v1013 = vsub.f32 %v587, %v1002
  %v1014 = vsub.f32 %v588, %v783
  %v1015 = vsub.f32 %v589, %v1000
  %v1016 = vsub.f32 %v590, %v1001
  %v1017 = vsub.f32 %v591, %v1002
  %v1018 = vsub.f32 %v592, %v783
  %v1019 = vsub.f32 %v593, %v1000
  %v1020 = vsub.f32 %v594, %v1001
  %v1021 = vsub.f32 %v595, %v1002
  %v1022 = vsub.f32 %v596, %v783
  %v1023 = vsub.f32 %v597, %v1000
  %v1024 = vsub.f32 %v598, %v1001
  %v1025 = vsub.f32 %v599, %v1002
  %v1026 = vsub.f32 %v600, %v783
  %v1027 = vsub.f32 %v601, %v1000
  %v1028 = vsub.f32 %v602, %v1001
  %v1029 = vsub.f32 %v603, %v1002
  %v1030 = vsub.f32 %v604, %v783
  %v1031 = vsub.f32 %v605, %v1000
  %v1032 = vsub.f32 %v606, %v1001
  %v1033 = vsub.f32 %v607, %v1002
  %v1034 = vsub.f32 %v608, %v783
  %v1035 = vsub.f32 %v609, %v1000
  %v1036 = vsub.f32 %v610, %v1001
  %v1037 = vsub.f32 %v611, %v1002
  %v1038 = vsub.f32 %v612, %v783
  %v1039 = vsub.f32 %v613, %v1000
  %v1040 = vsub.f32 %v614, %v1001
  %v1041 = vsub.f32 %v615, %v1002
  %v1042 = vsub.f32 %v616, %v783
  %v1043 = vsub.f32 %v617, %v1000
  %v1044 = vsub.f32 %v618, %v1001
  %v1045 = vsub.f32 %v619, %v1002
  %v1046 = vsub.f32 %v620, %v783
  %v1047 = vsub.f32 %v621, %v1000
  %v1048 = vsub.f32 %v622, %v1001
  %v1049 = vsub.f32 %v623, %v1002
  %v1050 = vsub.f32 %v624, %v783
  %v1051 = vsub.f32 %v625, %v1000
  %v1052 = vsub.f32 %v626, %v1001
  %v1053 = vsub.f32 %v627, %v1002
  %v1054 = vperm.slane %v998, 0
  %v1056 = vrot.slane %v1054, 1
  %v1057 = vrot.slane %v1054, 2
  %v1058 = vrot.slane %v1054, 3
  %v1062 = vmul.f32 %v1006, %v1054
  %v1063 = vmul.f32 %v1007, %v1056
  %v1064 = vmul.f32 %v1008, %v1057
  %v1065 = vmul.f32 %v1009, %v1058
  %v1066 = vmul.f32 %v1010, %v1054
  %v1067 = vmul.f32 %v1011, %v1056
  %v1068 = vmul.f32 %v1012, %v1057
  %v1069 = vmul.f32 %v1013, %v1058
  %v1070 = vmul.f32 %v1014, %v1054
  %v1071 = vmul.f32 %v1015, %v1056
  %v1072 = vmul.f32 %v1016, %v1057
  %v1073 = vmul.f32 %v1017, %v1058
  %v1074 = vmul.f32 %v1018, %v1054
  %v1075 = vmul.f32 %v1019, %v1056
  %v1076 = vmul.f32 %v1020, %v1057
  %v1077 = vmul.f32 %v1021, %v1058
  %v1078 = vmul.f32 %v1022, %v1054
  %v1079 = vmul.f32 %v1023, %v1056
  %v1080 = vmul.f32 %v1024, %v1057
  %v1081 = vmul.f32 %v1025, %v1058
  %v1082 = vmul.f32 %v1026, %v1054
  %v1083 = vmul.f32 %v1027, %v1056
  %v1084 = vmul.f32 %v1028, %v1057
  %v1085 = vmul.f32 %v1029, %v1058
  %v1086 = vmul.f32 %v1030, %v1054
  %v1087 = vmul.f32 %v1031, %v1056
  %v1088 = vmul.f32 %v1032, %v1057
  %v1089 = vmul.f32 %v1033, %v1058
  %v1090 = vmul.f32 %v1034, %v1054
  %v1091 = vmul.f32 %v1035, %v1056
  %v1092 = vmul.f32 %v1036, %v1057
  %v1093 = vmul.f32 %v1037, %v1058
  %v1094 = vmul.f32 %v1038, %v1054
  %v1095 = vmul.f32 %v1039, %v1056
  %v1096 = vmul.f32 %v1040, %v1057
  %v1097 = vmul.f32 %v1041, %v1058
  %v1098 = vmul.f32 %v1042, %v1054
  %v1099 = vmul.f32 %v1043, %v1056
  %v1100 = vmul.f32 %v1044, %v1057
  %v1101 = vmul.f32 %v1045, %v1058
  %v1102 = vmul.f32 %v1046, %v1054
  %v1103 = vmul.f32 %v1047, %v1056
  %v1104 = vmul.f32 %v1048, %v1057
  %v1105 = vmul.f32 %v1049, %v1058
  %v1106 = vmul.f32 %v1050, %v1054
  %v1107 = vmul.f32 %v1051, %v1056
  %v1108 = vmul.f32 %v1052, %v1057
  %v1109 = vmul.f32 %v1053, %v1058
  %v1110 = vperm.slane %v629, 0
  %v1112 = vrot.slane %v1110, 1
  %v1113 = vrot.slane %v1110, 2
  %v1114 = vrot.slane %v1110, 3
  %v1118 = vadd.f32 %v1062, %v1110
  %v1119 = vadd.f32 %v1063, %v1112
  %v1120 = vadd.f32 %v1064, %v1113
  %v1121 = vadd.f32 %v1065, %v1114
  %v1122 = vadd.f32 %v1066, %v1110
  %v1123 = vadd.f32 %v1067, %v1112
  %v1124 = vadd.f32 %v1068, %v1113
  %v1125 = vadd.f32 %v1069, %v1114
  %v1126 = vadd.f32 %v1070, %v1110
  %v1127 = vadd.f32 %v1071, %v1112
  %v1128 = vadd.f32 %v1072, %v1113
  %v1129 = vadd.f32 %v1073, %v1114
  %v1130 = vadd.f32 %v1074, %v1110
  %v1131 = vadd.f32 %v1075, %v1112
  %v1132 = vadd.f32 %v1076, %v1113
  %v1133 = vadd.f32 %v1077, %v1114
  %v1134 = vadd.f32 %v1078, %v1110
  %v1135 = vadd.f32 %v1079, %v1112
  %v1136 = vadd.f32 %v1080, %v1113
  %v1137 = vadd.f32 %v1081, %v1114
  %v1138 = vadd.f32 %v1082, %v1110
  %v1139 = vadd.f32 %v1083, %v1112
  %v1140 = vadd.f32 %v1084, %v1113
  %v1141 = vadd.f32 %v1085, %v1114
  %v1142 = vadd.f32 %v1086, %v1110
  %v1143 = vadd.f32 %v1087, %v1112
  %v1144 = vadd.f32 %v1088, %v1113
  %v1145 = vadd.f32 %v1089, %v1114
  %v1146 = vadd.f32 %v1090, %v1110
  %v1147 = vadd.f32 %v1091, %v1112
  %v1148 = vadd.f32 %v1092, %v1113
  %v1149 = vadd.f32 %v1093, %v1114
  %v1150 = vadd.f32 %v1094, %v1110
  %v1151 = vadd.f32 %v1095, %v1112
  %v1152 = vadd.f32 %v1096, %v1113
  %v1153 = vadd.f32 %v1097, %v1114
  %v1154 = vadd.f32 %v1098, %v1110
  %v1155 = vadd.f32 %v1099, %v1112
  %v1156 = vadd.f32 %v1100, %v1113
  %v1157 = vadd.f32 %v1101, %v1114
  %v1158 = vadd.f32 %v1102, %v1110
  %v1159 = vadd.f32 %v1103, %v1112
  %v1160 = vadd.f32 %v1104, %v1113
  %v1161 = vadd.f32 %v1105, %v1114
  %v1162 = vadd.f32 %v1106, %v1110
  %v1163 = vadd.f32 %v1107, %v1112
  %v1164 = vadd.f32 %v1108, %v1113
  %v1165 = vadd.f32 %v1109, %v1114
  %v1166 = vmax.f32 %v1118, 0.0
  %v1167 = vmax.f32 %v1119, 0.0
  %v1168 = vmax.f32 %v1120, 0.0
  %v1169 = vmax.f32 %v1121, 0.0
  %v1170 = vmax.f32 %v1122, 0.0
  %v1171 = vmax.f32 %v1123, 0.0
  %v1172 = vmax.f32 %v1124, 0.0
  %v1173 = vmax.f32 %v1125, 0.0
  %v1174 = vmax.f32 %v1126, 0.0
  %v1175 = vmax.f32 %v1127, 0.0
  %v1176 = vmax.f32 %v1128, 0.0
  %v1177 = vmax.f32 %v1129, 0.0
  %v1178 = vmax.f32 %v1130, 0.0
  %v1179 = vmax.f32 %v1131, 0.0
  %v1180 = vmax.f32 %v1132, 0.0
  %v1181 = vmax.f32 %v1133, 0.0
  %v1182 = vmax.f32 %v1134, 0.0
  %v1183 = vmax.f32 %v1135, 0.0
  %v1184 = vmax.f32 %v1136, 0.0
  %v1185 = vmax.f32 %v1137, 0.0
  %v1186 = vmax.f32 %v1138, 0.0
  %v1187 = vmax.f32 %v1139, 0.0
  %v1188 = vmax.f32 %v1140, 0.0
  %v1189 = vmax.f32 %v1141, 0.0
  %v1190 = vmax.f32 %v1142, 0.0
  %v1191 = vmax.f32 %v1143, 0.0
  %v1192 = vmax.f32 %v1144, 0.0
  %v1193 = vmax.f32 %v1145, 0.0
  %v1194 = vmax.f32 %v1146, 0.0
  %v1195 = vmax.f32 %v1147, 0.0
  %v1196 = vmax.f32 %v1148, 0.0
  %v1197 = vmax.f32 %v1149, 0.0
  %v1198 = vmax.f32 %v1150, 0.0
  %v1199 = vmax.f32 %v1151, 0.0
  %v1200 = vmax.f32 %v1152, 0.0
  %v1201 = vmax.f32 %v1153, 0.0
  %v1202 = vmax.f32 %v1154, 0.0
  %v1203 = vmax.f32 %v1155, 0.0
  %v1204 = vmax.f32 %v1156, 0.0
  %v1205 = vmax.f32 %v1157, 0.0
  %v1206 = vmax.f32 %v1158, 0.0
  %v1207 = vmax.f32 %v1159, 0.0
  %v1208 = vmax.f32 %v1160, 0.0
  %v1209 = vmax.f32 %v1161, 0.0
  %v1210 = vmax.f32 %v1162, 0.0
  %v1211 = vmax.f32 %v1163, 0.0
  %v1212 = vmax.f32 %v1164, 0.0
  %v1213 = vmax.f32 %v1165, 0.0
  %v1214 = vld [vmem:[%s4] sm:$0xff]
  %1263 = vst [vmem:[#allocation1] ss:$9 sm:$0xff] %v1166
  %s1264 = scalar_lea.vmem [#allocation1], 1
  %1265 = vst [vmem:[%s1264] ss:$9 sm:$0xff] %v1167
  %s1266 = scalar_lea.vmem [#allocation1], 2
  %1267 = vst [vmem:[%s1266] ss:$9 sm:$0xff] %v1168
  %s1268 = scalar_lea.vmem [#allocation1], 3
  %1269 = vst [vmem:[%s1268] ss:$9 sm:$0xff] %v1169
  %s1270 = scalar_lea.vmem [#allocation1], 4
  %1271 = vst [vmem:[%s1270] ss:$9 sm:$0xff] %v1170
  %s1272 = scalar_lea.vmem [#allocation1], 5
  %1273 = vst [vmem:[%s1272] ss:$9 sm:$0xff] %v1171
  %s1274 = scalar_lea.vmem [#allocation1], 6
  %1275 = vst [vmem:[%s1274] ss:$9 sm:$0xff] %v1172
  %s1276 = scalar_lea.vmem [#allocation1], 7
  %1277 = vst [vmem:[%s1276] ss:$9 sm:$0xff] %v1173
  %v1278 = vld [vmem:[#allocation1] sm:$0xff]
  %1279 = vst [vmem:[#allocation1] ss:$9 sm:$0xff] %v1174
  %1280 = vst [vmem:[%s1264] ss:$9 sm:$0xff] %v1175
  %1281 = vst [vmem:[%s1266] ss:$9 sm:$0xff] %v1176
  %1282 = vst [vmem:[%s1268] ss:$9 sm:$0xff] %v1177
  %1283 = vst [vmem:[%s1270] ss:$9 sm:$0xff] %v1178
  %1284 = vst [vmem:[%s1272] ss:$9 sm:$0xff] %v1179
  %1285 = vst [vmem:[%s1274] ss:$9 sm:$0xff] %v1180
  %1286 = vst [vmem:[%s1276] ss:$9 sm:$0xff] %v1181
  %v1287 = vld [vmem:[#allocation1] sm:$0xff]
  %1288 = vst [vmem:[#allocation1] ss:$9 sm:$0xff] %v1182
  %1289 = vst [vmem:[%s1264] ss:$9 sm:$0xff] %v1183
  %1290 = vst [vmem:[%s1266] ss:$9 sm:$0xff] %v1184
  %1291 = vst [vmem:[%s1268] ss:$9 sm:$0xff] %v1185
  %1292 = vst [vmem:[%s1270] ss:$9 sm:$0xff] %v1186
  %1293 = vst [vmem:[%s1272] ss:$9 sm:$0xff] %v1187
  %1294 = vst [vmem:[%s1274] ss:$9 sm:$0xff] %v1188
  %1295 = vst [vmem:[%s1276] ss:$9 sm:$0xff] %v1189
  %v1296 = vld [vmem:[#allocation1] sm:$0xff]
  %1297 = vst [vmem:[#allocation1] ss:$9 sm:$0xff] %v1190
  %1298 = vst [vmem:[%s1264] ss:$9 sm:$0xff] %v1191
  %1299 = vst [vmem:[%s1266] ss:$9 sm:$0xff] %v1192
  %1300 = vst [vmem:[%s1268] ss:$9 sm:$0xff] %v1193
  %1301 = vst [vmem:[%s1270] ss:$9 sm:$0xff] %v1194
  %1302 = vst [vmem:[%s1272] ss:$9 sm:$0xff] %v1195
  %1303 = vst [vmem:[%s1274] ss:$9 sm:$0xff] %v1196
  %1304 = vst [vmem:[%s1276] ss:$9 sm:$0xff] %v1197
  %v1305 = vld [vmem:[#allocation1] sm:$0xff]
  %1306 = vst [vmem:[#allocation1] ss:$9 sm:$0xff] %v1198
  %1307 = vst [vmem:[%s1264] ss:$9 sm:$0xff] %v1199
  %1308 = vst [vmem:[%s1266] ss:$9 sm:$0xff] %v1200
  %1309 = vst [vmem:[%s1268] ss:$9 sm:$0xff] %v1201
  %1310 = vst [vmem:[%s1270] ss:$9 sm:$0xff] %v1202
  %1311 = vst [vmem:[%s1272] ss:$9 sm:$0xff] %v1203
  %1312 = vst [vmem:[%s1274] ss:$9 sm:$0xff] %v1204
  %1313 = vst [vmem:[%s1276] ss:$9 sm:$0xff] %v1205
  %v1314 = vld [vmem:[#allocation1] sm:$0xff]
  %1315 = vst [vmem:[#allocation1] ss:$9 sm:$0xff] %v1206
  %1316 = vst [vmem:[%s1264] ss:$9 sm:$0xff] %v1207
  %1317 = vst [vmem:[%s1266] ss:$9 sm:$0xff] %v1208
  %1318 = vst [vmem:[%s1268] ss:$9 sm:$0xff] %v1209
  %1319 = vst [vmem:[%s1270] ss:$9 sm:$0xff] %v1210
  %1320 = vst [vmem:[%s1272] ss:$9 sm:$0xff] %v1211
  %1321 = vst [vmem:[%s1274] ss:$9 sm:$0xff] %v1212
  %1322 = vst [vmem:[%s1276] ss:$9 sm:$0xff] %v1213
  %v1323 = vld [vmem:[#allocation1] sm:$0xff]
  %vm1324 = vcmask 64512
  %v1325 = vsel %vm1324, %v1278, 0
  %v1327 = vsel %vm1324, %v1287, 0
  %v1329 = vsel %vm1324, %v1296, 0
  %v1331 = vsel %vm1324, %v1305, 0
  %v1333 = vsel %vm1324, %v1314, 0
  %v1335 = vsel %vm1324, %v1323, 0
  %1337 = vmatpush.msra.mxu0 0.0
  %1338 = vmatpush.msra.mxu0 0.0
  %1339 = vmatpush.msra.mxu0 0.0
  %1340 = vmatpush.msra.mxu0 0.0
  %1341 = vmatpush.msra.mxu0 0.0
  %1342 = vmatpush.msra.mxu0 0.0
  %1343 = vmatpush.msra.mxu0 0.0
  %1344 = vmatpush.msra.mxu0 0.0
  %1345 = vmatpush.msra.mxu0 0.0
  %1346 = vmatpush.msra.mxu0 0.0
  %1347 = vmatpush.msra.mxu0 0.0
  %1348 = vmatpush.msra.mxu0 0.0
  %1349 = vmatpush.msra.mxu0 0.0
  %1350 = vmatpush.msra.mxu0 0.0
  %1351 = vmatpush.msra.mxu0 0.0
  %1352 = vmatpush.msra.mxu0 %v1214
  %1353 = vmatmul.f32.gmra.mxu0 %v1325
  %v1354 = vpop.f32.mrf.mxu0
  %v1355 = vadd.f32 0.0, %v1354
  %1356 = vmatmul.f32.gmra.mxu0 %v1327
  %v1357 = vpop.f32.mrf.mxu0
  %v1358 = vadd.f32 0.0, %v1357
  %1359 = vmatmul.f32.gmra.mxu0 %v1329
  %v1360 = vpop.f32.mrf.mxu0
  %v1361 = vadd.f32 0.0, %v1360
  %1362 = vmatmul.f32.gmra.mxu0 %v1331
  %v1363 = vpop.f32.mrf.mxu0
  %v1364 = vadd.f32 0.0, %v1363
  %1365 = vmatmul.f32.gmra.mxu0 %v1333
  %v1366 = vpop.f32.mrf.mxu0
  %v1367 = vadd.f32 0.0, %v1366
  %1368 = vmatmul.f32.gmra.mxu0 %v1335
  %v1369 = vpop.f32.mrf.mxu0
  %v1370 = vadd.f32 0.0, %v1369
  %1371 = vdwg.mxu0
  %v1378 = vrot.slane %v1355, 4
  %v1379 = vrot.slane %v1358, 4
  %v1380 = vrot.slane %v1361, 4
  %v1381 = vrot.slane %v1364, 4
  %v1382 = vrot.slane %v1367, 4
  %v1383 = vrot.slane %v1370, 4
  %v1390 = vrot.slane %v1355, 5
  %v1391 = vrot.slane %v1390, 4
  %v1392 = vrot.slane %v1378, 5
  %v1393 = vrot.slane %v1392, 4
  %v1394 = vrot.slane %v1358, 5
  %v1395 = vrot.slane %v1394, 4
  %v1396 = vrot.slane %v1379, 5
  %v1397 = vrot.slane %v1396, 4
  %v1398 = vrot.slane %v1361, 5
  %v1399 = vrot.slane %v1398, 4
  %v1400 = vrot.slane %v1380, 5
  %v1401 = vrot.slane %v1400, 4
  %v1402 = vrot.slane %v1364, 5
  %v1403 = vrot.slane %v1402, 4
  %v1404 = vrot.slane %v1381, 5
  %v1405 = vrot.slane %v1404, 4
  %v1406 = vrot.slane %v1367, 5
  %v1407 = vrot.slane %v1406, 4
  %v1408 = vrot.slane %v1382, 5
  %v1409 = vrot.slane %v1408, 4
  %v1410 = vrot.slane %v1370, 5
  %v1411 = vrot.slane %v1410, 4
  %v1412 = vrot.slane %v1383, 5
  %v1413 = vrot.slane %v1412, 4
  %1414 = vrot.lane.b32.xlu0 %v1391, 120
  %v1415 = vpop.permute.xlu0 %1414
  %1416 = vrot.lane.b32.xlu0 %v1393, 120
  %v1417 = vpop.permute.xlu0 %1416
  %1418 = vrot.lane.b32.xlu0 %v1395, 120
  %v1419 = vpop.permute.xlu0 %1418
  %1420 = vrot.lane.b32.xlu0 %v1397, 120
  %v1421 = vpop.permute.xlu0 %1420
  %1422 = vrot.lane.b32.xlu0 %v1399, 120
  %v1423 = vpop.permute.xlu0 %1422
  %1424 = vrot.lane.b32.xlu0 %v1401, 120
  %v1425 = vpop.permute.xlu0 %1424
  %1426 = vrot.lane.b32.xlu0 %v1403, 120
  %v1427 = vpop.permute.xlu0 %1426
  %1428 = vrot.lane.b32.xlu0 %v1405, 120
  %v1429 = vpop.permute.xlu0 %1428
  %1430 = vrot.lane.b32.xlu0 %v1407, 120
  %v1431 = vpop.permute.xlu0 %1430
  %1432 = vrot.lane.b32.xlu0 %v1409, 120
  %v1433 = vpop.permute.xlu0 %1432
  %1434 = vrot.lane.b32.xlu0 %v1411, 120
  %v1435 = vpop.permute.xlu0 %1434
  %1436 = vrot.lane.b32.xlu0 %v1413, 120
  %v1437 = vpop.permute.xlu0 %1436
  %v1450 = vadd.f32 %v1355, %v1415
  %v1451 = vadd.f32 %v1378, %v1417
  %v1452 = vadd.f32 %v1358, %v1419
  %v1453 = vadd.f32 %v1379, %v1421
  %v1454 = vadd.f32 %v1361, %v1423
  %v1455 = vadd.f32 %v1380, %v1425
  %v1456 = vadd.f32 %v1364, %v1427
  %v1457 = vadd.f32 %v1381, %v1429
  %v1458 = vadd.f32 %v1367, %v1431
  %v1459 = vadd.f32 %v1382, %v1433
  %v1460 = vadd.f32 %v1370, %v1435
  %v1461 = vadd.f32 %v1383, %v1437
  %v1462 = vld [vmem:[%s5] sm:$0x1]
  %v1464 = vperm.slane %v1462, 0
  %v1466 = vadd.f32 %v1450, %v1464
  %v1467 = vadd.f32 %v1451, %v1464
  %v1468 = vadd.f32 %v1452, %v1464
  %v1469 = vadd.f32 %v1453, %v1464
  %v1470 = vadd.f32 %v1454, %v1464
  %v1471 = vadd.f32 %v1455, %v1464
  %v1472 = vadd.f32 %v1456, %v1464
  %v1473 = vadd.f32 %v1457, %v1464
  %v1474 = vadd.f32 %v1458, %v1464
  %v1475 = vadd.f32 %v1459, %v1464
  %v1476 = vadd.f32 %v1460, %v1464
  %v1477 = vadd.f32 %v1461, %v1464
  %v1478 = vld [vmem:[%s6] sm:$0x1]
  %v1479 = vld [vmem:[%s6 + $0x1] sm:$0x1]
  %vm1480 = vcmask 59392
  %v1481 = vsel %vm1480, %v1466, 0.0
  %v1482 = vsel %vm1480, %v1467, 0.0
  %v1483 = vadd.f32 %v1481, %v1482
  %v1484 = vsel %vm1480, %v1468, 0.0
  %v1485 = vadd.f32 %v1483, %v1484
  %v1486 = vsel %vm1480, %v1469, 0.0
  %v1487 = vadd.f32 %v1485, %v1486
  %v1488 = vsel %vm1480, %v1470, 0.0
  %v1489 = vadd.f32 %v1487, %v1488
  %v1490 = vsel %vm1480, %v1471, 0.0
  %v1491 = vadd.f32 %v1489, %v1490
  %v1492 = vsel %vm1480, %v1472, 0.0
  %v1493 = vadd.f32 %v1491, %v1492
  %v1494 = vsel %vm1480, %v1473, 0.0
  %v1495 = vadd.f32 %v1493, %v1494
  %v1496 = vsel %vm1480, %v1474, 0.0
  %v1497 = vadd.f32 %v1495, %v1496
  %v1498 = vsel %vm1480, %v1475, 0.0
  %v1499 = vadd.f32 %v1497, %v1498
  %v1500 = vsel %vm1480, %v1476, 0.0
  %v1501 = vadd.f32 %v1499, %v1500
  %v1502 = vsel %vm1480, %v1477, 0.0
  %v1503 = vadd.f32 %v1501, %v1502
  %v1504 = vrot.slane %v1503, 4
  %v1505 = vadd.f32 %v1503, %v1504
  %v1506 = vrot.slane %v1505, 2
  %v1507 = vadd.f32 %v1505, %v1506
  %v1508 = vrot.slane %v1507, 1
  %v1509 = vadd.f32 %v1507, %v1508
  %v1510 = vmul.f32 %v1509, 0.027777778
  %v1511 = vmul.f32 %v1466, %v1466
  %v1512 = vmul.f32 %v1467, %v1467
  %v1513 = vmul.f32 %v1468, %v1468
  %v1514 = vmul.f32 %v1469, %v1469
  %v1515 = vmul.f32 %v1470, %v1470
  %v1516 = vmul.f32 %v1471, %v1471
  %v1517 = vmul.f32 %v1472, %v1472
  %v1518 = vmul.f32 %v1473, %v1473
  %v1519 = vmul.f32 %v1474, %v1474
  %v1520 = vmul.f32 %v1475, %v1475
  %v1521 = vmul.f32 %v1476, %v1476
  %v1522 = vmul.f32 %v1477, %v1477
  %v1523 = vsel %vm1480, %v1511, 0.0
  %v1524 = vsel %vm1480, %v1512, 0.0
  %v1525 = vadd.f32 %v1523, %v1524
  %v1526 = vsel %vm1480, %v1513, 0.0
  %v1527 = vadd.f32 %v1525, %v1526
  %v1528 = vsel %vm1480, %v1514, 0.0
  %v1529 = vadd.f32 %v1527, %v1528
  %v1530 = vsel %vm1480, %v1515, 0.0
  %v1531 = vadd.f32 %v1529, %v1530
  %v1532 = vsel %vm1480, %v1516, 0.0
  %v1533 = vadd.f32 %v1531, %v1532
  %v1534 = vsel %vm1480, %v1517, 0.0
  %v1535 = vadd.f32 %v1533, %v1534
  %v1536 = vsel %vm1480, %v1518, 0.0
  %v1537 = vadd.f32 %v1535, %v1536
  %v1538 = vsel %vm1480, %v1519, 0.0
  %v1539 = vadd.f32 %v1537, %v1538
  %v1540 = vsel %vm1480, %v1520, 0.0
  %v1541 = vadd.f32 %v1539, %v1540
  %v1542 = vsel %vm1480, %v1521, 0.0
  %v1543 = vadd.f32 %v1541, %v1542
  %v1544 = vsel %vm1480, %v1522, 0.0
  %v1545 = vadd.f32 %v1543, %v1544
  %v1546 = vrot.slane %v1545, 4
  %v1547 = vadd.f32 %v1545, %v1546
  %v1548 = vrot.slane %v1547, 2
  %v1549 = vadd.f32 %v1547, %v1548
  %v1550 = vrot.slane %v1549, 1
  %v1551 = vadd.f32 %v1549, %v1550
  %v1552 = vmul.f32 %v1551, 0.027777778
  %v1553 = vmul.f32 %v1510, %v1510
  %v1554 = vsub.f32 %v1552, %v1553
  %v1555 = vadd.f32 %v1554, 1e-05
  %v1556 = vrsqrt.pop %v1555
  %v1557 = vmul.f32 %v1556, %v1555
  %v1558 = vmul.f32 %v1557, %v1556
  %v1559 = vmul.f32 0.5, %v1558
  %v1560 = vsub.f32 1.5, %v1559
  %v1561 = vmul.f32 %v1556, %v1560
  %vm1562 = vweird.f32 %v1555
  %vm1563 = vweird.f32 %v1556
  %vm1564 = vmor %vm1562, %vm1563
  %v1565 = vsel %vm1564, %v1556, %v1561
  %v1566 = vmul.f32 %v1478, %v1565
  %v1567 = vsub.f32 %v1466, %v1510
  %v1568 = vsub.f32 %v1467, %v1510
  %v1569 = vsub.f32 %v1468, %v1510
  %v1570 = vsub.f32 %v1469, %v1510
  %v1571 = vsub.f32 %v1470, %v1510
  %v1572 = vsub.f32 %v1471, %v1510
  %v1573 = vsub.f32 %v1472, %v1510
  %v1574 = vsub.f32 %v1473, %v1510
  %v1575 = vsub.f32 %v1474, %v1510
  %v1576 = vsub.f32 %v1475, %v1510
  %v1577 = vsub.f32 %v1476, %v1510
  %v1578 = vsub.f32 %v1477, %v1510
  %v1579 = vperm.slane %v1566, 0
  %v1580 = vmul.f32 %v1567, %v1579
  %v1581 = vmul.f32 %v1568, %v1579
  %v1582 = vmul.f32 %v1569, %v1579
  %v1583 = vmul.f32 %v1570, %v1579
  %v1584 = vmul.f32 %v1571, %v1579
  %v1585 = vmul.f32 %v1572, %v1579
  %v1586 = vmul.f32 %v1573, %v1579
  %v1587 = vmul.f32 %v1574, %v1579
  %v1588 = vmul.f32 %v1575, %v1579
  %v1589 = vmul.f32 %v1576, %v1579
  %v1590 = vmul.f32 %v1577, %v1579
  %v1591 = vmul.f32 %v1578, %v1579
  %v1592 = vperm.slane %v1479, 0
  %v1593 = vadd.f32 %v1580, %v1592
  %v1594 = vadd.f32 %v1581, %v1592
  %v1595 = vadd.f32 %v1582, %v1592
  %v1596 = vadd.f32 %v1583, %v1592
  %v1597 = vadd.f32 %v1584, %v1592
  %v1598 = vadd.f32 %v1585, %v1592
  %v1599 = vadd.f32 %v1586, %v1592
  %v1600 = vadd.f32 %v1587, %v1592
  %v1601 = vadd.f32 %v1588, %v1592
  %v1602 = vadd.f32 %v1589, %v1592
  %v1603 = vadd.f32 %v1590, %v1592
  %v1604 = vadd.f32 %v1591, %v1592
  %v1605 = vmax.f32 %v1593, 0.0
  %v1606 = vmax.f32 %v1594, 0.0
  %v1607 = vmax.f32 %v1595, 0.0
  %v1608 = vmax.f32 %v1596, 0.0
  %v1609 = vmax.f32 %v1597, 0.0
  %v1610 = vmax.f32 %v1598, 0.0
  %v1611 = vmax.f32 %v1599, 0.0
  %v1612 = vmax.f32 %v1600, 0.0
  %v1613 = vmax.f32 %v1601, 0.0
  %v1614 = vmax.f32 %v1602, 0.0
  %v1615 = vmax.f32 %v1603, 0.0
  %v1616 = vmax.f32 %v1604, 0.0
  %v1629 = vrot.slane %v1605, 3
  %v1630 = vrot.slane %v1606, 3
  %v1631 = vrot.slane %v1607, 3
  %v1632 = vrot.slane %v1608, 3
  %v1633 = vrot.slane %v1609, 3
  %v1634 = vrot.slane %v1610, 3
  %v1635 = vrot.slane %v1611, 3
  %v1636 = vrot.slane %v1612, 3
  %v1637 = vrot.slane %v1613, 3
  %v1638 = vrot.slane %v1614, 3
  %v1639 = vrot.slane %v1615, 3
  %v1640 = vrot.slane %v1616, 3
  %vm1641 = vcmask 1040384
  %v1642 = vsel %vm1641, %v1605, %v1629
  %vm1643 = vcmask 1041409
  %v1644 = vsel %vm1643, %v1605, %v1629
  %v1645 = vrot.slane %v1644, 1
  %vm1646 = vcmask 1042434
  %v1647 = vsel %vm1646, %v1605, %v1629
  %v1648 = vrot.slane %v1647, 2
  %v1649 = vsel %vm1641, %v1606, %v1630
  %v1650 = vsel %vm1643, %v1606, %v1630
  %v1651 = vrot.slane %v1650, 1
  %v1652 = vsel %vm1646, %v1606, %v1630
  %v1653 = vrot.slane %v1652, 2
  %v1654 = vsel %vm1641, %v1607, %v1631
  %v1655 = vsel %vm1643, %v1607, %v1631
  %v1656 = vrot.slane %v1655, 1
  %v1657 = vsel %vm1646, %v1607, %v1631
  %v1658 = vrot.slane %v1657, 2
  %v1659 = vsel %vm1641, %v1608, %v1632
  %v1660 = vsel %vm1643, %v1608, %v1632
  %v1661 = vrot.slane %v1660, 1
  %v1662 = vsel %vm1646, %v1608, %v1632
  %v1663 = vrot.slane %v1662, 2
  %v1664 = vsel %vm1641, %v1609, %v1633
  %v1665 = vsel %vm1643, %v1609, %v1633
  %v1666 = vrot.slane %v1665, 1
  %v1667 = vsel %vm1646, %v1609, %v1633
  %v1668 = vrot.slane %v1667, 2
  %v1669 = vsel %vm1641, %v1610, %v1634
  %v1670 = vsel %vm1643, %v1610, %v1634
  %v1671 = vrot.slane %v1670, 1
  %v1672 = vsel %vm1646, %v1610, %v1634
  %v1673 = vrot.slane %v1672, 2
  %v1674 = vsel %vm1641, %v1611, %v1635
  %v1675 = vsel %vm1643, %v1611, %v1635
  %v1676 = vrot.slane %v1675, 1
  %v1677 = vsel %vm1646, %v1611, %v1635
  %v1678 = vrot.slane %v1677, 2
  %v1679 = vsel %vm1641, %v1612, %v1636
  %v1680 = vsel %vm1643, %v1612, %v1636
  %v1681 = vrot.slane %v1680, 1
  %v1682 = vsel %vm1646, %v1612, %v1636
  %v1683 = vrot.slane %v1682, 2
  %v1684 = vsel %vm1641, %v1613, %v1637
  %v1685 = vsel %vm1643, %v1613, %v1637
  %v1686 = vrot.slane %v1685, 1
  %v1687 = vsel %vm1646, %v1613, %v1637
  %v1688 = vrot.slane %v1687, 2
  %v1689 = vsel %vm1641, %v1614, %v1638
  %v1690 = vsel %vm1643, %v1614, %v1638
  %v1691 = vrot.slane %v1690, 1
  %v1692 = vsel %vm1646, %v1614, %v1638
  %v1693 = vrot.slane %v1692, 2
  %v1694 = vsel %vm1641, %v1615, %v1639
  %v1695 = vsel %vm1643, %v1615, %v1639
  %v1696 = vrot.slane %v1695, 1
  %v1697 = vsel %vm1646, %v1615, %v1639
  %v1698 = vrot.slane %v1697, 2
  %v1699 = vsel %vm1641, %v1616, %v1640
  %v1700 = vsel %vm1643, %v1616, %v1640
  %v1701 = vrot.slane %v1700, 1
  %v1702 = vsel %vm1646, %v1616, %v1640
  %v1703 = vrot.slane %v1702, 2
  %v1704 = vld [vmem:[%s7] sm:$0xff]
  %1705 = vst [vmem:[#allocation1] ss:$9 sm:$0xff] %v1642
  %s1706 = scalar_lea.vmem [#allocation1], 1
  %1707 = vst [vmem:[%s1706] ss:$9 sm:$0xff] %v1645
  %s1708 = scalar_lea.vmem [#allocation1], 2
  %1709 = vst [vmem:[%s1708] ss:$9 sm:$0xff] %v1648
  %s1710 = scalar_lea.vmem [#allocation1], 3
  %1711 = vst [vmem:[%s1710] ss:$9 sm:$0xff] %v1649
  %s1712 = scalar_lea.vmem [#allocation1], 4
  %1713 = vst [vmem:[%s1712] ss:$9 sm:$0xff] %v1651
  %s1714 = scalar_lea.vmem [#allocation1], 5
  %1715 = vst [vmem:[%s1714] ss:$9 sm:$0xff] %v1653
  %s1716 = scalar_lea.vmem [#allocation1], 6
  %1717 = vst [vmem:[%s1716] ss:$9 sm:$0xff] %v1654
  %s1718 = scalar_lea.vmem [#allocation1], 7
  %1719 = vst [vmem:[%s1718] ss:$9 sm:$0xff] %v1656
  %v1720 = vld [vmem:[#allocation1] sm:$0xff]
  %1721 = vst [vmem:[#allocation1] ss:$9 sm:$0xff] %v1658
  %1722 = vst [vmem:[%s1706] ss:$9 sm:$0xff] %v1659
  %1723 = vst [vmem:[%s1708] ss:$9 sm:$0xff] %v1661
  %1724 = vst [vmem:[%s1710] ss:$9 sm:$0xff] %v1663
  %1725 = vst [vmem:[%s1712] ss:$9 sm:$0xff] %v1664
  %1726 = vst [vmem:[%s1714] ss:$9 sm:$0xff] %v1666
  %1727 = vst [vmem:[%s1716] ss:$9 sm:$0xff] %v1668
  %1728 = vst [vmem:[%s1718] ss:$9 sm:$0xff] %v1669
  %v1729 = vld [vmem:[#allocation1] sm:$0xff]
  %1730 = vst [vmem:[#allocation1] ss:$9 sm:$0xff] %v1671
  %1731 = vst [vmem:[%s1706] ss:$9 sm:$0xff] %v1673
  %1732 = vst [vmem:[%s1708] ss:$9 sm:$0xff] %v1674
  %1733 = vst [vmem:[%s1710] ss:$9 sm:$0xff] %v1676
  %1734 = vst [vmem:[%s1712] ss:$9 sm:$0xff] %v1678
  %1735 = vst [vmem:[%s1714] ss:$9 sm:$0xff] %v1679
  %1736 = vst [vmem:[%s1716] ss:$9 sm:$0xff] %v1681
  %1737 = vst [vmem:[%s1718] ss:$9 sm:$0xff] %v1683
  %v1738 = vld [vmem:[#allocation1] sm:$0xff]
  %1739 = vst [vmem:[#allocation1] ss:$9 sm:$0xff] %v1684
  %1740 = vst [vmem:[%s1706] ss:$9 sm:$0xff] %v1686
  %1741 = vst [vmem:[%s1708] ss:$9 sm:$0xff] %v1688
  %1742 = vst [vmem:[%s1710] ss:$9 sm:$0xff] %v1689
  %1743 = vst [vmem:[%s1712] ss:$9 sm:$0xff] %v1691
  %1744 = vst [vmem:[%s1714] ss:$9 sm:$0xff] %v1693
  %1745 = vst [vmem:[%s1716] ss:$9 sm:$0xff] %v1694
  %1746 = vst [vmem:[%s1718] ss:$9 sm:$0xff] %v1696
  %v1747 = vld [vmem:[#allocation1] sm:$0xff]
  %1748 = vst [vmem:[#allocation1] ss:$9 sm:$0xff] %v1698
  %1749 = vst [vmem:[%s1706] ss:$9 sm:$0xff] %v1699
  %1750 = vst [vmem:[%s1708] ss:$9 sm:$0xff] %v1701
  %1751 = vst [vmem:[%s1710] ss:$9 sm:$0xff] %v1703
  %v1752 = vld [vmem:[#allocation1] sm:$0xff]
  %v1753 = vsel %vm1324, %v1720, 0
  %v1755 = vsel %vm1324, %v1729, 0
  %v1757 = vsel %vm1324, %v1738, 0
  %v1759 = vsel %vm1324, %v1747, 0
  %v1761 = vsel %vm1324, %v1752, 0
  %1763 = vmatpush.msra.mxu0 0.0
  %1764 = vmatpush.msra.mxu0 0.0
  %1765 = vmatpush.msra.mxu0 0.0
  %1766 = vmatpush.msra.mxu0 0.0
  %1767 = vmatpush.msra.mxu0 0.0
  %1768 = vmatpush.msra.mxu0 0.0
  %1769 = vmatpush.msra.mxu0 0.0
  %1770 = vmatpush.msra.mxu0 0.0
  %1771 = vmatpush.msra.mxu0 0.0
  %1772 = vmatpush.msra.mxu0 0.0
  %1773 = vmatpush.msra.mxu0 0.0
  %1774 = vmatpush.msra.mxu0 0.0
  %1775 = vmatpush.msra.mxu0 0.0
  %1776 = vmatpush.msra.mxu0 0.0
  %1777 = vmatpush.msra.mxu0 0.0
  %1778 = vmatpush.msra.mxu0 %v1704
  %1779 = vmatmul.f32.gmra.mxu0 %v1753
  %v1780 = vpop.f32.mrf.mxu0
  %v1781 = vadd.f32 0.0, %v1780
  %1782 = vmatmul.f32.gmra.mxu0 %v1755
  %v1783 = vpop.f32.mrf.mxu0
  %v1784 = vadd.f32 0.0, %v1783
  %1785 = vmatmul.f32.gmra.mxu0 %v1757
  %v1786 = vpop.f32.mrf.mxu0
  %v1787 = vadd.f32 0.0, %v1786
  %1788 = vmatmul.f32.gmra.mxu0 %v1759
  %v1789 = vpop.f32.mrf.mxu0
  %v1790 = vadd.f32 0.0, %v1789
  %1791 = vmatmul.f32.gmra.mxu0 %v1761
  %v1792 = vpop.f32.mrf.mxu0
  %v1793 = vadd.f32 0.0, %v1792
  %1794 = vdwg.mxu0
  %v1800 = vrot.slane %v1781, 1
  %v1801 = vrot.slane %v1781, 2
  %v1802 = vrot.slane %v1781, 3
  %v1803 = vrot.slane %v1781, 4
  %v1804 = vrot.slane %v1781, 5
  %v1805 = vrot.slane %v1781, 6
  %v1806 = vrot.slane %v1781, 7
  %v1807 = vrot.slane %v1784, 1
  %v1808 = vrot.slane %v1784, 2
  %v1809 = vrot.slane %v1784, 3
  %v1810 = vrot.slane %v1784, 4
  %v1811 = vrot.slane %v1784, 5
  %v1812 = vrot.slane %v1784, 6
  %v1813 = vrot.slane %v1784, 7
  %v1814 = vrot.slane %v1787, 1
  %v1815 = vrot.slane %v1787, 2
  %v1816 = vrot.slane %v1787, 3
  %v1817 = vrot.slane %v1787, 4
  %v1818 = vrot.slane %v1787, 5
  %v1819 = vrot.slane %v1787, 6
  %v1820 = vrot.slane %v1787, 7
  %v1821 = vrot.slane %v1790, 1
  %v1822 = vrot.slane %v1790, 2
  %v1823 = vrot.slane %v1790, 3
  %v1824 = vrot.slane %v1790, 4
  %v1825 = vrot.slane %v1790, 5
  %v1826 = vrot.slane %v1790, 6
  %v1827 = vrot.slane %v1790, 7
  %v1828 = vrot.slane %v1793, 1
  %v1829 = vrot.slane %v1793, 2
  %v1830 = vrot.slane %v1793, 3
  %1831 = vst [vmem:[#allocation1] ss:$9 sm:$0xff] %v1781
  %s1832 = scalar_lea.vmem [#allocation1], 1
  %1833 = vst [vmem:[%s1832] ss:$9 sm:$0xff] %v1800
  %s1834 = scalar_lea.vmem [#allocation1], 2
  %1835 = vst [vmem:[%s1834] ss:$9 sm:$0xff] %v1801
  %v1836 = vld [vmem:[#allocation1] sm:$0xff]
  %1837 = vst [vmem:[#allocation1] ss:$9 sm:$0xff] %v1802
  %1838 = vst [vmem:[%s1832] ss:$9 sm:$0xff] %v1803
  %1839 = vst [vmem:[%s1834] ss:$9 sm:$0xff] %v1804
  %v1840 = vld [vmem:[#allocation1] sm:$0xff]
  %1841 = vst [vmem:[#allocation1] ss:$9 sm:$0xff] %v1805
  %1842 = vst [vmem:[%s1832] ss:$9 sm:$0xff] %v1806
  %1843 = vst [vmem:[%s1834] ss:$9 sm:$0xff] %v1784
  %v1844 = vld [vmem:[#allocation1] sm:$0xff]
  %1845 = vst [vmem:[#allocation1] ss:$9 sm:$0xff] %v1807
  %1846 = vst [vmem:[%s1832] ss:$9 sm:$0xff] %v1808
  %1847 = vst [vmem:[%s1834] ss:$9 sm:$0xff] %v1809
  %v1848 = vld [vmem:[#allocation1] sm:$0xff]
  %1849 = vst [vmem:[#allocation1] ss:$9 sm:$0xff] %v1810
  %1850 = vst [vmem:[%s1832] ss:$9 sm:$0xff] %v1811
  %1851 = vst [vmem:[%s1834] ss:$9 sm:$0xff] %v1812
  %v1852 = vld [vmem:[#allocation1] sm:$0xff]
  %1853 = vst [vmem:[#allocation1] ss:$9 sm:$0xff] %v1813
  %1854 = vst [vmem:[%s1832] ss:$9 sm:$0xff] %v1787
  %1855 = vst [vmem:[%s1834] ss:$9 sm:$0xff] %v1814
  %v1856 = vld [vmem:[#allocation1] sm:$0xff]
  %1857 = vst [vmem:[#allocation1] ss:$9 sm:$0xff] %v1815
  %1858 = vst [vmem:[%s1832] ss:$9 sm:$0xff] %v1816
  %1859 = vst [vmem:[%s1834] ss:$9 sm:$0xff] %v1817
  %v1860 = vld [vmem:[#allocation1] sm:$0xff]
  %1861 = vst [vmem:[#allocation1] ss:$9 sm:$0xff] %v1818
  %1862 = vst [vmem:[%s1832] ss:$9 sm:$0xff] %v1819
  %1863 = vst [vmem:[%s1834] ss:$9 sm:$0xff] %v1820
  %v1864 = vld [vmem:[#allocation1] sm:$0xff]
  %1865 = vst [vmem:[#allocation1] ss:$9 sm:$0xff] %v1790
  %1866 = vst [vmem:[%s1832] ss:$9 sm:$0xff] %v1821
  %1867 = vst [vmem:[%s1834] ss:$9 sm:$0xff] %v1822
  %v1868 = vld [vmem:[#allocation1] sm:$0xff]
  %1869 = vst [vmem:[#allocation1] ss:$9 sm:$0xff] %v1823
  %1870 = vst [vmem:[%s1832] ss:$9 sm:$0xff] %v1824
  %1871 = vst [vmem:[%s1834] ss:$9 sm:$0xff] %v1825
  %v1872 = vld [vmem:[#allocation1] sm:$0xff]
  %1873 = vst [vmem:[#allocation1] ss:$9 sm:$0xff] %v1826
  %1874 = vst [vmem:[%s1832] ss:$9 sm:$0xff] %v1827
  %1875 = vst [vmem:[%s1834] ss:$9 sm:$0xff] %v1793
  %v1876 = vld [vmem:[#allocation1] sm:$0xff]
  %1877 = vst [vmem:[#allocation1] ss:$9 sm:$0xff] %v1828
  %1878 = vst [vmem:[%s1832] ss:$9 sm:$0xff] %v1829
  %1879 = vst [vmem:[%s1834] ss:$9 sm:$0xff] %v1830
  %v1880 = vld [vmem:[#allocation1] sm:$0xff]
  %vm1893 = vcmask 1042432
  %v1894 = vsel %vm1893, %v1836, 0.0
  %v1895 = vsel %vm1893, %v1840, 0.0
  %v1896 = vsel %vm1893, %v1844, 0.0
  %v1897 = vsel %vm1893, %v1848, 0.0
  %v1898 = vsel %vm1893, %v1852, 0.0
  %v1899 = vsel %vm1893, %v1856, 0.0
  %v1900 = vsel %vm1893, %v1860, 0.0
  %v1901 = vsel %vm1893, %v1864, 0.0
  %v1902 = vsel %vm1893, %v1868, 0.0
  %v1903 = vsel %vm1893, %v1872, 0.0
  %v1904 = vsel %vm1893, %v1876, 0.0
  %v1905 = vsel %vm1893, %v1880, 0.0
  %s1906 = scalar_lea.vmem [#allocation1], 1
  %1907 = vst [vmem:[%s1906] ss:$9 sm:$0xff] %v1781
  %s1908 = scalar_lea.vmem [#allocation1], 2
  %1909 = vst [vmem:[%s1908] ss:$9 sm:$0xff] %v1800
  %s1910 = scalar_lea.vmem [#allocation1], 3
  %1911 = vst [vmem:[%s1910] ss:$9 sm:$0xff] %v1801
  %v1912 = vld [vmem:[#allocation1] sm:$0xff]
  %1913 = vst [vmem:[%s1906] ss:$9 sm:$0xff] %v1802
  %1914 = vst [vmem:[%s1908] ss:$9 sm:$0xff] %v1803
  %1915 = vst [vmem:[%s1910] ss:$9 sm:$0xff] %v1804
  %v1916 = vld [vmem:[#allocation1] sm:$0xff]
  %1917 = vst [vmem:[%s1906] ss:$9 sm:$0xff] %v1805
  %1918 = vst [vmem:[%s1908] ss:$9 sm:$0xff] %v1806
  %1919 = vst [vmem:[%s1910] ss:$9 sm:$0xff] %v1784
  %v1920 = vld [vmem:[#allocation1] sm:$0xff]
  %1921 = vst [vmem:[%s1906] ss:$9 sm:$0xff] %v1807
  %1922 = vst [vmem:[%s1908] ss:$9 sm:$0xff] %v1808
  %1923 = vst [vmem:[%s1910] ss:$9 sm:$0xff] %v1809
  %v1924 = vld [vmem:[#allocation1] sm:$0xff]
  %1925 = vst [vmem:[%s1906] ss:$9 sm:$0xff] %v1810
  %1926 = vst [vmem:[%s1908] ss:$9 sm:$0xff] %v1811
  %1927 = vst [vmem:[%s1910] ss:$9 sm:$0xff] %v1812
  %v1928 = vld [vmem:[#allocation1] sm:$0xff]
  %1929 = vst [vmem:[%s1906] ss:$9 sm:$0xff] %v1813
  %1930 = vst [vmem:[%s1908] ss:$9 sm:$0xff] %v1787
  %1931 = vst [vmem:[%s1910] ss:$9 sm:$0xff] %v1814
  %v1932 = vld [vmem:[#allocation1] sm:$0xff]
  %1933 = vst [vmem:[%s1906] ss:$9 sm:$0xff] %v1815
  %1934 = vst [vmem:[%s1908] ss:$9 sm:$0xff] %v1816
  %1935 = vst [vmem:[%s1910] ss:$9 sm:$0xff] %v1817
  %v1936 = vld [vmem:[#allocation1] sm:$0xff]
  %1937 = vst [vmem:[%s1906] ss:$9 sm:$0xff] %v1818
  %1938 = vst [vmem:[%s1908] ss:$9 sm:$0xff] %v1819
  %1939 = vst [vmem:[%s1910] ss:$9 sm:$0xff] %v1820
  %v1940 = vld [vmem:[#allocation1] sm:$0xff]
  %1941 = vst [vmem:[%s1906] ss:$9 sm:$0xff] %v1790
  %1942 = vst [vmem:[%s1908] ss:$9 sm:$0xff] %v1821
  %1943 = vst [vmem:[%s1910] ss:$9 sm:$0xff] %v1822
  %v1944 = vld [vmem:[#allocation1] sm:$0xff]
  %1945 = vst [vmem:[%s1906] ss:$9 sm:$0xff] %v1823
  %1946 = vst [vmem:[%s1908] ss:$9 sm:$0xff] %v1824
  %1947 = vst [vmem:[%s1910] ss:$9 sm:$0xff] %v1825
  %v1948 = vld [vmem:[#allocation1] sm:$0xff]
  %1949 = vst [vmem:[%s1906] ss:$9 sm:$0xff] %v1826
  %1950 = vst [vmem:[%s1908] ss:$9 sm:$0xff] %v1827
  %1951 = vst [vmem:[%s1910] ss:$9 sm:$0xff] %v1793
  %v1952 = vld [vmem:[#allocation1] sm:$0xff]
  %1953 = vst [vmem:[%s1906] ss:$9 sm:$0xff] %v1828
  %1954 = vst [vmem:[%s1908] ss:$9 sm:$0xff] %v1829
  %1955 = vst [vmem:[%s1910] ss:$9 sm:$0xff] %v1830
  %v1956 = vld [vmem:[#allocation1] sm:$0xff]
  %1957 = vrot.lane.b32.xlu0 %v1912, 120
  %v1958 = vpop.permute.xlu0 %1957
  %1959 = vrot.lane.b32.xlu0 %v1916, 120
  %v1960 = vpop.permute.xlu0 %1959
  %1961 = vrot.lane.b32.xlu0 %v1920, 120
  %v1962 = vpop.permute.xlu0 %1961
  %1963 = vrot.lane.b32.xlu0 %v1924, 120
  %v1964 = vpop.permute.xlu0 %1963
  %1965 = vrot.lane.b32.xlu0 %v1928, 120
  %v1966 = vpop.permute.xlu0 %1965
  %1967 = vrot.lane.b32.xlu0 %v1932, 120
  %v1968 = vpop.permute.xlu0 %1967
  %1969 = vrot.lane.b32.xlu0 %v1936, 120
  %v1970 = vpop.permute.xlu0 %1969
  %1971 = vrot.lane.b32.xlu0 %v1940, 120
  %v1972 = vpop.permute.xlu0 %1971
  %1973 = vrot.lane.b32.xlu0 %v1944, 120
  %v1974 = vpop.permute.xlu0 %1973
  %1975 = vrot.lane.b32.xlu0 %v1948, 120
  %v1976 = vpop.permute.xlu0 %1975
  %1977 = vrot.lane.b32.xlu0 %v1952, 120
  %v1978 = vpop.permute.xlu0 %1977
  %1979 = vrot.lane.b32.xlu0 %v1956, 120
  %v1980 = vpop.permute.xlu0 %1979
  %v1993 = vsel %vm1641, 0.0, %v1958
  %v1994 = vsel %vm1641, 0.0, %v1960
  %v1995 = vsel %vm1641, 0.0, %v1962
  %v1996 = vsel %vm1641, 0.0, %v1964
  %v1997 = vsel %vm1641, 0.0, %v1966
  %v1998 = vsel %vm1641, 0.0, %v1968
  %v1999 = vsel %vm1641, 0.0, %v1970
  %v2000 = vsel %vm1641, 0.0, %v1972
  %v2001 = vsel %vm1641, 0.0, %v1974
  %v2002 = vsel %vm1641, 0.0, %v1976
  %v2003 = vsel %vm1641, 0.0, %v1978
  %v2004 = vsel %vm1641, 0.0, %v1980
  %v2005 = vadd.f32 %v1894, %v1993
  %v2006 = vadd.f32 %v1895, %v1994
  %v2007 = vadd.f32 %v1896, %v1995
  %v2008 = vadd.f32 %v1897, %v1996
  %v2009 = vadd.f32 %v1898, %v1997
  %v2010 = vadd.f32 %v1899, %v1998
  %v2011 = vadd.f32 %v1900, %v1999
  %v2012 = vadd.f32 %v1901, %v2000
  %v2013 = vadd.f32 %v1902, %v2001
  %v2014 = vadd.f32 %v1903, %v2002
  %v2015 = vadd.f32 %v1904, %v2003
  %v2016 = vadd.f32 %v1905, %v2004
  %v2017 = vld [vmem:[%s8] sm:$0x1]
  %v2019 = vperm.slane %v2017, 0
  %v2021 = vadd.f32 %v2005, %v2019
  %v2022 = vadd.f32 %v2006, %v2019
  %v2023 = vadd.f32 %v2007, %v2019
  %v2024 = vadd.f32 %v2008, %v2019
  %v2025 = vadd.f32 %v2009, %v2019
  %v2026 = vadd.f32 %v2010, %v2019
  %v2027 = vadd.f32 %v2011, %v2019
  %v2028 = vadd.f32 %v2012, %v2019
  %v2029 = vadd.f32 %v2013, %v2019
  %v2030 = vadd.f32 %v2014, %v2019
  %v2031 = vadd.f32 %v2015, %v2019
  %v2032 = vadd.f32 %v2016, %v2019
  %v2033 = vld [vmem:[%s9] sm:$0x1]
  %v2034 = vld [vmem:[%s9 + $0x1] sm:$0x1]
  %v2035 = vsel %vm753, %v2021, 0.0
  %v2036 = vsel %vm753, %v2022, 0.0
  %v2037 = vadd.f32 %v2035, %v2036
  %v2038 = vsel %vm753, %v2023, 0.0
  %v2039 = vadd.f32 %v2037, %v2038
  %v2040 = vsel %vm753, %v2024, 0.0
  %v2041 = vadd.f32 %v2039, %v2040
  %v2042 = vsel %vm753, %v2025, 0.0
  %v2043 = vadd.f32 %v2041, %v2042
  %v2044 = vsel %vm753, %v2026, 0.0
  %v2045 = vadd.f32 %v2043, %v2044
  %v2046 = vsel %vm753, %v2027, 0.0
  %v2047 = vadd.f32 %v2045, %v2046
  %v2048 = vsel %vm753, %v2028, 0.0
  %v2049 = vadd.f32 %v2047, %v2048
  %v2050 = vsel %vm753, %v2029, 0.0
  %v2051 = vadd.f32 %v2049, %v2050
  %v2052 = vsel %vm753, %v2030, 0.0
  %v2053 = vadd.f32 %v2051, %v2052
  %v2054 = vsel %vm753, %v2031, 0.0
  %v2055 = vadd.f32 %v2053, %v2054
  %v2056 = vsel %vm753, %v2032, 0.0
  %v2057 = vadd.f32 %v2055, %v2056
  %v2058 = vrot.slane %v2057, 4
  %v2059 = vadd.f32 %v2057, %v2058
  %v2060 = vrot.slane %v2059, 2
  %v2061 = vadd.f32 %v2059, %v2060
  %v2062 = vrot.slane %v2061, 1
  %v2063 = vadd.f32 %v2061, %v2062
  %v2064 = vmul.f32 %v2063, 0.020833334
  %v2065 = vmul.f32 %v2021, %v2021
  %v2066 = vmul.f32 %v2022, %v2022
  %v2067 = vmul.f32 %v2023, %v2023
  %v2068 = vmul.f32 %v2024, %v2024
  %v2069 = vmul.f32 %v2025, %v2025
  %v2070 = vmul.f32 %v2026, %v2026
  %v2071 = vmul.f32 %v2027, %v2027
  %v2072 = vmul.f32 %v2028, %v2028
  %v2073 = vmul.f32 %v2029, %v2029
  %v2074 = vmul.f32 %v2030, %v2030
  %v2075 = vmul.f32 %v2031, %v2031
  %v2076 = vmul.f32 %v2032, %v2032
  %v2077 = vsel %vm753, %v2065, 0.0
  %v2078 = vsel %vm753, %v2066, 0.0
  %v2079 = vadd.f32 %v2077, %v2078
  %v2080 = vsel %vm753, %v2067, 0.0
  %v2081 = vadd.f32 %v2079, %v2080
  %v2082 = vsel %vm753, %v2068, 0.0
  %v2083 = vadd.f32 %v2081, %v2082
  %v2084 = vsel %vm753, %v2069, 0.0
  %v2085 = vadd.f32 %v2083, %v2084
  %v2086 = vsel %vm753, %v2070, 0.0
  %v2087 = vadd.f32 %v2085, %v2086
  %v2088 = vsel %vm753, %v2071, 0.0
  %v2089 = vadd.f32 %v2087, %v2088
  %v2090 = vsel %vm753, %v2072, 0.0
  %v2091 = vadd.f32 %v2089, %v2090
  %v2092 = vsel %vm753, %v2073, 0.0
  %v2093 = vadd.f32 %v2091, %v2092
  %v2094 = vsel %vm753, %v2074, 0.0
  %v2095 = vadd.f32 %v2093, %v2094
  %v2096 = vsel %vm753, %v2075, 0.0
  %v2097 = vadd.f32 %v2095, %v2096
  %v2098 = vsel %vm753, %v2076, 0.0
  %v2099 = vadd.f32 %v2097, %v2098
  %v2100 = vrot.slane %v2099, 4
  %v2101 = vadd.f32 %v2099, %v2100
  %v2102 = vrot.slane %v2101, 2
  %v2103 = vadd.f32 %v2101, %v2102
  %v2104 = vrot.slane %v2103, 1
  %v2105 = vadd.f32 %v2103, %v2104
  %v2106 = vmul.f32 %v2105, 0.020833334
  %v2107 = vmul.f32 %v2064, %v2064
  %v2108 = vsub.f32 %v2106, %v2107
  %v2109 = vadd.f32 %v2108, 1e-05
  %v2110 = vrsqrt.pop %v2109
  %v2111 = vmul.f32 %v2110, %v2109
  %v2112 = vmul.f32 %v2111, %v2110
  %v2113 = vmul.f32 0.5, %v2112
  %v2114 = vsub.f32 1.5, %v2113
  %v2115 = vmul.f32 %v2110, %v2114
  %vm2116 = vweird.f32 %v2109
  %vm2117 = vweird.f32 %v2110
  %vm2118 = vmor %vm2116, %vm2117
  %v2119 = vsel %vm2118, %v2110, %v2115
  %v2120 = vmul.f32 %v2033, %v2119
  %v2121 = vsub.f32 %v2021, %v2064
  %v2122 = vsub.f32 %v2022, %v2064
  %v2123 = vsub.f32 %v2023, %v2064
  %v2124 = vsub.f32 %v2024, %v2064
  %v2125 = vsub.f32 %v2025, %v2064
  %v2126 = vsub.f32 %v2026, %v2064
  %v2127 = vsub.f32 %v2027, %v2064
  %v2128 = vsub.f32 %v2028, %v2064
  %v2129 = vsub.f32 %v2029, %v2064
  %v2130 = vsub.f32 %v2030, %v2064
  %v2131 = vsub.f32 %v2031, %v2064
  %v2132 = vsub.f32 %v2032, %v2064
  %v2133 = vperm.slane %v2120, 0
  %v2134 = vmul.f32 %v2121, %v2133
  %v2135 = vmul.f32 %v2122, %v2133
  %v2136 = vmul.f32 %v2123, %v2133
  %v2137 = vmul.f32 %v2124, %v2133
  %v2138 = vmul.f32 %v2125, %v2133
  %v2139 = vmul.f32 %v2126, %v2133
  %v2140 = vmul.f32 %v2127, %v2133
  %v2141 = vmul.f32 %v2128, %v2133
  %v2142 = vmul.f32 %v2129, %v2133
  %v2143 = vmul.f32 %v2130, %v2133
  %v2144 = vmul.f32 %v2131, %v2133
  %v2145 = vmul.f32 %v2132, %v2133
  %v2146 = vperm.slane %v2034, 0
  %v2147 = vadd.f32 %v2134, %v2146
  %v2148 = vadd.f32 %v2135, %v2146
  %v2149 = vadd.f32 %v2136, %v2146
  %v2150 = vadd.f32 %v2137, %v2146
  %v2151 = vadd.f32 %v2138, %v2146
  %v2152 = vadd.f32 %v2139, %v2146
  %v2153 = vadd.f32 %v2140, %v2146
  %v2154 = vadd.f32 %v2141, %v2146
  %v2155 = vadd.f32 %v2142, %v2146
  %v2156 = vadd.f32 %v2143, %v2146
  %v2157 = vadd.f32 %v2144, %v2146
  %v2158 = vadd.f32 %v2145, %v2146
  %v2159 = vmax.f32 %v2147, 0.0
  %v2160 = vmax.f32 %v2148, 0.0
  %v2161 = vmax.f32 %v2149, 0.0
  %v2162 = vmax.f32 %v2150, 0.0
  %v2163 = vmax.f32 %v2151, 0.0
  %v2164 = vmax.f32 %v2152, 0.0
  %v2165 = vmax.f32 %v2153, 0.0
  %v2166 = vmax.f32 %v2154, 0.0
  %v2167 = vmax.f32 %v2155, 0.0
  %v2168 = vmax.f32 %v2156, 0.0
  %v2169 = vmax.f32 %v2157, 0.0
  %v2170 = vmax.f32 %v2158, 0.0
  %v2171 = vld [vmem:[%s10] sm:$0xff]
  %2184 = vst [vmem:[#allocation1] ss:$2 sm:$0xff] %v2159
  %s2185 = scalar_lea.vmem [#allocation1], 1
  %2186 = vst [vmem:[%s2185] ss:$2 sm:$0xff] %v2160
  %s2187 = scalar_lea.vmem [#allocation1], 16
  %2188 = vst [vmem:[%s2187] ss:$2 sm:$0xff] %v2161
  %s2189 = scalar_lea.vmem [#allocation1], 17
  %2190 = vst [vmem:[%s2189] ss:$2 sm:$0xff] %v2162
  %s2191 = scalar_lea.vmem [#allocation1], 32
  %2192 = vst [vmem:[%s2191] ss:$2 sm:$0xff] %v2163
  %s2193 = scalar_lea.vmem [#allocation1], 33
  %2194 = vst [vmem:[%s2193] ss:$2 sm:$0xff] %v2164
  %s2195 = scalar_lea.vmem [#allocation1], 48
  %2196 = vst [vmem:[%s2195] ss:$2 sm:$0xff] %v2165
  %s2197 = scalar_lea.vmem [#allocation1], 49
  %2198 = vst [vmem:[%s2197] ss:$2 sm:$0xff] %v2166
  %v2199 = vld.sshfl [vmem:[#allocation1] sm:$0xff pattern:$0x75316420]
  %v2200 = vld.sshfl [vmem:[#allocation1 + $0x10] sm:$0xff pattern:$0x75316420]
  %v2201 = vld.sshfl [vmem:[#allocation1 + $0x20] sm:$0xff pattern:$0x75316420]
  %v2202 = vld.sshfl [vmem:[#allocation1 + $0x30] sm:$0xff pattern:$0x75316420]
  %2203 = vst [vmem:[#allocation1] ss:$2 sm:$0xff] %v2167
  %2204 = vst [vmem:[%s2185] ss:$2 sm:$0xff] %v2168
  %2205 = vst [vmem:[%s2187] ss:$2 sm:$0xff] %v2169
  %2206 = vst [vmem:[%s2189] ss:$2 sm:$0xff] %v2170
  %v2207 = vld.sshfl [vmem:[#allocation1] sm:$0xff pattern:$0x75316420]
  %v2208 = vld.sshfl [vmem:[#allocation1 + $0x10] sm:$0xff pattern:$0x75316420]
  %v2209 = vsel %vm1324, %v2199, 0
  %v2211 = vsel %vm1324, %v2200, 0
  %v2213 = vsel %vm1324, %v2201, 0
  %v2215 = vsel %vm1324, %v2202, 0
  %v2217 = vsel %vm1324, %v2207, 0
  %v2219 = vsel %vm1324, %v2208, 0
  %2221 = vmatpush.msra.mxu0 0.0
  %2222 = vmatpush.msra.mxu0 0.0
  %2223 = vmatpush.msra.mxu0 0.0
  %2224 = vmatpush.msra.mxu0 0.0
  %2225 = vmatpush.msra.mxu0 0.0
  %2226 = vmatpush.msra.mxu0 0.0
  %2227 = vmatpush.msra.mxu0 0.0
  %2228 = vmatpush.msra.mxu0 0.0
  %2229 = vmatpush.msra.mxu0 0.0
  %2230 = vmatpush.msra.mxu0 0.0
  %2231 = vmatpush.msra.mxu0 0.0
  %2232 = vmatpush.msra.mxu0 0.0
  %2233 = vmatpush.msra.mxu0 0.0
  %2234 = vmatpush.msra.mxu0 0.0
  %2235 = vmatpush.msra.mxu0 0.0
  %2236 = vmatpush.msra.mxu0 %v2171
  %2237 = vmatmul.f32.gmra.mxu0 %v2209
  %v2238 = vpop.f32.mrf.mxu0
  %v2239 = vadd.f32 0.0, %v2238
  %2240 = vmatmul.f32.gmra.mxu0 %v2211
  %v2241 = vpop.f32.mrf.mxu0
  %v2242 = vadd.f32 0.0, %v2241
  %2243 = vmatmul.f32.gmra.mxu0 %v2213
  %v2244 = vpop.f32.mrf.mxu0
  %v2245 = vadd.f32 0.0, %v2244
  %2246 = vmatmul.f32.gmra.mxu0 %v2215
  %v2247 = vpop.f32.mrf.mxu0
  %v2248 = vadd.f32 0.0, %v2247
  %2249 = vmatmul.f32.gmra.mxu0 %v2217
  %v2250 = vpop.f32.mrf.mxu0
  %v2251 = vadd.f32 0.0, %v2250
  %2252 = vmatmul.f32.gmra.mxu0 %v2219
  %v2253 = vpop.f32.mrf.mxu0
  %v2254 = vadd.f32 0.0, %v2253
  %2255 = vdwg.mxu0
  %v2262 = vrot.slane %v2239, 4
  %v2263 = vrot.slane %v2242, 4
  %v2264 = vrot.slane %v2245, 4
  %v2265 = vrot.slane %v2248, 4
  %v2266 = vrot.slane %v2251, 4
  %v2267 = vrot.slane %v2254, 4
  %vm2274 = vcmask 1043456
  %v2275 = vsel %vm2274, %v2239, 0.0
  %v2276 = vsel %vm2274, %v2262, 0.0
  %v2277 = vsel %vm2274, %v2242, 0.0
  %v2278 = vsel %vm2274, %v2263, 0.0
  %v2279 = vsel %vm2274, %v2245, 0.0
  %v2280 = vsel %vm2274, %v2264, 0.0
  %v2281 = vsel %vm2274, %v2248, 0.0
  %v2282 = vsel %vm2274, %v2265, 0.0
  %v2283 = vsel %vm2274, %v2251, 0.0
  %v2284 = vsel %vm2274, %v2266, 0.0
  %v2285 = vsel %vm2274, %v2254, 0.0
  %v2286 = vsel %vm2274, %v2267, 0.0
  %2287 = vst [vmem:[#allocation1] ss:$2 sm:$0xff] %v2239
  %v2288 = vld.sshfl [vmem:[#allocation1] sm:$0xff pattern:$0x75316420]
  %s2289 = scalar_lea.vmem [#allocation1], 16
  %2290 = vst [vmem:[%s2289] ss:$2 sm:$0xff] %v2262
  %v2291 = vld.sshfl [vmem:[#allocation1 + $0x10] sm:$0xff pattern:$0x75316420]
  %s2292 = scalar_lea.vmem [#allocation1], 32
  %2293 = vst [vmem:[%s2292] ss:$2 sm:$0xff] %v2242
  %v2294 = vld.sshfl [vmem:[#allocation1 + $0x20] sm:$0xff pattern:$0x75316420]
  %s2295 = scalar_lea.vmem [#allocation1], 48
  %2296 = vst [vmem:[%s2295] ss:$2 sm:$0xff] %v2263
  %v2297 = vld.sshfl [vmem:[#allocation1 + $0x30] sm:$0xff pattern:$0x75316420]
  %2298 = vst [vmem:[#allocation1] ss:$2 sm:$0xff] %v2245
  %v2299 = vld.sshfl [vmem:[#allocation1] sm:$0xff pattern:$0x75316420]
  %2300 = vst [vmem:[%s2289] ss:$2 sm:$0xff] %v2264
  %v2301 = vld.sshfl [vmem:[#allocation1 + $0x10] sm:$0xff pattern:$0x75316420]
  %2302 = vst [vmem:[%s2292] ss:$2 sm:$0xff] %v2248
  %v2303 = vld.sshfl [vmem:[#allocation1 + $0x20] sm:$0xff pattern:$0x75316420]
  %2304 = vst [vmem:[%s2295] ss:$2 sm:$0xff] %v2265
  %v2305 = vld.sshfl [vmem:[#allocation1 + $0x30] sm:$0xff pattern:$0x75316420]
  %2306 = vst [vmem:[#allocation1] ss:$2 sm:$0xff] %v2251
  %v2307 = vld.sshfl [vmem:[#allocation1] sm:$0xff pattern:$0x75316420]
  %2308 = vst [vmem:[%s2289] ss:$2 sm:$0xff] %v2266
  %v2309 = vld.sshfl [vmem:[#allocation1 + $0x10] sm:$0xff pattern:$0x75316420]
  %2310 = vst [vmem:[%s2292] ss:$2 sm:$0xff] %v2254
  %v2311 = vld.sshfl [vmem:[#allocation1 + $0x20] sm:$0xff pattern:$0x75316420]
  %2312 = vst [vmem:[%s2295] ss:$2 sm:$0xff] %v2267
  %v2313 = vld.sshfl [vmem:[#allocation1 + $0x30] sm:$0xff pattern:$0x75316420]
  %v2314 = vrot.slane %v2288, 7
  %v2315 = vrot.slane %v2291, 7
  %v2316 = vrot.slane %v2294, 7
  %v2317 = vrot.slane %v2297, 7
  %v2318 = vrot.slane %v2299, 7
  %v2319 = vrot.slane %v2301, 7
  %v2320 = vrot.slane %v2303, 7
  %v2321 = vrot.slane %v2305, 7
  %v2322 = vrot.slane %v2307, 7
  %v2323 = vrot.slane %v2309, 7
  %v2324 = vrot.slane %v2311, 7
  %v2325 = vrot.slane %v2313, 7
  %2326 = vrot.lane.b32.xlu0 %v2314, 120
  %v2327 = vpop.permute.xlu0 %2326
  %2328 = vrot.lane.b32.xlu0 %v2315, 120
  %v2329 = vpop.permute.xlu0 %2328
  %2330 = vrot.lane.b32.xlu0 %v2316, 120
  %v2331 = vpop.permute.xlu0 %2330
  %2332 = vrot.lane.b32.xlu0 %v2317, 120
  %v2333 = vpop.permute.xlu0 %2332
  %2334 = vrot.lane.b32.xlu0 %v2318, 120
  %v2335 = vpop.permute.xlu0 %2334
  %2336 = vrot.lane.b32.xlu0 %v2319, 120
  %v2337 = vpop.permute.xlu0 %2336
  %2338 = vrot.lane.b32.xlu0 %v2320, 120
  %v2339 = vpop.permute.xlu0 %2338
  %2340 = vrot.lane.b32.xlu0 %v2321, 120
  %v2341 = vpop.permute.xlu0 %2340
  %2342 = vrot.lane.b32.xlu0 %v2322, 120
  %v2343 = vpop.permute.xlu0 %2342
  %2344 = vrot.lane.b32.xlu0 %v2323, 120
  %v2345 = vpop.permute.xlu0 %2344
  %2346 = vrot.lane.b32.xlu0 %v2324, 120
  %v2347 = vpop.permute.xlu0 %2346
  %2348 = vrot.lane.b32.xlu0 %v2325, 120
  %v2349 = vpop.permute.xlu0 %2348
  %v2362 = vsel %vm1641, 0.0, %v2327
  %v2363 = vsel %vm1641, 0.0, %v2329
  %v2364 = vsel %vm1641, 0.0, %v2331
  %v2365 = vsel %vm1641, 0.0, %v2333
  %v2366 = vsel %vm1641, 0.0, %v2335
  %v2367 = vsel %vm1641, 0.0, %v2337
  %v2368 = vsel %vm1641, 0.0, %v2339
  %v2369 = vsel %vm1641, 0.0, %v2341
  %v2370 = vsel %vm1641, 0.0, %v2343
  %v2371 = vsel %vm1641, 0.0, %v2345
  %v2372 = vsel %vm1641, 0.0, %v2347
  %v2373 = vsel %vm1641, 0.0, %v2349
  %v2374 = vadd.f32 %v2275, %v2362
  %v2375 = vadd.f32 %v2276, %v2363
  %v2376 = vadd.f32 %v2277, %v2364
  %v2377 = vadd.f32 %v2278, %v2365
  %v2378 = vadd.f32 %v2279, %v2366
  %v2379 = vadd.f32 %v2280, %v2367
  %v2380 = vadd.f32 %v2281, %v2368
  %v2381 = vadd.f32 %v2282, %v2369
  %v2382 = vadd.f32 %v2283, %v2370
  %v2383 = vadd.f32 %v2284, %v2371
  %v2384 = vadd.f32 %v2285, %v2372
  %v2385 = vadd.f32 %v2286, %v2373
  %v2386 = vld [vmem:[%s11] sm:$0x1]
  %v2388 = vperm.slane %v2386, 0
  %v2390 = vadd.f32 %v2374, %v2388
  %v2391 = vadd.f32 %v2375, %v2388
  %v2392 = vadd.f32 %v2376, %v2388
  %v2393 = vadd.f32 %v2377, %v2388
  %v2394 = vadd.f32 %v2378, %v2388
  %v2395 = vadd.f32 %v2379, %v2388
  %v2396 = vadd.f32 %v2380, %v2388
  %v2397 = vadd.f32 %v2381, %v2388
  %v2398 = vadd.f32 %v2382, %v2388
  %v2399 = vadd.f32 %v2383, %v2388
  %v2400 = vadd.f32 %v2384, %v2388
  %v2401 = vadd.f32 %v2385, %v2388
  %v2402 = vmax.f32 %v2390, 0.0
  %v2403 = vmax.f32 %v2391, 0.0
  %v2404 = vmax.f32 %v2392, 0.0
  %v2405 = vmax.f32 %v2393, 0.0
  %v2406 = vmax.f32 %v2394, 0.0
  %v2407 = vmax.f32 %v2395, 0.0
  %v2408 = vmax.f32 %v2396, 0.0
  %v2409 = vmax.f32 %v2397, 0.0
  %v2410 = vmax.f32 %v2398, 0.0
  %v2411 = vmax.f32 %v2399, 0.0
  %v2412 = vmax.f32 %v2400, 0.0
  %v2413 = vmax.f32 %v2401, 0.0
  %v2426 = vrot.slane %v2402, 1
  %v2427 = vrot.slane %v2402, 2
  %v2428 = vrot.slane %v2402, 3
  %v2429 = vrot.slane %v2402, 4
  %v2430 = vrot.slane %v2403, 1
  %v2431 = vrot.slane %v2403, 2
  %v2432 = vrot.slane %v2403, 3
  %v2433 = vrot.slane %v2403, 4
  %v2434 = vrot.slane %v2404, 1
  %v2435 = vrot.slane %v2404, 2
  %v2436 = vrot.slane %v2404, 3
  %v2437 = vrot.slane %v2404, 4
  %v2438 = vrot.slane %v2405, 1
  %v2439 = vrot.slane %v2405, 2
  %v2440 = vrot.slane %v2405, 3
  %v2441 = vrot.slane %v2405, 4
  %v2442 = vrot.slane %v2406, 1
  %v2443 = vrot.slane %v2406, 2
  %v2444 = vrot.slane %v2406, 3
  %v2445 = vrot.slane %v2406, 4
  %v2446 = vrot.slane %v2407, 1
  %v2447 = vrot.slane %v2407, 2
  %v2448 = vrot.slane %v2407, 3
  %v2449 = vrot.slane %v2407, 4
  %v2450 = vrot.slane %v2408, 1
  %v2451 = vrot.slane %v2408, 2
  %v2452 = vrot.slane %v2408, 3
  %v2453 = vrot.slane %v2408, 4
  %v2454 = vrot.slane %v2409, 1
  %v2455 = vrot.slane %v2409, 2
  %v2456 = vrot.slane %v2409, 3
  %v2457 = vrot.slane %v2409, 4
  %v2458 = vrot.slane %v2410, 1
  %v2459 = vrot.slane %v2410, 2
  %v2460 = vrot.slane %v2410, 3
  %v2461 = vrot.slane %v2410, 4
  %v2462 = vrot.slane %v2411, 1
  %v2463 = vrot.slane %v2411, 2
  %v2464 = vrot.slane %v2411, 3
  %v2465 = vrot.slane %v2411, 4
  %v2466 = vrot.slane %v2412, 1
  %v2467 = vrot.slane %v2412, 2
  %v2468 = vrot.slane %v2412, 3
  %v2469 = vrot.slane %v2412, 4
  %v2470 = vrot.slane %v2413, 1
  %v2471 = vrot.slane %v2413, 2
  %v2472 = vrot.slane %v2413, 3
  %v2473 = vrot.slane %v2413, 4
  %v2474 = vld [vmem:[%s14] sm:$0xff]
  %2475 = vst [vmem:[#allocation1] ss:$9 sm:$0xff] %v2402
  %s2476 = scalar_lea.vmem [#allocation1], 1
  %2477 = vst [vmem:[%s2476] ss:$9 sm:$0xff] %v2426
  %s2478 = scalar_lea.vmem [#allocation1], 2
  %2479 = vst [vmem:[%s2478] ss:$9 sm:$0xff] %v2427
  %s2480 = scalar_lea.vmem [#allocation1], 3
  %2481 = vst [vmem:[%s2480] ss:$9 sm:$0xff] %v2428
  %s2482 = scalar_lea.vmem [#allocation1], 4
  %2483 = vst [vmem:[%s2482] ss:$9 sm:$0xff] %v2429
  %s2484 = scalar_lea.vmem [#allocation1], 5
  %2485 = vst [vmem:[%s2484] ss:$9 sm:$0xff] %v2403
  %s2486 = scalar_lea.vmem [#allocation1], 6
  %2487 = vst [vmem:[%s2486] ss:$9 sm:$0xff] %v2430
  %s2488 = scalar_lea.vmem [#allocation1], 7
  %2489 = vst [vmem:[%s2488] ss:$9 sm:$0xff] %v2431
  %v2490 = vld [vmem:[#allocation1] sm:$0xff]
  %2491 = vst [vmem:[#allocation1] ss:$9 sm:$0xff] %v2432
  %2492 = vst [vmem:[%s2476] ss:$9 sm:$0xff] %v2433
  %2493 = vst [vmem:[%s2478] ss:$9 sm:$0xff] %v2404
  %2494 = vst [vmem:[%s2480] ss:$9 sm:$0xff] %v2434
  %2495 = vst [vmem:[%s2482] ss:$9 sm:$0xff] %v2435
  %2496 = vst [vmem:[%s2484] ss:$9 sm:$0xff] %v2436
  %2497 = vst [vmem:[%s2486] ss:$9 sm:$0xff] %v2437
  %2498 = vst [vmem:[%s2488] ss:$9 sm:$0xff] %v2405
  %v2499 = vld [vmem:[#allocation1] sm:$0xff]
  %2500 = vst [vmem:[#allocation1] ss:$9 sm:$0xff] %v2438
  %2501 = vst [vmem:[%s2476] ss:$9 sm:$0xff] %v2439
  %2502 = vst [vmem:[%s2478] ss:$9 sm:$0xff] %v2440
  %2503 = vst [vmem:[%s2480] ss:$9 sm:$0xff] %v2441
  %2504 = vst [vmem:[%s2482] ss:$9 sm:$0xff] %v2406
  %2505 = vst [vmem:[%s2484] ss:$9 sm:$0xff] %v2442
  %2506 = vst [vmem:[%s2486] ss:$9 sm:$0xff] %v2443
  %2507 = vst [vmem:[%s2488] ss:$9 sm:$0xff] %v2444
  %v2508 = vld [vmem:[#allocation1] sm:$0xff]
  %2509 = vst [vmem:[#allocation1] ss:$9 sm:$0xff] %v2445
  %2510 = vst [vmem:[%s2476] ss:$9 sm:$0xff] %v2407
  %2511 = vst [vmem:[%s2478] ss:$9 sm:$0xff] %v2446
  %2512 = vst [vmem:[%s2480] ss:$9 sm:$0xff] %v2447
  %2513 = vst [vmem:[%s2482] ss:$9 sm:$0xff] %v2448
  %2514 = vst [vmem:[%s2484] ss:$9 sm:$0xff] %v2449
  %2515 = vst [vmem:[%s2486] ss:$9 sm:$0xff] %v2408
  %2516 = vst [vmem:[%s2488] ss:$9 sm:$0xff] %v2450
  %v2517 = vld [vmem:[#allocation1] sm:$0xff]
  %2518 = vst [vmem:[#allocation1] ss:$9 sm:$0xff] %v2451
  %2519 = vst [vmem:[%s2476] ss:$9 sm:$0xff] %v2452
  %2520 = vst [vmem:[%s2478] ss:$9 sm:$0xff] %v2453
  %2521 = vst [vmem:[%s2480] ss:$9 sm:$0xff] %v2409
  %2522 = vst [vmem:[%s2482] ss:$9 sm:$0xff] %v2454
  %2523 = vst [vmem:[%s2484] ss:$9 sm:$0xff] %v2455
  %2524 = vst [vmem:[%s2486] ss:$9 sm:$0xff] %v2456
  %2525 = vst [vmem:[%s2488] ss:$9 sm:$0xff] %v2457
  %v2526 = vld [vmem:[#allocation1] sm:$0xff]
  %2527 = vst [vmem:[#allocation1] ss:$9 sm:$0xff] %v2410
  %2528 = vst [vmem:[%s2476] ss:$9 sm:$0xff] %v2458
  %2529 = vst [vmem:[%s2478] ss:$9 sm:$0xff] %v2459
  %2530 = vst [vmem:[%s2480] ss:$9 sm:$0xff] %v2460
  %2531 = vst [vmem:[%s2482] ss:$9 sm:$0xff] %v2461
  %2532 = vst [vmem:[%s2484] ss:$9 sm:$0xff] %v2411
  %2533 = vst [vmem:[%s2486] ss:$9 sm:$0xff] %v2462
  %2534 = vst [vmem:[%s2488] ss:$9 sm:$0xff] %v2463
  %v2535 = vld [vmem:[#allocation1] sm:$0xff]
  %2536 = vst [vmem:[#allocation1] ss:$9 sm:$0xff] %v2464
  %2537 = vst [vmem:[%s2476] ss:$9 sm:$0xff] %v2465
  %2538 = vst [vmem:[%s2478] ss:$9 sm:$0xff] %v2412
  %2539 = vst [vmem:[%s2480] ss:$9 sm:$0xff] %v2466
  %2540 = vst [vmem:[%s2482] ss:$9 sm:$0xff] %v2467
  %2541 = vst [vmem:[%s2484] ss:$9 sm:$0xff] %v2468
  %2542 = vst [vmem:[%s2486] ss:$9 sm:$0xff] %v2469
  %2543 = vst [vmem:[%s2488] ss:$9 sm:$0xff] %v2413
  %v2544 = vld [vmem:[#allocation1] sm:$0xff]
  %2545 = vst [vmem:[#allocation1] ss:$9 sm:$0xff] %v2470
  %2546 = vst [vmem:[%s2476] ss:$9 sm:$0xff] %v2471
  %2547 = vst [vmem:[%s2478] ss:$9 sm:$0xff] %v2472
  %2548 = vst [vmem:[%s2480] ss:$9 sm:$0xff] %v2473
  %v2549 = vld [vmem:[#allocation1] sm:$0xff]
  %v2550 = vsel %vm1324, %v2490, 0
  %v2552 = vsel %vm1324, %v2499, 0
  %v2554 = vsel %vm1324, %v2508, 0
  %v2556 = vsel %vm1324, %v2517, 0
  %v2558 = vsel %vm1324, %v2526, 0
  %v2560 = vsel %vm1324, %v2535, 0
  %v2562 = vsel %vm1324, %v2544, 0
  %v2564 = vsel %vm1324, %v2549, 0
  %2566 = vmatpush.msra.mxu0 0.0
  %2567 = vmatpush.msra.mxu0 0.0
  %2568 = vmatpush.msra.mxu0 0.0
  %2569 = vmatpush.msra.mxu0 0.0
  %2570 = vmatpush.msra.mxu0 0.0
  %2571 = vmatpush.msra.mxu0 0.0
  %2572 = vmatpush.msra.mxu0 0.0
  %2573 = vmatpush.msra.mxu0 0.0
  %2574 = vmatpush.msra.mxu0 0.0
  %2575 = vmatpush.msra.mxu0 0.0
  %2576 = vmatpush.msra.mxu0 0.0
  %2577 = vmatpush.msra.mxu0 0.0
  %2578 = vmatpush.msra.mxu0 0.0
  %2579 = vmatpush.msra.mxu0 0.0
  %2580 = vmatpush.msra.mxu0 0.0
  %2581 = vmatpush.msra.mxu0 %v2474
  %2582 = vmatmul.f32.gmra.mxu0 %v2550
  %v2583 = vpop.f32.mrf.mxu0
  %v2584 = vadd.f32 0.0, %v2583
  %2585 = vmatmul.f32.gmra.mxu0 %v2552
  %v2586 = vpop.f32.mrf.mxu0
  %v2587 = vadd.f32 0.0, %v2586
  %2588 = vmatmul.f32.gmra.mxu0 %v2554
  %v2589 = vpop.f32.mrf.mxu0
  %v2590 = vadd.f32 0.0, %v2589
  %2591 = vmatmul.f32.gmra.mxu0 %v2556
  %v2592 = vpop.f32.mrf.mxu0
  %v2593 = vadd.f32 0.0, %v2592
  %2594 = vmatmul.f32.gmra.mxu0 %v2558
  %v2595 = vpop.f32.mrf.mxu0
  %v2596 = vadd.f32 0.0, %v2595
  %2597 = vmatmul.f32.gmra.mxu0 %v2560
  %v2598 = vpop.f32.mrf.mxu0
  %v2599 = vadd.f32 0.0, %v2598
  %2600 = vmatmul.f32.gmra.mxu0 %v2562
  %v2601 = vpop.f32.mrf.mxu0
  %v2602 = vadd.f32 0.0, %v2601
  %2603 = vmatmul.f32.gmra.mxu0 %v2564
  %v2604 = vpop.f32.mrf.mxu0
  %v2605 = vadd.f32 0.0, %v2604
  %2606 = vdwg.mxu0
  %v2615 = vrot.slane %v2584, 1
  %v2616 = vrot.slane %v2584, 2
  %v2617 = vrot.slane %v2584, 3
  %v2618 = vrot.slane %v2584, 4
  %v2619 = vrot.slane %v2584, 5
  %v2620 = vrot.slane %v2584, 6
  %v2621 = vrot.slane %v2584, 7
  %v2622 = vrot.slane %v2587, 1
  %v2623 = vrot.slane %v2587, 2
  %v2624 = vrot.slane %v2587, 3
  %v2625 = vrot.slane %v2587, 4
  %v2626 = vrot.slane %v2587, 5
  %v2627 = vrot.slane %v2587, 6
  %v2628 = vrot.slane %v2587, 7
  %v2629 = vrot.slane %v2590, 1
  %v2630 = vrot.slane %v2590, 2
  %v2631 = vrot.slane %v2590, 3
  %v2632 = vrot.slane %v2590, 4
  %v2633 = vrot.slane %v2590, 5
  %v2634 = vrot.slane %v2590, 6
  %v2635 = vrot.slane %v2590, 7
  %v2636 = vrot.slane %v2593, 1
  %v2637 = vrot.slane %v2593, 2
  %v2638 = vrot.slane %v2593, 3
  %v2639 = vrot.slane %v2593, 4
  %v2640 = vrot.slane %v2593, 5
  %v2641 = vrot.slane %v2593, 6
  %v2642 = vrot.slane %v2593, 7
  %v2643 = vrot.slane %v2596, 1
  %v2644 = vrot.slane %v2596, 2
  %v2645 = vrot.slane %v2596, 3
  %v2646 = vrot.slane %v2596, 4
  %v2647 = vrot.slane %v2596, 5
  %v2648 = vrot.slane %v2596, 6
  %v2649 = vrot.slane %v2596, 7
  %v2650 = vrot.slane %v2599, 1
  %v2651 = vrot.slane %v2599, 2
  %v2652 = vrot.slane %v2599, 3
  %v2653 = vrot.slane %v2599, 4
  %v2654 = vrot.slane %v2599, 5
  %v2655 = vrot.slane %v2599, 6
  %v2656 = vrot.slane %v2599, 7
  %v2657 = vrot.slane %v2602, 1
  %v2658 = vrot.slane %v2602, 2
  %v2659 = vrot.slane %v2602, 3
  %v2660 = vrot.slane %v2602, 4
  %v2661 = vrot.slane %v2602, 5
  %v2662 = vrot.slane %v2602, 6
  %v2663 = vrot.slane %v2602, 7
  %v2664 = vrot.slane %v2605, 1
  %v2665 = vrot.slane %v2605, 2
  %v2666 = vrot.slane %v2605, 3
  %v2719 = vld [vmem:[%s16] sm:$0x1]
  %v2721 = vperm.slane %v2719, 0
  %v2723 = vrot.slane %v2721, 1
  %v2724 = vrot.slane %v2721, 2
  %v2725 = vrot.slane %v2721, 3
  %v2726 = vrot.slane %v2721, 4
  %v2731 = vadd.f32 %v2584, %v2721
  %v2732 = vadd.f32 %v2615, %v2723
  %v2733 = vadd.f32 %v2616, %v2724
  %v2734 = vadd.f32 %v2617, %v2725
  %v2735 = vadd.f32 %v2618, %v2726
  %v2736 = vadd.f32 %v2619, %v2721
  %v2737 = vadd.f32 %v2620, %v2723
  %v2738 = vadd.f32 %v2621, %v2724
  %v2739 = vadd.f32 %v2587, %v2725
  %v2740 = vadd.f32 %v2622, %v2726
  %v2741 = vadd.f32 %v2623, %v2721
  %v2742 = vadd.f32 %v2624, %v2723
  %v2743 = vadd.f32 %v2625, %v2724
  %v2744 = vadd.f32 %v2626, %v2725
  %v2745 = vadd.f32 %v2627, %v2726
  %v2746 = vadd.f32 %v2628, %v2721
  %v2747 = vadd.f32 %v2590, %v2723
  %v2748 = vadd.f32 %v2629, %v2724
  %v2749 = vadd.f32 %v2630, %v2725
  %v2750 = vadd.f32 %v2631, %v2726
  %v2751 = vadd.f32 %v2632, %v2721
  %v2752 = vadd.f32 %v2633, %v2723
  %v2753 = vadd.f32 %v2634, %v2724
  %v2754 = vadd.f32 %v2635, %v2725
  %v2755 = vadd.f32 %v2593, %v2726
  %v2756 = vadd.f32 %v2636, %v2721
  %v2757 = vadd.f32 %v2637, %v2723
  %v2758 = vadd.f32 %v2638, %v2724
  %v2759 = vadd.f32 %v2639, %v2725
  %v2760 = vadd.f32 %v2640, %v2726
  %v2761 = vadd.f32 %v2641, %v2721
  %v2762 = vadd.f32 %v2642, %v2723
  %v2763 = vadd.f32 %v2596, %v2724
  %v2764 = vadd.f32 %v2643, %v2725
  %v2765 = vadd.f32 %v2644, %v2726
  %v2766 = vadd.f32 %v2645, %v2721
  %v2767 = vadd.f32 %v2646, %v2723
  %v2768 = vadd.f32 %v2647, %v2724
  %v2769 = vadd.f32 %v2648, %v2725
  %v2770 = vadd.f32 %v2649, %v2726
  %v2771 = vadd.f32 %v2599, %v2721
  %v2772 = vadd.f32 %v2650, %v2723
  %v2773 = vadd.f32 %v2651, %v2724
  %v2774 = vadd.f32 %v2652, %v2725
  %v2775 = vadd.f32 %v2653, %v2726
  %v2776 = vadd.f32 %v2654, %v2721
  %v2777 = vadd.f32 %v2655, %v2723
  %v2778 = vadd.f32 %v2656, %v2724
  %v2779 = vadd.f32 %v2602, %v2725
  %v2780 = vadd.f32 %v2657, %v2726
  %v2781 = vadd.f32 %v2658, %v2721
  %v2782 = vadd.f32 %v2659, %v2723
  %v2783 = vadd.f32 %v2660, %v2724
  %v2784 = vadd.f32 %v2661, %v2725
  %v2785 = vadd.f32 %v2662, %v2726
  %v2786 = vadd.f32 %v2663, %v2721
  %v2787 = vadd.f32 %v2605, %v2723
  %v2788 = vadd.f32 %v2664, %v2724
  %v2789 = vadd.f32 %v2665, %v2725
  %v2790 = vadd.f32 %v2666, %v2726
  %s2791 = scalar_lea.vmem %s14, 8
  %v2792 = vld [vmem:[%s2791] sm:$0xff]
  %2793 = vst [vmem:[#allocation1] ss:$9 sm:$0xff] %v2402
  %s2794 = scalar_lea.vmem [#allocation1], 1
  %2795 = vst [vmem:[%s2794] ss:$9 sm:$0xff] %v2426
  %s2796 = scalar_lea.vmem [#allocation1], 2
  %2797 = vst [vmem:[%s2796] ss:$9 sm:$0xff] %v2427
  %s2798 = scalar_lea.vmem [#allocation1], 3
  %2799 = vst [vmem:[%s2798] ss:$9 sm:$0xff] %v2428
  %s2800 = scalar_lea.vmem [#allocation1], 4
  %2801 = vst [vmem:[%s2800] ss:$9 sm:$0xff] %v2429
  %s2802 = scalar_lea.vmem [#allocation1], 5
  %2803 = vst [vmem:[%s2802] ss:$9 sm:$0xff] %v2403
  %s2804 = scalar_lea.vmem [#allocation1], 6
  %2805 = vst [vmem:[%s2804] ss:$9 sm:$0xff] %v2430
  %s2806 = scalar_lea.vmem [#allocation1], 7
  %2807 = vst [vmem:[%s2806] ss:$9 sm:$0xff] %v2431
  %v2808 = vld [vmem:[#allocation1] sm:$0xff]
  %2809 = vst [vmem:[#allocation1] ss:$9 sm:$0xff] %v2432
  %2810 = vst [vmem:[%s2794] ss:$9 sm:$0xff] %v2433
  %2811 = vst [vmem:[%s2796] ss:$9 sm:$0xff] %v2404
  %2812 = vst [vmem:[%s2798] ss:$9 sm:$0xff] %v2434
  %2813 = vst [vmem:[%s2800] ss:$9 sm:$0xff] %v2435
  %2814 = vst [vmem:[%s2802] ss:$9 sm:$0xff] %v2436
  %2815 = vst [vmem:[%s2804] ss:$9 sm:$0xff] %v2437
  %2816 = vst [vmem:[%s2806] ss:$9 sm:$0xff] %v2405
  %v2817 = vld [vmem:[#allocation1] sm:$0xff]
  %2818 = vst [vmem:[#allocation1] ss:$9 sm:$0xff] %v2438
  %2819 = vst [vmem:[%s2794] ss:$9 sm:$0xff] %v2439
  %2820 = vst [vmem:[%s2796] ss:$9 sm:$0xff] %v2440
  %2821 = vst [vmem:[%s2798] ss:$9 sm:$0xff] %v2441
  %2822 = vst [vmem:[%s2800] ss:$9 sm:$0xff] %v2406
  %2823 = vst [vmem:[%s2802] ss:$9 sm:$0xff] %v2442
  %2824 = vst [vmem:[%s2804] ss:$9 sm:$0xff] %v2443
  %2825 = vst [vmem:[%s2806] ss:$9 sm:$0xff] %v2444
  %v2826 = vld [vmem:[#allocation1] sm:$0xff]
  %2827 = vst [vmem:[#allocation1] ss:$9 sm:$0xff] %v2445
  %2828 = vst [vmem:[%s2794] ss:$9 sm:$0xff] %v2407
  %2829 = vst [vmem:[%s2796] ss:$9 sm:$0xff] %v2446
  %2830 = vst [vmem:[%s2798] ss:$9 sm:$0xff] %v2447
  %2831 = vst [vmem:[%s2800] ss:$9 sm:$0xff] %v2448
  %2832 = vst [vmem:[%s2802] ss:$9 sm:$0xff] %v2449
  %2833 = vst [vmem:[%s2804] ss:$9 sm:$0xff] %v2408
  %2834 = vst [vmem:[%s2806] ss:$9 sm:$0xff] %v2450
  %v2835 = vld [vmem:[#allocation1] sm:$0xff]
  %2836 = vst [vmem:[#allocation1] ss:$9 sm:$0xff] %v2451
  %2837 = vst [vmem:[%s2794] ss:$9 sm:$0xff] %v2452
  %2838 = vst [vmem:[%s2796] ss:$9 sm:$0xff] %v2453
  %2839 = vst [vmem:[%s2798] ss:$9 sm:$0xff] %v2409
  %2840 = vst [vmem:[%s2800] ss:$9 sm:$0xff] %v2454
  %2841 = vst [vmem:[%s2802] ss:$9 sm:$0xff] %v2455
  %2842 = vst [vmem:[%s2804] ss:$9 sm:$0xff] %v2456
  %2843 = vst [vmem:[%s2806] ss:$9 sm:$0xff] %v2457
  %v2844 = vld [vmem:[#allocation1] sm:$0xff]
  %2845 = vst [vmem:[#allocation1] ss:$9 sm:$0xff] %v2410
  %2846 = vst [vmem:[%s2794] ss:$9 sm:$0xff] %v2458
  %2847 = vst [vmem:[%s2796] ss:$9 sm:$0xff] %v2459
  %2848 = vst [vmem:[%s2798] ss:$9 sm:$0xff] %v2460
  %2849 = vst [vmem:[%s2800] ss:$9 sm:$0xff] %v2461
  %2850 = vst [vmem:[%s2802] ss:$9 sm:$0xff] %v2411
  %2851 = vst [vmem:[%s2804] ss:$9 sm:$0xff] %v2462
  %2852 = vst [vmem:[%s2806] ss:$9 sm:$0xff] %v2463
  %v2853 = vld [vmem:[#allocation1] sm:$0xff]
  %2854 = vst [vmem:[#allocation1] ss:$9 sm:$0xff] %v2464
  %2855 = vst [vmem:[%s2794] ss:$9 sm:$0xff] %v2465
  %2856 = vst [vmem:[%s2796] ss:$9 sm:$0xff] %v2412
  %2857 = vst [vmem:[%s2798] ss:$9 sm:$0xff] %v2466
  %2858 = vst [vmem:[%s2800] ss:$9 sm:$0xff] %v2467
  %2859 = vst [vmem:[%s2802] ss:$9 sm:$0xff] %v2468
  %2860 = vst [vmem:[%s2804] ss:$9 sm:$0xff] %v2469
  %2861 = vst [vmem:[%s2806] ss:$9 sm:$0xff] %v2413
  %v2862 = vld [vmem:[#allocation1] sm:$0xff]
  %2863 = vst [vmem:[#allocation1] ss:$9 sm:$0xff] %v2470
  %2864 = vst [vmem:[%s2794] ss:$9 sm:$0xff] %v2471
  %2865 = vst [vmem:[%s2796] ss:$9 sm:$0xff] %v2472
  %2866 = vst [vmem:[%s2798] ss:$9 sm:$0xff] %v2473
  %v2867 = vld [vmem:[#allocation1] sm:$0xff]
  %v2868 = vsel %vm1324, %v2808, 0
  %v2870 = vsel %vm1324, %v2817, 0
  %v2872 = vsel %vm1324, %v2826, 0
  %v2874 = vsel %vm1324, %v2835, 0
  %v2876 = vsel %vm1324, %v2844, 0
  %v2878 = vsel %vm1324, %v2853, 0
  %v2880 = vsel %vm1324, %v2862, 0
  %v2882 = vsel %vm1324, %v2867, 0
  %2884 = vmatpush.msra.mxu0 0.0
  %2885 = vmatpush.msra.mxu0 0.0
  %2886 = vmatpush.msra.mxu0 0.0
  %2887 = vmatpush.msra.mxu0 0.0
  %2888 = vmatpush.msra.mxu0 0.0
  %2889 = vmatpush.msra.mxu0 0.0
  %2890 = vmatpush.msra.mxu0 0.0
  %2891 = vmatpush.msra.mxu0 0.0
  %2892 = vmatpush.msra.mxu0 0.0
  %2893 = vmatpush.msra.mxu0 0.0
  %2894 = vmatpush.msra.mxu0 0.0
  %2895 = vmatpush.msra.mxu0 0.0
  %2896 = vmatpush.msra.mxu0 0.0
  %2897 = vmatpush.msra.mxu0 0.0
  %2898 = vmatpush.msra.mxu0 0.0
  %2899 = vmatpush.msra.mxu0 %v2792
  %2900 = vmatmul.f32.gmra.mxu0 %v2868
  %v2901 = vpop.f32.mrf.mxu0
  %v2902 = vadd.f32 0.0, %v2901
  %2903 = vmatmul.f32.gmra.mxu0 %v2870
  %v2904 = vpop.f32.mrf.mxu0
  %v2905 = vadd.f32 0.0, %v2904
  %2906 = vmatmul.f32.gmra.mxu0 %v2872
  %v2907 = vpop.f32.mrf.mxu0
  %v2908 = vadd.f32 0.0, %v2907
  %2909 = vmatmul.f32.gmra.mxu0 %v2874
  %v2910 = vpop.f32.mrf.mxu0
  %v2911 = vadd.f32 0.0, %v2910
  %2912 = vmatmul.f32.gmra.mxu0 %v2876
  %v2913 = vpop.f32.mrf.mxu0
  %v2914 = vadd.f32 0.0, %v2913
  %2915 = vmatmul.f32.gmra.mxu0 %v2878
  %v2916 = vpop.f32.mrf.mxu0
  %v2917 = vadd.f32 0.0, %v2916
  %2918 = vmatmul.f32.gmra.mxu0 %v2880
  %v2919 = vpop.f32.mrf.mxu0
  %v2920 = vadd.f32 0.0, %v2919
  %2921 = vmatmul.f32.gmra.mxu0 %v2882
  %v2922 = vpop.f32.mrf.mxu0
  %v2923 = vadd.f32 0.0, %v2922
  %2924 = vdwg.mxu0
  %v2933 = vrot.slane %v2902, 1
  %v2934 = vrot.slane %v2902, 2
  %v2935 = vrot.slane %v2902, 3
  %v2936 = vrot.slane %v2902, 4
  %v2937 = vrot.slane %v2902, 5
  %v2938 = vrot.slane %v2902, 6
  %v2939 = vrot.slane %v2902, 7
  %v2940 = vrot.slane %v2905, 1
  %v2941 = vrot.slane %v2905, 2
  %v2942 = vrot.slane %v2905, 3
  %v2943 = vrot.slane %v2905, 4
  %v2944 = vrot.slane %v2905, 5
  %v2945 = vrot.slane %v2905, 6
  %v2946 = vrot.slane %v2905, 7
  %v2947 = vrot.slane %v2908, 1
  %v2948 = vrot.slane %v2908, 2
  %v2949 = vrot.slane %v2908, 3
  %v2950 = vrot.slane %v2908, 4
  %v2951 = vrot.slane %v2908, 5
  %v2952 = vrot.slane %v2908, 6
  %v2953 = vrot.slane %v2908, 7
  %v2954 = vrot.slane %v2911, 1
  %v2955 = vrot.slane %v2911, 2
  %v2956 = vrot.slane %v2911, 3
  %v2957 = vrot.slane %v2911, 4
  %v2958 = vrot.slane %v2911, 5
  %v2959 = vrot.slane %v2911, 6
  %v2960 = vrot.slane %v2911, 7
  %v2961 = vrot.slane %v2914, 1
  %v2962 = vrot.slane %v2914, 2
  %v2963 = vrot.slane %v2914, 3
  %v2964 = vrot.slane %v2914, 4
  %v2965 = vrot.slane %v2914, 5
  %v2966 = vrot.slane %v2914, 6
  %v2967 = vrot.slane %v2914, 7
  %v2968 = vrot.slane %v2917, 1
  %v2969 = vrot.slane %v2917, 2
  %v2970 = vrot.slane %v2917, 3
  %v2971 = vrot.slane %v2917, 4
  %v2972 = vrot.slane %v2917, 5
  %v2973 = vrot.slane %v2917, 6
  %v2974 = vrot.slane %v2917, 7
  %v2975 = vrot.slane %v2920, 1
  %v2976 = vrot.slane %v2920, 2
  %v2977 = vrot.slane %v2920, 3
  %v2978 = vrot.slane %v2920, 4
  %v2979 = vrot.slane %v2920, 5
  %v2980 = vrot.slane %v2920, 6
  %v2981 = vrot.slane %v2920, 7
  %v2982 = vrot.slane %v2923, 1
  %v2983 = vrot.slane %v2923, 2
  %v2984 = vrot.slane %v2923, 3
  %s3037 = scalar_lea.vmem %s16, 1
  %v3038 = vld [vmem:[%s3037] sm:$0x1]
  %v3040 = vperm.slane %v3038, 0
  %v3042 = vrot.slane %v3040, 1
  %v3043 = vrot.slane %v3040, 2
  %v3044 = vrot.slane %v3040, 3
  %v3045 = vrot.slane %v3040, 4
  %v3050 = vadd.f32 %v2902, %v3040
  %v3051 = vadd.f32 %v2933, %v3042
  %v3052 = vadd.f32 %v2934, %v3043
  %v3053 = vadd.f32 %v2935, %v3044
  %v3054 = vadd.f32 %v2936, %v3045
  %v3055 = vadd.f32 %v2937, %v3040
  %v3056 = vadd.f32 %v2938, %v3042
  %v3057 = vadd.f32 %v2939, %v3043
  %v3058 = vadd.f32 %v2905, %v3044
  %v3059 = vadd.f32 %v2940, %v3045
  %v3060 = vadd.f32 %v2941, %v3040
  %v3061 = vadd.f32 %v2942, %v3042
  %v3062 = vadd.f32 %v2943, %v3043
  %v3063 = vadd.f32 %v2944, %v3044
  %v3064 = vadd.f32 %v2945, %v3045
  %v3065 = vadd.f32 %v2946, %v3040
  %v3066 = vadd.f32 %v2908, %v3042
  %v3067 = vadd.f32 %v2947, %v3043
  %v3068 = vadd.f32 %v2948, %v3044
  %v3069 = vadd.f32 %v2949, %v3045
  %v3070 = vadd.f32 %v2950, %v3040
  %v3071 = vadd.f32 %v2951, %v3042
  %v3072 = vadd.f32 %v2952, %v3043
  %v3073 = vadd.f32 %v2953, %v3044
  %v3074 = vadd.f32 %v2911, %v3045
  %v3075 = vadd.f32 %v2954, %v3040
  %v3076 = vadd.f32 %v2955, %v3042
  %v3077 = vadd.f32 %v2956, %v3043
  %v3078 = vadd.f32 %v2957, %v3044
  %v3079 = vadd.f32 %v2958, %v3045
  %v3080 = vadd.f32 %v2959, %v3040
  %v3081 = vadd.f32 %v2960, %v3042
  %v3082 = vadd.f32 %v2914, %v3043
  %v3083 = vadd.f32 %v2961, %v3044
  %v3084 = vadd.f32 %v2962, %v3045
  %v3085 = vadd.f32 %v2963, %v3040
  %v3086 = vadd.f32 %v2964, %v3042
  %v3087 = vadd.f32 %v2965, %v3043
  %v3088 = vadd.f32 %v2966, %v3044
  %v3089 = vadd.f32 %v2967, %v3045
  %v3090 = vadd.f32 %v2917, %v3040
  %v3091 = vadd.f32 %v2968, %v3042
  %v3092 = vadd.f32 %v2969, %v3043
  %v3093 = vadd.f32 %v2970, %v3044
  %v3094 = vadd.f32 %v2971, %v3045
  %v3095 = vadd.f32 %v2972, %v3040
  %v3096 = vadd.f32 %v2973, %v3042
  %v3097 = vadd.f32 %v2974, %v3043
  %v3098 = vadd.f32 %v2920, %v3044
  %v3099 = vadd.f32 %v2975, %v3045
  %v3100 = vadd.f32 %v2976, %v3040
  %v3101 = vadd.f32 %v2977, %v3042
  %v3102 = vadd.f32 %v2978, %v3043
  %v3103 = vadd.f32 %v2979, %v3044
  %v3104 = vadd.f32 %v2980, %v3045
  %v3105 = vadd.f32 %v2981, %v3040
  %v3106 = vadd.f32 %v2923, %v3042
  %v3107 = vadd.f32 %v2982, %v3043
  %v3108 = vadd.f32 %v2983, %v3044
  %v3109 = vadd.f32 %v2984, %v3045
  %s3110 = scalar_lea.vmem %s14, 16
  %v3111 = vld [vmem:[%s3110] sm:$0xff]
  %3112 = vst [vmem:[#allocation1] ss:$9 sm:$0xff] %v2402
  %s3113 = scalar_lea.vmem [#allocation1], 1
  %3114 = vst [vmem:[%s3113] ss:$9 sm:$0xff] %v2426
  %s3115 = scalar_lea.vmem [#allocation1], 2
  %3116 = vst [vmem:[%s3115] ss:$9 sm:$0xff] %v2427
  %s3117 = scalar_lea.vmem [#allocation1], 3
  %3118 = vst [vmem:[%s3117] ss:$9 sm:$0xff] %v2428
  %s3119 = scalar_lea.vmem [#allocation1], 4
  %3120 = vst [vmem:[%s3119] ss:$9 sm:$0xff] %v2429
  %s3121 = scalar_lea.vmem [#allocation1], 5
  %3122 = vst [vmem:[%s3121] ss:$9 sm:$0xff] %v2403
  %s3123 = scalar_lea.vmem [#allocation1], 6
  %3124 = vst [vmem:[%s3123] ss:$9 sm:$0xff] %v2430
  %s3125 = scalar_lea.vmem [#allocation1], 7
  %3126 = vst [vmem:[%s3125] ss:$9 sm:$0xff] %v2431
  %v3127 = vld [vmem:[#allocation1] sm:$0xff]
  %3128 = vst [vmem:[#allocation1] ss:$9 sm:$0xff] %v2432
  %3129 = vst [vmem:[%s3113] ss:$9 sm:$0xff] %v2433
  %3130 = vst [vmem:[%s3115] ss:$9 sm:$0xff] %v2404
  %3131 = vst [vmem:[%s3117] ss:$9 sm:$0xff] %v2434
  %3132 = vst [vmem:[%s3119] ss:$9 sm:$0xff] %v2435
  %3133 = vst [vmem:[%s3121] ss:$9 sm:$0xff] %v2436
  %3134 = vst [vmem:[%s3123] ss:$9 sm:$0xff] %v2437
  %3135 = vst [vmem:[%s3125] ss:$9 sm:$0xff] %v2405
  %v3136 = vld [vmem:[#allocation1] sm:$0xff]
  %3137 = vst [vmem:[#allocation1] ss:$9 sm:$0xff] %v2438
  %3138 = vst [vmem:[%s3113] ss:$9 sm:$0xff] %v2439
  %3139 = vst [vmem:[%s3115] ss:$9 sm:$0xff] %v2440
  %3140 = vst [vmem:[%s3117] ss:$9 sm:$0xff] %v2441
  %3141 = vst [vmem:[%s3119] ss:$9 sm:$0xff] %v2406
  %3142 = vst [vmem:[%s3121] ss:$9 sm:$0xff] %v2442
  %3143 = vst [vmem:[%s3123] ss:$9 sm:$0xff] %v2443
  %3144 = vst [vmem:[%s3125] ss:$9 sm:$0xff] %v2444
  %v3145 = vld [vmem:[#allocation1] sm:$0xff]
  %3146 = vst [vmem:[#allocation1] ss:$9 sm:$0xff] %v2445
  %3147 = vst [vmem:[%s3113] ss:$9 sm:$0xff] %v2407
  %3148 = vst [vmem:[%s3115] ss:$9 sm:$0xff] %v2446
  %3149 = vst [vmem:[%s3117] ss:$9 sm:$0xff] %v2447
  %3150 = vst [vmem:[%s3119] ss:$9 sm:$0xff] %v2448
  %3151 = vst [vmem:[%s3121] ss:$9 sm:$0xff] %v2449
  %3152 = vst [vmem:[%s3123] ss:$9 sm:$0xff] %v2408
  %3153 = vst [vmem:[%s3125] ss:$9 sm:$0xff] %v2450
  %v3154 = vld [vmem:[#allocation1] sm:$0xff]
  %3155 = vst [vmem:[#allocation1] ss:$9 sm:$0xff] %v2451
  %3156 = vst [vmem:[%s3113] ss:$9 sm:$0xff] %v2452
  %3157 = vst [vmem:[%s3115] ss:$9 sm:$0xff] %v2453
  %3158 = vst [vmem:[%s3117] ss:$9 sm:$0xff] %v2409
  %3159 = vst [vmem:[%s3119] ss:$9 sm:$0xff] %v2454
  %3160 = vst [vmem:[%s3121] ss:$9 sm:$0xff] %v2455
  %3161 = vst [vmem:[%s3123] ss:$9 sm:$0xff] %v2456
  %3162 = vst [vmem:[%s3125] ss:$9 sm:$0xff] %v2457
  %v3163 = vld [vmem:[#allocation1] sm:$0xff]
  %3164 = vst [vmem:[#allocation1] ss:$9 sm:$0xff] %v2410
  %3165 = vst [vmem:[%s3113] ss:$9 sm:$0xff] %v2458
  %3166 = vst [vmem:[%s3115] ss:$9 sm:$0xff] %v2459
  %3167 = vst [vmem:[%s3117] ss:$9 sm:$0xff] %v2460
  %3168 = vst [vmem:[%s3119] ss:$9 sm:$0xff] %v2461
  %3169 = vst [vmem:[%s3121] ss:$9 sm:$0xff] %v2411
  %3170 = vst [vmem:[%s3123] ss:$9 sm:$0xff] %v2462
  %3171 = vst [vmem:[%s3125] ss:$9 sm:$0xff] %v2463
  %v3172 = vld [vmem:[#allocation1] sm:$0xff]
  %3173 = vst [vmem:[#allocation1] ss:$9 sm:$0xff] %v2464
  %3174 = vst [vmem:[%s3113] ss:$9 sm:$0xff] %v2465
  %3175 = vst [vmem:[%s3115] ss:$9 sm:$0xff] %v2412
  %3176 = vst [vmem:[%s3117] ss:$9 sm:$0xff] %v2466
  %3177 = vst [vmem:[%s3119] ss:$9 sm:$0xff] %v2467
  %3178 = vst [vmem:[%s3121] ss:$9 sm:$0xff] %v2468
  %3179 = vst [vmem:[%s3123] ss:$9 sm:$0xff] %v2469
  %3180 = vst [vmem:[%s3125] ss:$9 sm:$0xff] %v2413
  %v3181 = vld [vmem:[#allocation1] sm:$0xff]
  %3182 = vst [vmem:[#allocation1] ss:$9 sm:$0xff] %v2470
  %3183 = vst [vmem:[%s3113] ss:$9 sm:$0xff] %v2471
  %3184 = vst [vmem:[%s3115] ss:$9 sm:$0xff] %v2472
  %3185 = vst [vmem:[%s3117] ss:$9 sm:$0xff] %v2473
  %v3186 = vld [vmem:[#allocation1] sm:$0xff]
  %v3187 = vsel %vm1324, %v3127, 0
  %v3189 = vsel %vm1324, %v3136, 0
  %v3191 = vsel %vm1324, %v3145, 0
  %v3193 = vsel %vm1324, %v3154, 0
  %v3195 = vsel %vm1324, %v3163, 0
  %v3197 = vsel %vm1324, %v3172, 0
  %v3199 = vsel %vm1324, %v3181, 0
  %v3201 = vsel %vm1324, %v3186, 0
  %3203 = vmatpush.msra.mxu0 0.0
  %3204 = vmatpush.msra.mxu0 0.0
  %3205 = vmatpush.msra.mxu0 0.0
  %3206 = vmatpush.msra.mxu0 0.0
  %3207 = vmatpush.msra.mxu0 0.0
  %3208 = vmatpush.msra.mxu0 0.0
  %3209 = vmatpush.msra.mxu0 0.0
  %3210 = vmatpush.msra.mxu0 0.0
  %3211 = vmatpush.msra.mxu0 0.0
  %3212 = vmatpush.msra.mxu0 0.0
  %3213 = vmatpush.msra.mxu0 0.0
  %3214 = vmatpush.msra.mxu0 0.0
  %3215 = vmatpush.msra.mxu0 0.0
  %3216 = vmatpush.msra.mxu0 0.0
  %3217 = vmatpush.msra.mxu0 0.0
  %3218 = vmatpush.msra.mxu0 %v3111
  %3219 = vmatmul.f32.gmra.mxu0 %v3187
  %v3220 = vpop.f32.mrf.mxu0
  %v3221 = vadd.f32 0.0, %v3220
  %3222 = vmatmul.f32.gmra.mxu0 %v3189
  %v3223 = vpop.f32.mrf.mxu0
  %v3224 = vadd.f32 0.0, %v3223
  %3225 = vmatmul.f32.gmra.mxu0 %v3191
  %v3226 = vpop.f32.mrf.mxu0
  %v3227 = vadd.f32 0.0, %v3226
  %3228 = vmatmul.f32.gmra.mxu0 %v3193
  %v3229 = vpop.f32.mrf.mxu0
  %v3230 = vadd.f32 0.0, %v3229
  %3231 = vmatmul.f32.gmra.mxu0 %v3195
  %v3232 = vpop.f32.mrf.mxu0
  %v3233 = vadd.f32 0.0, %v3232
  %3234 = vmatmul.f32.gmra.mxu0 %v3197
  %v3235 = vpop.f32.mrf.mxu0
  %v3236 = vadd.f32 0.0, %v3235
  %3237 = vmatmul.f32.gmra.mxu0 %v3199
  %v3238 = vpop.f32.mrf.mxu0
  %v3239 = vadd.f32 0.0, %v3238
  %3240 = vmatmul.f32.gmra.mxu0 %v3201
  %v3241 = vpop.f32.mrf.mxu0
  %v3242 = vadd.f32 0.0, %v3241
  %3243 = vdwg.mxu0
  %v3252 = vrot.slane %v3221, 1
  %v3253 = vrot.slane %v3221, 2
  %v3254 = vrot.slane %v3221, 3
  %v3255 = vrot.slane %v3221, 4
  %v3256 = vrot.slane %v3221, 5
  %v3257 = vrot.slane %v3221, 6
  %v3258 = vrot.slane %v3221, 7
  %v3259 = vrot.slane %v3224, 1
  %v3260 = vrot.slane %v3224, 2
  %v3261 = vrot.slane %v3224, 3
  %v3262 = vrot.slane %v3224, 4
  %v3263 = vrot.slane %v3224, 5
  %v3264 = vrot.slane %v3224, 6
  %v3265 = vrot.slane %v3224, 7
  %v3266 = vrot.slane %v3227, 1
  %v3267 = vrot.slane %v3227, 2
  %v3268 = vrot.slane %v3227, 3
  %v3269 = vrot.slane %v3227, 4
  %v3270 = vrot.slane %v3227, 5
  %v3271 = vrot.slane %v3227, 6
  %v3272 = vrot.slane %v3227, 7
  %v3273 = vrot.slane %v3230, 1
  %v3274 = vrot.slane %v3230, 2
  %v3275 = vrot.slane %v3230, 3
  %v3276 = vrot.slane %v3230, 4
  %v3277 = vrot.slane %v3230, 5
  %v3278 = vrot.slane %v3230, 6
  %v3279 = vrot.slane %v3230, 7
  %v3280 = vrot.slane %v3233, 1
  %v3281 = vrot.slane %v3233, 2
  %v3282 = vrot.slane %v3233, 3
  %v3283 = vrot.slane %v3233, 4
  %v3284 = vrot.slane %v3233, 5
  %v3285 = vrot.slane %v3233, 6
  %v3286 = vrot.slane %v3233, 7
  %v3287 = vrot.slane %v3236, 1
  %v3288 = vrot.slane %v3236, 2
  %v3289 = vrot.slane %v3236, 3
  %v3290 = vrot.slane %v3236, 4
  %v3291 = vrot.slane %v3236, 5
  %v3292 = vrot.slane %v3236, 6
  %v3293 = vrot.slane %v3236, 7
  %v3294 = vrot.slane %v3239, 1
  %v3295 = vrot.slane %v3239, 2
  %v3296 = vrot.slane %v3239, 3
  %v3297 = vrot.slane %v3239, 4
  %v3298 = vrot.slane %v3239, 5
  %v3299 = vrot.slane %v3239, 6
  %v3300 = vrot.slane %v3239, 7
  %v3301 = vrot.slane %v3242, 1
  %v3302 = vrot.slane %v3242, 2
  %v3303 = vrot.slane %v3242, 3
  %s3356 = scalar_lea.vmem %s16, 2
  %v3357 = vld [vmem:[%s3356] sm:$0x1]
  %v3359 = vperm.slane %v3357, 0
  %v3361 = vrot.slane %v3359, 1
  %v3362 = vrot.slane %v3359, 2
  %v3363 = vrot.slane %v3359, 3
  %v3364 = vrot.slane %v3359, 4
  %v3369 = vadd.f32 %v3221, %v3359
  %v3370 = vadd.f32 %v3252, %v3361
  %v3371 = vadd.f32 %v3253, %v3362
  %v3372 = vadd.f32 %v3254, %v3363
  %v3373 = vadd.f32 %v3255, %v3364
  %v3374 = vadd.f32 %v3256, %v3359
  %v3375 = vadd.f32 %v3257, %v3361
  %v3376 = vadd.f32 %v3258, %v3362
  %v3377 = vadd.f32 %v3224, %v3363
  %v3378 = vadd.f32 %v3259, %v3364
  %v3379 = vadd.f32 %v3260, %v3359
  %v3380 = vadd.f32 %v3261, %v3361
  %v3381 = vadd.f32 %v3262, %v3362
  %v3382 = vadd.f32 %v3263, %v3363
  %v3383 = vadd.f32 %v3264, %v3364
  %v3384 = vadd.f32 %v3265, %v3359
  %v3385 = vadd.f32 %v3227, %v3361
  %v3386 = vadd.f32 %v3266, %v3362
  %v3387 = vadd.f32 %v3267, %v3363
  %v3388 = vadd.f32 %v3268, %v3364
  %v3389 = vadd.f32 %v3269, %v3359
  %v3390 = vadd.f32 %v3270, %v3361
  %v3391 = vadd.f32 %v3271, %v3362
  %v3392 = vadd.f32 %v3272, %v3363
  %v3393 = vadd.f32 %v3230, %v3364
  %v3394 = vadd.f32 %v3273, %v3359
  %v3395 = vadd.f32 %v3274, %v3361
  %v3396 = vadd.f32 %v3275, %v3362
  %v3397 = vadd.f32 %v3276, %v3363
  %v3398 = vadd.f32 %v3277, %v3364
  %v3399 = vadd.f32 %v3278, %v3359
  %v3400 = vadd.f32 %v3279, %v3361
  %v3401 = vadd.f32 %v3233, %v3362
  %v3402 = vadd.f32 %v3280, %v3363
  %v3403 = vadd.f32 %v3281, %v3364
  %v3404 = vadd.f32 %v3282, %v3359
  %v3405 = vadd.f32 %v3283, %v3361
  %v3406 = vadd.f32 %v3284, %v3362
  %v3407 = vadd.f32 %v3285, %v3363
  %v3408 = vadd.f32 %v3286, %v3364
  %v3409 = vadd.f32 %v3236, %v3359
  %v3410 = vadd.f32 %v3287, %v3361
  %v3411 = vadd.f32 %v3288, %v3362
  %v3412 = vadd.f32 %v3289, %v3363
  %v3413 = vadd.f32 %v3290, %v3364
  %v3414 = vadd.f32 %v3291, %v3359
  %v3415 = vadd.f32 %v3292, %v3361
  %v3416 = vadd.f32 %v3293, %v3362
  %v3417 = vadd.f32 %v3239, %v3363
  %v3418 = vadd.f32 %v3294, %v3364
  %v3419 = vadd.f32 %v3295, %v3359
  %v3420 = vadd.f32 %v3296, %v3361
  %v3421 = vadd.f32 %v3297, %v3362
  %v3422 = vadd.f32 %v3298, %v3363
  %v3423 = vadd.f32 %v3299, %v3364
  %v3424 = vadd.f32 %v3300, %v3359
  %v3425 = vadd.f32 %v3242, %v3361
  %v3426 = vadd.f32 %v3301, %v3362
  %v3427 = vadd.f32 %v3302, %v3363
  %v3428 = vadd.f32 %v3303, %v3364
  %s3429 = scalar_lea.vmem %s14, 24
  %v3430 = vld [vmem:[%s3429] sm:$0xff]
  %3431 = vst [vmem:[#allocation1] ss:$9 sm:$0xff] %v2402
  %s3432 = scalar_lea.vmem [#allocation1], 1
  %3433 = vst [vmem:[%s3432] ss:$9 sm:$0xff] %v2426
  %s3434 = scalar_lea.vmem [#allocation1], 2
  %3435 = vst [vmem:[%s3434] ss:$9 sm:$0xff] %v2427
  %s3436 = scalar_lea.vmem [#allocation1], 3
  %3437 = vst [vmem:[%s3436] ss:$9 sm:$0xff] %v2428
  %s3438 = scalar_lea.vmem [#allocation1], 4
  %3439 = vst [vmem:[%s3438] ss:$9 sm:$0xff] %v2429
  %s3440 = scalar_lea.vmem [#allocation1], 5
  %3441 = vst [vmem:[%s3440] ss:$9 sm:$0xff] %v2403
  %s3442 = scalar_lea.vmem [#allocation1], 6
  %3443 = vst [vmem:[%s3442] ss:$9 sm:$0xff] %v2430
  %s3444 = scalar_lea.vmem [#allocation1], 7
  %3445 = vst [vmem:[%s3444] ss:$9 sm:$0xff] %v2431
  %v3446 = vld [vmem:[#allocation1] sm:$0xff]
  %3447 = vst [vmem:[#allocation1] ss:$9 sm:$0xff] %v2432
  %3448 = vst [vmem:[%s3432] ss:$9 sm:$0xff] %v2433
  %3449 = vst [vmem:[%s3434] ss:$9 sm:$0xff] %v2404
  %3450 = vst [vmem:[%s3436] ss:$9 sm:$0xff] %v2434
  %3451 = vst [vmem:[%s3438] ss:$9 sm:$0xff] %v2435
  %3452 = vst [vmem:[%s3440] ss:$9 sm:$0xff] %v2436
  %3453 = vst [vmem:[%s3442] ss:$9 sm:$0xff] %v2437
  %3454 = vst [vmem:[%s3444] ss:$9 sm:$0xff] %v2405
  %v3455 = vld [vmem:[#allocation1] sm:$0xff]
  %3456 = vst [vmem:[#allocation1] ss:$9 sm:$0xff] %v2438
  %3457 = vst [vmem:[%s3432] ss:$9 sm:$0xff] %v2439
  %3458 = vst [vmem:[%s3434] ss:$9 sm:$0xff] %v2440
  %3459 = vst [vmem:[%s3436] ss:$9 sm:$0xff] %v2441
  %3460 = vst [vmem:[%s3438] ss:$9 sm:$0xff] %v2406
  %3461 = vst [vmem:[%s3440] ss:$9 sm:$0xff] %v2442
  %3462 = vst [vmem:[%s3442] ss:$9 sm:$0xff] %v2443
  %3463 = vst [vmem:[%s3444] ss:$9 sm:$0xff] %v2444
  %v3464 = vld [vmem:[#allocation1] sm:$0xff]
  %3465 = vst [vmem:[#allocation1] ss:$9 sm:$0xff] %v2445
  %3466 = vst [vmem:[%s3432] ss:$9 sm:$0xff] %v2407
  %3467 = vst [vmem:[%s3434] ss:$9 sm:$0xff] %v2446
  %3468 = vst [vmem:[%s3436] ss:$9 sm:$0xff] %v2447
  %3469 = vst [vmem:[%s3438] ss:$9 sm:$0xff] %v2448
  %3470 = vst [vmem:[%s3440] ss:$9 sm:$0xff] %v2449
  %3471 = vst [vmem:[%s3442] ss:$9 sm:$0xff] %v2408
  %3472 = vst [vmem:[%s3444] ss:$9 sm:$0xff] %v2450
  %v3473 = vld [vmem:[#allocation1] sm:$0xff]
  %3474 = vst [vmem:[#allocation1] ss:$9 sm:$0xff] %v2451
  %3475 = vst [vmem:[%s3432] ss:$9 sm:$0xff] %v2452
  %3476 = vst [vmem:[%s3434] ss:$9 sm:$0xff] %v2453
  %3477 = vst [vmem:[%s3436] ss:$9 sm:$0xff] %v2409
  %3478 = vst [vmem:[%s3438] ss:$9 sm:$0xff] %v2454
  %3479 = vst [vmem:[%s3440] ss:$9 sm:$0xff] %v2455
  %3480 = vst [vmem:[%s3442] ss:$9 sm:$0xff] %v2456
  %3481 = vst [vmem:[%s3444] ss:$9 sm:$0xff] %v2457
  %v3482 = vld [vmem:[#allocation1] sm:$0xff]
  %3483 = vst [vmem:[#allocation1] ss:$9 sm:$0xff] %v2410
  %3484 = vst [vmem:[%s3432] ss:$9 sm:$0xff] %v2458
  %3485 = vst [vmem:[%s3434] ss:$9 sm:$0xff] %v2459
  %3486 = vst [vmem:[%s3436] ss:$9 sm:$0xff] %v2460
  %3487 = vst [vmem:[%s3438] ss:$9 sm:$0xff] %v2461
  %3488 = vst [vmem:[%s3440] ss:$9 sm:$0xff] %v2411
  %3489 = vst [vmem:[%s3442] ss:$9 sm:$0xff] %v2462
  %3490 = vst [vmem:[%s3444] ss:$9 sm:$0xff] %v2463
  %v3491 = vld [vmem:[#allocation1] sm:$0xff]
  %3492 = vst [vmem:[#allocation1] ss:$9 sm:$0xff] %v2464
  %3493 = vst [vmem:[%s3432] ss:$9 sm:$0xff] %v2465
  %3494 = vst [vmem:[%s3434] ss:$9 sm:$0xff] %v2412
  %3495 = vst [vmem:[%s3436] ss:$9 sm:$0xff] %v2466
  %3496 = vst [vmem:[%s3438] ss:$9 sm:$0xff] %v2467
  %3497 = vst [vmem:[%s3440] ss:$9 sm:$0xff] %v2468
  %3498 = vst [vmem:[%s3442] ss:$9 sm:$0xff] %v2469
  %3499 = vst [vmem:[%s3444] ss:$9 sm:$0xff] %v2413
  %v3500 = vld [vmem:[#allocation1] sm:$0xff]
  %3501 = vst [vmem:[#allocation1] ss:$9 sm:$0xff] %v2470
  %3502 = vst [vmem:[%s3432] ss:$9 sm:$0xff] %v2471
  %3503 = vst [vmem:[%s3434] ss:$9 sm:$0xff] %v2472
  %3504 = vst [vmem:[%s3436] ss:$9 sm:$0xff] %v2473
  %v3505 = vld [vmem:[#allocation1] sm:$0xff]
  %v3506 = vsel %vm1324, %v3446, 0
  %v3508 = vsel %vm1324, %v3455, 0
  %v3510 = vsel %vm1324, %v3464, 0
  %v3512 = vsel %vm1324, %v3473, 0
  %v3514 = vsel %vm1324, %v3482, 0
  %v3516 = vsel %vm1324, %v3491, 0
  %v3518 = vsel %vm1324, %v3500, 0
  %v3520 = vsel %vm1324, %v3505, 0
  %3522 = vmatpush.msra.mxu0 0.0
  %3523 = vmatpush.msra.mxu0 0.0
  %3524 = vmatpush.msra.mxu0 0.0
  %3525 = vmatpush.msra.mxu0 0.0
  %3526 = vmatpush.msra.mxu0 0.0
  %3527 = vmatpush.msra.mxu0 0.0
  %3528 = vmatpush.msra.mxu0 0.0
  %3529 = vmatpush.msra.mxu0 0.0
  %3530 = vmatpush.msra.mxu0 0.0
  %3531 = vmatpush.msra.mxu0 0.0
  %3532 = vmatpush.msra.mxu0 0.0
  %3533 = vmatpush.msra.mxu0 0.0
  %3534 = vmatpush.msra.mxu0 0.0
  %3535 = vmatpush.msra.mxu0 0.0
  %3536 = vmatpush.msra.mxu0 0.0
  %3537 = vmatpush.msra.mxu0 %v3430
  %3538 = vmatmul.f32.gmra.mxu0 %v3506
  %v3539 = vpop.f32.mrf.mxu0
  %v3540 = vadd.f32 0.0, %v3539
  %3541 = vmatmul.f32.gmra.mxu0 %v3508
  %v3542 = vpop.f32.mrf.mxu0
  %v3543 = vadd.f32 0.0, %v3542
  %3544 = vmatmul.f32.gmra.mxu0 %v3510
  %v3545 = vpop.f32.mrf.mxu0
  %v3546 = vadd.f32 0.0, %v3545
  %3547 = vmatmul.f32.gmra.mxu0 %v3512
  %v3548 = vpop.f32.mrf.mxu0
  %v3549 = vadd.f32 0.0, %v3548
  %3550 = vmatmul.f32.gmra.mxu0 %v3514
  %v3551 = vpop.f32.mrf.mxu0
  %v3552 = vadd.f32 0.0, %v3551
  %3553 = vmatmul.f32.gmra.mxu0 %v3516
  %v3554 = vpop.f32.mrf.mxu0
  %v3555 = vadd.f32 0.0, %v3554
  %3556 = vmatmul.f32.gmra.mxu0 %v3518
  %v3557 = vpop.f32.mrf.mxu0
  %v3558 = vadd.f32 0.0, %v3557
  %3559 = vmatmul.f32.gmra.mxu0 %v3520
  %v3560 = vpop.f32.mrf.mxu0
  %v3561 = vadd.f32 0.0, %v3560
  %3562 = vdwg.mxu0
  %v3571 = vrot.slane %v3540, 1
  %v3572 = vrot.slane %v3540, 2
  %v3573 = vrot.slane %v3540, 3
  %v3574 = vrot.slane %v3540, 4
  %v3575 = vrot.slane %v3540, 5
  %v3576 = vrot.slane %v3540, 6
  %v3577 = vrot.slane %v3540, 7
  %v3578 = vrot.slane %v3543, 1
  %v3579 = vrot.slane %v3543, 2
  %v3580 = vrot.slane %v3543, 3
  %v3581 = vrot.slane %v3543, 4
  %v3582 = vrot.slane %v3543, 5
  %v3583 = vrot.slane %v3543, 6
  %v3584 = vrot.slane %v3543, 7
  %v3585 = vrot.slane %v3546, 1
  %v3586 = vrot.slane %v3546, 2
  %v3587 = vrot.slane %v3546, 3
  %v3588 = vrot.slane %v3546, 4
  %v3589 = vrot.slane %v3546, 5
  %v3590 = vrot.slane %v3546, 6
  %v3591 = vrot.slane %v3546, 7
  %v3592 = vrot.slane %v3549, 1
  %v3593 = vrot.slane %v3549, 2
  %v3594 = vrot.slane %v3549, 3
  %v3595 = vrot.slane %v3549, 4
  %v3596 = vrot.slane %v3549, 5
  %v3597 = vrot.slane %v3549, 6
  %v3598 = vrot.slane %v3549, 7
  %v3599 = vrot.slane %v3552, 1
  %v3600 = vrot.slane %v3552, 2
  %v3601 = vrot.slane %v3552, 3
  %v3602 = vrot.slane %v3552, 4
  %v3603 = vrot.slane %v3552, 5
  %v3604 = vrot.slane %v3552, 6
  %v3605 = vrot.slane %v3552, 7
  %v3606 = vrot.slane %v3555, 1
  %v3607 = vrot.slane %v3555, 2
  %v3608 = vrot.slane %v3555, 3
  %v3609 = vrot.slane %v3555, 4
  %v3610 = vrot.slane %v3555, 5
  %v3611 = vrot.slane %v3555, 6
  %v3612 = vrot.slane %v3555, 7
  %v3613 = vrot.slane %v3558, 1
  %v3614 = vrot.slane %v3558, 2
  %v3615 = vrot.slane %v3558, 3
  %v3616 = vrot.slane %v3558, 4
  %v3617 = vrot.slane %v3558, 5
  %v3618 = vrot.slane %v3558, 6
  %v3619 = vrot.slane %v3558, 7
  %v3620 = vrot.slane %v3561, 1
  %v3621 = vrot.slane %v3561, 2
  %v3622 = vrot.slane %v3561, 3
  %s3675 = scalar_lea.vmem %s16, 3
  %v3676 = vld [vmem:[%s3675] sm:$0x1]
  %v3678 = vperm.slane %v3676, 0
  %v3680 = vrot.slane %v3678, 1
  %v3681 = vrot.slane %v3678, 2
  %v3682 = vrot.slane %v3678, 3
  %v3683 = vrot.slane %v3678, 4
  %v3688 = vadd.f32 %v3540, %v3678
  %v3689 = vadd.f32 %v3571, %v3680
  %v3690 = vadd.f32 %v3572, %v3681
  %v3691 = vadd.f32 %v3573, %v3682
  %v3692 = vadd.f32 %v3574, %v3683
  %v3693 = vadd.f32 %v3575, %v3678
  %v3694 = vadd.f32 %v3576, %v3680
  %v3695 = vadd.f32 %v3577, %v3681
  %v3696 = vadd.f32 %v3543, %v3682
  %v3697 = vadd.f32 %v3578, %v3683
  %v3698 = vadd.f32 %v3579, %v3678
  %v3699 = vadd.f32 %v3580, %v3680
  %v3700 = vadd.f32 %v3581, %v3681
  %v3701 = vadd.f32 %v3582, %v3682
  %v3702 = vadd.f32 %v3583, %v3683
  %v3703 = vadd.f32 %v3584, %v3678
  %v3704 = vadd.f32 %v3546, %v3680
  %v3705 = vadd.f32 %v3585, %v3681
  %v3706 = vadd.f32 %v3586, %v3682
  %v3707 = vadd.f32 %v3587, %v3683
  %v3708 = vadd.f32 %v3588, %v3678
  %v3709 = vadd.f32 %v3589, %v3680
  %v3710 = vadd.f32 %v3590, %v3681
  %v3711 = vadd.f32 %v3591, %v3682
  %v3712 = vadd.f32 %v3549, %v3683
  %v3713 = vadd.f32 %v3592, %v3678
  %v3714 = vadd.f32 %v3593, %v3680
  %v3715 = vadd.f32 %v3594, %v3681
  %v3716 = vadd.f32 %v3595, %v3682
  %v3717 = vadd.f32 %v3596, %v3683
  %v3718 = vadd.f32 %v3597, %v3678
  %v3719 = vadd.f32 %v3598, %v3680
  %v3720 = vadd.f32 %v3552, %v3681
  %v3721 = vadd.f32 %v3599, %v3682
  %v3722 = vadd.f32 %v3600, %v3683
  %v3723 = vadd.f32 %v3601, %v3678
  %v3724 = vadd.f32 %v3602, %v3680
  %v3725 = vadd.f32 %v3603, %v3681
  %v3726 = vadd.f32 %v3604, %v3682
  %v3727 = vadd.f32 %v3605, %v3683
  %v3728 = vadd.f32 %v3555, %v3678
  %v3729 = vadd.f32 %v3606, %v3680
  %v3730 = vadd.f32 %v3607, %v3681
  %v3731 = vadd.f32 %v3608, %v3682
  %v3732 = vadd.f32 %v3609, %v3683
  %v3733 = vadd.f32 %v3610, %v3678
  %v3734 = vadd.f32 %v3611, %v3680
  %v3735 = vadd.f32 %v3612, %v3681
  %v3736 = vadd.f32 %v3558, %v3682
  %v3737 = vadd.f32 %v3613, %v3683
  %v3738 = vadd.f32 %v3614, %v3678
  %v3739 = vadd.f32 %v3615, %v3680
  %v3740 = vadd.f32 %v3616, %v3681
  %v3741 = vadd.f32 %v3617, %v3682
  %v3742 = vadd.f32 %v3618, %v3683
  %v3743 = vadd.f32 %v3619, %v3678
  %v3744 = vadd.f32 %v3561, %v3680
  %v3745 = vadd.f32 %v3620, %v3681
  %v3746 = vadd.f32 %v3621, %v3682
  %v3747 = vadd.f32 %v3622, %v3683
  %v3748 = vld [vmem:[%s15] sm:$0xff]
  %s3749 = scalar_lea.vmem %s15, 8
  %v3750 = vld [vmem:[%s3749] sm:$0xff]
  %s3751 = scalar_lea.vmem %s15, 16
  %v3752 = vld [vmem:[%s3751] sm:$0xff]
  %s3753 = scalar_lea.vmem %s15, 24
  %v3754 = vld [vmem:[%s3753] sm:$0xff]
  %v3755 = vld [vmem:[%s12] sm:$0x1f]
  %v3756 = vld [vmem:[%s13] sm:$0x1f]
  %v3758 = vsel %vm1324, %v3755, 0
  %3760 = vmatpush.msra.mxu0 0.0
  %3761 = vmatpush.msra.mxu0 0.0
  %3762 = vmatpush.msra.mxu0 0.0
  %3763 = vmatpush.msra.mxu0 0.0
  %3764 = vmatpush.msra.mxu0 0.0
  %3765 = vmatpush.msra.mxu0 0.0
  %3766 = vmatpush.msra.mxu0 0.0
  %3767 = vmatpush.msra.mxu0 0.0
  %3768 = vmatpush.msra.mxu0 0.0
  %3769 = vmatpush.msra.mxu0 0.0
  %3770 = vmatpush.msra.mxu0 0.0
  %3771 = vmatpush.msra.mxu0 0.0
  %3772 = vmatpush.msra.mxu0 0.0
  %3773 = vmatpush.msra.mxu0 0.0
  %3774 = vmatpush.msra.mxu0 0.0
  %3775 = vmatpush.msra.mxu0 %v3748
  %3776 = vmatmul.f32.gmra.mxu0 %v3758
  %v3777 = vpop.f32.mrf.mxu0
  %v3778 = vadd.f32 0.0, %v3777
  %3779 = vdwg.mxu0
  %v3781 = vrot.slane %v3778, 1
  %v3782 = vrot.slane %v3778, 2
  %v3783 = vrot.slane %v3778, 3
  %v3784 = vrot.slane %v3778, 4
  %v3789 = vadd.f32 %v2731, %v3778
  %v3790 = vadd.f32 %v2732, %v3781
  %v3791 = vadd.f32 %v2733, %v3782
  %v3792 = vadd.f32 %v2734, %v3783
  %v3793 = vadd.f32 %v2735, %v3784
  %v3794 = vxor.u32 %v3789, 2147483648
  %v3795 = vxor.u32 %v3790, 2147483648
  %v3796 = vxor.u32 %v3791, 2147483648
  %v3797 = vxor.u32 %v3792, 2147483648
  %v3798 = vxor.u32 %v3793, 2147483648
  %v3799 = vmul.f32 %v3794, 1.442695
  %v3800 = vpow.pop %v3799
  %v3801 = vmul.f32 %v3795, 1.442695
  %v3802 = vpow.pop %v3801
  %v3803 = vmul.f32 %v3796, 1.442695
  %v3804 = vpow.pop %v3803
  %v3805 = vmul.f32 %v3797, 1.442695
  %v3806 = vpow.pop %v3805
  %v3807 = vmul.f32 %v3798, 1.442695
  %v3808 = vpow.pop %v3807
  %v3809 = vadd.f32 %v3800, 1.0
  %v3810 = vadd.f32 %v3802, 1.0
  %v3811 = vadd.f32 %v3804, 1.0
  %v3812 = vadd.f32 %v3806, 1.0
  %v3813 = vadd.f32 %v3808, 1.0
  %v3814 = vrcp.pop %v3809
  %v3815 = vmul.f32 %v3809, %v3814
  %v3816 = vsub.f32 1.0, %v3815
  %v3817 = vmul.f32 %v3814, %v3816
  %v3818 = vadd.f32 %v3814, %v3817
  %vm3819 = vweird.f32 %v3809
  %vm3820 = vweird.f32 %v3814
  %vm3821 = vmor %vm3819, %vm3820
  %v3822 = vsel %vm3821, %v3814, %v3818
  %v3823 = vand.u32 2147483647, %v3809
  %vm3824 = vcmp.eq.f32.partialorder %v3823, 8.507059e+37
  %v3825 = vand.u32 %v3809, 2147483648
  %v3826 = vor.u32 1.1754944e-38, %v3825
  %v3827 = vsel %vm3824, %v3826, %v3822
  %v3828 = vmul.f32 1.0, %v3827
  %v3829 = vrcp.pop %v3810
  %v3830 = vmul.f32 %v3810, %v3829
  %v3831 = vsub.f32 1.0, %v3830
  %v3832 = vmul.f32 %v3829, %v3831
  %v3833 = vadd.f32 %v3829, %v3832
  %vm3834 = vweird.f32 %v3810
  %vm3835 = vweird.f32 %v3829
  %vm3836 = vmor %vm3834, %vm3835
  %v3837 = vsel %vm3836, %v3829, %v3833
  %v3838 = vand.u32 2147483647, %v3810
  %vm3839 = vcmp.eq.f32.partialorder %v3838, 8.507059e+37
  %v3840 = vand.u32 %v3810, 2147483648
  %v3841 = vor.u32 1.1754944e-38, %v3840
  %v3842 = vsel %vm3839, %v3841, %v3837
  %v3843 = vmul.f32 1.0, %v3842
  %v3844 = vrcp.pop %v3811
  %v3845 = vmul.f32 %v3811, %v3844
  %v3846 = vsub.f32 1.0, %v3845
  %v3847 = vmul.f32 %v3844, %v3846
  %v3848 = vadd.f32 %v3844, %v3847
  %vm3849 = vweird.f32 %v3811
  %vm3850 = vweird.f32 %v3844
  %vm3851 = vmor %vm3849, %vm3850
  %v3852 = vsel %vm3851, %v3844, %v3848
  %v3853 = vand.u32 2147483647, %v3811
  %vm3854 = vcmp.eq.f32.partialorder %v3853, 8.507059e+37
  %v3855 = vand.u32 %v3811, 2147483648
  %v3856 = vor.u32 1.1754944e-38, %v3855
  %v3857 = vsel %vm3854, %v3856, %v3852
  %v3858 = vmul.f32 1.0, %v3857
  %v3859 = vrcp.pop %v3812
  %v3860 = vmul.f32 %v3812, %v3859
  %v3861 = vsub.f32 1.0, %v3860
  %v3862 = vmul.f32 %v3859, %v3861
  %v3863 = vadd.f32 %v3859, %v3862
  %vm3864 = vweird.f32 %v3812
  %vm3865 = vweird.f32 %v3859
  %vm3866 = vmor %vm3864, %vm3865
  %v3867 = vsel %vm3866, %v3859, %v3863
  %v3868 = vand.u32 2147483647, %v3812
  %vm3869 = vcmp.eq.f32.partialorder %v3868, 8.507059e+37
  %v3870 = vand.u32 %v3812, 2147483648
  %v3871 = vor.u32 1.1754944e-38, %v3870
  %v3872 = vsel %vm3869, %v3871, %v3867
  %v3873 = vmul.f32 1.0, %v3872
  %v3874 = vrcp.pop %v3813
  %v3875 = vmul.f32 %v3813, %v3874
  %v3876 = vsub.f32 1.0, %v3875
  %v3877 = vmul.f32 %v3874, %v3876
  %v3878 = vadd.f32 %v3874, %v3877
  %vm3879 = vweird.f32 %v3813
  %vm3880 = vweird.f32 %v3874
  %vm3881 = vmor %vm3879, %vm3880
  %v3882 = vsel %vm3881, %v3874, %v3878
  %v3883 = vand.u32 2147483647, %v3813
  %vm3884 = vcmp.eq.f32.partialorder %v3883, 8.507059e+37
  %v3885 = vand.u32 %v3813, 2147483648
  %v3886 = vor.u32 1.1754944e-38, %v3885
  %v3887 = vsel %vm3884, %v3886, %v3882
  %v3888 = vmul.f32 1.0, %v3887
  %3889 = vmatpush.msra.mxu0 0.0
  %3890 = vmatpush.msra.mxu0 0.0
  %3891 = vmatpush.msra.mxu0 0.0
  %3892 = vmatpush.msra.mxu0 0.0
  %3893 = vmatpush.msra.mxu0 0.0
  %3894 = vmatpush.msra.mxu0 0.0
  %3895 = vmatpush.msra.mxu0 0.0
  %3896 = vmatpush.msra.mxu0 0.0
  %3897 = vmatpush.msra.mxu0 0.0
  %3898 = vmatpush.msra.mxu0 0.0
  %3899 = vmatpush.msra.mxu0 0.0
  %3900 = vmatpush.msra.mxu0 0.0
  %3901 = vmatpush.msra.mxu0 0.0
  %3902 = vmatpush.msra.mxu0 0.0
  %3903 = vmatpush.msra.mxu0 0.0
  %3904 = vmatpush.msra.mxu0 %v3750
  %3905 = vmatmul.f32.gmra.mxu0 %v3758
  %v3906 = vpop.f32.mrf.mxu0
  %v3907 = vadd.f32 0.0, %v3906
  %3908 = vdwg.mxu0
  %v3910 = vrot.slane %v3907, 1
  %v3911 = vrot.slane %v3907, 2
  %v3912 = vrot.slane %v3907, 3
  %v3913 = vrot.slane %v3907, 4
  %v3918 = vadd.f32 %v3050, %v3907
  %v3919 = vadd.f32 %v3051, %v3910
  %v3920 = vadd.f32 %v3052, %v3911
  %v3921 = vadd.f32 %v3053, %v3912
  %v3922 = vadd.f32 %v3054, %v3913
  %v3923 = vxor.u32 %v3918, 2147483648
  %v3924 = vxor.u32 %v3919, 2147483648
  %v3925 = vxor.u32 %v3920, 2147483648
  %v3926 = vxor.u32 %v3921, 2147483648
  %v3927 = vxor.u32 %v3922, 2147483648
  %v3928 = vmul.f32 %v3923, 1.442695
  %v3929 = vpow.pop %v3928
  %v3930 = vmul.f32 %v3924, 1.442695
  %v3931 = vpow.pop %v3930
  %v3932 = vmul.f32 %v3925, 1.442695
  %v3933 = vpow.pop %v3932
  %v3934 = vmul.f32 %v3926, 1.442695
  %v3935 = vpow.pop %v3934
  %v3936 = vmul.f32 %v3927, 1.442695
  %v3937 = vpow.pop %v3936
  %v3938 = vadd.f32 %v3929, 1.0
  %v3939 = vadd.f32 %v3931, 1.0
  %v3940 = vadd.f32 %v3933, 1.0
  %v3941 = vadd.f32 %v3935, 1.0
  %v3942 = vadd.f32 %v3937, 1.0
  %v3943 = vrcp.pop %v3938
  %v3944 = vmul.f32 %v3938, %v3943
  %v3945 = vsub.f32 1.0, %v3944
  %v3946 = vmul.f32 %v3943, %v3945
  %v3947 = vadd.f32 %v3943, %v3946
  %vm3948 = vweird.f32 %v3938
  %vm3949 = vweird.f32 %v3943
  %vm3950 = vmor %vm3948, %vm3949
  %v3951 = vsel %vm3950, %v3943, %v3947
  %v3952 = vand.u32 2147483647, %v3938
  %vm3953 = vcmp.eq.f32.partialorder %v3952, 8.507059e+37
  %v3954 = vand.u32 %v3938, 2147483648
  %v3955 = vor.u32 1.1754944e-38, %v3954
  %v3956 = vsel %vm3953, %v3955, %v3951
  %v3957 = vmul.f32 1.0, %v3956
  %v3958 = vrcp.pop %v3939
  %v3959 = vmul.f32 %v3939, %v3958
  %v3960 = vsub.f32 1.0, %v3959
  %v3961 = vmul.f32 %v3958, %v3960
  %v3962 = vadd.f32 %v3958, %v3961
  %vm3963 = vweird.f32 %v3939
  %vm3964 = vweird.f32 %v3958
  %vm3965 = vmor %vm3963, %vm3964
  %v3966 = vsel %vm3965, %v3958, %v3962
  %v3967 = vand.u32 2147483647, %v3939
  %vm3968 = vcmp.eq.f32.partialorder %v3967, 8.507059e+37
  %v3969 = vand.u32 %v3939, 2147483648
  %v3970 = vor.u32 1.1754944e-38, %v3969
  %v3971 = vsel %vm3968, %v3970, %v3966
  %v3972 = vmul.f32 1.0, %v3971
  %v3973 = vrcp.pop %v3940
  %v3974 = vmul.f32 %v3940, %v3973
  %v3975 = vsub.f32 1.0, %v3974
  %v3976 = vmul.f32 %v3973, %v3975
  %v3977 = vadd.f32 %v3973, %v3976
  %vm3978 = vweird.f32 %v3940
  %vm3979 = vweird.f32 %v3973
  %vm3980 = vmor %vm3978, %vm3979
  %v3981 = vsel %vm3980, %v3973, %v3977
  %v3982 = vand.u32 2147483647, %v3940
  %vm3983 = vcmp.eq.f32.partialorder %v3982, 8.507059e+37
  %v3984 = vand.u32 %v3940, 2147483648
  %v3985 = vor.u32 1.1754944e-38, %v3984
  %v3986 = vsel %vm3983, %v3985, %v3981
  %v3987 = vmul.f32 1.0, %v3986
  %v3988 = vrcp.pop %v3941
  %v3989 = vmul.f32 %v3941, %v3988
  %v3990 = vsub.f32 1.0, %v3989
  %v3991 = vmul.f32 %v3988, %v3990
  %v3992 = vadd.f32 %v3988, %v3991
  %vm3993 = vweird.f32 %v3941
  %vm3994 = vweird.f32 %v3988
  %vm3995 = vmor %vm3993, %vm3994
  %v3996 = vsel %vm3995, %v3988, %v3992
  %v3997 = vand.u32 2147483647, %v3941
  %vm3998 = vcmp.eq.f32.partialorder %v3997, 8.507059e+37
  %v3999 = vand.u32 %v3941, 2147483648
  %v4000 = vor.u32 1.1754944e-38, %v3999
  %v4001 = vsel %vm3998, %v4000, %v3996
  %v4002 = vmul.f32 1.0, %v4001
  %v4003 = vrcp.pop %v3942
  %v4004 = vmul.f32 %v3942, %v4003
  %v4005 = vsub.f32 1.0, %v4004
  %v4006 = vmul.f32 %v4003, %v4005
  %v4007 = vadd.f32 %v4003, %v4006
  %vm4008 = vweird.f32 %v3942
  %vm4009 = vweird.f32 %v4003
  %vm4010 = vmor %vm4008, %vm4009
  %v4011 = vsel %vm4010, %v4003, %v4007
  %v4012 = vand.u32 2147483647, %v3942
  %vm4013 = vcmp.eq.f32.partialorder %v4012, 8.507059e+37
  %v4014 = vand.u32 %v3942, 2147483648
  %v4015 = vor.u32 1.1754944e-38, %v4014
  %v4016 = vsel %vm4013, %v4015, %v4011
  %v4017 = vmul.f32 1.0, %v4016
  %4018 = vmatpush.msra.mxu0 0.0
  %4019 = vmatpush.msra.mxu0 0.0
  %4020 = vmatpush.msra.mxu0 0.0
  %4021 = vmatpush.msra.mxu0 0.0
  %4022 = vmatpush.msra.mxu0 0.0
  %4023 = vmatpush.msra.mxu0 0.0
  %4024 = vmatpush.msra.mxu0 0.0
  %4025 = vmatpush.msra.mxu0 0.0
  %4026 = vmatpush.msra.mxu0 0.0
  %4027 = vmatpush.msra.mxu0 0.0
  %4028 = vmatpush.msra.mxu0 0.0
  %4029 = vmatpush.msra.mxu0 0.0
  %4030 = vmatpush.msra.mxu0 0.0
  %4031 = vmatpush.msra.mxu0 0.0
  %4032 = vmatpush.msra.mxu0 0.0
  %4033 = vmatpush.msra.mxu0 %v3752
  %4034 = vmatmul.f32.gmra.mxu0 %v3758
  %v4035 = vpop.f32.mrf.mxu0
  %v4036 = vadd.f32 0.0, %v4035
  %4037 = vdwg.mxu0
  %v4039 = vrot.slane %v4036, 1
  %v4040 = vrot.slane %v4036, 2
  %v4041 = vrot.slane %v4036, 3
  %v4042 = vrot.slane %v4036, 4
  %v4047 = vadd.f32 %v3369, %v4036
  %v4048 = vadd.f32 %v3370, %v4039
  %v4049 = vadd.f32 %v3371, %v4040
  %v4050 = vadd.f32 %v3372, %v4041
  %v4051 = vadd.f32 %v3373, %v4042
  %v4052 = vtanh.pop %v4047
  %v4053 = vtanh.pop %v4048
  %v4054 = vtanh.pop %v4049
  %v4055 = vtanh.pop %v4050
  %v4056 = vtanh.pop %v4051
  %4057 = vmatpush.msra.mxu0 0.0
  %4058 = vmatpush.msra.mxu0 0.0
  %4059 = vmatpush.msra.mxu0 0.0
  %4060 = vmatpush.msra.mxu0 0.0
  %4061 = vmatpush.msra.mxu0 0.0
  %4062 = vmatpush.msra.mxu0 0.0
  %4063 = vmatpush.msra.mxu0 0.0
  %4064 = vmatpush.msra.mxu0 0.0
  %4065 = vmatpush.msra.mxu0 0.0
  %4066 = vmatpush.msra.mxu0 0.0
  %4067 = vmatpush.msra.mxu0 0.0
  %4068 = vmatpush.msra.mxu0 0.0
  %4069 = vmatpush.msra.mxu0 0.0
  %4070 = vmatpush.msra.mxu0 0.0
  %4071 = vmatpush.msra.mxu0 0.0
  %4072 = vmatpush.msra.mxu0 %v3754
  %4073 = vmatmul.f32.gmra.mxu0 %v3758
  %v4074 = vpop.f32.mrf.mxu0
  %v4075 = vadd.f32 0.0, %v4074
  %4076 = vdwg.mxu0
  %v4078 = vrot.slane %v4075, 1
  %v4079 = vrot.slane %v4075, 2
  %v4080 = vrot.slane %v4075, 3
  %v4081 = vrot.slane %v4075, 4
  %v4086 = vadd.f32 %v3688, %v4075
  %v4087 = vadd.f32 %v3689, %v4078
  %v4088 = vadd.f32 %v3690, %v4079
  %v4089 = vadd.f32 %v3691, %v4080
  %v4090 = vadd.f32 %v3692, %v4081
  %v4091 = vxor.u32 %v4086, 2147483648
  %v4092 = vxor.u32 %v4087, 2147483648
  %v4093 = vxor.u32 %v4088, 2147483648
  %v4094 = vxor.u32 %v4089, 2147483648
  %v4095 = vxor.u32 %v4090, 2147483648
  %v4096 = vmul.f32 %v4091, 1.442695
  %v4097 = vpow.pop %v4096
  %v4098 = vmul.f32 %v4092, 1.442695
  %v4099 = vpow.pop %v4098
  %v4100 = vmul.f32 %v4093, 1.442695
  %v4101 = vpow.pop %v4100
  %v4102 = vmul.f32 %v4094, 1.442695
  %v4103 = vpow.pop %v4102
  %v4104 = vmul.f32 %v4095, 1.442695
  %v4105 = vpow.pop %v4104
  %v4106 = vadd.f32 %v4097, 1.0
  %v4107 = vadd.f32 %v4099, 1.0
  %v4108 = vadd.f32 %v4101, 1.0
  %v4109 = vadd.f32 %v4103, 1.0
  %v4110 = vadd.f32 %v4105, 1.0
  %v4111 = vrcp.pop %v4106
  %v4112 = vmul.f32 %v4106, %v4111
  %v4113 = vsub.f32 1.0, %v4112
  %v4114 = vmul.f32 %v4111, %v4113
  %v4115 = vadd.f32 %v4111, %v4114
  %vm4116 = vweird.f32 %v4106
  %vm4117 = vweird.f32 %v4111
  %vm4118 = vmor %vm4116, %vm4117
  %v4119 = vsel %vm4118, %v4111, %v4115
  %v4120 = vand.u32 2147483647, %v4106
  %vm4121 = vcmp.eq.f32.partialorder %v4120, 8.507059e+37
  %v4122 = vand.u32 %v4106, 2147483648
  %v4123 = vor.u32 1.1754944e-38, %v4122
  %v4124 = vsel %vm4121, %v4123, %v4119
  %v4125 = vmul.f32 1.0, %v4124
  %v4126 = vrcp.pop %v4107
  %v4127 = vmul.f32 %v4107, %v4126
  %v4128 = vsub.f32 1.0, %v4127
  %v4129 = vmul.f32 %v4126, %v4128
  %v4130 = vadd.f32 %v4126, %v4129
  %vm4131 = vweird.f32 %v4107
  %vm4132 = vweird.f32 %v4126
  %vm4133 = vmor %vm4131, %vm4132
  %v4134 = vsel %vm4133, %v4126, %v4130
  %v4135 = vand.u32 2147483647, %v4107
  %vm4136 = vcmp.eq.f32.partialorder %v4135, 8.507059e+37
  %v4137 = vand.u32 %v4107, 2147483648
  %v4138 = vor.u32 1.1754944e-38, %v4137
  %v4139 = vsel %vm4136, %v4138, %v4134
  %v4140 = vmul.f32 1.0, %v4139
  %v4141 = vrcp.pop %v4108
  %v4142 = vmul.f32 %v4108, %v4141
  %v4143 = vsub.f32 1.0, %v4142
  %v4144 = vmul.f32 %v4141, %v4143
  %v4145 = vadd.f32 %v4141, %v4144
  %vm4146 = vweird.f32 %v4108
  %vm4147 = vweird.f32 %v4141
  %vm4148 = vmor %vm4146, %vm4147
  %v4149 = vsel %vm4148, %v4141, %v4145
  %v4150 = vand.u32 2147483647, %v4108
  %vm4151 = vcmp.eq.f32.partialorder %v4150, 8.507059e+37
  %v4152 = vand.u32 %v4108, 2147483648
  %v4153 = vor.u32 1.1754944e-38, %v4152
  %v4154 = vsel %vm4151, %v4153, %v4149
  %v4155 = vmul.f32 1.0, %v4154
  %v4156 = vrcp.pop %v4109
  %v4157 = vmul.f32 %v4109, %v4156
  %v4158 = vsub.f32 1.0, %v4157
  %v4159 = vmul.f32 %v4156, %v4158
  %v4160 = vadd.f32 %v4156, %v4159
  %vm4161 = vweird.f32 %v4109
  %vm4162 = vweird.f32 %v4156
  %vm4163 = vmor %vm4161, %vm4162
  %v4164 = vsel %vm4163, %v4156, %v4160
  %v4165 = vand.u32 2147483647, %v4109
  %vm4166 = vcmp.eq.f32.partialorder %v4165, 8.507059e+37
  %v4167 = vand.u32 %v4109, 2147483648
  %v4168 = vor.u32 1.1754944e-38, %v4167
  %v4169 = vsel %vm4166, %v4168, %v4164
  %v4170 = vmul.f32 1.0, %v4169
  %v4171 = vrcp.pop %v4110
  %v4172 = vmul.f32 %v4110, %v4171
  %v4173 = vsub.f32 1.0, %v4172
  %v4174 = vmul.f32 %v4171, %v4173
  %v4175 = vadd.f32 %v4171, %v4174
  %vm4176 = vweird.f32 %v4110
  %vm4177 = vweird.f32 %v4171
  %vm4178 = vmor %vm4176, %vm4177
  %v4179 = vsel %vm4178, %v4171, %v4175
  %v4180 = vand.u32 2147483647, %v4110
  %vm4181 = vcmp.eq.f32.partialorder %v4180, 8.507059e+37
  %v4182 = vand.u32 %v4110, 2147483648
  %v4183 = vor.u32 1.1754944e-38, %v4182
  %v4184 = vsel %vm4181, %v4183, %v4179
  %v4185 = vmul.f32 1.0, %v4184
  %v4187 = vrot.slane %v3756, 1
  %v4188 = vrot.slane %v3756, 2
  %v4189 = vrot.slane %v3756, 3
  %v4190 = vrot.slane %v3756, 4
  %v4195 = vmul.f32 %v3957, %v3756
  %v4196 = vmul.f32 %v3972, %v4187
  %v4197 = vmul.f32 %v3987, %v4188
  %v4198 = vmul.f32 %v4002, %v4189
  %v4199 = vmul.f32 %v4017, %v4190
  %v4200 = vmul.f32 %v3828, %v4052
  %v4201 = vmul.f32 %v3843, %v4053
  %v4202 = vmul.f32 %v3858, %v4054
  %v4203 = vmul.f32 %v3873, %v4055
  %v4204 = vmul.f32 %v3888, %v4056
  %v4205 = vadd.f32 %v4195, %v4200
  %v4206 = vadd.f32 %v4196, %v4201
  %v4207 = vadd.f32 %v4197, %v4202
  %v4208 = vadd.f32 %v4198, %v4203
  %v4209 = vadd.f32 %v4199, %v4204
  %v4210 = vtanh.pop %v4205
  %v4211 = vtanh.pop %v4206
  %v4212 = vtanh.pop %v4207
  %v4213 = vtanh.pop %v4208
  %v4214 = vtanh.pop %v4209
  %v4215 = vmul.f32 %v4125, %v4210
  %v4216 = vmul.f32 %v4140, %v4211
  %v4217 = vmul.f32 %v4155, %v4212
  %v4218 = vmul.f32 %v4170, %v4213
  %v4219 = vmul.f32 %v4185, %v4214
  %4225 = vst [vmem:[#allocation1] ss:$9 sm:$0xff] %v4215
  %s4226 = scalar_lea.vmem [#allocation1], 1
  %4227 = vst [vmem:[%s4226] ss:$9 sm:$0xff] %v4216
  %s4228 = scalar_lea.vmem [#allocation1], 2
  %4229 = vst [vmem:[%s4228] ss:$9 sm:$0xff] %v4217
  %s4230 = scalar_lea.vmem [#allocation1], 3
  %4231 = vst [vmem:[%s4230] ss:$9 sm:$0xff] %v4218
  %s4232 = scalar_lea.vmem [#allocation1], 4
  %4233 = vst [vmem:[%s4232] ss:$9 sm:$0xff] %v4219
  %v4234 = vld [vmem:[#allocation1] sm:$0xff]
  %vm4236 = vcmask 61440
  %4237 = vst.msk [vmem:[#allocation2] sm:$0x1f] %vm4236, %v4234
  %4238 = vst [vmem:[#allocation1] ss:$9 sm:$0xff] %v4215
  %s4239 = scalar_lea.vmem [#allocation1], 1
  %4240 = vst [vmem:[%s4239] ss:$9 sm:$0xff] %v4216
  %s4241 = scalar_lea.vmem [#allocation1], 2
  %4242 = vst [vmem:[%s4241] ss:$9 sm:$0xff] %v4217
  %s4243 = scalar_lea.vmem [#allocation1], 3
  %4244 = vst [vmem:[%s4243] ss:$9 sm:$0xff] %v4218
  %s4245 = scalar_lea.vmem [#allocation1], 4
  %4246 = vst [vmem:[%s4245] ss:$9 sm:$0xff] %v4219
  %v4247 = vld [vmem:[#allocation1] sm:$0xff]
  %v4248 = vsel %vm1324, %v4247, 0
  %4250 = vmatpush.msra.mxu0 0.0
  %4251 = vmatpush.msra.mxu0 0.0
  %4252 = vmatpush.msra.mxu0 0.0
  %4253 = vmatpush.msra.mxu0 0.0
  %4254 = vmatpush.msra.mxu0 0.0
  %4255 = vmatpush.msra.mxu0 0.0
  %4256 = vmatpush.msra.mxu0 0.0
  %4257 = vmatpush.msra.mxu0 0.0
  %4258 = vmatpush.msra.mxu0 0.0
  %4259 = vmatpush.msra.mxu0 0.0
  %4260 = vmatpush.msra.mxu0 0.0
  %4261 = vmatpush.msra.mxu0 0.0
  %4262 = vmatpush.msra.mxu0 0.0
  %4263 = vmatpush.msra.mxu0 0.0
  %4264 = vmatpush.msra.mxu0 0.0
  %4265 = vmatpush.msra.mxu0 %v3748
  %4266 = vmatmul.f32.gmra.mxu0 %v4248
  %v4267 = vpop.f32.mrf.mxu0
  %v4268 = vadd.f32 0.0, %v4267
  %4269 = vdwg.mxu0
  %v4271 = vrot.slane %v4268, 1
  %v4272 = vrot.slane %v4268, 2
  %v4273 = vrot.slane %v4268, 3
  %v4274 = vrot.slane %v4268, 4
  %v4279 = vadd.f32 %v2736, %v4268
  %v4280 = vadd.f32 %v2737, %v4271
  %v4281 = vadd.f32 %v2738, %v4272
  %v4282 = vadd.f32 %v2739, %v4273
  %v4283 = vadd.f32 %v2740, %v4274
  %v4284 = vxor.u32 %v4279, 2147483648
  %v4285 = vxor.u32 %v4280, 2147483648
  %v4286 = vxor.u32 %v4281, 2147483648
  %v4287 = vxor.u32 %v4282, 2147483648
  %v4288 = vxor.u32 %v4283, 2147483648
  %v4289 = vmul.f32 %v4284, 1.442695
  %v4290 = vpow.pop %v4289
  %v4291 = vmul.f32 %v4285, 1.442695
  %v4292 = vpow.pop %v4291
  %v4293 = vmul.f32 %v4286, 1.442695
  %v4294 = vpow.pop %v4293
  %v4295 = vmul.f32 %v4287, 1.442695
  %v4296 = vpow.pop %v4295
  %v4297 = vmul.f32 %v4288, 1.442695
  %v4298 = vpow.pop %v4297
  %v4299 = vadd.f32 %v4290, 1.0
  %v4300 = vadd.f32 %v4292, 1.0
  %v4301 = vadd.f32 %v4294, 1.0
  %v4302 = vadd.f32 %v4296, 1.0
  %v4303 = vadd.f32 %v4298, 1.0
  %v4304 = vrcp.pop %v4299
  %v4305 = vmul.f32 %v4299, %v4304
  %v4306 = vsub.f32 1.0, %v4305
  %v4307 = vmul.f32 %v4304, %v4306
  %v4308 = vadd.f32 %v4304, %v4307
  %vm4309 = vweird.f32 %v4299
  %vm4310 = vweird.f32 %v4304
  %vm4311 = vmor %vm4309, %vm4310
  %v4312 = vsel %vm4311, %v4304, %v4308
  %v4313 = vand.u32 2147483647, %v4299
  %vm4314 = vcmp.eq.f32.partialorder %v4313, 8.507059e+37
  %v4315 = vand.u32 %v4299, 2147483648
  %v4316 = vor.u32 1.1754944e-38, %v4315
  %v4317 = vsel %vm4314, %v4316, %v4312
  %v4318 = vmul.f32 1.0, %v4317
  %v4319 = vrcp.pop %v4300
  %v4320 = vmul.f32 %v4300, %v4319
  %v4321 = vsub.f32 1.0, %v4320
  %v4322 = vmul.f32 %v4319, %v4321
  %v4323 = vadd.f32 %v4319, %v4322
  %vm4324 = vweird.f32 %v4300
  %vm4325 = vweird.f32 %v4319
  %vm4326 = vmor %vm4324, %vm4325
  %v4327 = vsel %vm4326, %v4319, %v4323
  %v4328 = vand.u32 2147483647, %v4300
  %vm4329 = vcmp.eq.f32.partialorder %v4328, 8.507059e+37
  %v4330 = vand.u32 %v4300, 2147483648
  %v4331 = vor.u32 1.1754944e-38, %v4330
  %v4332 = vsel %vm4329, %v4331, %v4327
  %v4333 = vmul.f32 1.0, %v4332
  %v4334 = vrcp.pop %v4301
  %v4335 = vmul.f32 %v4301, %v4334
  %v4336 = vsub.f32 1.0, %v4335
  %v4337 = vmul.f32 %v4334, %v4336
  %v4338 = vadd.f32 %v4334, %v4337
  %vm4339 = vweird.f32 %v4301
  %vm4340 = vweird.f32 %v4334
  %vm4341 = vmor %vm4339, %vm4340
  %v4342 = vsel %vm4341, %v4334, %v4338
  %v4343 = vand.u32 2147483647, %v4301
  %vm4344 = vcmp.eq.f32.partialorder %v4343, 8.507059e+37
  %v4345 = vand.u32 %v4301, 2147483648
  %v4346 = vor.u32 1.1754944e-38, %v4345
  %v4347 = vsel %vm4344, %v4346, %v4342
  %v4348 = vmul.f32 1.0, %v4347
  %v4349 = vrcp.pop %v4302
  %v4350 = vmul.f32 %v4302, %v4349
  %v4351 = vsub.f32 1.0, %v4350
  %v4352 = vmul.f32 %v4349, %v4351
  %v4353 = vadd.f32 %v4349, %v4352
  %vm4354 = vweird.f32 %v4302
  %vm4355 = vweird.f32 %v4349
  %vm4356 = vmor %vm4354, %vm4355
  %v4357 = vsel %vm4356, %v4349, %v4353
  %v4358 = vand.u32 2147483647, %v4302
  %vm4359 = vcmp.eq.f32.partialorder %v4358, 8.507059e+37
  %v4360 = vand.u32 %v4302, 2147483648
  %v4361 = vor.u32 1.1754944e-38, %v4360
  %v4362 = vsel %vm4359, %v4361, %v4357
  %v4363 = vmul.f32 1.0, %v4362
  %v4364 = vrcp.pop %v4303
  %v4365 = vmul.f32 %v4303, %v4364
  %v4366 = vsub.f32 1.0, %v4365
  %v4367 = vmul.f32 %v4364, %v4366
  %v4368 = vadd.f32 %v4364, %v4367
  %vm4369 = vweird.f32 %v4303
  %vm4370 = vweird.f32 %v4364
  %vm4371 = vmor %vm4369, %vm4370
  %v4372 = vsel %vm4371, %v4364, %v4368
  %v4373 = vand.u32 2147483647, %v4303
  %vm4374 = vcmp.eq.f32.partialorder %v4373, 8.507059e+37
  %v4375 = vand.u32 %v4303, 2147483648
  %v4376 = vor.u32 1.1754944e-38, %v4375
  %v4377 = vsel %vm4374, %v4376, %v4372
  %v4378 = vmul.f32 1.0, %v4377
  %4379 = vst [vmem:[#allocation1] ss:$9 sm:$0xff] %v4215
  %s4380 = scalar_lea.vmem [#allocation1], 1
  %4381 = vst [vmem:[%s4380] ss:$9 sm:$0xff] %v4216
  %s4382 = scalar_lea.vmem [#allocation1], 2
  %4383 = vst [vmem:[%s4382] ss:$9 sm:$0xff] %v4217
  %s4384 = scalar_lea.vmem [#allocation1], 3
  %4385 = vst [vmem:[%s4384] ss:$9 sm:$0xff] %v4218
  %s4386 = scalar_lea.vmem [#allocation1], 4
  %4387 = vst [vmem:[%s4386] ss:$9 sm:$0xff] %v4219
  %v4388 = vld [vmem:[#allocation1] sm:$0xff]
  %v4389 = vsel %vm1324, %v4388, 0
  %4391 = vmatpush.msra.mxu0 0.0
  %4392 = vmatpush.msra.mxu0 0.0
  %4393 = vmatpush.msra.mxu0 0.0
  %4394 = vmatpush.msra.mxu0 0.0
  %4395 = vmatpush.msra.mxu0 0.0
  %4396 = vmatpush.msra.mxu0 0.0
  %4397 = vmatpush.msra.mxu0 0.0
  %4398 = vmatpush.msra.mxu0 0.0
  %4399 = vmatpush.msra.mxu0 0.0
  %4400 = vmatpush.msra.mxu0 0.0
  %4401 = vmatpush.msra.mxu0 0.0
  %4402 = vmatpush.msra.mxu0 0.0
  %4403 = vmatpush.msra.mxu0 0.0
  %4404 = vmatpush.msra.mxu0 0.0
  %4405 = vmatpush.msra.mxu0 0.0
  %4406 = vmatpush.msra.mxu0 %v3750
  %4407 = vmatmul.f32.gmra.mxu0 %v4389
  %v4408 = vpop.f32.mrf.mxu0
  %v4409 = vadd.f32 0.0, %v4408
  %4410 = vdwg.mxu0
  %v4412 = vrot.slane %v4409, 1
  %v4413 = vrot.slane %v4409, 2
  %v4414 = vrot.slane %v4409, 3
  %v4415 = vrot.slane %v4409, 4
  %v4420 = vadd.f32 %v3055, %v4409
  %v4421 = vadd.f32 %v3056, %v4412
  %v4422 = vadd.f32 %v3057, %v4413
  %v4423 = vadd.f32 %v3058, %v4414
  %v4424 = vadd.f32 %v3059, %v4415
  %v4425 = vxor.u32 %v4420, 2147483648
  %v4426 = vxor.u32 %v4421, 2147483648
  %v4427 = vxor.u32 %v4422, 2147483648
  %v4428 = vxor.u32 %v4423, 2147483648
  %v4429 = vxor.u32 %v4424, 2147483648
  %v4430 = vmul.f32 %v4425, 1.442695
  %v4431 = vpow.pop %v4430
  %v4432 = vmul.f32 %v4426, 1.442695
  %v4433 = vpow.pop %v4432
  %v4434 = vmul.f32 %v4427, 1.442695
  %v4435 = vpow.pop %v4434
  %v4436 = vmul.f32 %v4428, 1.442695
  %v4437 = vpow.pop %v4436
  %v4438 = vmul.f32 %v4429, 1.442695
  %v4439 = vpow.pop %v4438
  %v4440 = vadd.f32 %v4431, 1.0
  %v4441 = vadd.f32 %v4433, 1.0
  %v4442 = vadd.f32 %v4435, 1.0
  %v4443 = vadd.f32 %v4437, 1.0
  %v4444 = vadd.f32 %v4439, 1.0
  %v4445 = vrcp.pop %v4440
  %v4446 = vmul.f32 %v4440, %v4445
  %v4447 = vsub.f32 1.0, %v4446
  %v4448 = vmul.f32 %v4445, %v4447
  %v4449 = vadd.f32 %v4445, %v4448
  %vm4450 = vweird.f32 %v4440
  %vm4451 = vweird.f32 %v4445
  %vm4452 = vmor %vm4450, %vm4451
  %v4453 = vsel %vm4452, %v4445, %v4449
  %v4454 = vand.u32 2147483647, %v4440
  %vm4455 = vcmp.eq.f32.partialorder %v4454, 8.507059e+37
  %v4456 = vand.u32 %v4440, 2147483648
  %v4457 = vor.u32 1.1754944e-38, %v4456
  %v4458 = vsel %vm4455, %v4457, %v4453
  %v4459 = vmul.f32 1.0, %v4458
  %v4460 = vrcp.pop %v4441
  %v4461 = vmul.f32 %v4441, %v4460
  %v4462 = vsub.f32 1.0, %v4461
  %v4463 = vmul.f32 %v4460, %v4462
  %v4464 = vadd.f32 %v4460, %v4463
  %vm4465 = vweird.f32 %v4441
  %vm4466 = vweird.f32 %v4460
  %vm4467 = vmor %vm4465, %vm4466
  %v4468 = vsel %vm4467, %v4460, %v4464
  %v4469 = vand.u32 2147483647, %v4441
  %vm4470 = vcmp.eq.f32.partialorder %v4469, 8.507059e+37
  %v4471 = vand.u32 %v4441, 2147483648
  %v4472 = vor.u32 1.1754944e-38, %v4471
  %v4473 = vsel %vm4470, %v4472, %v4468
  %v4474 = vmul.f32 1.0, %v4473
  %v4475 = vrcp.pop %v4442
  %v4476 = vmul.f32 %v4442, %v4475
  %v4477 = vsub.f32 1.0, %v4476
  %v4478 = vmul.f32 %v4475, %v4477
  %v4479 = vadd.f32 %v4475, %v4478
  %vm4480 = vweird.f32 %v4442
  %vm4481 = vweird.f32 %v4475
  %vm4482 = vmor %vm4480, %vm4481
  %v4483 = vsel %vm4482, %v4475, %v4479
  %v4484 = vand.u32 2147483647, %v4442
  %vm4485 = vcmp.eq.f32.partialorder %v4484, 8.507059e+37
  %v4486 = vand.u32 %v4442, 2147483648
  %v4487 = vor.u32 1.1754944e-38, %v4486
  %v4488 = vsel %vm4485, %v4487, %v4483
  %v4489 = vmul.f32 1.0, %v4488
  %v4490 = vrcp.pop %v4443
  %v4491 = vmul.f32 %v4443, %v4490
  %v4492 = vsub.f32 1.0, %v4491
  %v4493 = vmul.f32 %v4490, %v4492
  %v4494 = vadd.f32 %v4490, %v4493
  %vm4495 = vweird.f32 %v4443
  %vm4496 = vweird.f32 %v4490
  %vm4497 = vmor %vm4495, %vm4496
  %v4498 = vsel %vm4497, %v4490, %v4494
  %v4499 = vand.u32 2147483647, %v4443
  %vm4500 = vcmp.eq.f32.partialorder %v4499, 8.507059e+37
  %v4501 = vand.u32 %v4443, 2147483648
  %v4502 = vor.u32 1.1754944e-38, %v4501
  %v4503 = vsel %vm4500, %v4502, %v4498
  %v4504 = vmul.f32 1.0, %v4503
  %v4505 = vrcp.pop %v4444
  %v4506 = vmul.f32 %v4444, %v4505
  %v4507 = vsub.f32 1.0, %v4506
  %v4508 = vmul.f32 %v4505, %v4507
  %v4509 = vadd.f32 %v4505, %v4508
  %vm4510 = vweird.f32 %v4444
  %vm4511 = vweird.f32 %v4505
  %vm4512 = vmor %vm4510, %vm4511
  %v4513 = vsel %vm4512, %v4505, %v4509
  %v4514 = vand.u32 2147483647, %v4444
  %vm4515 = vcmp.eq.f32.partialorder %v4514, 8.507059e+37
  %v4516 = vand.u32 %v4444, 2147483648
  %v4517 = vor.u32 1.1754944e-38, %v4516
  %v4518 = vsel %vm4515, %v4517, %v4513
  %v4519 = vmul.f32 1.0, %v4518
  %4520 = vst [vmem:[#allocation1] ss:$9 sm:$0xff] %v4215
  %s4521 = scalar_lea.vmem [#allocation1], 1
  %4522 = vst [vmem:[%s4521] ss:$9 sm:$0xff] %v4216
  %s4523 = scalar_lea.vmem [#allocation1], 2
  %4524 = vst [vmem:[%s4523] ss:$9 sm:$0xff] %v4217
  %s4525 = scalar_lea.vmem [#allocation1], 3
  %4526 = vst [vmem:[%s4525] ss:$9 sm:$0xff] %v4218
  %s4527 = scalar_lea.vmem [#allocation1], 4
  %4528 = vst [vmem:[%s4527] ss:$9 sm:$0xff] %v4219
  %v4529 = vld [vmem:[#allocation1] sm:$0xff]
  %v4530 = vsel %vm1324, %v4529, 0
  %4532 = vmatpush.msra.mxu0 0.0
  %4533 = vmatpush.msra.mxu0 0.0
  %4534 = vmatpush.msra.mxu0 0.0
  %4535 = vmatpush.msra.mxu0 0.0
  %4536 = vmatpush.msra.mxu0 0.0
  %4537 = vmatpush.msra.mxu0 0.0
  %4538 = vmatpush.msra.mxu0 0.0
  %4539 = vmatpush.msra.mxu0 0.0
  %4540 = vmatpush.msra.mxu0 0.0
  %4541 = vmatpush.msra.mxu0 0.0
  %4542 = vmatpush.msra.mxu0 0.0
  %4543 = vmatpush.msra.mxu0 0.0
  %4544 = vmatpush.msra.mxu0 0.0
  %4545 = vmatpush.msra.mxu0 0.0
  %4546 = vmatpush.msra.mxu0 0.0
  %4547 = vmatpush.msra.mxu0 %v3752
  %4548 = vmatmul.f32.gmra.mxu0 %v4530
  %v4549 = vpop.f32.mrf.mxu0
  %v4550 = vadd.f32 0.0, %v4549
  %4551 = vdwg.mxu0
  %v4553 = vrot.slane %v4550, 1
  %v4554 = vrot.slane %v4550, 2
  %v4555 = vrot.slane %v4550, 3
  %v4556 = vrot.slane %v4550, 4
  %v4561 = vadd.f32 %v3374, %v4550
  %v4562 = vadd.f32 %v3375, %v4553
  %v4563 = vadd.f32 %v3376, %v4554
  %v4564 = vadd.f32 %v3377, %v4555
  %v4565 = vadd.f32 %v3378, %v4556
  %v4566 = vtanh.pop %v4561
  %v4567 = vtanh.pop %v4562
  %v4568 = vtanh.pop %v4563
  %v4569 = vtanh.pop %v4564
  %v4570 = vtanh.pop %v4565
  %4571 = vst [vmem:[#allocation1] ss:$9 sm:$0xff] %v4215
  %s4572 = scalar_lea.vmem [#allocation1], 1
  %4573 = vst [vmem:[%s4572] ss:$9 sm:$0xff] %v4216
  %s4574 = scalar_lea.vmem [#allocation1], 2
  %4575 = vst [vmem:[%s4574] ss:$9 sm:$0xff] %v4217
  %s4576 = scalar_lea.vmem [#allocation1], 3
  %4577 = vst [vmem:[%s4576] ss:$9 sm:$0xff] %v4218
  %s4578 = scalar_lea.vmem [#allocation1], 4
  %4579 = vst [vmem:[%s4578] ss:$9 sm:$0xff] %v4219
  %v4580 = vld [vmem:[#allocation1] sm:$0xff]
  %v4581 = vsel %vm1324, %v4580, 0
  %4583 = vmatpush.msra.mxu0 0.0
  %4584 = vmatpush.msra.mxu0 0.0
  %4585 = vmatpush.msra.mxu0 0.0
  %4586 = vmatpush.msra.mxu0 0.0
  %4587 = vmatpush.msra.mxu0 0.0
  %4588 = vmatpush.msra.mxu0 0.0
  %4589 = vmatpush.msra.mxu0 0.0
  %4590 = vmatpush.msra.mxu0 0.0
  %4591 = vmatpush.msra.mxu0 0.0
  %4592 = vmatpush.msra.mxu0 0.0
  %4593 = vmatpush.msra.mxu0 0.0
  %4594 = vmatpush.msra.mxu0 0.0
  %4595 = vmatpush.msra.mxu0 0.0
  %4596 = vmatpush.msra.mxu0 0.0
  %4597 = vmatpush.msra.mxu0 0.0
  %4598 = vmatpush.msra.mxu0 %v3754
  %4599 = vmatmul.f32.gmra.mxu0 %v4581
  %v4600 = vpop.f32.mrf.mxu0
  %v4601 = vadd.f32 0.0, %v4600
  %4602 = vdwg.mxu0
  %v4604 = vrot.slane %v4601, 1
  %v4605 = vrot.slane %v4601, 2
  %v4606 = vrot.slane %v4601, 3
  %v4607 = vrot.slane %v4601, 4
  %v4612 = vadd.f32 %v3693, %v4601
  %v4613 = vadd.f32 %v3694, %v4604
  %v4614 = vadd.f32 %v3695, %v4605
  %v4615 = vadd.f32 %v3696, %v4606
  %v4616 = vadd.f32 %v3697, %v4607
  %v4617 = vxor.u32 %v4612, 2147483648
  %v4618 = vxor.u32 %v4613, 2147483648
  %v4619 = vxor.u32 %v4614, 2147483648
  %v4620 = vxor.u32 %v4615, 2147483648
  %v4621 = vxor.u32 %v4616, 2147483648
  %v4622 = vmul.f32 %v4617, 1.442695
  %v4623 = vpow.pop %v4622
  %v4624 = vmul.f32 %v4618, 1.442695
  %v4625 = vpow.pop %v4624
  %v4626 = vmul.f32 %v4619, 1.442695
  %v4627 = vpow.pop %v4626
  %v4628 = vmul.f32 %v4620, 1.442695
  %v4629 = vpow.pop %v4628
  %v4630 = vmul.f32 %v4621, 1.442695
  %v4631 = vpow.pop %v4630
  %v4632 = vadd.f32 %v4623, 1.0
  %v4633 = vadd.f32 %v4625, 1.0
  %v4634 = vadd.f32 %v4627, 1.0
  %v4635 = vadd.f32 %v4629, 1.0
  %v4636 = vadd.f32 %v4631, 1.0
  %v4637 = vrcp.pop %v4632
  %v4638 = vmul.f32 %v4632, %v4637
  %v4639 = vsub.f32 1.0, %v4638
  %v4640 = vmul.f32 %v4637, %v4639
  %v4641 = vadd.f32 %v4637, %v4640
  %vm4642 = vweird.f32 %v4632
  %vm4643 = vweird.f32 %v4637
  %vm4644 = vmor %vm4642, %vm4643
  %v4645 = vsel %vm4644, %v4637, %v4641
  %v4646 = vand.u32 2147483647, %v4632
  %vm4647 = vcmp.eq.f32.partialorder %v4646, 8.507059e+37
  %v4648 = vand.u32 %v4632, 2147483648
  %v4649 = vor.u32 1.1754944e-38, %v4648
  %v4650 = vsel %vm4647, %v4649, %v4645
  %v4651 = vmul.f32 1.0, %v4650
  %v4652 = vrcp.pop %v4633
  %v4653 = vmul.f32 %v4633, %v4652
  %v4654 = vsub.f32 1.0, %v4653
  %v4655 = vmul.f32 %v4652, %v4654
  %v4656 = vadd.f32 %v4652, %v4655
  %vm4657 = vweird.f32 %v4633
  %vm4658 = vweird.f32 %v4652
  %vm4659 = vmor %vm4657, %vm4658
  %v4660 = vsel %vm4659, %v4652, %v4656
  %v4661 = vand.u32 2147483647, %v4633
  %vm4662 = vcmp.eq.f32.partialorder %v4661, 8.507059e+37
  %v4663 = vand.u32 %v4633, 2147483648
  %v4664 = vor.u32 1.1754944e-38, %v4663
  %v4665 = vsel %vm4662, %v4664, %v4660
  %v4666 = vmul.f32 1.0, %v4665
  %v4667 = vrcp.pop %v4634
  %v4668 = vmul.f32 %v4634, %v4667
  %v4669 = vsub.f32 1.0, %v4668
  %v4670 = vmul.f32 %v4667, %v4669
  %v4671 = vadd.f32 %v4667, %v4670
  %vm4672 = vweird.f32 %v4634
  %vm4673 = vweird.f32 %v4667
  %vm4674 = vmor %vm4672, %vm4673
  %v4675 = vsel %vm4674, %v4667, %v4671
  %v4676 = vand.u32 2147483647, %v4634
  %vm4677 = vcmp.eq.f32.partialorder %v4676, 8.507059e+37
  %v4678 = vand.u32 %v4634, 2147483648
  %v4679 = vor.u32 1.1754944e-38, %v4678
  %v4680 = vsel %vm4677, %v4679, %v4675
  %v4681 = vmul.f32 1.0, %v4680
  %v4682 = vrcp.pop %v4635
  %v4683 = vmul.f32 %v4635, %v4682
  %v4684 = vsub.f32 1.0, %v4683
  %v4685 = vmul.f32 %v4682, %v4684
  %v4686 = vadd.f32 %v4682, %v4685
  %vm4687 = vweird.f32 %v4635
  %vm4688 = vweird.f32 %v4682
  %vm4689 = vmor %vm4687, %vm4688
  %v4690 = vsel %vm4689, %v4682, %v4686
  %v4691 = vand.u32 2147483647, %v4635
  %vm4692 = vcmp.eq.f32.partialorder %v4691, 8.507059e+37
  %v4693 = vand.u32 %v4635, 2147483648
  %v4694 = vor.u32 1.1754944e-38, %v4693
  %v4695 = vsel %vm4692, %v4694, %v4690
  %v4696 = vmul.f32 1.0, %v4695
  %v4697 = vrcp.pop %v4636
  %v4698 = vmul.f32 %v4636, %v4697
  %v4699 = vsub.f32 1.0, %v4698
  %v4700 = vmul.f32 %v4697, %v4699
  %v4701 = vadd.f32 %v4697, %v4700
  %vm4702 = vweird.f32 %v4636
  %vm4703 = vweird.f32 %v4697
  %vm4704 = vmor %vm4702, %vm4703
  %v4705 = vsel %vm4704, %v4697, %v4701
  %v4706 = vand.u32 2147483647, %v4636
  %vm4707 = vcmp.eq.f32.partialorder %v4706, 8.507059e+37
  %v4708 = vand.u32 %v4636, 2147483648
  %v4709 = vor.u32 1.1754944e-38, %v4708
  %v4710 = vsel %vm4707, %v4709, %v4705
  %v4711 = vmul.f32 1.0, %v4710
  %v4712 = vmul.f32 %v4459, %v4205
  %v4713 = vmul.f32 %v4474, %v4206
  %v4714 = vmul.f32 %v4489, %v4207
  %v4715 = vmul.f32 %v4504, %v4208
  %v4716 = vmul.f32 %v4519, %v4209
  %v4717 = vmul.f32 %v4318, %v4566
  %v4718 = vmul.f32 %v4333, %v4567
  %v4719 = vmul.f32 %v4348, %v4568
  %v4720 = vmul.f32 %v4363, %v4569
  %v4721 = vmul.f32 %v4378, %v4570
  %v4722 = vadd.f32 %v4712, %v4717
  %v4723 = vadd.f32 %v4713, %v4718
  %v4724 = vadd.f32 %v4714, %v4719
  %v4725 = vadd.f32 %v4715, %v4720
  %v4726 = vadd.f32 %v4716, %v4721
  %v4727 = vtanh.pop %v4722
  %v4728 = vtanh.pop %v4723
  %v4729 = vtanh.pop %v4724
  %v4730 = vtanh.pop %v4725
  %v4731 = vtanh.pop %v4726
  %v4732 = vmul.f32 %v4651, %v4727
  %v4733 = vmul.f32 %v4666, %v4728
  %v4734 = vmul.f32 %v4681, %v4729
  %v4735 = vmul.f32 %v4696, %v4730
  %v4736 = vmul.f32 %v4711, %v4731
  %4742 = vst [vmem:[#allocation1] ss:$9 sm:$0xff] %v4732
  %s4743 = scalar_lea.vmem [#allocation1], 1
  %4744 = vst [vmem:[%s4743] ss:$9 sm:$0xff] %v4733
  %s4745 = scalar_lea.vmem [#allocation1], 2
  %4746 = vst [vmem:[%s4745] ss:$9 sm:$0xff] %v4734
  %s4747 = scalar_lea.vmem [#allocation1], 3
  %4748 = vst [vmem:[%s4747] ss:$9 sm:$0xff] %v4735
  %s4749 = scalar_lea.vmem [#allocation1], 4
  %4750 = vst [vmem:[%s4749] ss:$9 sm:$0xff] %v4736
  %v4751 = vld [vmem:[#allocation1] sm:$0xff]
  %s4753 = scalar_lea.vmem [#allocation2], 8
  %4754 = vst.msk [vmem:[%s4753] sm:$0x1f] %vm4236, %v4751
  %4755 = vst [vmem:[#allocation1] ss:$9 sm:$0xff] %v4732
  %s4756 = scalar_lea.vmem [#allocation1], 1
  %4757 = vst [vmem:[%s4756] ss:$9 sm:$0xff] %v4733
  %s4758 = scalar_lea.vmem [#allocation1], 2
  %4759 = vst [vmem:[%s4758] ss:$9 sm:$0xff] %v4734
  %s4760 = scalar_lea.vmem [#allocation1], 3
  %4761 = vst [vmem:[%s4760] ss:$9 sm:$0xff] %v4735
  %s4762 = scalar_lea.vmem [#allocation1], 4
  %4763 = vst [vmem:[%s4762] ss:$9 sm:$0xff] %v4736
  %v4764 = vld [vmem:[#allocation1] sm:$0xff]
  %v4765 = vsel %vm1324, %v4764, 0
  %4767 = vmatpush.msra.mxu0 0.0
  %4768 = vmatpush.msra.mxu0 0.0
  %4769 = vmatpush.msra.mxu0 0.0
  %4770 = vmatpush.msra.mxu0 0.0
  %4771 = vmatpush.msra.mxu0 0.0
  %4772 = vmatpush.msra.mxu0 0.0
  %4773 = vmatpush.msra.mxu0 0.0
  %4774 = vmatpush.msra.mxu0 0.0
  %4775 = vmatpush.msra.mxu0 0.0
  %4776 = vmatpush.msra.mxu0 0.0
  %4777 = vmatpush.msra.mxu0 0.0
  %4778 = vmatpush.msra.mxu0 0.0
  %4779 = vmatpush.msra.mxu0 0.0
  %4780 = vmatpush.msra.mxu0 0.0
  %4781 = vmatpush.msra.mxu0 0.0
  %4782 = vmatpush.msra.mxu0 %v3748
  %4783 = vmatmul.f32.gmra.mxu0 %v4765
  %v4784 = vpop.f32.mrf.mxu0
  %v4785 = vadd.f32 0.0, %v4784
  %4786 = vdwg.mxu0
  %v4788 = vrot.slane %v4785, 1
  %v4789 = vrot.slane %v4785, 2
  %v4790 = vrot.slane %v4785, 3
  %v4791 = vrot.slane %v4785, 4
  %v4796 = vadd.f32 %v2741, %v4785
  %v4797 = vadd.f32 %v2742, %v4788
  %v4798 = vadd.f32 %v2743, %v4789
  %v4799 = vadd.f32 %v2744, %v4790
  %v4800 = vadd.f32 %v2745, %v4791
  %v4801 = vxor.u32 %v4796, 2147483648
  %v4802 = vxor.u32 %v4797, 2147483648
  %v4803 = vxor.u32 %v4798, 2147483648
  %v4804 = vxor.u32 %v4799, 2147483648
  %v4805 = vxor.u32 %v4800, 2147483648
  %v4806 = vmul.f32 %v4801, 1.442695
  %v4807 = vpow.pop %v4806
  %v4808 = vmul.f32 %v4802, 1.442695
  %v4809 = vpow.pop %v4808
  %v4810 = vmul.f32 %v4803, 1.442695
  %v4811 = vpow.pop %v4810
  %v4812 = vmul.f32 %v4804, 1.442695
  %v4813 = vpow.pop %v4812
  %v4814 = vmul.f32 %v4805, 1.442695
  %v4815 = vpow.pop %v4814
  %v4816 = vadd.f32 %v4807, 1.0
  %v4817 = vadd.f32 %v4809, 1.0
  %v4818 = vadd.f32 %v4811, 1.0
  %v4819 = vadd.f32 %v4813, 1.0
  %v4820 = vadd.f32 %v4815, 1.0
  %v4821 = vrcp.pop %v4816
  %v4822 = vmul.f32 %v4816, %v4821
  %v4823 = vsub.f32 1.0, %v4822
  %v4824 = vmul.f32 %v4821, %v4823
  %v4825 = vadd.f32 %v4821, %v4824
  %vm4826 = vweird.f32 %v4816
  %vm4827 = vweird.f32 %v4821
  %vm4828 = vmor %vm4826, %vm4827
  %v4829 = vsel %vm4828, %v4821, %v4825
  %v4830 = vand.u32 2147483647, %v4816
  %vm4831 = vcmp.eq.f32.partialorder %v4830, 8.507059e+37
  %v4832 = vand.u32 %v4816, 2147483648
  %v4833 = vor.u32 1.1754944e-38, %v4832
  %v4834 = vsel %vm4831, %v4833, %v4829
  %v4835 = vmul.f32 1.0, %v4834
  %v4836 = vrcp.pop %v4817
  %v4837 = vmul.f32 %v4817, %v4836
  %v4838 = vsub.f32 1.0, %v4837
  %v4839 = vmul.f32 %v4836, %v4838
  %v4840 = vadd.f32 %v4836, %v4839
  %vm4841 = vweird.f32 %v4817
  %vm4842 = vweird.f32 %v4836
  %vm4843 = vmor %vm4841, %vm4842
  %v4844 = vsel %vm4843, %v4836, %v4840
  %v4845 = vand.u32 2147483647, %v4817
  %vm4846 = vcmp.eq.f32.partialorder %v4845, 8.507059e+37
  %v4847 = vand.u32 %v4817, 2147483648
  %v4848 = vor.u32 1.1754944e-38, %v4847
  %v4849 = vsel %vm4846, %v4848, %v4844
  %v4850 = vmul.f32 1.0, %v4849
  %v4851 = vrcp.pop %v4818
  %v4852 = vmul.f32 %v4818, %v4851
  %v4853 = vsub.f32 1.0, %v4852
  %v4854 = vmul.f32 %v4851, %v4853
  %v4855 = vadd.f32 %v4851, %v4854
  %vm4856 = vweird.f32 %v4818
  %vm4857 = vweird.f32 %v4851
  %vm4858 = vmor %vm4856, %vm4857
  %v4859 = vsel %vm4858, %v4851, %v4855
  %v4860 = vand.u32 2147483647, %v4818
  %vm4861 = vcmp.eq.f32.partialorder %v4860, 8.507059e+37
  %v4862 = vand.u32 %v4818, 2147483648
  %v4863 = vor.u32 1.1754944e-38, %v4862
  %v4864 = vsel %vm4861, %v4863, %v4859
  %v4865 = vmul.f32 1.0, %v4864
  %v4866 = vrcp.pop %v4819
  %v4867 = vmul.f32 %v4819, %v4866
  %v4868 = vsub.f32 1.0, %v4867
  %v4869 = vmul.f32 %v4866, %v4868
  %v4870 = vadd.f32 %v4866, %v4869
  %vm4871 = vweird.f32 %v4819
  %vm4872 = vweird.f32 %v4866
  %vm4873 = vmor %vm4871, %vm4872
  %v4874 = vsel %vm4873, %v4866, %v4870
  %v4875 = vand.u32 2147483647, %v4819
  %vm4876 = vcmp.eq.f32.partialorder %v4875, 8.507059e+37
  %v4877 = vand.u32 %v4819, 2147483648
  %v4878 = vor.u32 1.1754944e-38, %v4877
  %v4879 = vsel %vm4876, %v4878, %v4874
  %v4880 = vmul.f32 1.0, %v4879
  %v4881 = vrcp.pop %v4820
  %v4882 = vmul.f32 %v4820, %v4881
  %v4883 = vsub.f32 1.0, %v4882
  %v4884 = vmul.f32 %v4881, %v4883
  %v4885 = vadd.f32 %v4881, %v4884
  %vm4886 = vweird.f32 %v4820
  %vm4887 = vweird.f32 %v4881
  %vm4888 = vmor %vm4886, %vm4887
  %v4889 = vsel %vm4888, %v4881, %v4885
  %v4890 = vand.u32 2147483647, %v4820
  %vm4891 = vcmp.eq.f32.partialorder %v4890, 8.507059e+37
  %v4892 = vand.u32 %v4820, 2147483648
  %v4893 = vor.u32 1.1754944e-38, %v4892
  %v4894 = vsel %vm4891, %v4893, %v4889
  %v4895 = vmul.f32 1.0, %v4894
  %4896 = vst [vmem:[#allocation1] ss:$9 sm:$0xff] %v4732
  %s4897 = scalar_lea.vmem [#allocation1], 1
  %4898 = vst [vmem:[%s4897] ss:$9 sm:$0xff] %v4733
  %s4899 = scalar_lea.vmem [#allocation1], 2
  %4900 = vst [vmem:[%s4899] ss:$9 sm:$0xff] %v4734
  %s4901 = scalar_lea.vmem [#allocation1], 3
  %4902 = vst [vmem:[%s4901] ss:$9 sm:$0xff] %v4735
  %s4903 = scalar_lea.vmem [#allocation1], 4
  %4904 = vst [vmem:[%s4903] ss:$9 sm:$0xff] %v4736
  %v4905 = vld [vmem:[#allocation1] sm:$0xff]
  %v4906 = vsel %vm1324, %v4905, 0
  %4908 = vmatpush.msra.mxu0 0.0
  %4909 = vmatpush.msra.mxu0 0.0
  %4910 = vmatpush.msra.mxu0 0.0
  %4911 = vmatpush.msra.mxu0 0.0
  %4912 = vmatpush.msra.mxu0 0.0
  %4913 = vmatpush.msra.mxu0 0.0
  %4914 = vmatpush.msra.mxu0 0.0
  %4915 = vmatpush.msra.mxu0 0.0
  %4916 = vmatpush.msra.mxu0 0.0
  %4917 = vmatpush.msra.mxu0 0.0
  %4918 = vmatpush.msra.mxu0 0.0
  %4919 = vmatpush.msra.mxu0 0.0
  %4920 = vmatpush.msra.mxu0 0.0
  %4921 = vmatpush.msra.mxu0 0.0
  %4922 = vmatpush.msra.mxu0 0.0
  %4923 = vmatpush.msra.mxu0 %v3750
  %4924 = vmatmul.f32.gmra.mxu0 %v4906
  %v4925 = vpop.f32.mrf.mxu0
  %v4926 = vadd.f32 0.0, %v4925
  %4927 = vdwg.mxu0
  %v4929 = vrot.slane %v4926, 1
  %v4930 = vrot.slane %v4926, 2
  %v4931 = vrot.slane %v4926, 3
  %v4932 = vrot.slane %v4926, 4
  %v4937 = vadd.f32 %v3060, %v4926
  %v4938 = vadd.f32 %v3061, %v4929
  %v4939 = vadd.f32 %v3062, %v4930
  %v4940 = vadd.f32 %v3063, %v4931
  %v4941 = vadd.f32 %v3064, %v4932
  %v4942 = vxor.u32 %v4937, 2147483648
  %v4943 = vxor.u32 %v4938, 2147483648
  %v4944 = vxor.u32 %v4939, 2147483648
  %v4945 = vxor.u32 %v4940, 2147483648
  %v4946 = vxor.u32 %v4941, 2147483648
  %v4947 = vmul.f32 %v4942, 1.442695
  %v4948 = vpow.pop %v4947
  %v4949 = vmul.f32 %v4943, 1.442695
  %v4950 = vpow.pop %v4949
  %v4951 = vmul.f32 %v4944, 1.442695
  %v4952 = vpow.pop %v4951
  %v4953 = vmul.f32 %v4945, 1.442695
  %v4954 = vpow.pop %v4953
  %v4955 = vmul.f32 %v4946, 1.442695
  %v4956 = vpow.pop %v4955
  %v4957 = vadd.f32 %v4948, 1.0
  %v4958 = vadd.f32 %v4950, 1.0
  %v4959 = vadd.f32 %v4952, 1.0
  %v4960 = vadd.f32 %v4954, 1.0
  %v4961 = vadd.f32 %v4956, 1.0
  %v4962 = vrcp.pop %v4957
  %v4963 = vmul.f32 %v4957, %v4962
  %v4964 = vsub.f32 1.0, %v4963
  %v4965 = vmul.f32 %v4962, %v4964
  %v4966 = vadd.f32 %v4962, %v4965
  %vm4967 = vweird.f32 %v4957
  %vm4968 = vweird.f32 %v4962
  %vm4969 = vmor %vm4967, %vm4968
  %v4970 = vsel %vm4969, %v4962, %v4966
  %v4971 = vand.u32 2147483647, %v4957
  %vm4972 = vcmp.eq.f32.partialorder %v4971, 8.507059e+37
  %v4973 = vand.u32 %v4957, 2147483648
  %v4974 = vor.u32 1.1754944e-38, %v4973
  %v4975 = vsel %vm4972, %v4974, %v4970
  %v4976 = vmul.f32 1.0, %v4975
  %v4977 = vrcp.pop %v4958
  %v4978 = vmul.f32 %v4958, %v4977
  %v4979 = vsub.f32 1.0, %v4978
  %v4980 = vmul.f32 %v4977, %v4979
  %v4981 = vadd.f32 %v4977, %v4980
  %vm4982 = vweird.f32 %v4958
  %vm4983 = vweird.f32 %v4977
  %vm4984 = vmor %vm4982, %vm4983
  %v4985 = vsel %vm4984, %v4977, %v4981
  %v4986 = vand.u32 2147483647, %v4958
  %vm4987 = vcmp.eq.f32.partialorder %v4986, 8.507059e+37
  %v4988 = vand.u32 %v4958, 2147483648
  %v4989 = vor.u32 1.1754944e-38, %v4988
  %v4990 = vsel %vm4987, %v4989, %v4985
  %v4991 = vmul.f32 1.0, %v4990
  %v4992 = vrcp.pop %v4959
  %v4993 = vmul.f32 %v4959, %v4992
  %v4994 = vsub.f32 1.0, %v4993
  %v4995 = vmul.f32 %v4992, %v4994
  %v4996 = vadd.f32 %v4992, %v4995
  %vm4997 = vweird.f32 %v4959
  %vm4998 = vweird.f32 %v4992
  %vm4999 = vmor %vm4997, %vm4998
  %v5000 = vsel %vm4999, %v4992, %v4996
  %v5001 = vand.u32 2147483647, %v4959
  %vm5002 = vcmp.eq.f32.partialorder %v5001, 8.507059e+37
  %v5003 = vand.u32 %v4959, 2147483648
  %v5004 = vor.u32 1.1754944e-38, %v5003
  %v5005 = vsel %vm5002, %v5004, %v5000
  %v5006 = vmul.f32 1.0, %v5005
  %v5007 = vrcp.pop %v4960
  %v5008 = vmul.f32 %v4960, %v5007
  %v5009 = vsub.f32 1.0, %v5008
  %v5010 = vmul.f32 %v5007, %v5009
  %v5011 = vadd.f32 %v5007, %v5010
  %vm5012 = vweird.f32 %v4960
  %vm5013 = vweird.f32 %v5007
  %vm5014 = vmor %vm5012, %vm5013
  %v5015 = vsel %vm5014, %v5007, %v5011
  %v5016 = vand.u32 2147483647, %v4960
  %vm5017 = vcmp.eq.f32.partialorder %v5016, 8.507059e+37
  %v5018 = vand.u32 %v4960, 2147483648
  %v5019 = vor.u32 1.1754944e-38, %v5018
  %v5020 = vsel %vm5017, %v5019, %v5015
  %v5021 = vmul.f32 1.0, %v5020
  %v5022 = vrcp.pop %v4961
  %v5023 = vmul.f32 %v4961, %v5022
  %v5024 = vsub.f32 1.0, %v5023
  %v5025 = vmul.f32 %v5022, %v5024
  %v5026 = vadd.f32 %v5022, %v5025
  %vm5027 = vweird.f32 %v4961
  %vm5028 = vweird.f32 %v5022
  %vm5029 = vmor %vm5027, %vm5028
  %v5030 = vsel %vm5029, %v5022, %v5026
  %v5031 = vand.u32 2147483647, %v4961
  %vm5032 = vcmp.eq.f32.partialorder %v5031, 8.507059e+37
  %v5033 = vand.u32 %v4961, 2147483648
  %v5034 = vor.u32 1.1754944e-38, %v5033
  %v5035 = vsel %vm5032, %v5034, %v5030
  %v5036 = vmul.f32 1.0, %v5035
  %5037 = vst [vmem:[#allocation1] ss:$9 sm:$0xff] %v4732
  %s5038 = scalar_lea.vmem [#allocation1], 1
  %5039 = vst [vmem:[%s5038] ss:$9 sm:$0xff] %v4733
  %s5040 = scalar_lea.vmem [#allocation1], 2
  %5041 = vst [vmem:[%s5040] ss:$9 sm:$0xff] %v4734
  %s5042 = scalar_lea.vmem [#allocation1], 3
  %5043 = vst [vmem:[%s5042] ss:$9 sm:$0xff] %v4735
  %s5044 = scalar_lea.vmem [#allocation1], 4
  %5045 = vst [vmem:[%s5044] ss:$9 sm:$0xff] %v4736
  %v5046 = vld [vmem:[#allocation1] sm:$0xff]
  %v5047 = vsel %vm1324, %v5046, 0
  %5049 = vmatpush.msra.mxu0 0.0
  %5050 = vmatpush.msra.mxu0 0.0
  %5051 = vmatpush.msra.mxu0 0.0
  %5052 = vmatpush.msra.mxu0 0.0
  %5053 = vmatpush.msra.mxu0 0.0
  %5054 = vmatpush.msra.mxu0 0.0
  %5055 = vmatpush.msra.mxu0 0.0
  %5056 = vmatpush.msra.mxu0 0.0
  %5057 = vmatpush.msra.mxu0 0.0
  %5058 = vmatpush.msra.mxu0 0.0
  %5059 = vmatpush.msra.mxu0 0.0
  %5060 = vmatpush.msra.mxu0 0.0
  %5061 = vmatpush.msra.mxu0 0.0
  %5062 = vmatpush.msra.mxu0 0.0
  %5063 = vmatpush.msra.mxu0 0.0
  %5064 = vmatpush.msra.mxu0 %v3752
  %5065 = vmatmul.f32.gmra.mxu0 %v5047
  %v5066 = vpop.f32.mrf.mxu0
  %v5067 = vadd.f32 0.0, %v5066
  %5068 = vdwg.mxu0
  %v5070 = vrot.slane %v5067, 1
  %v5071 = vrot.slane %v5067, 2
  %v5072 = vrot.slane %v5067, 3
  %v5073 = vrot.slane %v5067, 4
  %v5078 = vadd.f32 %v3379, %v5067
  %v5079 = vadd.f32 %v3380, %v5070
  %v5080 = vadd.f32 %v3381, %v5071
  %v5081 = vadd.f32 %v3382, %v5072
  %v5082 = vadd.f32 %v3383, %v5073
  %v5083 = vtanh.pop %v5078
  %v5084 = vtanh.pop %v5079
  %v5085 = vtanh.pop %v5080
  %v5086 = vtanh.pop %v5081
  %v5087 = vtanh.pop %v5082
  %5088 = vst [vmem:[#allocation1] ss:$9 sm:$0xff] %v4732
  %s5089 = scalar_lea.vmem [#allocation1], 1
  %5090 = vst [vmem:[%s5089] ss:$9 sm:$0xff] %v4733
  %s5091 = scalar_lea.vmem [#allocation1], 2
  %5092 = vst [vmem:[%s5091] ss:$9 sm:$0xff] %v4734
  %s5093 = scalar_lea.vmem [#allocation1], 3
  %5094 = vst [vmem:[%s5093] ss:$9 sm:$0xff] %v4735
  %s5095 = scalar_lea.vmem [#allocation1], 4
  %5096 = vst [vmem:[%s5095] ss:$9 sm:$0xff] %v4736
  %v5097 = vld [vmem:[#allocation1] sm:$0xff]
  %v5098 = vsel %vm1324, %v5097, 0
  %5100 = vmatpush.msra.mxu0 0.0
  %5101 = vmatpush.msra.mxu0 0.0
  %5102 = vmatpush.msra.mxu0 0.0
  %5103 = vmatpush.msra.mxu0 0.0
  %5104 = vmatpush.msra.mxu0 0.0
  %5105 = vmatpush.msra.mxu0 0.0
  %5106 = vmatpush.msra.mxu0 0.0
  %5107 = vmatpush.msra.mxu0 0.0
  %5108 = vmatpush.msra.mxu0 0.0
  %5109 = vmatpush.msra.mxu0 0.0
  %5110 = vmatpush.msra.mxu0 0.0
  %5111 = vmatpush.msra.mxu0 0.0
  %5112 = vmatpush.msra.mxu0 0.0
  %5113 = vmatpush.msra.mxu0 0.0
  %5114 = vmatpush.msra.mxu0 0.0
  %5115 = vmatpush.msra.mxu0 %v3754
  %5116 = vmatmul.f32.gmra.mxu0 %v5098
  %v5117 = vpop.f32.mrf.mxu0
  %v5118 = vadd.f32 0.0, %v5117
  %5119 = vdwg.mxu0
  %v5121 = vrot.slane %v5118, 1
  %v5122 = vrot.slane %v5118, 2
  %v5123 = vrot.slane %v5118, 3
  %v5124 = vrot.slane %v5118, 4
  %v5129 = vadd.f32 %v3698, %v5118
  %v5130 = vadd.f32 %v3699, %v5121
  %v5131 = vadd.f32 %v3700, %v5122
  %v5132 = vadd.f32 %v3701, %v5123
  %v5133 = vadd.f32 %v3702, %v5124
  %v5134 = vxor.u32 %v5129, 2147483648
  %v5135 = vxor.u32 %v5130, 2147483648
  %v5136 = vxor.u32 %v5131, 2147483648
  %v5137 = vxor.u32 %v5132, 2147483648
  %v5138 = vxor.u32 %v5133, 2147483648
  %v5139 = vmul.f32 %v5134, 1.442695
  %v5140 = vpow.pop %v5139
  %v5141 = vmul.f32 %v5135, 1.442695
  %v5142 = vpow.pop %v5141
  %v5143 = vmul.f32 %v5136, 1.442695
  %v5144 = vpow.pop %v5143
  %v5145 = vmul.f32 %v5137, 1.442695
  %v5146 = vpow.pop %v5145
  %v5147 = vmul.f32 %v5138, 1.442695
  %v5148 = vpow.pop %v5147
  %v5149 = vadd.f32 %v5140, 1.0
  %v5150 = vadd.f32 %v5142, 1.0
  %v5151 = vadd.f32 %v5144, 1.0
  %v5152 = vadd.f32 %v5146, 1.0
  %v5153 = vadd.f32 %v5148, 1.0
  %v5154 = vrcp.pop %v5149
  %v5155 = vmul.f32 %v5149, %v5154
  %v5156 = vsub.f32 1.0, %v5155
  %v5157 = vmul.f32 %v5154, %v5156
  %v5158 = vadd.f32 %v5154, %v5157
  %vm5159 = vweird.f32 %v5149
  %vm5160 = vweird.f32 %v5154
  %vm5161 = vmor %vm5159, %vm5160
  %v5162 = vsel %vm5161, %v5154, %v5158
  %v5163 = vand.u32 2147483647, %v5149
  %vm5164 = vcmp.eq.f32.partialorder %v5163, 8.507059e+37
  %v5165 = vand.u32 %v5149, 2147483648
  %v5166 = vor.u32 1.1754944e-38, %v5165
  %v5167 = vsel %vm5164, %v5166, %v5162
  %v5168 = vmul.f32 1.0, %v5167
  %v5169 = vrcp.pop %v5150
  %v5170 = vmul.f32 %v5150, %v5169
  %v5171 = vsub.f32 1.0, %v5170
  %v5172 = vmul.f32 %v5169, %v5171
  %v5173 = vadd.f32 %v5169, %v5172
  %vm5174 = vweird.f32 %v5150
  %vm5175 = vweird.f32 %v5169
  %vm5176 = vmor %vm5174, %vm5175
  %v5177 = vsel %vm5176, %v5169, %v5173
  %v5178 = vand.u32 2147483647, %v5150
  %vm5179 = vcmp.eq.f32.partialorder %v5178, 8.507059e+37
  %v5180 = vand.u32 %v5150, 2147483648
  %v5181 = vor.u32 1.1754944e-38, %v5180
  %v5182 = vsel %vm5179, %v5181, %v5177
  %v5183 = vmul.f32 1.0, %v5182
  %v5184 = vrcp.pop %v5151
  %v5185 = vmul.f32 %v5151, %v5184
  %v5186 = vsub.f32 1.0, %v5185
  %v5187 = vmul.f32 %v5184, %v5186
  %v5188 = vadd.f32 %v5184, %v5187
  %vm5189 = vweird.f32 %v5151
  %vm5190 = vweird.f32 %v5184
  %vm5191 = vmor %vm5189, %vm5190
  %v5192 = vsel %vm5191, %v5184, %v5188
  %v5193 = vand.u32 2147483647, %v5151
  %vm5194 = vcmp.eq.f32.partialorder %v5193, 8.507059e+37
  %v5195 = vand.u32 %v5151, 2147483648
  %v5196 = vor.u32 1.1754944e-38, %v5195
  %v5197 = vsel %vm5194, %v5196, %v5192
  %v5198 = vmul.f32 1.0, %v5197
  %v5199 = vrcp.pop %v5152
  %v5200 = vmul.f32 %v5152, %v5199
  %v5201 = vsub.f32 1.0, %v5200
  %v5202 = vmul.f32 %v5199, %v5201
  %v5203 = vadd.f32 %v5199, %v5202
  %vm5204 = vweird.f32 %v5152
  %vm5205 = vweird.f32 %v5199
  %vm5206 = vmor %vm5204, %vm5205
  %v5207 = vsel %vm5206, %v5199, %v5203
  %v5208 = vand.u32 2147483647, %v5152
  %vm5209 = vcmp.eq.f32.partialorder %v5208, 8.507059e+37
  %v5210 = vand.u32 %v5152, 2147483648
  %v5211 = vor.u32 1.1754944e-38, %v5210
  %v5212 = vsel %vm5209, %v5211, %v5207
  %v5213 = vmul.f32 1.0, %v5212
  %v5214 = vrcp.pop %v5153
  %v5215 = vmul.f32 %v5153, %v5214
  %v5216 = vsub.f32 1.0, %v5215
  %v5217 = vmul.f32 %v5214, %v5216
  %v5218 = vadd.f32 %v5214, %v5217
  %vm5219 = vweird.f32 %v5153
  %vm5220 = vweird.f32 %v5214
  %vm5221 = vmor %vm5219, %vm5220
  %v5222 = vsel %vm5221, %v5214, %v5218
  %v5223 = vand.u32 2147483647, %v5153
  %vm5224 = vcmp.eq.f32.partialorder %v5223, 8.507059e+37
  %v5225 = vand.u32 %v5153, 2147483648
  %v5226 = vor.u32 1.1754944e-38, %v5225
  %v5227 = vsel %vm5224, %v5226, %v5222
  %v5228 = vmul.f32 1.0, %v5227
  %v5229 = vmul.f32 %v4976, %v4722
  %v5230 = vmul.f32 %v4991, %v4723
  %v5231 = vmul.f32 %v5006, %v4724
  %v5232 = vmul.f32 %v5021, %v4725
  %v5233 = vmul.f32 %v5036, %v4726
  %v5234 = vmul.f32 %v4835, %v5083
  %v5235 = vmul.f32 %v4850, %v5084
  %v5236 = vmul.f32 %v4865, %v5085
  %v5237 = vmul.f32 %v4880, %v5086
  %v5238 = vmul.f32 %v4895, %v5087
  %v5239 = vadd.f32 %v5229, %v5234
  %v5240 = vadd.f32 %v5230, %v5235
  %v5241 = vadd.f32 %v5231, %v5236
  %v5242 = vadd.f32 %v5232, %v5237
  %v5243 = vadd.f32 %v5233, %v5238
  %v5244 = vtanh.pop %v5239
  %v5245 = vtanh.pop %v5240
  %v5246 = vtanh.pop %v5241
  %v5247 = vtanh.pop %v5242
  %v5248 = vtanh.pop %v5243
  %v5249 = vmul.f32 %v5168, %v5244
  %v5250 = vmul.f32 %v5183, %v5245
  %v5251 = vmul.f32 %v5198, %v5246
  %v5252 = vmul.f32 %v5213, %v5247
  %v5253 = vmul.f32 %v5228, %v5248
  %5259 = vst [vmem:[#allocation1] ss:$9 sm:$0xff] %v5249
  %s5260 = scalar_lea.vmem [#allocation1], 1
  %5261 = vst [vmem:[%s5260] ss:$9 sm:$0xff] %v5250
  %s5262 = scalar_lea.vmem [#allocation1], 2
  %5263 = vst [vmem:[%s5262] ss:$9 sm:$0xff] %v5251
  %s5264 = scalar_lea.vmem [#allocation1], 3
  %5265 = vst [vmem:[%s5264] ss:$9 sm:$0xff] %v5252
  %s5266 = scalar_lea.vmem [#allocation1], 4
  %5267 = vst [vmem:[%s5266] ss:$9 sm:$0xff] %v5253
  %v5268 = vld [vmem:[#allocation1] sm:$0xff]
  %s5270 = scalar_lea.vmem [#allocation2], 16
  %5271 = vst.msk [vmem:[%s5270] sm:$0x1f] %vm4236, %v5268
  %5272 = vst [vmem:[#allocation1] ss:$9 sm:$0xff] %v5249
  %s5273 = scalar_lea.vmem [#allocation1], 1
  %5274 = vst [vmem:[%s5273] ss:$9 sm:$0xff] %v5250
  %s5275 = scalar_lea.vmem [#allocation1], 2
  %5276 = vst [vmem:[%s5275] ss:$9 sm:$0xff] %v5251
  %s5277 = scalar_lea.vmem [#allocation1], 3
  %5278 = vst [vmem:[%s5277] ss:$9 sm:$0xff] %v5252
  %s5279 = scalar_lea.vmem [#allocation1], 4
  %5280 = vst [vmem:[%s5279] ss:$9 sm:$0xff] %v5253
  %v5281 = vld [vmem:[#allocation1] sm:$0xff]
  %v5282 = vsel %vm1324, %v5281, 0
  %5284 = vmatpush.msra.mxu0 0.0
  %5285 = vmatpush.msra.mxu0 0.0
  %5286 = vmatpush.msra.mxu0 0.0
  %5287 = vmatpush.msra.mxu0 0.0
  %5288 = vmatpush.msra.mxu0 0.0
  %5289 = vmatpush.msra.mxu0 0.0
  %5290 = vmatpush.msra.mxu0 0.0
  %5291 = vmatpush.msra.mxu0 0.0
  %5292 = vmatpush.msra.mxu0 0.0
  %5293 = vmatpush.msra.mxu0 0.0
  %5294 = vmatpush.msra.mxu0 0.0
  %5295 = vmatpush.msra.mxu0 0.0
  %5296 = vmatpush.msra.mxu0 0.0
  %5297 = vmatpush.msra.mxu0 0.0
  %5298 = vmatpush.msra.mxu0 0.0
  %5299 = vmatpush.msra.mxu0 %v3748
  %5300 = vmatmul.f32.gmra.mxu0 %v5282
  %v5301 = vpop.f32.mrf.mxu0
  %v5302 = vadd.f32 0.0, %v5301
  %5303 = vdwg.mxu0
  %v5305 = vrot.slane %v5302, 1
  %v5306 = vrot.slane %v5302, 2
  %v5307 = vrot.slane %v5302, 3
  %v5308 = vrot.slane %v5302, 4
  %v5313 = vadd.f32 %v2746, %v5302
  %v5314 = vadd.f32 %v2747, %v5305
  %v5315 = vadd.f32 %v2748, %v5306
  %v5316 = vadd.f32 %v2749, %v5307
  %v5317 = vadd.f32 %v2750, %v5308
  %v5318 = vxor.u32 %v5313, 2147483648
  %v5319 = vxor.u32 %v5314, 2147483648
  %v5320 = vxor.u32 %v5315, 2147483648
  %v5321 = vxor.u32 %v5316, 2147483648
  %v5322 = vxor.u32 %v5317, 2147483648
  %v5323 = vmul.f32 %v5318, 1.442695
  %v5324 = vpow.pop %v5323
  %v5325 = vmul.f32 %v5319, 1.442695
  %v5326 = vpow.pop %v5325
  %v5327 = vmul.f32 %v5320, 1.442695
  %v5328 = vpow.pop %v5327
  %v5329 = vmul.f32 %v5321, 1.442695
  %v5330 = vpow.pop %v5329
  %v5331 = vmul.f32 %v5322, 1.442695
  %v5332 = vpow.pop %v5331
  %v5333 = vadd.f32 %v5324, 1.0
  %v5334 = vadd.f32 %v5326, 1.0
  %v5335 = vadd.f32 %v5328, 1.0
  %v5336 = vadd.f32 %v5330, 1.0
  %v5337 = vadd.f32 %v5332, 1.0
  %v5338 = vrcp.pop %v5333
  %v5339 = vmul.f32 %v5333, %v5338
  %v5340 = vsub.f32 1.0, %v5339
  %v5341 = vmul.f32 %v5338, %v5340
  %v5342 = vadd.f32 %v5338, %v5341
  %vm5343 = vweird.f32 %v5333
  %vm5344 = vweird.f32 %v5338
  %vm5345 = vmor %vm5343, %vm5344
  %v5346 = vsel %vm5345, %v5338, %v5342
  %v5347 = vand.u32 2147483647, %v5333
  %vm5348 = vcmp.eq.f32.partialorder %v5347, 8.507059e+37
  %v5349 = vand.u32 %v5333, 2147483648
  %v5350 = vor.u32 1.1754944e-38, %v5349
  %v5351 = vsel %vm5348, %v5350, %v5346
  %v5352 = vmul.f32 1.0, %v5351
  %v5353 = vrcp.pop %v5334
  %v5354 = vmul.f32 %v5334, %v5353
  %v5355 = vsub.f32 1.0, %v5354
  %v5356 = vmul.f32 %v5353, %v5355
  %v5357 = vadd.f32 %v5353, %v5356
  %vm5358 = vweird.f32 %v5334
  %vm5359 = vweird.f32 %v5353
  %vm5360 = vmor %vm5358, %vm5359
  %v5361 = vsel %vm5360, %v5353, %v5357
  %v5362 = vand.u32 2147483647, %v5334
  %vm5363 = vcmp.eq.f32.partialorder %v5362, 8.507059e+37
  %v5364 = vand.u32 %v5334, 2147483648
  %v5365 = vor.u32 1.1754944e-38, %v5364
  %v5366 = vsel %vm5363, %v5365, %v5361
  %v5367 = vmul.f32 1.0, %v5366
  %v5368 = vrcp.pop %v5335
  %v5369 = vmul.f32 %v5335, %v5368
  %v5370 = vsub.f32 1.0, %v5369
  %v5371 = vmul.f32 %v5368, %v5370
  %v5372 = vadd.f32 %v5368, %v5371
  %vm5373 = vweird.f32 %v5335
  %vm5374 = vweird.f32 %v5368
  %vm5375 = vmor %vm5373, %vm5374
  %v5376 = vsel %vm5375, %v5368, %v5372
  %v5377 = vand.u32 2147483647, %v5335
  %vm5378 = vcmp.eq.f32.partialorder %v5377, 8.507059e+37
  %v5379 = vand.u32 %v5335, 2147483648
  %v5380 = vor.u32 1.1754944e-38, %v5379
  %v5381 = vsel %vm5378, %v5380, %v5376
  %v5382 = vmul.f32 1.0, %v5381
  %v5383 = vrcp.pop %v5336
  %v5384 = vmul.f32 %v5336, %v5383
  %v5385 = vsub.f32 1.0, %v5384
  %v5386 = vmul.f32 %v5383, %v5385
  %v5387 = vadd.f32 %v5383, %v5386
  %vm5388 = vweird.f32 %v5336
  %vm5389 = vweird.f32 %v5383
  %vm5390 = vmor %vm5388, %vm5389
  %v5391 = vsel %vm5390, %v5383, %v5387
  %v5392 = vand.u32 2147483647, %v5336
  %vm5393 = vcmp.eq.f32.partialorder %v5392, 8.507059e+37
  %v5394 = vand.u32 %v5336, 2147483648
  %v5395 = vor.u32 1.1754944e-38, %v5394
  %v5396 = vsel %vm5393, %v5395, %v5391
  %v5397 = vmul.f32 1.0, %v5396
  %v5398 = vrcp.pop %v5337
  %v5399 = vmul.f32 %v5337, %v5398
  %v5400 = vsub.f32 1.0, %v5399
  %v5401 = vmul.f32 %v5398, %v5400
  %v5402 = vadd.f32 %v5398, %v5401
  %vm5403 = vweird.f32 %v5337
  %vm5404 = vweird.f32 %v5398
  %vm5405 = vmor %vm5403, %vm5404
  %v5406 = vsel %vm5405, %v5398, %v5402
  %v5407 = vand.u32 2147483647, %v5337
  %vm5408 = vcmp.eq.f32.partialorder %v5407, 8.507059e+37
  %v5409 = vand.u32 %v5337, 2147483648
  %v5410 = vor.u32 1.1754944e-38, %v5409
  %v5411 = vsel %vm5408, %v5410, %v5406
  %v5412 = vmul.f32 1.0, %v5411
  %5413 = vst [vmem:[#allocation1] ss:$9 sm:$0xff] %v5249
  %s5414 = scalar_lea.vmem [#allocation1], 1
  %5415 = vst [vmem:[%s5414] ss:$9 sm:$0xff] %v5250
  %s5416 = scalar_lea.vmem [#allocation1], 2
  %5417 = vst [vmem:[%s5416] ss:$9 sm:$0xff] %v5251
  %s5418 = scalar_lea.vmem [#allocation1], 3
  %5419 = vst [vmem:[%s5418] ss:$9 sm:$0xff] %v5252
  %s5420 = scalar_lea.vmem [#allocation1], 4
  %5421 = vst [vmem:[%s5420] ss:$9 sm:$0xff] %v5253
  %v5422 = vld [vmem:[#allocation1] sm:$0xff]
  %v5423 = vsel %vm1324, %v5422, 0
  %5425 = vmatpush.msra.mxu0 0.0
  %5426 = vmatpush.msra.mxu0 0.0
  %5427 = vmatpush.msra.mxu0 0.0
  %5428 = vmatpush.msra.mxu0 0.0
  %5429 = vmatpush.msra.mxu0 0.0
  %5430 = vmatpush.msra.mxu0 0.0
  %5431 = vmatpush.msra.mxu0 0.0
  %5432 = vmatpush.msra.mxu0 0.0
  %5433 = vmatpush.msra.mxu0 0.0
  %5434 = vmatpush.msra.mxu0 0.0
  %5435 = vmatpush.msra.mxu0 0.0
  %5436 = vmatpush.msra.mxu0 0.0
  %5437 = vmatpush.msra.mxu0 0.0
  %5438 = vmatpush.msra.mxu0 0.0
  %5439 = vmatpush.msra.mxu0 0.0
  %5440 = vmatpush.msra.mxu0 %v3750
  %5441 = vmatmul.f32.gmra.mxu0 %v5423
  %v5442 = vpop.f32.mrf.mxu0
  %v5443 = vadd.f32 0.0, %v5442
  %5444 = vdwg.mxu0
  %v5446 = vrot.slane %v5443, 1
  %v5447 = vrot.slane %v5443, 2
  %v5448 = vrot.slane %v5443, 3
  %v5449 = vrot.slane %v5443, 4
  %v5454 = vadd.f32 %v3065, %v5443
  %v5455 = vadd.f32 %v3066, %v5446
  %v5456 = vadd.f32 %v3067, %v5447
  %v5457 = vadd.f32 %v3068, %v5448
  %v5458 = vadd.f32 %v3069, %v5449
  %v5459 = vxor.u32 %v5454, 2147483648
  %v5460 = vxor.u32 %v5455, 2147483648
  %v5461 = vxor.u32 %v5456, 2147483648
  %v5462 = vxor.u32 %v5457, 2147483648
  %v5463 = vxor.u32 %v5458, 2147483648
  %v5464 = vmul.f32 %v5459, 1.442695
  %v5465 = vpow.pop %v5464
  %v5466 = vmul.f32 %v5460, 1.442695
  %v5467 = vpow.pop %v5466
  %v5468 = vmul.f32 %v5461, 1.442695
  %v5469 = vpow.pop %v5468
  %v5470 = vmul.f32 %v5462, 1.442695
  %v5471 = vpow.pop %v5470
  %v5472 = vmul.f32 %v5463, 1.442695
  %v5473 = vpow.pop %v5472
  %v5474 = vadd.f32 %v5465, 1.0
  %v5475 = vadd.f32 %v5467, 1.0
  %v5476 = vadd.f32 %v5469, 1.0
  %v5477 = vadd.f32 %v5471, 1.0
  %v5478 = vadd.f32 %v5473, 1.0
  %v5479 = vrcp.pop %v5474
  %v5480 = vmul.f32 %v5474, %v5479
  %v5481 = vsub.f32 1.0, %v5480
  %v5482 = vmul.f32 %v5479, %v5481
  %v5483 = vadd.f32 %v5479, %v5482
  %vm5484 = vweird.f32 %v5474
  %vm5485 = vweird.f32 %v5479
  %vm5486 = vmor %vm5484, %vm5485
  %v5487 = vsel %vm5486, %v5479, %v5483
  %v5488 = vand.u32 2147483647, %v5474
  %vm5489 = vcmp.eq.f32.partialorder %v5488, 8.507059e+37
  %v5490 = vand.u32 %v5474, 2147483648
  %v5491 = vor.u32 1.1754944e-38, %v5490
  %v5492 = vsel %vm5489, %v5491, %v5487
  %v5493 = vmul.f32 1.0, %v5492
  %v5494 = vrcp.pop %v5475
  %v5495 = vmul.f32 %v5475, %v5494
  %v5496 = vsub.f32 1.0, %v5495
  %v5497 = vmul.f32 %v5494, %v5496
  %v5498 = vadd.f32 %v5494, %v5497
  %vm5499 = vweird.f32 %v5475
  %vm5500 = vweird.f32 %v5494
  %vm5501 = vmor %vm5499, %vm5500
  %v5502 = vsel %vm5501, %v5494, %v5498
  %v5503 = vand.u32 2147483647, %v5475
  %vm5504 = vcmp.eq.f32.partialorder %v5503, 8.507059e+37
  %v5505 = vand.u32 %v5475, 2147483648
  %v5506 = vor.u32 1.1754944e-38, %v5505
  %v5507 = vsel %vm5504, %v5506, %v5502
  %v5508 = vmul.f32 1.0, %v5507
  %v5509 = vrcp.pop %v5476
  %v5510 = vmul.f32 %v5476, %v5509
  %v5511 = vsub.f32 1.0, %v5510
  %v5512 = vmul.f32 %v5509, %v5511
  %v5513 = vadd.f32 %v5509, %v5512
  %vm5514 = vweird.f32 %v5476
  %vm5515 = vweird.f32 %v5509
  %vm5516 = vmor %vm5514, %vm5515
  %v5517 = vsel %vm5516, %v5509, %v5513
  %v5518 = vand.u32 2147483647, %v5476
  %vm5519 = vcmp.eq.f32.partialorder %v5518, 8.507059e+37
  %v5520 = vand.u32 %v5476, 2147483648
  %v5521 = vor.u32 1.1754944e-38, %v5520
  %v5522 = vsel %vm5519, %v5521, %v5517
  %v5523 = vmul.f32 1.0, %v5522
  %v5524 = vrcp.pop %v5477
  %v5525 = vmul.f32 %v5477, %v5524
  %v5526 = vsub.f32 1.0, %v5525
  %v5527 = vmul.f32 %v5524, %v5526
  %v5528 = vadd.f32 %v5524, %v5527
  %vm5529 = vweird.f32 %v5477
  %vm5530 = vweird.f32 %v5524
  %vm5531 = vmor %vm5529, %vm5530
  %v5532 = vsel %vm5531, %v5524, %v5528
  %v5533 = vand.u32 2147483647, %v5477
  %vm5534 = vcmp.eq.f32.partialorder %v5533, 8.507059e+37
  %v5535 = vand.u32 %v5477, 2147483648
  %v5536 = vor.u32 1.1754944e-38, %v5535
  %v5537 = vsel %vm5534, %v5536, %v5532
  %v5538 = vmul.f32 1.0, %v5537
  %v5539 = vrcp.pop %v5478
  %v5540 = vmul.f32 %v5478, %v5539
  %v5541 = vsub.f32 1.0, %v5540
  %v5542 = vmul.f32 %v5539, %v5541
  %v5543 = vadd.f32 %v5539, %v5542
  %vm5544 = vweird.f32 %v5478
  %vm5545 = vweird.f32 %v5539
  %vm5546 = vmor %vm5544, %vm5545
  %v5547 = vsel %vm5546, %v5539, %v5543
  %v5548 = vand.u32 2147483647, %v5478
  %vm5549 = vcmp.eq.f32.partialorder %v5548, 8.507059e+37
  %v5550 = vand.u32 %v5478, 2147483648
  %v5551 = vor.u32 1.1754944e-38, %v5550
  %v5552 = vsel %vm5549, %v5551, %v5547
  %v5553 = vmul.f32 1.0, %v5552
  %5554 = vst [vmem:[#allocation1] ss:$9 sm:$0xff] %v5249
  %s5555 = scalar_lea.vmem [#allocation1], 1
  %5556 = vst [vmem:[%s5555] ss:$9 sm:$0xff] %v5250
  %s5557 = scalar_lea.vmem [#allocation1], 2
  %5558 = vst [vmem:[%s5557] ss:$9 sm:$0xff] %v5251
  %s5559 = scalar_lea.vmem [#allocation1], 3
  %5560 = vst [vmem:[%s5559] ss:$9 sm:$0xff] %v5252
  %s5561 = scalar_lea.vmem [#allocation1], 4
  %5562 = vst [vmem:[%s5561] ss:$9 sm:$0xff] %v5253
  %v5563 = vld [vmem:[#allocation1] sm:$0xff]
  %v5564 = vsel %vm1324, %v5563, 0
  %5566 = vmatpush.msra.mxu0 0.0
  %5567 = vmatpush.msra.mxu0 0.0
  %5568 = vmatpush.msra.mxu0 0.0
  %5569 = vmatpush.msra.mxu0 0.0
  %5570 = vmatpush.msra.mxu0 0.0
  %5571 = vmatpush.msra.mxu0 0.0
  %5572 = vmatpush.msra.mxu0 0.0
  %5573 = vmatpush.msra.mxu0 0.0
  %5574 = vmatpush.msra.mxu0 0.0
  %5575 = vmatpush.msra.mxu0 0.0
  %5576 = vmatpush.msra.mxu0 0.0
  %5577 = vmatpush.msra.mxu0 0.0
  %5578 = vmatpush.msra.mxu0 0.0
  %5579 = vmatpush.msra.mxu0 0.0
  %5580 = vmatpush.msra.mxu0 0.0
  %5581 = vmatpush.msra.mxu0 %v3752
  %5582 = vmatmul.f32.gmra.mxu0 %v5564
  %v5583 = vpop.f32.mrf.mxu0
  %v5584 = vadd.f32 0.0, %v5583
  %5585 = vdwg.mxu0
  %v5587 = vrot.slane %v5584, 1
  %v5588 = vrot.slane %v5584, 2
  %v5589 = vrot.slane %v5584, 3
  %v5590 = vrot.slane %v5584, 4
  %v5595 = vadd.f32 %v3384, %v5584
  %v5596 = vadd.f32 %v3385, %v5587
  %v5597 = vadd.f32 %v3386, %v5588
  %v5598 = vadd.f32 %v3387, %v5589
  %v5599 = vadd.f32 %v3388, %v5590
  %v5600 = vtanh.pop %v5595
  %v5601 = vtanh.pop %v5596
  %v5602 = vtanh.pop %v5597
  %v5603 = vtanh.pop %v5598
  %v5604 = vtanh.pop %v5599
  %5605 = vst [vmem:[#allocation1] ss:$9 sm:$0xff] %v5249
  %s5606 = scalar_lea.vmem [#allocation1], 1
  %5607 = vst [vmem:[%s5606] ss:$9 sm:$0xff] %v5250
  %s5608 = scalar_lea.vmem [#allocation1], 2
  %5609 = vst [vmem:[%s5608] ss:$9 sm:$0xff] %v5251
  %s5610 = scalar_lea.vmem [#allocation1], 3
  %5611 = vst [vmem:[%s5610] ss:$9 sm:$0xff] %v5252
  %s5612 = scalar_lea.vmem [#allocation1], 4
  %5613 = vst [vmem:[%s5612] ss:$9 sm:$0xff] %v5253
  %v5614 = vld [vmem:[#allocation1] sm:$0xff]
  %v5615 = vsel %vm1324, %v5614, 0
  %5617 = vmatpush.msra.mxu0 0.0
  %5618 = vmatpush.msra.mxu0 0.0
  %5619 = vmatpush.msra.mxu0 0.0
  %5620 = vmatpush.msra.mxu0 0.0
  %5621 = vmatpush.msra.mxu0 0.0
  %5622 = vmatpush.msra.mxu0 0.0
  %5623 = vmatpush.msra.mxu0 0.0
  %5624 = vmatpush.msra.mxu0 0.0
  %5625 = vmatpush.msra.mxu0 0.0
  %5626 = vmatpush.msra.mxu0 0.0
  %5627 = vmatpush.msra.mxu0 0.0
  %5628 = vmatpush.msra.mxu0 0.0
  %5629 = vmatpush.msra.mxu0 0.0
  %5630 = vmatpush.msra.mxu0 0.0
  %5631 = vmatpush.msra.mxu0 0.0
  %5632 = vmatpush.msra.mxu0 %v3754
  %5633 = vmatmul.f32.gmra.mxu0 %v5615
  %v5634 = vpop.f32.mrf.mxu0
  %v5635 = vadd.f32 0.0, %v5634
  %5636 = vdwg.mxu0
  %v5638 = vrot.slane %v5635, 1
  %v5639 = vrot.slane %v5635, 2
  %v5640 = vrot.slane %v5635, 3
  %v5641 = vrot.slane %v5635, 4
  %v5646 = vadd.f32 %v3703, %v5635
  %v5647 = vadd.f32 %v3704, %v5638
  %v5648 = vadd.f32 %v3705, %v5639
  %v5649 = vadd.f32 %v3706, %v5640
  %v5650 = vadd.f32 %v3707, %v5641
  %v5651 = vxor.u32 %v5646, 2147483648
  %v5652 = vxor.u32 %v5647, 2147483648
  %v5653 = vxor.u32 %v5648, 2147483648
  %v5654 = vxor.u32 %v5649, 2147483648
  %v5655 = vxor.u32 %v5650, 2147483648
  %v5656 = vmul.f32 %v5651, 1.442695
  %v5657 = vpow.pop %v5656
  %v5658 = vmul.f32 %v5652, 1.442695
  %v5659 = vpow.pop %v5658
  %v5660 = vmul.f32 %v5653, 1.442695
  %v5661 = vpow.pop %v5660
  %v5662 = vmul.f32 %v5654, 1.442695
  %v5663 = vpow.pop %v5662
  %v5664 = vmul.f32 %v5655, 1.442695
  %v5665 = vpow.pop %v5664
  %v5666 = vadd.f32 %v5657, 1.0
  %v5667 = vadd.f32 %v5659, 1.0
  %v5668 = vadd.f32 %v5661, 1.0
  %v5669 = vadd.f32 %v5663, 1.0
  %v5670 = vadd.f32 %v5665, 1.0
  %v5671 = vrcp.pop %v5666
  %v5672 = vmul.f32 %v5666, %v5671
  %v5673 = vsub.f32 1.0, %v5672
  %v5674 = vmul.f32 %v5671, %v5673
  %v5675 = vadd.f32 %v5671, %v5674
  %vm5676 = vweird.f32 %v5666
  %vm5677 = vweird.f32 %v5671
  %vm5678 = vmor %vm5676, %vm5677
  %v5679 = vsel %vm5678, %v5671, %v5675
  %v5680 = vand.u32 2147483647, %v5666
  %vm5681 = vcmp.eq.f32.partialorder %v5680, 8.507059e+37
  %v5682 = vand.u32 %v5666, 2147483648
  %v5683 = vor.u32 1.1754944e-38, %v5682
  %v5684 = vsel %vm5681, %v5683, %v5679
  %v5685 = vmul.f32 1.0, %v5684
  %v5686 = vrcp.pop %v5667
  %v5687 = vmul.f32 %v5667, %v5686
  %v5688 = vsub.f32 1.0, %v5687
  %v5689 = vmul.f32 %v5686, %v5688
  %v5690 = vadd.f32 %v5686, %v5689
  %vm5691 = vweird.f32 %v5667
  %vm5692 = vweird.f32 %v5686
  %vm5693 = vmor %vm5691, %vm5692
  %v5694 = vsel %vm5693, %v5686, %v5690
  %v5695 = vand.u32 2147483647, %v5667
  %vm5696 = vcmp.eq.f32.partialorder %v5695, 8.507059e+37
  %v5697 = vand.u32 %v5667, 2147483648
  %v5698 = vor.u32 1.1754944e-38, %v5697
  %v5699 = vsel %vm5696, %v5698, %v5694
  %v5700 = vmul.f32 1.0, %v5699
  %v5701 = vrcp.pop %v5668
  %v5702 = vmul.f32 %v5668, %v5701
  %v5703 = vsub.f32 1.0, %v5702
  %v5704 = vmul.f32 %v5701, %v5703
  %v5705 = vadd.f32 %v5701, %v5704
  %vm5706 = vweird.f32 %v5668
  %vm5707 = vweird.f32 %v5701
  %vm5708 = vmor %vm5706, %vm5707
  %v5709 = vsel %vm5708, %v5701, %v5705
  %v5710 = vand.u32 2147483647, %v5668
  %vm5711 = vcmp.eq.f32.partialorder %v5710, 8.507059e+37
  %v5712 = vand.u32 %v5668, 2147483648
  %v5713 = vor.u32 1.1754944e-38, %v5712
  %v5714 = vsel %vm5711, %v5713, %v5709
  %v5715 = vmul.f32 1.0, %v5714
  %v5716 = vrcp.pop %v5669
  %v5717 = vmul.f32 %v5669, %v5716
  %v5718 = vsub.f32 1.0, %v5717
  %v5719 = vmul.f32 %v5716, %v5718
  %v5720 = vadd.f32 %v5716, %v5719
  %vm5721 = vweird.f32 %v5669
  %vm5722 = vweird.f32 %v5716
  %vm5723 = vmor %vm5721, %vm5722
  %v5724 = vsel %vm5723, %v5716, %v5720
  %v5725 = vand.u32 2147483647, %v5669
  %vm5726 = vcmp.eq.f32.partialorder %v5725, 8.507059e+37
  %v5727 = vand.u32 %v5669, 2147483648
  %v5728 = vor.u32 1.1754944e-38, %v5727
  %v5729 = vsel %vm5726, %v5728, %v5724
  %v5730 = vmul.f32 1.0, %v5729
  %v5731 = vrcp.pop %v5670
  %v5732 = vmul.f32 %v5670, %v5731
  %v5733 = vsub.f32 1.0, %v5732
  %v5734 = vmul.f32 %v5731, %v5733
  %v5735 = vadd.f32 %v5731, %v5734
  %vm5736 = vweird.f32 %v5670
  %vm5737 = vweird.f32 %v5731
  %vm5738 = vmor %vm5736, %vm5737
  %v5739 = vsel %vm5738, %v5731, %v5735
  %v5740 = vand.u32 2147483647, %v5670
  %vm5741 = vcmp.eq.f32.partialorder %v5740, 8.507059e+37
  %v5742 = vand.u32 %v5670, 2147483648
  %v5743 = vor.u32 1.1754944e-38, %v5742
  %v5744 = vsel %vm5741, %v5743, %v5739
  %v5745 = vmul.f32 1.0, %v5744
  %v5746 = vmul.f32 %v5493, %v5239
  %v5747 = vmul.f32 %v5508, %v5240
  %v5748 = vmul.f32 %v5523, %v5241
  %v5749 = vmul.f32 %v5538, %v5242
  %v5750 = vmul.f32 %v5553, %v5243
  %v5751 = vmul.f32 %v5352, %v5600
  %v5752 = vmul.f32 %v5367, %v5601
  %v5753 = vmul.f32 %v5382, %v5602
  %v5754 = vmul.f32 %v5397, %v5603
  %v5755 = vmul.f32 %v5412, %v5604
  %v5756 = vadd.f32 %v5746, %v5751
  %v5757 = vadd.f32 %v5747, %v5752
  %v5758 = vadd.f32 %v5748, %v5753
  %v5759 = vadd.f32 %v5749, %v5754
  %v5760 = vadd.f32 %v5750, %v5755
  %v5761 = vtanh.pop %v5756
  %v5762 = vtanh.pop %v5757
  %v5763 = vtanh.pop %v5758
  %v5764 = vtanh.pop %v5759
  %v5765 = vtanh.pop %v5760
  %v5766 = vmul.f32 %v5685, %v5761
  %v5767 = vmul.f32 %v5700, %v5762
  %v5768 = vmul.f32 %v5715, %v5763
  %v5769 = vmul.f32 %v5730, %v5764
  %v5770 = vmul.f32 %v5745, %v5765
  %5776 = vst [vmem:[#allocation1] ss:$9 sm:$0xff] %v5766
  %s5777 = scalar_lea.vmem [#allocation1], 1
  %5778 = vst [vmem:[%s5777] ss:$9 sm:$0xff] %v5767
  %s5779 = scalar_lea.vmem [#allocation1], 2
  %5780 = vst [vmem:[%s5779] ss:$9 sm:$0xff] %v5768
  %s5781 = scalar_lea.vmem [#allocation1], 3
  %5782 = vst [vmem:[%s5781] ss:$9 sm:$0xff] %v5769
  %s5783 = scalar_lea.vmem [#allocation1], 4
  %5784 = vst [vmem:[%s5783] ss:$9 sm:$0xff] %v5770
  %v5785 = vld [vmem:[#allocation1] sm:$0xff]
  %s5787 = scalar_lea.vmem [#allocation2], 24
  %5788 = vst.msk [vmem:[%s5787] sm:$0x1f] %vm4236, %v5785
  %5789 = vst [vmem:[#allocation1] ss:$9 sm:$0xff] %v5766
  %s5790 = scalar_lea.vmem [#allocation1], 1
  %5791 = vst [vmem:[%s5790] ss:$9 sm:$0xff] %v5767
  %s5792 = scalar_lea.vmem [#allocation1], 2
  %5793 = vst [vmem:[%s5792] ss:$9 sm:$0xff] %v5768
  %s5794 = scalar_lea.vmem [#allocation1], 3
  %5795 = vst [vmem:[%s5794] ss:$9 sm:$0xff] %v5769
  %s5796 = scalar_lea.vmem [#allocation1], 4
  %5797 = vst [vmem:[%s5796] ss:$9 sm:$0xff] %v5770
  %v5798 = vld [vmem:[#allocation1] sm:$0xff]
  %v5799 = vsel %vm1324, %v5798, 0
  %5801 = vmatpush.msra.mxu0 0.0
  %5802 = vmatpush.msra.mxu0 0.0
  %5803 = vmatpush.msra.mxu0 0.0
  %5804 = vmatpush.msra.mxu0 0.0
  %5805 = vmatpush.msra.mxu0 0.0
  %5806 = vmatpush.msra.mxu0 0.0
  %5807 = vmatpush.msra.mxu0 0.0
  %5808 = vmatpush.msra.mxu0 0.0
  %5809 = vmatpush.msra.mxu0 0.0
  %5810 = vmatpush.msra.mxu0 0.0
  %5811 = vmatpush.msra.mxu0 0.0
  %5812 = vmatpush.msra.mxu0 0.0
  %5813 = vmatpush.msra.mxu0 0.0
  %5814 = vmatpush.msra.mxu0 0.0
  %5815 = vmatpush.msra.mxu0 0.0
  %5816 = vmatpush.msra.mxu0 %v3748
  %5817 = vmatmul.f32.gmra.mxu0 %v5799
  %v5818 = vpop.f32.mrf.mxu0
  %v5819 = vadd.f32 0.0, %v5818
  %5820 = vdwg.mxu0
  %v5822 = vrot.slane %v5819, 1
  %v5823 = vrot.slane %v5819, 2
  %v5824 = vrot.slane %v5819, 3
  %v5825 = vrot.slane %v5819, 4
  %v5830 = vadd.f32 %v2751, %v5819
  %v5831 = vadd.f32 %v2752, %v5822
  %v5832 = vadd.f32 %v2753, %v5823
  %v5833 = vadd.f32 %v2754, %v5824
  %v5834 = vadd.f32 %v2755, %v5825
  %v5835 = vxor.u32 %v5830, 2147483648
  %v5836 = vxor.u32 %v5831, 2147483648
  %v5837 = vxor.u32 %v5832, 2147483648
  %v5838 = vxor.u32 %v5833, 2147483648
  %v5839 = vxor.u32 %v5834, 2147483648
  %v5840 = vmul.f32 %v5835, 1.442695
  %v5841 = vpow.pop %v5840
  %v5842 = vmul.f32 %v5836, 1.442695
  %v5843 = vpow.pop %v5842
  %v5844 = vmul.f32 %v5837, 1.442695
  %v5845 = vpow.pop %v5844
  %v5846 = vmul.f32 %v5838, 1.442695
  %v5847 = vpow.pop %v5846
  %v5848 = vmul.f32 %v5839, 1.442695
  %v5849 = vpow.pop %v5848
  %v5850 = vadd.f32 %v5841, 1.0
  %v5851 = vadd.f32 %v5843, 1.0
  %v5852 = vadd.f32 %v5845, 1.0
  %v5853 = vadd.f32 %v5847, 1.0
  %v5854 = vadd.f32 %v5849, 1.0
  %v5855 = vrcp.pop %v5850
  %v5856 = vmul.f32 %v5850, %v5855
  %v5857 = vsub.f32 1.0, %v5856
  %v5858 = vmul.f32 %v5855, %v5857
  %v5859 = vadd.f32 %v5855, %v5858
  %vm5860 = vweird.f32 %v5850
  %vm5861 = vweird.f32 %v5855
  %vm5862 = vmor %vm5860, %vm5861
  %v5863 = vsel %vm5862, %v5855, %v5859
  %v5864 = vand.u32 2147483647, %v5850
  %vm5865 = vcmp.eq.f32.partialorder %v5864, 8.507059e+37
  %v5866 = vand.u32 %v5850, 2147483648
  %v5867 = vor.u32 1.1754944e-38, %v5866
  %v5868 = vsel %vm5865, %v5867, %v5863
  %v5869 = vmul.f32 1.0, %v5868
  %v5870 = vrcp.pop %v5851
  %v5871 = vmul.f32 %v5851, %v5870
  %v5872 = vsub.f32 1.0, %v5871
  %v5873 = vmul.f32 %v5870, %v5872
  %v5874 = vadd.f32 %v5870, %v5873
  %vm5875 = vweird.f32 %v5851
  %vm5876 = vweird.f32 %v5870
  %vm5877 = vmor %vm5875, %vm5876
  %v5878 = vsel %vm5877, %v5870, %v5874
  %v5879 = vand.u32 2147483647, %v5851
  %vm5880 = vcmp.eq.f32.partialorder %v5879, 8.507059e+37
  %v5881 = vand.u32 %v5851, 2147483648
  %v5882 = vor.u32 1.1754944e-38, %v5881
  %v5883 = vsel %vm5880, %v5882, %v5878
  %v5884 = vmul.f32 1.0, %v5883
  %v5885 = vrcp.pop %v5852
  %v5886 = vmul.f32 %v5852, %v5885
  %v5887 = vsub.f32 1.0, %v5886
  %v5888 = vmul.f32 %v5885, %v5887
  %v5889 = vadd.f32 %v5885, %v5888
  %vm5890 = vweird.f32 %v5852
  %vm5891 = vweird.f32 %v5885
  %vm5892 = vmor %vm5890, %vm5891
  %v5893 = vsel %vm5892, %v5885, %v5889
  %v5894 = vand.u32 2147483647, %v5852
  %vm5895 = vcmp.eq.f32.partialorder %v5894, 8.507059e+37
  %v5896 = vand.u32 %v5852, 2147483648
  %v5897 = vor.u32 1.1754944e-38, %v5896
  %v5898 = vsel %vm5895, %v5897, %v5893
  %v5899 = vmul.f32 1.0, %v5898
  %v5900 = vrcp.pop %v5853
  %v5901 = vmul.f32 %v5853, %v5900
  %v5902 = vsub.f32 1.0, %v5901
  %v5903 = vmul.f32 %v5900, %v5902
  %v5904 = vadd.f32 %v5900, %v5903
  %vm5905 = vweird.f32 %v5853
  %vm5906 = vweird.f32 %v5900
  %vm5907 = vmor %vm5905, %vm5906
  %v5908 = vsel %vm5907, %v5900, %v5904
  %v5909 = vand.u32 2147483647, %v5853
  %vm5910 = vcmp.eq.f32.partialorder %v5909, 8.507059e+37
  %v5911 = vand.u32 %v5853, 2147483648
  %v5912 = vor.u32 1.1754944e-38, %v5911
  %v5913 = vsel %vm5910, %v5912, %v5908
  %v5914 = vmul.f32 1.0, %v5913
  %v5915 = vrcp.pop %v5854
  %v5916 = vmul.f32 %v5854, %v5915
  %v5917 = vsub.f32 1.0, %v5916
  %v5918 = vmul.f32 %v5915, %v5917
  %v5919 = vadd.f32 %v5915, %v5918
  %vm5920 = vweird.f32 %v5854
  %vm5921 = vweird.f32 %v5915
  %vm5922 = vmor %vm5920, %vm5921
  %v5923 = vsel %vm5922, %v5915, %v5919
  %v5924 = vand.u32 2147483647, %v5854
  %vm5925 = vcmp.eq.f32.partialorder %v5924, 8.507059e+37
  %v5926 = vand.u32 %v5854, 2147483648
  %v5927 = vor.u32 1.1754944e-38, %v5926
  %v5928 = vsel %vm5925, %v5927, %v5923
  %v5929 = vmul.f32 1.0, %v5928
  %5930 = vst [vmem:[#allocation1] ss:$9 sm:$0xff] %v5766
  %s5931 = scalar_lea.vmem [#allocation1], 1
  %5932 = vst [vmem:[%s5931] ss:$9 sm:$0xff] %v5767
  %s5933 = scalar_lea.vmem [#allocation1], 2
  %5934 = vst [vmem:[%s5933] ss:$9 sm:$0xff] %v5768
  %s5935 = scalar_lea.vmem [#allocation1], 3
  %5936 = vst [vmem:[%s5935] ss:$9 sm:$0xff] %v5769
  %s5937 = scalar_lea.vmem [#allocation1], 4
  %5938 = vst [vmem:[%s5937] ss:$9 sm:$0xff] %v5770
  %v5939 = vld [vmem:[#allocation1] sm:$0xff]
  %v5940 = vsel %vm1324, %v5939, 0
  %5942 = vmatpush.msra.mxu0 0.0
  %5943 = vmatpush.msra.mxu0 0.0
  %5944 = vmatpush.msra.mxu0 0.0
  %5945 = vmatpush.msra.mxu0 0.0
  %5946 = vmatpush.msra.mxu0 0.0
  %5947 = vmatpush.msra.mxu0 0.0
  %5948 = vmatpush.msra.mxu0 0.0
  %5949 = vmatpush.msra.mxu0 0.0
  %5950 = vmatpush.msra.mxu0 0.0
  %5951 = vmatpush.msra.mxu0 0.0
  %5952 = vmatpush.msra.mxu0 0.0
  %5953 = vmatpush.msra.mxu0 0.0
  %5954 = vmatpush.msra.mxu0 0.0
  %5955 = vmatpush.msra.mxu0 0.0
  %5956 = vmatpush.msra.mxu0 0.0
  %5957 = vmatpush.msra.mxu0 %v3750
  %5958 = vmatmul.f32.gmra.mxu0 %v5940
  %v5959 = vpop.f32.mrf.mxu0
  %v5960 = vadd.f32 0.0, %v5959
  %5961 = vdwg.mxu0
  %v5963 = vrot.slane %v5960, 1
  %v5964 = vrot.slane %v5960, 2
  %v5965 = vrot.slane %v5960, 3
  %v5966 = vrot.slane %v5960, 4
  %v5971 = vadd.f32 %v3070, %v5960
  %v5972 = vadd.f32 %v3071, %v5963
  %v5973 = vadd.f32 %v3072, %v5964
  %v5974 = vadd.f32 %v3073, %v5965
  %v5975 = vadd.f32 %v3074, %v5966
  %v5976 = vxor.u32 %v5971, 2147483648
  %v5977 = vxor.u32 %v5972, 2147483648
  %v5978 = vxor.u32 %v5973, 2147483648
  %v5979 = vxor.u32 %v5974, 2147483648
  %v5980 = vxor.u32 %v5975, 2147483648
  %v5981 = vmul.f32 %v5976, 1.442695
  %v5982 = vpow.pop %v5981
  %v5983 = vmul.f32 %v5977, 1.442695
  %v5984 = vpow.pop %v5983
  %v5985 = vmul.f32 %v5978, 1.442695
  %v5986 = vpow.pop %v5985
  %v5987 = vmul.f32 %v5979, 1.442695
  %v5988 = vpow.pop %v5987
  %v5989 = vmul.f32 %v5980, 1.442695
  %v5990 = vpow.pop %v5989
  %v5991 = vadd.f32 %v5982, 1.0
  %v5992 = vadd.f32 %v5984, 1.0
  %v5993 = vadd.f32 %v5986, 1.0
  %v5994 = vadd.f32 %v5988, 1.0
  %v5995 = vadd.f32 %v5990, 1.0
  %v5996 = vrcp.pop %v5991
  %v5997 = vmul.f32 %v5991, %v5996
  %v5998 = vsub.f32 1.0, %v5997
  %v5999 = vmul.f32 %v5996, %v5998
  %v6000 = vadd.f32 %v5996, %v5999
  %vm6001 = vweird.f32 %v5991
  %vm6002 = vweird.f32 %v5996
  %vm6003 = vmor %vm6001, %vm6002
  %v6004 = vsel %vm6003, %v5996, %v6000
  %v6005 = vand.u32 2147483647, %v5991
  %vm6006 = vcmp.eq.f32.partialorder %v6005, 8.507059e+37
  %v6007 = vand.u32 %v5991, 2147483648
  %v6008 = vor.u32 1.1754944e-38, %v6007
  %v6009 = vsel %vm6006, %v6008, %v6004
  %v6010 = vmul.f32 1.0, %v6009
  %v6011 = vrcp.pop %v5992
  %v6012 = vmul.f32 %v5992, %v6011
  %v6013 = vsub.f32 1.0, %v6012
  %v6014 = vmul.f32 %v6011, %v6013
  %v6015 = vadd.f32 %v6011, %v6014
  %vm6016 = vweird.f32 %v5992
  %vm6017 = vweird.f32 %v6011
  %vm6018 = vmor %vm6016, %vm6017
  %v6019 = vsel %vm6018, %v6011, %v6015
  %v6020 = vand.u32 2147483647, %v5992
  %vm6021 = vcmp.eq.f32.partialorder %v6020, 8.507059e+37
  %v6022 = vand.u32 %v5992, 2147483648
  %v6023 = vor.u32 1.1754944e-38, %v6022
  %v6024 = vsel %vm6021, %v6023, %v6019
  %v6025 = vmul.f32 1.0, %v6024
  %v6026 = vrcp.pop %v5993
  %v6027 = vmul.f32 %v5993, %v6026
  %v6028 = vsub.f32 1.0, %v6027
  %v6029 = vmul.f32 %v6026, %v6028
  %v6030 = vadd.f32 %v6026, %v6029
  %vm6031 = vweird.f32 %v5993
  %vm6032 = vweird.f32 %v6026
  %vm6033 = vmor %vm6031, %vm6032
  %v6034 = vsel %vm6033, %v6026, %v6030
  %v6035 = vand.u32 2147483647, %v5993
  %vm6036 = vcmp.eq.f32.partialorder %v6035, 8.507059e+37
  %v6037 = vand.u32 %v5993, 2147483648
  %v6038 = vor.u32 1.1754944e-38, %v6037
  %v6039 = vsel %vm6036, %v6038, %v6034
  %v6040 = vmul.f32 1.0, %v6039
  %v6041 = vrcp.pop %v5994
  %v6042 = vmul.f32 %v5994, %v6041
  %v6043 = vsub.f32 1.0, %v6042
  %v6044 = vmul.f32 %v6041, %v6043
  %v6045 = vadd.f32 %v6041, %v6044
  %vm6046 = vweird.f32 %v5994
  %vm6047 = vweird.f32 %v6041
  %vm6048 = vmor %vm6046, %vm6047
  %v6049 = vsel %vm6048, %v6041, %v6045
  %v6050 = vand.u32 2147483647, %v5994
  %vm6051 = vcmp.eq.f32.partialorder %v6050, 8.507059e+37
  %v6052 = vand.u32 %v5994, 2147483648
  %v6053 = vor.u32 1.1754944e-38, %v6052
  %v6054 = vsel %vm6051, %v6053, %v6049
  %v6055 = vmul.f32 1.0, %v6054
  %v6056 = vrcp.pop %v5995
  %v6057 = vmul.f32 %v5995, %v6056
  %v6058 = vsub.f32 1.0, %v6057
  %v6059 = vmul.f32 %v6056, %v6058
  %v6060 = vadd.f32 %v6056, %v6059
  %vm6061 = vweird.f32 %v5995
  %vm6062 = vweird.f32 %v6056
  %vm6063 = vmor %vm6061, %vm6062
  %v6064 = vsel %vm6063, %v6056, %v6060
  %v6065 = vand.u32 2147483647, %v5995
  %vm6066 = vcmp.eq.f32.partialorder %v6065, 8.507059e+37
  %v6067 = vand.u32 %v5995, 2147483648
  %v6068 = vor.u32 1.1754944e-38, %v6067
  %v6069 = vsel %vm6066, %v6068, %v6064
  %v6070 = vmul.f32 1.0, %v6069
  %6071 = vst [vmem:[#allocation1] ss:$9 sm:$0xff] %v5766
  %s6072 = scalar_lea.vmem [#allocation1], 1
  %6073 = vst [vmem:[%s6072] ss:$9 sm:$0xff] %v5767
  %s6074 = scalar_lea.vmem [#allocation1], 2
  %6075 = vst [vmem:[%s6074] ss:$9 sm:$0xff] %v5768
  %s6076 = scalar_lea.vmem [#allocation1], 3
  %6077 = vst [vmem:[%s6076] ss:$9 sm:$0xff] %v5769
  %s6078 = scalar_lea.vmem [#allocation1], 4
  %6079 = vst [vmem:[%s6078] ss:$9 sm:$0xff] %v5770
  %v6080 = vld [vmem:[#allocation1] sm:$0xff]
  %v6081 = vsel %vm1324, %v6080, 0
  %6083 = vmatpush.msra.mxu0 0.0
  %6084 = vmatpush.msra.mxu0 0.0
  %6085 = vmatpush.msra.mxu0 0.0
  %6086 = vmatpush.msra.mxu0 0.0
  %6087 = vmatpush.msra.mxu0 0.0
  %6088 = vmatpush.msra.mxu0 0.0
  %6089 = vmatpush.msra.mxu0 0.0
  %6090 = vmatpush.msra.mxu0 0.0
  %6091 = vmatpush.msra.mxu0 0.0
  %6092 = vmatpush.msra.mxu0 0.0
  %6093 = vmatpush.msra.mxu0 0.0
  %6094 = vmatpush.msra.mxu0 0.0
  %6095 = vmatpush.msra.mxu0 0.0
  %6096 = vmatpush.msra.mxu0 0.0
  %6097 = vmatpush.msra.mxu0 0.0
  %6098 = vmatpush.msra.mxu0 %v3752
  %6099 = vmatmul.f32.gmra.mxu0 %v6081
  %v6100 = vpop.f32.mrf.mxu0
  %v6101 = vadd.f32 0.0, %v6100
  %6102 = vdwg.mxu0
  %v6104 = vrot.slane %v6101, 1
  %v6105 = vrot.slane %v6101, 2
  %v6106 = vrot.slane %v6101, 3
  %v6107 = vrot.slane %v6101, 4
  %v6112 = vadd.f32 %v3389, %v6101
  %v6113 = vadd.f32 %v3390, %v6104
  %v6114 = vadd.f32 %v3391, %v6105
  %v6115 = vadd.f32 %v3392, %v6106
  %v6116 = vadd.f32 %v3393, %v6107
  %v6117 = vtanh.pop %v6112
  %v6118 = vtanh.pop %v6113
  %v6119 = vtanh.pop %v6114
  %v6120 = vtanh.pop %v6115
  %v6121 = vtanh.pop %v6116
  %6122 = vst [vmem:[#allocation1] ss:$9 sm:$0xff] %v5766
  %s6123 = scalar_lea.vmem [#allocation1], 1
  %6124 = vst [vmem:[%s6123] ss:$9 sm:$0xff] %v5767
  %s6125 = scalar_lea.vmem [#allocation1], 2
  %6126 = vst [vmem:[%s6125] ss:$9 sm:$0xff] %v5768
  %s6127 = scalar_lea.vmem [#allocation1], 3
  %6128 = vst [vmem:[%s6127] ss:$9 sm:$0xff] %v5769
  %s6129 = scalar_lea.vmem [#allocation1], 4
  %6130 = vst [vmem:[%s6129] ss:$9 sm:$0xff] %v5770
  %v6131 = vld [vmem:[#allocation1] sm:$0xff]
  %v6132 = vsel %vm1324, %v6131, 0
  %6134 = vmatpush.msra.mxu0 0.0
  %6135 = vmatpush.msra.mxu0 0.0
  %6136 = vmatpush.msra.mxu0 0.0
  %6137 = vmatpush.msra.mxu0 0.0
  %6138 = vmatpush.msra.mxu0 0.0
  %6139 = vmatpush.msra.mxu0 0.0
  %6140 = vmatpush.msra.mxu0 0.0
  %6141 = vmatpush.msra.mxu0 0.0
  %6142 = vmatpush.msra.mxu0 0.0
  %6143 = vmatpush.msra.mxu0 0.0
  %6144 = vmatpush.msra.mxu0 0.0
  %6145 = vmatpush.msra.mxu0 0.0
  %6146 = vmatpush.msra.mxu0 0.0
  %6147 = vmatpush.msra.mxu0 0.0
  %6148 = vmatpush.msra.mxu0 0.0
  %6149 = vmatpush.msra.mxu0 %v3754
  %6150 = vmatmul.f32.gmra.mxu0 %v6132
  %v6151 = vpop.f32.mrf.mxu0
  %v6152 = vadd.f32 0.0, %v6151
  %6153 = vdwg.mxu0
  %v6155 = vrot.slane %v6152, 1
  %v6156 = vrot.slane %v6152, 2
  %v6157 = vrot.slane %v6152, 3
  %v6158 = vrot.slane %v6152, 4
  %v6163 = vadd.f32 %v3708, %v6152
  %v6164 = vadd.f32 %v3709, %v6155
  %v6165 = vadd.f32 %v3710, %v6156
  %v6166 = vadd.f32 %v3711, %v6157
  %v6167 = vadd.f32 %v3712, %v6158
  %v6168 = vxor.u32 %v6163, 2147483648
  %v6169 = vxor.u32 %v6164, 2147483648
  %v6170 = vxor.u32 %v6165, 2147483648
  %v6171 = vxor.u32 %v6166, 2147483648
  %v6172 = vxor.u32 %v6167, 2147483648
  %v6173 = vmul.f32 %v6168, 1.442695
  %v6174 = vpow.pop %v6173
  %v6175 = vmul.f32 %v6169, 1.442695
  %v6176 = vpow.pop %v6175
  %v6177 = vmul.f32 %v6170, 1.442695
  %v6178 = vpow.pop %v6177
  %v6179 = vmul.f32 %v6171, 1.442695
  %v6180 = vpow.pop %v6179
  %v6181 = vmul.f32 %v6172, 1.442695
  %v6182 = vpow.pop %v6181
  %v6183 = vadd.f32 %v6174, 1.0
  %v6184 = vadd.f32 %v6176, 1.0
  %v6185 = vadd.f32 %v6178, 1.0
  %v6186 = vadd.f32 %v6180, 1.0
  %v6187 = vadd.f32 %v6182, 1.0
  %v6188 = vrcp.pop %v6183
  %v6189 = vmul.f32 %v6183, %v6188
  %v6190 = vsub.f32 1.0, %v6189
  %v6191 = vmul.f32 %v6188, %v6190
  %v6192 = vadd.f32 %v6188, %v6191
  %vm6193 = vweird.f32 %v6183
  %vm6194 = vweird.f32 %v6188
  %vm6195 = vmor %vm6193, %vm6194
  %v6196 = vsel %vm6195, %v6188, %v6192
  %v6197 = vand.u32 2147483647, %v6183
  %vm6198 = vcmp.eq.f32.partialorder %v6197, 8.507059e+37
  %v6199 = vand.u32 %v6183, 2147483648
  %v6200 = vor.u32 1.1754944e-38, %v6199
  %v6201 = vsel %vm6198, %v6200, %v6196
  %v6202 = vmul.f32 1.0, %v6201
  %v6203 = vrcp.pop %v6184
  %v6204 = vmul.f32 %v6184, %v6203
  %v6205 = vsub.f32 1.0, %v6204
  %v6206 = vmul.f32 %v6203, %v6205
  %v6207 = vadd.f32 %v6203, %v6206
  %vm6208 = vweird.f32 %v6184
  %vm6209 = vweird.f32 %v6203
  %vm6210 = vmor %vm6208, %vm6209
  %v6211 = vsel %vm6210, %v6203, %v6207
  %v6212 = vand.u32 2147483647, %v6184
  %vm6213 = vcmp.eq.f32.partialorder %v6212, 8.507059e+37
  %v6214 = vand.u32 %v6184, 2147483648
  %v6215 = vor.u32 1.1754944e-38, %v6214
  %v6216 = vsel %vm6213, %v6215, %v6211
  %v6217 = vmul.f32 1.0, %v6216
  %v6218 = vrcp.pop %v6185
  %v6219 = vmul.f32 %v6185, %v6218
  %v6220 = vsub.f32 1.0, %v6219
  %v6221 = vmul.f32 %v6218, %v6220
  %v6222 = vadd.f32 %v6218, %v6221
  %vm6223 = vweird.f32 %v6185
  %vm6224 = vweird.f32 %v6218
  %vm6225 = vmor %vm6223, %vm6224
  %v6226 = vsel %vm6225, %v6218, %v6222
  %v6227 = vand.u32 2147483647, %v6185
  %vm6228 = vcmp.eq.f32.partialorder %v6227, 8.507059e+37
  %v6229 = vand.u32 %v6185, 2147483648
  %v6230 = vor.u32 1.1754944e-38, %v6229
  %v6231 = vsel %vm6228, %v6230, %v6226
  %v6232 = vmul.f32 1.0, %v6231
  %v6233 = vrcp.pop %v6186
  %v6234 = vmul.f32 %v6186, %v6233
  %v6235 = vsub.f32 1.0, %v6234
  %v6236 = vmul.f32 %v6233, %v6235
  %v6237 = vadd.f32 %v6233, %v6236
  %vm6238 = vweird.f32 %v6186
  %vm6239 = vweird.f32 %v6233
  %vm6240 = vmor %vm6238, %vm6239
  %v6241 = vsel %vm6240, %v6233, %v6237
  %v6242 = vand.u32 2147483647, %v6186
  %vm6243 = vcmp.eq.f32.partialorder %v6242, 8.507059e+37
  %v6244 = vand.u32 %v6186, 2147483648
  %v6245 = vor.u32 1.1754944e-38, %v6244
  %v6246 = vsel %vm6243, %v6245, %v6241
  %v6247 = vmul.f32 1.0, %v6246
  %v6248 = vrcp.pop %v6187
  %v6249 = vmul.f32 %v6187, %v6248
  %v6250 = vsub.f32 1.0, %v6249
  %v6251 = vmul.f32 %v6248, %v6250
  %v6252 = vadd.f32 %v6248, %v6251
  %vm6253 = vweird.f32 %v6187
  %vm6254 = vweird.f32 %v6248
  %vm6255 = vmor %vm6253, %vm6254
  %v6256 = vsel %vm6255, %v6248, %v6252
  %v6257 = vand.u32 2147483647, %v6187
  %vm6258 = vcmp.eq.f32.partialorder %v6257, 8.507059e+37
  %v6259 = vand.u32 %v6187, 2147483648
  %v6260 = vor.u32 1.1754944e-38, %v6259
  %v6261 = vsel %vm6258, %v6260, %v6256
  %v6262 = vmul.f32 1.0, %v6261
  %v6263 = vmul.f32 %v6010, %v5756
  %v6264 = vmul.f32 %v6025, %v5757
  %v6265 = vmul.f32 %v6040, %v5758
  %v6266 = vmul.f32 %v6055, %v5759
  %v6267 = vmul.f32 %v6070, %v5760
  %v6268 = vmul.f32 %v5869, %v6117
  %v6269 = vmul.f32 %v5884, %v6118
  %v6270 = vmul.f32 %v5899, %v6119
  %v6271 = vmul.f32 %v5914, %v6120
  %v6272 = vmul.f32 %v5929, %v6121
  %v6273 = vadd.f32 %v6263, %v6268
  %v6274 = vadd.f32 %v6264, %v6269
  %v6275 = vadd.f32 %v6265, %v6270
  %v6276 = vadd.f32 %v6266, %v6271
  %v6277 = vadd.f32 %v6267, %v6272
  %v6278 = vtanh.pop %v6273
  %v6279 = vtanh.pop %v6274
  %v6280 = vtanh.pop %v6275
  %v6281 = vtanh.pop %v6276
  %v6282 = vtanh.pop %v6277
  %v6283 = vmul.f32 %v6202, %v6278
  %v6284 = vmul.f32 %v6217, %v6279
  %v6285 = vmul.f32 %v6232, %v6280
  %v6286 = vmul.f32 %v6247, %v6281
  %v6287 = vmul.f32 %v6262, %v6282
  %6293 = vst [vmem:[#allocation1] ss:$9 sm:$0xff] %v6283
  %s6294 = scalar_lea.vmem [#allocation1], 1
  %6295 = vst [vmem:[%s6294] ss:$9 sm:$0xff] %v6284
  %s6296 = scalar_lea.vmem [#allocation1], 2
  %6297 = vst [vmem:[%s6296] ss:$9 sm:$0xff] %v6285
  %s6298 = scalar_lea.vmem [#allocation1], 3
  %6299 = vst [vmem:[%s6298] ss:$9 sm:$0xff] %v6286
  %s6300 = scalar_lea.vmem [#allocation1], 4
  %6301 = vst [vmem:[%s6300] ss:$9 sm:$0xff] %v6287
  %v6302 = vld [vmem:[#allocation1] sm:$0xff]
  %s6304 = scalar_lea.vmem [#allocation2], 32
  %6305 = vst.msk [vmem:[%s6304] sm:$0x1f] %vm4236, %v6302
  %6306 = vst [vmem:[#allocation1] ss:$9 sm:$0xff] %v6283
  %s6307 = scalar_lea.vmem [#allocation1], 1
  %6308 = vst [vmem:[%s6307] ss:$9 sm:$0xff] %v6284
  %s6309 = scalar_lea.vmem [#allocation1], 2
  %6310 = vst [vmem:[%s6309] ss:$9 sm:$0xff] %v6285
  %s6311 = scalar_lea.vmem [#allocation1], 3
  %6312 = vst [vmem:[%s6311] ss:$9 sm:$0xff] %v6286
  %s6313 = scalar_lea.vmem [#allocation1], 4
  %6314 = vst [vmem:[%s6313] ss:$9 sm:$0xff] %v6287
  %v6315 = vld [vmem:[#allocation1] sm:$0xff]
  %v6316 = vsel %vm1324, %v6315, 0
  %6318 = vmatpush.msra.mxu0 0.0
  %6319 = vmatpush.msra.mxu0 0.0
  %6320 = vmatpush.msra.mxu0 0.0
  %6321 = vmatpush.msra.mxu0 0.0
  %6322 = vmatpush.msra.mxu0 0.0
  %6323 = vmatpush.msra.mxu0 0.0
  %6324 = vmatpush.msra.mxu0 0.0
  %6325 = vmatpush.msra.mxu0 0.0
  %6326 = vmatpush.msra.mxu0 0.0
  %6327 = vmatpush.msra.mxu0 0.0
  %6328 = vmatpush.msra.mxu0 0.0
  %6329 = vmatpush.msra.mxu0 0.0
  %6330 = vmatpush.msra.mxu0 0.0
  %6331 = vmatpush.msra.mxu0 0.0
  %6332 = vmatpush.msra.mxu0 0.0
  %6333 = vmatpush.msra.mxu0 %v3748
  %6334 = vmatmul.f32.gmra.mxu0 %v6316
  %v6335 = vpop.f32.mrf.mxu0
  %v6336 = vadd.f32 0.0, %v6335
  %6337 = vdwg.mxu0
  %v6339 = vrot.slane %v6336, 1
  %v6340 = vrot.slane %v6336, 2
  %v6341 = vrot.slane %v6336, 3
  %v6342 = vrot.slane %v6336, 4
  %v6347 = vadd.f32 %v2756, %v6336
  %v6348 = vadd.f32 %v2757, %v6339
  %v6349 = vadd.f32 %v2758, %v6340
  %v6350 = vadd.f32 %v2759, %v6341
  %v6351 = vadd.f32 %v2760, %v6342
  %v6352 = vxor.u32 %v6347, 2147483648
  %v6353 = vxor.u32 %v6348, 2147483648
  %v6354 = vxor.u32 %v6349, 2147483648
  %v6355 = vxor.u32 %v6350, 2147483648
  %v6356 = vxor.u32 %v6351, 2147483648
  %v6357 = vmul.f32 %v6352, 1.442695
  %v6358 = vpow.pop %v6357
  %v6359 = vmul.f32 %v6353, 1.442695
  %v6360 = vpow.pop %v6359
  %v6361 = vmul.f32 %v6354, 1.442695
  %v6362 = vpow.pop %v6361
  %v6363 = vmul.f32 %v6355, 1.442695
  %v6364 = vpow.pop %v6363
  %v6365 = vmul.f32 %v6356, 1.442695
  %v6366 = vpow.pop %v6365
  %v6367 = vadd.f32 %v6358, 1.0
  %v6368 = vadd.f32 %v6360, 1.0
  %v6369 = vadd.f32 %v6362, 1.0
  %v6370 = vadd.f32 %v6364, 1.0
  %v6371 = vadd.f32 %v6366, 1.0
  %v6372 = vrcp.pop %v6367
  %v6373 = vmul.f32 %v6367, %v6372
  %v6374 = vsub.f32 1.0, %v6373
  %v6375 = vmul.f32 %v6372, %v6374
  %v6376 = vadd.f32 %v6372, %v6375
  %vm6377 = vweird.f32 %v6367
  %vm6378 = vweird.f32 %v6372
  %vm6379 = vmor %vm6377, %vm6378
  %v6380 = vsel %vm6379, %v6372, %v6376
  %v6381 = vand.u32 2147483647, %v6367
  %vm6382 = vcmp.eq.f32.partialorder %v6381, 8.507059e+37
  %v6383 = vand.u32 %v6367, 2147483648
  %v6384 = vor.u32 1.1754944e-38, %v6383
  %v6385 = vsel %vm6382, %v6384, %v6380
  %v6386 = vmul.f32 1.0, %v6385
  %v6387 = vrcp.pop %v6368
  %v6388 = vmul.f32 %v6368, %v6387
  %v6389 = vsub.f32 1.0, %v6388
  %v6390 = vmul.f32 %v6387, %v6389
  %v6391 = vadd.f32 %v6387, %v6390
  %vm6392 = vweird.f32 %v6368
  %vm6393 = vweird.f32 %v6387
  %vm6394 = vmor %vm6392, %vm6393
  %v6395 = vsel %vm6394, %v6387, %v6391
  %v6396 = vand.u32 2147483647, %v6368
  %vm6397 = vcmp.eq.f32.partialorder %v6396, 8.507059e+37
  %v6398 = vand.u32 %v6368, 2147483648
  %v6399 = vor.u32 1.1754944e-38, %v6398
  %v6400 = vsel %vm6397, %v6399, %v6395
  %v6401 = vmul.f32 1.0, %v6400
  %v6402 = vrcp.pop %v6369
  %v6403 = vmul.f32 %v6369, %v6402
  %v6404 = vsub.f32 1.0, %v6403
  %v6405 = vmul.f32 %v6402, %v6404
  %v6406 = vadd.f32 %v6402, %v6405
  %vm6407 = vweird.f32 %v6369
  %vm6408 = vweird.f32 %v6402
  %vm6409 = vmor %vm6407, %vm6408
  %v6410 = vsel %vm6409, %v6402, %v6406
  %v6411 = vand.u32 2147483647, %v6369
  %vm6412 = vcmp.eq.f32.partialorder %v6411, 8.507059e+37
  %v6413 = vand.u32 %v6369, 2147483648
  %v6414 = vor.u32 1.1754944e-38, %v6413
  %v6415 = vsel %vm6412, %v6414, %v6410
  %v6416 = vmul.f32 1.0, %v6415
  %v6417 = vrcp.pop %v6370
  %v6418 = vmul.f32 %v6370, %v6417
  %v6419 = vsub.f32 1.0, %v6418
  %v6420 = vmul.f32 %v6417, %v6419
  %v6421 = vadd.f32 %v6417, %v6420
  %vm6422 = vweird.f32 %v6370
  %vm6423 = vweird.f32 %v6417
  %vm6424 = vmor %vm6422, %vm6423
  %v6425 = vsel %vm6424, %v6417, %v6421
  %v6426 = vand.u32 2147483647, %v6370
  %vm6427 = vcmp.eq.f32.partialorder %v6426, 8.507059e+37
  %v6428 = vand.u32 %v6370, 2147483648
  %v6429 = vor.u32 1.1754944e-38, %v6428
  %v6430 = vsel %vm6427, %v6429, %v6425
  %v6431 = vmul.f32 1.0, %v6430
  %v6432 = vrcp.pop %v6371
  %v6433 = vmul.f32 %v6371, %v6432
  %v6434 = vsub.f32 1.0, %v6433
  %v6435 = vmul.f32 %v6432, %v6434
  %v6436 = vadd.f32 %v6432, %v6435
  %vm6437 = vweird.f32 %v6371
  %vm6438 = vweird.f32 %v6432
  %vm6439 = vmor %vm6437, %vm6438
  %v6440 = vsel %vm6439, %v6432, %v6436
  %v6441 = vand.u32 2147483647, %v6371
  %vm6442 = vcmp.eq.f32.partialorder %v6441, 8.507059e+37
  %v6443 = vand.u32 %v6371, 2147483648
  %v6444 = vor.u32 1.1754944e-38, %v6443
  %v6445 = vsel %vm6442, %v6444, %v6440
  %v6446 = vmul.f32 1.0, %v6445
  %6447 = vst [vmem:[#allocation1] ss:$9 sm:$0xff] %v6283
  %s6448 = scalar_lea.vmem [#allocation1], 1
  %6449 = vst [vmem:[%s6448] ss:$9 sm:$0xff] %v6284
  %s6450 = scalar_lea.vmem [#allocation1], 2
  %6451 = vst [vmem:[%s6450] ss:$9 sm:$0xff] %v6285
  %s6452 = scalar_lea.vmem [#allocation1], 3
  %6453 = vst [vmem:[%s6452] ss:$9 sm:$0xff] %v6286
  %s6454 = scalar_lea.vmem [#allocation1], 4
  %6455 = vst [vmem:[%s6454] ss:$9 sm:$0xff] %v6287
  %v6456 = vld [vmem:[#allocation1] sm:$0xff]
  %v6457 = vsel %vm1324, %v6456, 0
  %6459 = vmatpush.msra.mxu0 0.0
  %6460 = vmatpush.msra.mxu0 0.0
  %6461 = vmatpush.msra.mxu0 0.0
  %6462 = vmatpush.msra.mxu0 0.0
  %6463 = vmatpush.msra.mxu0 0.0
  %6464 = vmatpush.msra.mxu0 0.0
  %6465 = vmatpush.msra.mxu0 0.0
  %6466 = vmatpush.msra.mxu0 0.0
  %6467 = vmatpush.msra.mxu0 0.0
  %6468 = vmatpush.msra.mxu0 0.0
  %6469 = vmatpush.msra.mxu0 0.0
  %6470 = vmatpush.msra.mxu0 0.0
  %6471 = vmatpush.msra.mxu0 0.0
  %6472 = vmatpush.msra.mxu0 0.0
  %6473 = vmatpush.msra.mxu0 0.0
  %6474 = vmatpush.msra.mxu0 %v3750
  %6475 = vmatmul.f32.gmra.mxu0 %v6457
  %v6476 = vpop.f32.mrf.mxu0
  %v6477 = vadd.f32 0.0, %v6476
  %6478 = vdwg.mxu0
  %v6480 = vrot.slane %v6477, 1
  %v6481 = vrot.slane %v6477, 2
  %v6482 = vrot.slane %v6477, 3
  %v6483 = vrot.slane %v6477, 4
  %v6488 = vadd.f32 %v3075, %v6477
  %v6489 = vadd.f32 %v3076, %v6480
  %v6490 = vadd.f32 %v3077, %v6481
  %v6491 = vadd.f32 %v3078, %v6482
  %v6492 = vadd.f32 %v3079, %v6483
  %v6493 = vxor.u32 %v6488, 2147483648
  %v6494 = vxor.u32 %v6489, 2147483648
  %v6495 = vxor.u32 %v6490, 2147483648
  %v6496 = vxor.u32 %v6491, 2147483648
  %v6497 = vxor.u32 %v6492, 2147483648
  %v6498 = vmul.f32 %v6493, 1.442695
  %v6499 = vpow.pop %v6498
  %v6500 = vmul.f32 %v6494, 1.442695
  %v6501 = vpow.pop %v6500
  %v6502 = vmul.f32 %v6495, 1.442695
  %v6503 = vpow.pop %v6502
  %v6504 = vmul.f32 %v6496, 1.442695
  %v6505 = vpow.pop %v6504
  %v6506 = vmul.f32 %v6497, 1.442695
  %v6507 = vpow.pop %v6506
  %v6508 = vadd.f32 %v6499, 1.0
  %v6509 = vadd.f32 %v6501, 1.0
  %v6510 = vadd.f32 %v6503, 1.0
  %v6511 = vadd.f32 %v6505, 1.0
  %v6512 = vadd.f32 %v6507, 1.0
  %v6513 = vrcp.pop %v6508
  %v6514 = vmul.f32 %v6508, %v6513
  %v6515 = vsub.f32 1.0, %v6514
  %v6516 = vmul.f32 %v6513, %v6515
  %v6517 = vadd.f32 %v6513, %v6516
  %vm6518 = vweird.f32 %v6508
  %vm6519 = vweird.f32 %v6513
  %vm6520 = vmor %vm6518, %vm6519
  %v6521 = vsel %vm6520, %v6513, %v6517
  %v6522 = vand.u32 2147483647, %v6508
  %vm6523 = vcmp.eq.f32.partialorder %v6522, 8.507059e+37
  %v6524 = vand.u32 %v6508, 2147483648
  %v6525 = vor.u32 1.1754944e-38, %v6524
  %v6526 = vsel %vm6523, %v6525, %v6521
  %v6527 = vmul.f32 1.0, %v6526
  %v6528 = vrcp.pop %v6509
  %v6529 = vmul.f32 %v6509, %v6528
  %v6530 = vsub.f32 1.0, %v6529
  %v6531 = vmul.f32 %v6528, %v6530
  %v6532 = vadd.f32 %v6528, %v6531
  %vm6533 = vweird.f32 %v6509
  %vm6534 = vweird.f32 %v6528
  %vm6535 = vmor %vm6533, %vm6534
  %v6536 = vsel %vm6535, %v6528, %v6532
  %v6537 = vand.u32 2147483647, %v6509
  %vm6538 = vcmp.eq.f32.partialorder %v6537, 8.507059e+37
  %v6539 = vand.u32 %v6509, 2147483648
  %v6540 = vor.u32 1.1754944e-38, %v6539
  %v6541 = vsel %vm6538, %v6540, %v6536
  %v6542 = vmul.f32 1.0, %v6541
  %v6543 = vrcp.pop %v6510
  %v6544 = vmul.f32 %v6510, %v6543
  %v6545 = vsub.f32 1.0, %v6544
  %v6546 = vmul.f32 %v6543, %v6545
  %v6547 = vadd.f32 %v6543, %v6546
  %vm6548 = vweird.f32 %v6510
  %vm6549 = vweird.f32 %v6543
  %vm6550 = vmor %vm6548, %vm6549
  %v6551 = vsel %vm6550, %v6543, %v6547
  %v6552 = vand.u32 2147483647, %v6510
  %vm6553 = vcmp.eq.f32.partialorder %v6552, 8.507059e+37
  %v6554 = vand.u32 %v6510, 2147483648
  %v6555 = vor.u32 1.1754944e-38, %v6554
  %v6556 = vsel %vm6553, %v6555, %v6551
  %v6557 = vmul.f32 1.0, %v6556
  %v6558 = vrcp.pop %v6511
  %v6559 = vmul.f32 %v6511, %v6558
  %v6560 = vsub.f32 1.0, %v6559
  %v6561 = vmul.f32 %v6558, %v6560
  %v6562 = vadd.f32 %v6558, %v6561
  %vm6563 = vweird.f32 %v6511
  %vm6564 = vweird.f32 %v6558
  %vm6565 = vmor %vm6563, %vm6564
  %v6566 = vsel %vm6565, %v6558, %v6562
  %v6567 = vand.u32 2147483647, %v6511
  %vm6568 = vcmp.eq.f32.partialorder %v6567, 8.507059e+37
  %v6569 = vand.u32 %v6511, 2147483648
  %v6570 = vor.u32 1.1754944e-38, %v6569
  %v6571 = vsel %vm6568, %v6570, %v6566
  %v6572 = vmul.f32 1.0, %v6571
  %v6573 = vrcp.pop %v6512
  %v6574 = vmul.f32 %v6512, %v6573
  %v6575 = vsub.f32 1.0, %v6574
  %v6576 = vmul.f32 %v6573, %v6575
  %v6577 = vadd.f32 %v6573, %v6576
  %vm6578 = vweird.f32 %v6512
  %vm6579 = vweird.f32 %v6573
  %vm6580 = vmor %vm6578, %vm6579
  %v6581 = vsel %vm6580, %v6573, %v6577
  %v6582 = vand.u32 2147483647, %v6512
  %vm6583 = vcmp.eq.f32.partialorder %v6582, 8.507059e+37
  %v6584 = vand.u32 %v6512, 2147483648
  %v6585 = vor.u32 1.1754944e-38, %v6584
  %v6586 = vsel %vm6583, %v6585, %v6581
  %v6587 = vmul.f32 1.0, %v6586
  %6588 = vst [vmem:[#allocation1] ss:$9 sm:$0xff] %v6283
  %s6589 = scalar_lea.vmem [#allocation1], 1
  %6590 = vst [vmem:[%s6589] ss:$9 sm:$0xff] %v6284
  %s6591 = scalar_lea.vmem [#allocation1], 2
  %6592 = vst [vmem:[%s6591] ss:$9 sm:$0xff] %v6285
  %s6593 = scalar_lea.vmem [#allocation1], 3
  %6594 = vst [vmem:[%s6593] ss:$9 sm:$0xff] %v6286
  %s6595 = scalar_lea.vmem [#allocation1], 4
  %6596 = vst [vmem:[%s6595] ss:$9 sm:$0xff] %v6287
  %v6597 = vld [vmem:[#allocation1] sm:$0xff]
  %v6598 = vsel %vm1324, %v6597, 0
  %6600 = vmatpush.msra.mxu0 0.0
  %6601 = vmatpush.msra.mxu0 0.0
  %6602 = vmatpush.msra.mxu0 0.0
  %6603 = vmatpush.msra.mxu0 0.0
  %6604 = vmatpush.msra.mxu0 0.0
  %6605 = vmatpush.msra.mxu0 0.0
  %6606 = vmatpush.msra.mxu0 0.0
  %6607 = vmatpush.msra.mxu0 0.0
  %6608 = vmatpush.msra.mxu0 0.0
  %6609 = vmatpush.msra.mxu0 0.0
  %6610 = vmatpush.msra.mxu0 0.0
  %6611 = vmatpush.msra.mxu0 0.0
  %6612 = vmatpush.msra.mxu0 0.0
  %6613 = vmatpush.msra.mxu0 0.0
  %6614 = vmatpush.msra.mxu0 0.0
  %6615 = vmatpush.msra.mxu0 %v3752
  %6616 = vmatmul.f32.gmra.mxu0 %v6598
  %v6617 = vpop.f32.mrf.mxu0
  %v6618 = vadd.f32 0.0, %v6617
  %6619 = vdwg.mxu0
  %v6621 = vrot.slane %v6618, 1
  %v6622 = vrot.slane %v6618, 2
  %v6623 = vrot.slane %v6618, 3
  %v6624 = vrot.slane %v6618, 4
  %v6629 = vadd.f32 %v3394, %v6618
  %v6630 = vadd.f32 %v3395, %v6621
  %v6631 = vadd.f32 %v3396, %v6622
  %v6632 = vadd.f32 %v3397, %v6623
  %v6633 = vadd.f32 %v3398, %v6624
  %v6634 = vtanh.pop %v6629
  %v6635 = vtanh.pop %v6630
  %v6636 = vtanh.pop %v6631
  %v6637 = vtanh.pop %v6632
  %v6638 = vtanh.pop %v6633
  %6639 = vst [vmem:[#allocation1] ss:$9 sm:$0xff] %v6283
  %s6640 = scalar_lea.vmem [#allocation1], 1
  %6641 = vst [vmem:[%s6640] ss:$9 sm:$0xff] %v6284
  %s6642 = scalar_lea.vmem [#allocation1], 2
  %6643 = vst [vmem:[%s6642] ss:$9 sm:$0xff] %v6285
  %s6644 = scalar_lea.vmem [#allocation1], 3
  %6645 = vst [vmem:[%s6644] ss:$9 sm:$0xff] %v6286
  %s6646 = scalar_lea.vmem [#allocation1], 4
  %6647 = vst [vmem:[%s6646] ss:$9 sm:$0xff] %v6287
  %v6648 = vld [vmem:[#allocation1] sm:$0xff]
  %v6649 = vsel %vm1324, %v6648, 0
  %6651 = vmatpush.msra.mxu0 0.0
  %6652 = vmatpush.msra.mxu0 0.0
  %6653 = vmatpush.msra.mxu0 0.0
  %6654 = vmatpush.msra.mxu0 0.0
  %6655 = vmatpush.msra.mxu0 0.0
  %6656 = vmatpush.msra.mxu0 0.0
  %6657 = vmatpush.msra.mxu0 0.0
  %6658 = vmatpush.msra.mxu0 0.0
  %6659 = vmatpush.msra.mxu0 0.0
  %6660 = vmatpush.msra.mxu0 0.0
  %6661 = vmatpush.msra.mxu0 0.0
  %6662 = vmatpush.msra.mxu0 0.0
  %6663 = vmatpush.msra.mxu0 0.0
  %6664 = vmatpush.msra.mxu0 0.0
  %6665 = vmatpush.msra.mxu0 0.0
  %6666 = vmatpush.msra.mxu0 %v3754
  %6667 = vmatmul.f32.gmra.mxu0 %v6649
  %v6668 = vpop.f32.mrf.mxu0
  %v6669 = vadd.f32 0.0, %v6668
  %6670 = vdwg.mxu0
  %v6672 = vrot.slane %v6669, 1
  %v6673 = vrot.slane %v6669, 2
  %v6674 = vrot.slane %v6669, 3
  %v6675 = vrot.slane %v6669, 4
  %v6680 = vadd.f32 %v3713, %v6669
  %v6681 = vadd.f32 %v3714, %v6672
  %v6682 = vadd.f32 %v3715, %v6673
  %v6683 = vadd.f32 %v3716, %v6674
  %v6684 = vadd.f32 %v3717, %v6675
  %v6685 = vxor.u32 %v6680, 2147483648
  %v6686 = vxor.u32 %v6681, 2147483648
  %v6687 = vxor.u32 %v6682, 2147483648
  %v6688 = vxor.u32 %v6683, 2147483648
  %v6689 = vxor.u32 %v6684, 2147483648
  %v6690 = vmul.f32 %v6685, 1.442695
  %v6691 = vpow.pop %v6690
  %v6692 = vmul.f32 %v6686, 1.442695
  %v6693 = vpow.pop %v6692
  %v6694 = vmul.f32 %v6687, 1.442695
  %v6695 = vpow.pop %v6694
  %v6696 = vmul.f32 %v6688, 1.442695
  %v6697 = vpow.pop %v6696
  %v6698 = vmul.f32 %v6689, 1.442695
  %v6699 = vpow.pop %v6698
  %v6700 = vadd.f32 %v6691, 1.0
  %v6701 = vadd.f32 %v6693, 1.0
  %v6702 = vadd.f32 %v6695, 1.0
  %v6703 = vadd.f32 %v6697, 1.0
  %v6704 = vadd.f32 %v6699, 1.0
  %v6705 = vrcp.pop %v6700
  %v6706 = vmul.f32 %v6700, %v6705
  %v6707 = vsub.f32 1.0, %v6706
  %v6708 = vmul.f32 %v6705, %v6707
  %v6709 = vadd.f32 %v6705, %v6708
  %vm6710 = vweird.f32 %v6700
  %vm6711 = vweird.f32 %v6705
  %vm6712 = vmor %vm6710, %vm6711
  %v6713 = vsel %vm6712, %v6705, %v6709
  %v6714 = vand.u32 2147483647, %v6700
  %vm6715 = vcmp.eq.f32.partialorder %v6714, 8.507059e+37
  %v6716 = vand.u32 %v6700, 2147483648
  %v6717 = vor.u32 1.1754944e-38, %v6716
  %v6718 = vsel %vm6715, %v6717, %v6713
  %v6719 = vmul.f32 1.0, %v6718
  %v6720 = vrcp.pop %v6701
  %v6721 = vmul.f32 %v6701, %v6720
  %v6722 = vsub.f32 1.0, %v6721
  %v6723 = vmul.f32 %v6720, %v6722
  %v6724 = vadd.f32 %v6720, %v6723
  %vm6725 = vweird.f32 %v6701
  %vm6726 = vweird.f32 %v6720
  %vm6727 = vmor %vm6725, %vm6726
  %v6728 = vsel %vm6727, %v6720, %v6724
  %v6729 = vand.u32 2147483647, %v6701
  %vm6730 = vcmp.eq.f32.partialorder %v6729, 8.507059e+37
  %v6731 = vand.u32 %v6701, 2147483648
  %v6732 = vor.u32 1.1754944e-38, %v6731
  %v6733 = vsel %vm6730, %v6732, %v6728
  %v6734 = vmul.f32 1.0, %v6733
  %v6735 = vrcp.pop %v6702
  %v6736 = vmul.f32 %v6702, %v6735
  %v6737 = vsub.f32 1.0, %v6736
  %v6738 = vmul.f32 %v6735, %v6737
  %v6739 = vadd.f32 %v6735, %v6738
  %vm6740 = vweird.f32 %v6702
  %vm6741 = vweird.f32 %v6735
  %vm6742 = vmor %vm6740, %vm6741
  %v6743 = vsel %vm6742, %v6735, %v6739
  %v6744 = vand.u32 2147483647, %v6702
  %vm6745 = vcmp.eq.f32.partialorder %v6744, 8.507059e+37
  %v6746 = vand.u32 %v6702, 2147483648
  %v6747 = vor.u32 1.1754944e-38, %v6746
  %v6748 = vsel %vm6745, %v6747, %v6743
  %v6749 = vmul.f32 1.0, %v6748
  %v6750 = vrcp.pop %v6703
  %v6751 = vmul.f32 %v6703, %v6750
  %v6752 = vsub.f32 1.0, %v6751
  %v6753 = vmul.f32 %v6750, %v6752
  %v6754 = vadd.f32 %v6750, %v6753
  %vm6755 = vweird.f32 %v6703
  %vm6756 = vweird.f32 %v6750
  %vm6757 = vmor %vm6755, %vm6756
  %v6758 = vsel %vm6757, %v6750, %v6754
  %v6759 = vand.u32 2147483647, %v6703
  %vm6760 = vcmp.eq.f32.partialorder %v6759, 8.507059e+37
  %v6761 = vand.u32 %v6703, 2147483648
  %v6762 = vor.u32 1.1754944e-38, %v6761
  %v6763 = vsel %vm6760, %v6762, %v6758
  %v6764 = vmul.f32 1.0, %v6763
  %v6765 = vrcp.pop %v6704
  %v6766 = vmul.f32 %v6704, %v6765
  %v6767 = vsub.f32 1.0, %v6766
  %v6768 = vmul.f32 %v6765, %v6767
  %v6769 = vadd.f32 %v6765, %v6768
  %vm6770 = vweird.f32 %v6704
  %vm6771 = vweird.f32 %v6765
  %vm6772 = vmor %vm6770, %vm6771
  %v6773 = vsel %vm6772, %v6765, %v6769
  %v6774 = vand.u32 2147483647, %v6704
  %vm6775 = vcmp.eq.f32.partialorder %v6774, 8.507059e+37
  %v6776 = vand.u32 %v6704, 2147483648
  %v6777 = vor.u32 1.1754944e-38, %v6776
  %v6778 = vsel %vm6775, %v6777, %v6773
  %v6779 = vmul.f32 1.0, %v6778
  %v6780 = vmul.f32 %v6527, %v6273
  %v6781 = vmul.f32 %v6542, %v6274
  %v6782 = vmul.f32 %v6557, %v6275
  %v6783 = vmul.f32 %v6572, %v6276
  %v6784 = vmul.f32 %v6587, %v6277
  %v6785 = vmul.f32 %v6386, %v6634
  %v6786 = vmul.f32 %v6401, %v6635
  %v6787 = vmul.f32 %v6416, %v6636
  %v6788 = vmul.f32 %v6431, %v6637
  %v6789 = vmul.f32 %v6446, %v6638
  %v6790 = vadd.f32 %v6780, %v6785
  %v6791 = vadd.f32 %v6781, %v6786
  %v6792 = vadd.f32 %v6782, %v6787
  %v6793 = vadd.f32 %v6783, %v6788
  %v6794 = vadd.f32 %v6784, %v6789
  %v6795 = vtanh.pop %v6790
  %v6796 = vtanh.pop %v6791
  %v6797 = vtanh.pop %v6792
  %v6798 = vtanh.pop %v6793
  %v6799 = vtanh.pop %v6794
  %v6800 = vmul.f32 %v6719, %v6795
  %v6801 = vmul.f32 %v6734, %v6796
  %v6802 = vmul.f32 %v6749, %v6797
  %v6803 = vmul.f32 %v6764, %v6798
  %v6804 = vmul.f32 %v6779, %v6799
  %6810 = vst [vmem:[#allocation1] ss:$9 sm:$0xff] %v6800
  %s6811 = scalar_lea.vmem [#allocation1], 1
  %6812 = vst [vmem:[%s6811] ss:$9 sm:$0xff] %v6801
  %s6813 = scalar_lea.vmem [#allocation1], 2
  %6814 = vst [vmem:[%s6813] ss:$9 sm:$0xff] %v6802
  %s6815 = scalar_lea.vmem [#allocation1], 3
  %6816 = vst [vmem:[%s6815] ss:$9 sm:$0xff] %v6803
  %s6817 = scalar_lea.vmem [#allocation1], 4
  %6818 = vst [vmem:[%s6817] ss:$9 sm:$0xff] %v6804
  %v6819 = vld [vmem:[#allocation1] sm:$0xff]
  %s6821 = scalar_lea.vmem [#allocation2], 40
  %6822 = vst.msk [vmem:[%s6821] sm:$0x1f] %vm4236, %v6819
  %6823 = vst [vmem:[#allocation1] ss:$9 sm:$0xff] %v6800
  %s6824 = scalar_lea.vmem [#allocation1], 1
  %6825 = vst [vmem:[%s6824] ss:$9 sm:$0xff] %v6801
  %s6826 = scalar_lea.vmem [#allocation1], 2
  %6827 = vst [vmem:[%s6826] ss:$9 sm:$0xff] %v6802
  %s6828 = scalar_lea.vmem [#allocation1], 3
  %6829 = vst [vmem:[%s6828] ss:$9 sm:$0xff] %v6803
  %s6830 = scalar_lea.vmem [#allocation1], 4
  %6831 = vst [vmem:[%s6830] ss:$9 sm:$0xff] %v6804
  %v6832 = vld [vmem:[#allocation1] sm:$0xff]
  %v6833 = vsel %vm1324, %v6832, 0
  %6835 = vmatpush.msra.mxu0 0.0
  %6836 = vmatpush.msra.mxu0 0.0
  %6837 = vmatpush.msra.mxu0 0.0
  %6838 = vmatpush.msra.mxu0 0.0
  %6839 = vmatpush.msra.mxu0 0.0
  %6840 = vmatpush.msra.mxu0 0.0
  %6841 = vmatpush.msra.mxu0 0.0
  %6842 = vmatpush.msra.mxu0 0.0
  %6843 = vmatpush.msra.mxu0 0.0
  %6844 = vmatpush.msra.mxu0 0.0
  %6845 = vmatpush.msra.mxu0 0.0
  %6846 = vmatpush.msra.mxu0 0.0
  %6847 = vmatpush.msra.mxu0 0.0
  %6848 = vmatpush.msra.mxu0 0.0
  %6849 = vmatpush.msra.mxu0 0.0
  %6850 = vmatpush.msra.mxu0 %v3748
  %6851 = vmatmul.f32.gmra.mxu0 %v6833
  %v6852 = vpop.f32.mrf.mxu0
  %v6853 = vadd.f32 0.0, %v6852
  %6854 = vdwg.mxu0
  %v6856 = vrot.slane %v6853, 1
  %v6857 = vrot.slane %v6853, 2
  %v6858 = vrot.slane %v6853, 3
  %v6859 = vrot.slane %v6853, 4
  %v6864 = vadd.f32 %v2761, %v6853
  %v6865 = vadd.f32 %v2762, %v6856
  %v6866 = vadd.f32 %v2763, %v6857
  %v6867 = vadd.f32 %v2764, %v6858
  %v6868 = vadd.f32 %v2765, %v6859
  %v6869 = vxor.u32 %v6864, 2147483648
  %v6870 = vxor.u32 %v6865, 2147483648
  %v6871 = vxor.u32 %v6866, 2147483648
  %v6872 = vxor.u32 %v6867, 2147483648
  %v6873 = vxor.u32 %v6868, 2147483648
  %v6874 = vmul.f32 %v6869, 1.442695
  %v6875 = vpow.pop %v6874
  %v6876 = vmul.f32 %v6870, 1.442695
  %v6877 = vpow.pop %v6876
  %v6878 = vmul.f32 %v6871, 1.442695
  %v6879 = vpow.pop %v6878
  %v6880 = vmul.f32 %v6872, 1.442695
  %v6881 = vpow.pop %v6880
  %v6882 = vmul.f32 %v6873, 1.442695
  %v6883 = vpow.pop %v6882
  %v6884 = vadd.f32 %v6875, 1.0
  %v6885 = vadd.f32 %v6877, 1.0
  %v6886 = vadd.f32 %v6879, 1.0
  %v6887 = vadd.f32 %v6881, 1.0
  %v6888 = vadd.f32 %v6883, 1.0
  %v6889 = vrcp.pop %v6884
  %v6890 = vmul.f32 %v6884, %v6889
  %v6891 = vsub.f32 1.0, %v6890
  %v6892 = vmul.f32 %v6889, %v6891
  %v6893 = vadd.f32 %v6889, %v6892
  %vm6894 = vweird.f32 %v6884
  %vm6895 = vweird.f32 %v6889
  %vm6896 = vmor %vm6894, %vm6895
  %v6897 = vsel %vm6896, %v6889, %v6893
  %v6898 = vand.u32 2147483647, %v6884
  %vm6899 = vcmp.eq.f32.partialorder %v6898, 8.507059e+37
  %v6900 = vand.u32 %v6884, 2147483648
  %v6901 = vor.u32 1.1754944e-38, %v6900
  %v6902 = vsel %vm6899, %v6901, %v6897
  %v6903 = vmul.f32 1.0, %v6902
  %v6904 = vrcp.pop %v6885
  %v6905 = vmul.f32 %v6885, %v6904
  %v6906 = vsub.f32 1.0, %v6905
  %v6907 = vmul.f32 %v6904, %v6906
  %v6908 = vadd.f32 %v6904, %v6907
  %vm6909 = vweird.f32 %v6885
  %vm6910 = vweird.f32 %v6904
  %vm6911 = vmor %vm6909, %vm6910
  %v6912 = vsel %vm6911, %v6904, %v6908
  %v6913 = vand.u32 2147483647, %v6885
  %vm6914 = vcmp.eq.f32.partialorder %v6913, 8.507059e+37
  %v6915 = vand.u32 %v6885, 2147483648
  %v6916 = vor.u32 1.1754944e-38, %v6915
  %v6917 = vsel %vm6914, %v6916, %v6912
  %v6918 = vmul.f32 1.0, %v6917
  %v6919 = vrcp.pop %v6886
  %v6920 = vmul.f32 %v6886, %v6919
  %v6921 = vsub.f32 1.0, %v6920
  %v6922 = vmul.f32 %v6919, %v6921
  %v6923 = vadd.f32 %v6919, %v6922
  %vm6924 = vweird.f32 %v6886
  %vm6925 = vweird.f32 %v6919
  %vm6926 = vmor %vm6924, %vm6925
  %v6927 = vsel %vm6926, %v6919, %v6923
  %v6928 = vand.u32 2147483647, %v6886
  %vm6929 = vcmp.eq.f32.partialorder %v6928, 8.507059e+37
  %v6930 = vand.u32 %v6886, 2147483648
  %v6931 = vor.u32 1.1754944e-38, %v6930
  %v6932 = vsel %vm6929, %v6931, %v6927
  %v6933 = vmul.f32 1.0, %v6932
  %v6934 = vrcp.pop %v6887
  %v6935 = vmul.f32 %v6887, %v6934
  %v6936 = vsub.f32 1.0, %v6935
  %v6937 = vmul.f32 %v6934, %v6936
  %v6938 = vadd.f32 %v6934, %v6937
  %vm6939 = vweird.f32 %v6887
  %vm6940 = vweird.f32 %v6934
  %vm6941 = vmor %vm6939, %vm6940
  %v6942 = vsel %vm6941, %v6934, %v6938
  %v6943 = vand.u32 2147483647, %v6887
  %vm6944 = vcmp.eq.f32.partialorder %v6943, 8.507059e+37
  %v6945 = vand.u32 %v6887, 2147483648
  %v6946 = vor.u32 1.1754944e-38, %v6945
  %v6947 = vsel %vm6944, %v6946, %v6942
  %v6948 = vmul.f32 1.0, %v6947
  %v6949 = vrcp.pop %v6888
  %v6950 = vmul.f32 %v6888, %v6949
  %v6951 = vsub.f32 1.0, %v6950
  %v6952 = vmul.f32 %v6949, %v6951
  %v6953 = vadd.f32 %v6949, %v6952
  %vm6954 = vweird.f32 %v6888
  %vm6955 = vweird.f32 %v6949
  %vm6956 = vmor %vm6954, %vm6955
  %v6957 = vsel %vm6956, %v6949, %v6953
  %v6958 = vand.u32 2147483647, %v6888
  %vm6959 = vcmp.eq.f32.partialorder %v6958, 8.507059e+37
  %v6960 = vand.u32 %v6888, 2147483648
  %v6961 = vor.u32 1.1754944e-38, %v6960
  %v6962 = vsel %vm6959, %v6961, %v6957
  %v6963 = vmul.f32 1.0, %v6962
  %6964 = vst [vmem:[#allocation1] ss:$9 sm:$0xff] %v6800
  %s6965 = scalar_lea.vmem [#allocation1], 1
  %6966 = vst [vmem:[%s6965] ss:$9 sm:$0xff] %v6801
  %s6967 = scalar_lea.vmem [#allocation1], 2
  %6968 = vst [vmem:[%s6967] ss:$9 sm:$0xff] %v6802
  %s6969 = scalar_lea.vmem [#allocation1], 3
  %6970 = vst [vmem:[%s6969] ss:$9 sm:$0xff] %v6803
  %s6971 = scalar_lea.vmem [#allocation1], 4
  %6972 = vst [vmem:[%s6971] ss:$9 sm:$0xff] %v6804
  %v6973 = vld [vmem:[#allocation1] sm:$0xff]
  %v6974 = vsel %vm1324, %v6973, 0
  %6976 = vmatpush.msra.mxu0 0.0
  %6977 = vmatpush.msra.mxu0 0.0
  %6978 = vmatpush.msra.mxu0 0.0
  %6979 = vmatpush.msra.mxu0 0.0
  %6980 = vmatpush.msra.mxu0 0.0
  %6981 = vmatpush.msra.mxu0 0.0
  %6982 = vmatpush.msra.mxu0 0.0
  %6983 = vmatpush.msra.mxu0 0.0
  %6984 = vmatpush.msra.mxu0 0.0
  %6985 = vmatpush.msra.mxu0 0.0
  %6986 = vmatpush.msra.mxu0 0.0
  %6987 = vmatpush.msra.mxu0 0.0
  %6988 = vmatpush.msra.mxu0 0.0
  %6989 = vmatpush.msra.mxu0 0.0
  %6990 = vmatpush.msra.mxu0 0.0
  %6991 = vmatpush.msra.mxu0 %v3750
  %6992 = vmatmul.f32.gmra.mxu0 %v6974
  %v6993 = vpop.f32.mrf.mxu0
  %v6994 = vadd.f32 0.0, %v6993
  %6995 = vdwg.mxu0
  %v6997 = vrot.slane %v6994, 1
  %v6998 = vrot.slane %v6994, 2
  %v6999 = vrot.slane %v6994, 3
  %v7000 = vrot.slane %v6994, 4
  %v7005 = vadd.f32 %v3080, %v6994
  %v7006 = vadd.f32 %v3081, %v6997
  %v7007 = vadd.f32 %v3082, %v6998
  %v7008 = vadd.f32 %v3083, %v6999
  %v7009 = vadd.f32 %v3084, %v7000
  %v7010 = vxor.u32 %v7005, 2147483648
  %v7011 = vxor.u32 %v7006, 2147483648
  %v7012 = vxor.u32 %v7007, 2147483648
  %v7013 = vxor.u32 %v7008, 2147483648
  %v7014 = vxor.u32 %v7009, 2147483648
  %v7015 = vmul.f32 %v7010, 1.442695
  %v7016 = vpow.pop %v7015
  %v7017 = vmul.f32 %v7011, 1.442695
  %v7018 = vpow.pop %v7017
  %v7019 = vmul.f32 %v7012, 1.442695
  %v7020 = vpow.pop %v7019
  %v7021 = vmul.f32 %v7013, 1.442695
  %v7022 = vpow.pop %v7021
  %v7023 = vmul.f32 %v7014, 1.442695
  %v7024 = vpow.pop %v7023
  %v7025 = vadd.f32 %v7016, 1.0
  %v7026 = vadd.f32 %v7018, 1.0
  %v7027 = vadd.f32 %v7020, 1.0
  %v7028 = vadd.f32 %v7022, 1.0
  %v7029 = vadd.f32 %v7024, 1.0
  %v7030 = vrcp.pop %v7025
  %v7031 = vmul.f32 %v7025, %v7030
  %v7032 = vsub.f32 1.0, %v7031
  %v7033 = vmul.f32 %v7030, %v7032
  %v7034 = vadd.f32 %v7030, %v7033
  %vm7035 = vweird.f32 %v7025
  %vm7036 = vweird.f32 %v7030
  %vm7037 = vmor %vm7035, %vm7036
  %v7038 = vsel %vm7037, %v7030, %v7034
  %v7039 = vand.u32 2147483647, %v7025
  %vm7040 = vcmp.eq.f32.partialorder %v7039, 8.507059e+37
  %v7041 = vand.u32 %v7025, 2147483648
  %v7042 = vor.u32 1.1754944e-38, %v7041
  %v7043 = vsel %vm7040, %v7042, %v7038
  %v7044 = vmul.f32 1.0, %v7043
  %v7045 = vrcp.pop %v7026
  %v7046 = vmul.f32 %v7026, %v7045
  %v7047 = vsub.f32 1.0, %v7046
  %v7048 = vmul.f32 %v7045, %v7047
  %v7049 = vadd.f32 %v7045, %v7048
  %vm7050 = vweird.f32 %v7026
  %vm7051 = vweird.f32 %v7045
  %vm7052 = vmor %vm7050, %vm7051
  %v7053 = vsel %vm7052, %v7045, %v7049
  %v7054 = vand.u32 2147483647, %v7026
  %vm7055 = vcmp.eq.f32.partialorder %v7054, 8.507059e+37
  %v7056 = vand.u32 %v7026, 2147483648
  %v7057 = vor.u32 1.1754944e-38, %v7056
  %v7058 = vsel %vm7055, %v7057, %v7053
  %v7059 = vmul.f32 1.0, %v7058
  %v7060 = vrcp.pop %v7027
  %v7061 = vmul.f32 %v7027, %v7060
  %v7062 = vsub.f32 1.0, %v7061
  %v7063 = vmul.f32 %v7060, %v7062
  %v7064 = vadd.f32 %v7060, %v7063
  %vm7065 = vweird.f32 %v7027
  %vm7066 = vweird.f32 %v7060
  %vm7067 = vmor %vm7065, %vm7066
  %v7068 = vsel %vm7067, %v7060, %v7064
  %v7069 = vand.u32 2147483647, %v7027
  %vm7070 = vcmp.eq.f32.partialorder %v7069, 8.507059e+37
  %v7071 = vand.u32 %v7027, 2147483648
  %v7072 = vor.u32 1.1754944e-38, %v7071
  %v7073 = vsel %vm7070, %v7072, %v7068
  %v7074 = vmul.f32 1.0, %v7073
  %v7075 = vrcp.pop %v7028
  %v7076 = vmul.f32 %v7028, %v7075
  %v7077 = vsub.f32 1.0, %v7076
  %v7078 = vmul.f32 %v7075, %v7077
  %v7079 = vadd.f32 %v7075, %v7078
  %vm7080 = vweird.f32 %v7028
  %vm7081 = vweird.f32 %v7075
  %vm7082 = vmor %vm7080, %vm7081
  %v7083 = vsel %vm7082, %v7075, %v7079
  %v7084 = vand.u32 2147483647, %v7028
  %vm7085 = vcmp.eq.f32.partialorder %v7084, 8.507059e+37
  %v7086 = vand.u32 %v7028, 2147483648
  %v7087 = vor.u32 1.1754944e-38, %v7086
  %v7088 = vsel %vm7085, %v7087, %v7083
  %v7089 = vmul.f32 1.0, %v7088
  %v7090 = vrcp.pop %v7029
  %v7091 = vmul.f32 %v7029, %v7090
  %v7092 = vsub.f32 1.0, %v7091
  %v7093 = vmul.f32 %v7090, %v7092
  %v7094 = vadd.f32 %v7090, %v7093
  %vm7095 = vweird.f32 %v7029
  %vm7096 = vweird.f32 %v7090
  %vm7097 = vmor %vm7095, %vm7096
  %v7098 = vsel %vm7097, %v7090, %v7094
  %v7099 = vand.u32 2147483647, %v7029
  %vm7100 = vcmp.eq.f32.partialorder %v7099, 8.507059e+37
  %v7101 = vand.u32 %v7029, 2147483648
  %v7102 = vor.u32 1.1754944e-38, %v7101
  %v7103 = vsel %vm7100, %v7102, %v7098
  %v7104 = vmul.f32 1.0, %v7103
  %7105 = vst [vmem:[#allocation1] ss:$9 sm:$0xff] %v6800
  %s7106 = scalar_lea.vmem [#allocation1], 1
  %7107 = vst [vmem:[%s7106] ss:$9 sm:$0xff] %v6801
  %s7108 = scalar_lea.vmem [#allocation1], 2
  %7109 = vst [vmem:[%s7108] ss:$9 sm:$0xff] %v6802
  %s7110 = scalar_lea.vmem [#allocation1], 3
  %7111 = vst [vmem:[%s7110] ss:$9 sm:$0xff] %v6803
  %s7112 = scalar_lea.vmem [#allocation1], 4
  %7113 = vst [vmem:[%s7112] ss:$9 sm:$0xff] %v6804
  %v7114 = vld [vmem:[#allocation1] sm:$0xff]
  %v7115 = vsel %vm1324, %v7114, 0
  %7117 = vmatpush.msra.mxu0 0.0
  %7118 = vmatpush.msra.mxu0 0.0
  %7119 = vmatpush.msra.mxu0 0.0
  %7120 = vmatpush.msra.mxu0 0.0
  %7121 = vmatpush.msra.mxu0 0.0
  %7122 = vmatpush.msra.mxu0 0.0
  %7123 = vmatpush.msra.mxu0 0.0
  %7124 = vmatpush.msra.mxu0 0.0
  %7125 = vmatpush.msra.mxu0 0.0
  %7126 = vmatpush.msra.mxu0 0.0
  %7127 = vmatpush.msra.mxu0 0.0
  %7128 = vmatpush.msra.mxu0 0.0
  %7129 = vmatpush.msra.mxu0 0.0
  %7130 = vmatpush.msra.mxu0 0.0
  %7131 = vmatpush.msra.mxu0 0.0
  %7132 = vmatpush.msra.mxu0 %v3752
  %7133 = vmatmul.f32.gmra.mxu0 %v7115
  %v7134 = vpop.f32.mrf.mxu0
  %v7135 = vadd.f32 0.0, %v7134
  %7136 = vdwg.mxu0
  %v7138 = vrot.slane %v7135, 1
  %v7139 = vrot.slane %v7135, 2
  %v7140 = vrot.slane %v7135, 3
  %v7141 = vrot.slane %v7135, 4
  %v7146 = vadd.f32 %v3399, %v7135
  %v7147 = vadd.f32 %v3400, %v7138
  %v7148 = vadd.f32 %v3401, %v7139
  %v7149 = vadd.f32 %v3402, %v7140
  %v7150 = vadd.f32 %v3403, %v7141
  %v7151 = vtanh.pop %v7146
  %v7152 = vtanh.pop %v7147
  %v7153 = vtanh.pop %v7148
  %v7154 = vtanh.pop %v7149
  %v7155 = vtanh.pop %v7150
  %7156 = vst [vmem:[#allocation1] ss:$9 sm:$0xff] %v6800
  %s7157 = scalar_lea.vmem [#allocation1], 1
  %7158 = vst [vmem:[%s7157] ss:$9 sm:$0xff] %v6801
  %s7159 = scalar_lea.vmem [#allocation1], 2
  %7160 = vst [vmem:[%s7159] ss:$9 sm:$0xff] %v6802
  %s7161 = scalar_lea.vmem [#allocation1], 3
  %7162 = vst [vmem:[%s7161] ss:$9 sm:$0xff] %v6803
  %s7163 = scalar_lea.vmem [#allocation1], 4
  %7164 = vst [vmem:[%s7163] ss:$9 sm:$0xff] %v6804
  %v7165 = vld [vmem:[#allocation1] sm:$0xff]
  %v7166 = vsel %vm1324, %v7165, 0
  %7168 = vmatpush.msra.mxu0 0.0
  %7169 = vmatpush.msra.mxu0 0.0
  %7170 = vmatpush.msra.mxu0 0.0
  %7171 = vmatpush.msra.mxu0 0.0
  %7172 = vmatpush.msra.mxu0 0.0
  %7173 = vmatpush.msra.mxu0 0.0
  %7174 = vmatpush.msra.mxu0 0.0
  %7175 = vmatpush.msra.mxu0 0.0
  %7176 = vmatpush.msra.mxu0 0.0
  %7177 = vmatpush.msra.mxu0 0.0
  %7178 = vmatpush.msra.mxu0 0.0
  %7179 = vmatpush.msra.mxu0 0.0
  %7180 = vmatpush.msra.mxu0 0.0
  %7181 = vmatpush.msra.mxu0 0.0
  %7182 = vmatpush.msra.mxu0 0.0
  %7183 = vmatpush.msra.mxu0 %v3754
  %7184 = vmatmul.f32.gmra.mxu0 %v7166
  %v7185 = vpop.f32.mrf.mxu0
  %v7186 = vadd.f32 0.0, %v7185
  %7187 = vdwg.mxu0
  %v7189 = vrot.slane %v7186, 1
  %v7190 = vrot.slane %v7186, 2
  %v7191 = vrot.slane %v7186, 3
  %v7192 = vrot.slane %v7186, 4
  %v7197 = vadd.f32 %v3718, %v7186
  %v7198 = vadd.f32 %v3719, %v7189
  %v7199 = vadd.f32 %v3720, %v7190
  %v7200 = vadd.f32 %v3721, %v7191
  %v7201 = vadd.f32 %v3722, %v7192
  %v7202 = vxor.u32 %v7197, 2147483648
  %v7203 = vxor.u32 %v7198, 2147483648
  %v7204 = vxor.u32 %v7199, 2147483648
  %v7205 = vxor.u32 %v7200, 2147483648
  %v7206 = vxor.u32 %v7201, 2147483648
  %v7207 = vmul.f32 %v7202, 1.442695
  %v7208 = vpow.pop %v7207
  %v7209 = vmul.f32 %v7203, 1.442695
  %v7210 = vpow.pop %v7209
  %v7211 = vmul.f32 %v7204, 1.442695
  %v7212 = vpow.pop %v7211
  %v7213 = vmul.f32 %v7205, 1.442695
  %v7214 = vpow.pop %v7213
  %v7215 = vmul.f32 %v7206, 1.442695
  %v7216 = vpow.pop %v7215
  %v7217 = vadd.f32 %v7208, 1.0
  %v7218 = vadd.f32 %v7210, 1.0
  %v7219 = vadd.f32 %v7212, 1.0
  %v7220 = vadd.f32 %v7214, 1.0
  %v7221 = vadd.f32 %v7216, 1.0
  %v7222 = vrcp.pop %v7217
  %v7223 = vmul.f32 %v7217, %v7222
  %v7224 = vsub.f32 1.0, %v7223
  %v7225 = vmul.f32 %v7222, %v7224
  %v7226 = vadd.f32 %v7222, %v7225
  %vm7227 = vweird.f32 %v7217
  %vm7228 = vweird.f32 %v7222
  %vm7229 = vmor %vm7227, %vm7228
  %v7230 = vsel %vm7229, %v7222, %v7226
  %v7231 = vand.u32 2147483647, %v7217
  %vm7232 = vcmp.eq.f32.partialorder %v7231, 8.507059e+37
  %v7233 = vand.u32 %v7217, 2147483648
  %v7234 = vor.u32 1.1754944e-38, %v7233
  %v7235 = vsel %vm7232, %v7234, %v7230
  %v7236 = vmul.f32 1.0, %v7235
  %v7237 = vrcp.pop %v7218
  %v7238 = vmul.f32 %v7218, %v7237
  %v7239 = vsub.f32 1.0, %v7238
  %v7240 = vmul.f32 %v7237, %v7239
  %v7241 = vadd.f32 %v7237, %v7240
  %vm7242 = vweird.f32 %v7218
  %vm7243 = vweird.f32 %v7237
  %vm7244 = vmor %vm7242, %vm7243
  %v7245 = vsel %vm7244, %v7237, %v7241
  %v7246 = vand.u32 2147483647, %v7218
  %vm7247 = vcmp.eq.f32.partialorder %v7246, 8.507059e+37
  %v7248 = vand.u32 %v7218, 2147483648
  %v7249 = vor.u32 1.1754944e-38, %v7248
  %v7250 = vsel %vm7247, %v7249, %v7245
  %v7251 = vmul.f32 1.0, %v7250
  %v7252 = vrcp.pop %v7219
  %v7253 = vmul.f32 %v7219, %v7252
  %v7254 = vsub.f32 1.0, %v7253
  %v7255 = vmul.f32 %v7252, %v7254
  %v7256 = vadd.f32 %v7252, %v7255
  %vm7257 = vweird.f32 %v7219
  %vm7258 = vweird.f32 %v7252
  %vm7259 = vmor %vm7257, %vm7258
  %v7260 = vsel %vm7259, %v7252, %v7256
  %v7261 = vand.u32 2147483647, %v7219
  %vm7262 = vcmp.eq.f32.partialorder %v7261, 8.507059e+37
  %v7263 = vand.u32 %v7219, 2147483648
  %v7264 = vor.u32 1.1754944e-38, %v7263
  %v7265 = vsel %vm7262, %v7264, %v7260
  %v7266 = vmul.f32 1.0, %v7265
  %v7267 = vrcp.pop %v7220
  %v7268 = vmul.f32 %v7220, %v7267
  %v7269 = vsub.f32 1.0, %v7268
  %v7270 = vmul.f32 %v7267, %v7269
  %v7271 = vadd.f32 %v7267, %v7270
  %vm7272 = vweird.f32 %v7220
  %vm7273 = vweird.f32 %v7267
  %vm7274 = vmor %vm7272, %vm7273
  %v7275 = vsel %vm7274, %v7267, %v7271
  %v7276 = vand.u32 2147483647, %v7220
  %vm7277 = vcmp.eq.f32.partialorder %v7276, 8.507059e+37
  %v7278 = vand.u32 %v7220, 2147483648
  %v7279 = vor.u32 1.1754944e-38, %v7278
  %v7280 = vsel %vm7277, %v7279, %v7275
  %v7281 = vmul.f32 1.0, %v7280
  %v7282 = vrcp.pop %v7221
  %v7283 = vmul.f32 %v7221, %v7282
  %v7284 = vsub.f32 1.0, %v7283
  %v7285 = vmul.f32 %v7282, %v7284
  %v7286 = vadd.f32 %v7282, %v7285
  %vm7287 = vweird.f32 %v7221
  %vm7288 = vweird.f32 %v7282
  %vm7289 = vmor %vm7287, %vm7288
  %v7290 = vsel %vm7289, %v7282, %v7286
  %v7291 = vand.u32 2147483647, %v7221
  %vm7292 = vcmp.eq.f32.partialorder %v7291, 8.507059e+37
  %v7293 = vand.u32 %v7221, 2147483648
  %v7294 = vor.u32 1.1754944e-38, %v7293
  %v7295 = vsel %vm7292, %v7294, %v7290
  %v7296 = vmul.f32 1.0, %v7295
  %v7297 = vmul.f32 %v7044, %v6790
  %v7298 = vmul.f32 %v7059, %v6791
  %v7299 = vmul.f32 %v7074, %v6792
  %v7300 = vmul.f32 %v7089, %v6793
  %v7301 = vmul.f32 %v7104, %v6794
  %v7302 = vmul.f32 %v6903, %v7151
  %v7303 = vmul.f32 %v6918, %v7152
  %v7304 = vmul.f32 %v6933, %v7153
  %v7305 = vmul.f32 %v6948, %v7154
  %v7306 = vmul.f32 %v6963, %v7155
  %v7307 = vadd.f32 %v7297, %v7302
  %v7308 = vadd.f32 %v7298, %v7303
  %v7309 = vadd.f32 %v7299, %v7304
  %v7310 = vadd.f32 %v7300, %v7305
  %v7311 = vadd.f32 %v7301, %v7306
  %v7312 = vtanh.pop %v7307
  %v7313 = vtanh.pop %v7308
  %v7314 = vtanh.pop %v7309
  %v7315 = vtanh.pop %v7310
  %v7316 = vtanh.pop %v7311
  %v7317 = vmul.f32 %v7236, %v7312
  %v7318 = vmul.f32 %v7251, %v7313
  %v7319 = vmul.f32 %v7266, %v7314
  %v7320 = vmul.f32 %v7281, %v7315
  %v7321 = vmul.f32 %v7296, %v7316
  %7327 = vst [vmem:[#allocation1] ss:$9 sm:$0xff] %v7317
  %s7328 = scalar_lea.vmem [#allocation1], 1
  %7329 = vst [vmem:[%s7328] ss:$9 sm:$0xff] %v7318
  %s7330 = scalar_lea.vmem [#allocation1], 2
  %7331 = vst [vmem:[%s7330] ss:$9 sm:$0xff] %v7319
  %s7332 = scalar_lea.vmem [#allocation1], 3
  %7333 = vst [vmem:[%s7332] ss:$9 sm:$0xff] %v7320
  %s7334 = scalar_lea.vmem [#allocation1], 4
  %7335 = vst [vmem:[%s7334] ss:$9 sm:$0xff] %v7321
  %v7336 = vld [vmem:[#allocation1] sm:$0xff]
  %s7338 = scalar_lea.vmem [#allocation2], 48
  %7339 = vst.msk [vmem:[%s7338] sm:$0x1f] %vm4236, %v7336
  %7340 = vst [vmem:[#allocation1] ss:$9 sm:$0xff] %v7317
  %s7341 = scalar_lea.vmem [#allocation1], 1
  %7342 = vst [vmem:[%s7341] ss:$9 sm:$0xff] %v7318
  %s7343 = scalar_lea.vmem [#allocation1], 2
  %7344 = vst [vmem:[%s7343] ss:$9 sm:$0xff] %v7319
  %s7345 = scalar_lea.vmem [#allocation1], 3
  %7346 = vst [vmem:[%s7345] ss:$9 sm:$0xff] %v7320
  %s7347 = scalar_lea.vmem [#allocation1], 4
  %7348 = vst [vmem:[%s7347] ss:$9 sm:$0xff] %v7321
  %v7349 = vld [vmem:[#allocation1] sm:$0xff]
  %v7350 = vsel %vm1324, %v7349, 0
  %7352 = vmatpush.msra.mxu0 0.0
  %7353 = vmatpush.msra.mxu0 0.0
  %7354 = vmatpush.msra.mxu0 0.0
  %7355 = vmatpush.msra.mxu0 0.0
  %7356 = vmatpush.msra.mxu0 0.0
  %7357 = vmatpush.msra.mxu0 0.0
  %7358 = vmatpush.msra.mxu0 0.0
  %7359 = vmatpush.msra.mxu0 0.0
  %7360 = vmatpush.msra.mxu0 0.0
  %7361 = vmatpush.msra.mxu0 0.0
  %7362 = vmatpush.msra.mxu0 0.0
  %7363 = vmatpush.msra.mxu0 0.0
  %7364 = vmatpush.msra.mxu0 0.0
  %7365 = vmatpush.msra.mxu0 0.0
  %7366 = vmatpush.msra.mxu0 0.0
  %7367 = vmatpush.msra.mxu0 %v3748
  %7368 = vmatmul.f32.gmra.mxu0 %v7350
  %v7369 = vpop.f32.mrf.mxu0
  %v7370 = vadd.f32 0.0, %v7369
  %7371 = vdwg.mxu0
  %v7373 = vrot.slane %v7370, 1
  %v7374 = vrot.slane %v7370, 2
  %v7375 = vrot.slane %v7370, 3
  %v7376 = vrot.slane %v7370, 4
  %v7381 = vadd.f32 %v2766, %v7370
  %v7382 = vadd.f32 %v2767, %v7373
  %v7383 = vadd.f32 %v2768, %v7374
  %v7384 = vadd.f32 %v2769, %v7375
  %v7385 = vadd.f32 %v2770, %v7376
  %v7386 = vxor.u32 %v7381, 2147483648
  %v7387 = vxor.u32 %v7382, 2147483648
  %v7388 = vxor.u32 %v7383, 2147483648
  %v7389 = vxor.u32 %v7384, 2147483648
  %v7390 = vxor.u32 %v7385, 2147483648
  %v7391 = vmul.f32 %v7386, 1.442695
  %v7392 = vpow.pop %v7391
  %v7393 = vmul.f32 %v7387, 1.442695
  %v7394 = vpow.pop %v7393
  %v7395 = vmul.f32 %v7388, 1.442695
  %v7396 = vpow.pop %v7395
  %v7397 = vmul.f32 %v7389, 1.442695
  %v7398 = vpow.pop %v7397
  %v7399 = vmul.f32 %v7390, 1.442695
  %v7400 = vpow.pop %v7399
  %v7401 = vadd.f32 %v7392, 1.0
  %v7402 = vadd.f32 %v7394, 1.0
  %v7403 = vadd.f32 %v7396, 1.0
  %v7404 = vadd.f32 %v7398, 1.0
  %v7405 = vadd.f32 %v7400, 1.0
  %v7406 = vrcp.pop %v7401
  %v7407 = vmul.f32 %v7401, %v7406
  %v7408 = vsub.f32 1.0, %v7407
  %v7409 = vmul.f32 %v7406, %v7408
  %v7410 = vadd.f32 %v7406, %v7409
  %vm7411 = vweird.f32 %v7401
  %vm7412 = vweird.f32 %v7406
  %vm7413 = vmor %vm7411, %vm7412
  %v7414 = vsel %vm7413, %v7406, %v7410
  %v7415 = vand.u32 2147483647, %v7401
  %vm7416 = vcmp.eq.f32.partialorder %v7415, 8.507059e+37
  %v7417 = vand.u32 %v7401, 2147483648
  %v7418 = vor.u32 1.1754944e-38, %v7417
  %v7419 = vsel %vm7416, %v7418, %v7414
  %v7420 = vmul.f32 1.0, %v7419
  %v7421 = vrcp.pop %v7402
  %v7422 = vmul.f32 %v7402, %v7421
  %v7423 = vsub.f32 1.0, %v7422
  %v7424 = vmul.f32 %v7421, %v7423
  %v7425 = vadd.f32 %v7421, %v7424
  %vm7426 = vweird.f32 %v7402
  %vm7427 = vweird.f32 %v7421
  %vm7428 = vmor %vm7426, %vm7427
  %v7429 = vsel %vm7428, %v7421, %v7425
  %v7430 = vand.u32 2147483647, %v7402
  %vm7431 = vcmp.eq.f32.partialorder %v7430, 8.507059e+37
  %v7432 = vand.u32 %v7402, 2147483648
  %v7433 = vor.u32 1.1754944e-38, %v7432
  %v7434 = vsel %vm7431, %v7433, %v7429
  %v7435 = vmul.f32 1.0, %v7434
  %v7436 = vrcp.pop %v7403
  %v7437 = vmul.f32 %v7403, %v7436
  %v7438 = vsub.f32 1.0, %v7437
  %v7439 = vmul.f32 %v7436, %v7438
  %v7440 = vadd.f32 %v7436, %v7439
  %vm7441 = vweird.f32 %v7403
  %vm7442 = vweird.f32 %v7436
  %vm7443 = vmor %vm7441, %vm7442
  %v7444 = vsel %vm7443, %v7436, %v7440
  %v7445 = vand.u32 2147483647, %v7403
  %vm7446 = vcmp.eq.f32.partialorder %v7445, 8.507059e+37
  %v7447 = vand.u32 %v7403, 2147483648
  %v7448 = vor.u32 1.1754944e-38, %v7447
  %v7449 = vsel %vm7446, %v7448, %v7444
  %v7450 = vmul.f32 1.0, %v7449
  %v7451 = vrcp.pop %v7404
  %v7452 = vmul.f32 %v7404, %v7451
  %v7453 = vsub.f32 1.0, %v7452
  %v7454 = vmul.f32 %v7451, %v7453
  %v7455 = vadd.f32 %v7451, %v7454
  %vm7456 = vweird.f32 %v7404
  %vm7457 = vweird.f32 %v7451
  %vm7458 = vmor %vm7456, %vm7457
  %v7459 = vsel %vm7458, %v7451, %v7455
  %v7460 = vand.u32 2147483647, %v7404
  %vm7461 = vcmp.eq.f32.partialorder %v7460, 8.507059e+37
  %v7462 = vand.u32 %v7404, 2147483648
  %v7463 = vor.u32 1.1754944e-38, %v7462
  %v7464 = vsel %vm7461, %v7463, %v7459
  %v7465 = vmul.f32 1.0, %v7464
  %v7466 = vrcp.pop %v7405
  %v7467 = vmul.f32 %v7405, %v7466
  %v7468 = vsub.f32 1.0, %v7467
  %v7469 = vmul.f32 %v7466, %v7468
  %v7470 = vadd.f32 %v7466, %v7469
  %vm7471 = vweird.f32 %v7405
  %vm7472 = vweird.f32 %v7466
  %vm7473 = vmor %vm7471, %vm7472
  %v7474 = vsel %vm7473, %v7466, %v7470
  %v7475 = vand.u32 2147483647, %v7405
  %vm7476 = vcmp.eq.f32.partialorder %v7475, 8.507059e+37
  %v7477 = vand.u32 %v7405, 2147483648
  %v7478 = vor.u32 1.1754944e-38, %v7477
  %v7479 = vsel %vm7476, %v7478, %v7474
  %v7480 = vmul.f32 1.0, %v7479
  %7481 = vst [vmem:[#allocation1] ss:$9 sm:$0xff] %v7317
  %s7482 = scalar_lea.vmem [#allocation1], 1
  %7483 = vst [vmem:[%s7482] ss:$9 sm:$0xff] %v7318
  %s7484 = scalar_lea.vmem [#allocation1], 2
  %7485 = vst [vmem:[%s7484] ss:$9 sm:$0xff] %v7319
  %s7486 = scalar_lea.vmem [#allocation1], 3
  %7487 = vst [vmem:[%s7486] ss:$9 sm:$0xff] %v7320
  %s7488 = scalar_lea.vmem [#allocation1], 4
  %7489 = vst [vmem:[%s7488] ss:$9 sm:$0xff] %v7321
  %v7490 = vld [vmem:[#allocation1] sm:$0xff]
  %v7491 = vsel %vm1324, %v7490, 0
  %7493 = vmatpush.msra.mxu0 0.0
  %7494 = vmatpush.msra.mxu0 0.0
  %7495 = vmatpush.msra.mxu0 0.0
  %7496 = vmatpush.msra.mxu0 0.0
  %7497 = vmatpush.msra.mxu0 0.0
  %7498 = vmatpush.msra.mxu0 0.0
  %7499 = vmatpush.msra.mxu0 0.0
  %7500 = vmatpush.msra.mxu0 0.0
  %7501 = vmatpush.msra.mxu0 0.0
  %7502 = vmatpush.msra.mxu0 0.0
  %7503 = vmatpush.msra.mxu0 0.0
  %7504 = vmatpush.msra.mxu0 0.0
  %7505 = vmatpush.msra.mxu0 0.0
  %7506 = vmatpush.msra.mxu0 0.0
  %7507 = vmatpush.msra.mxu0 0.0
  %7508 = vmatpush.msra.mxu0 %v3750
  %7509 = vmatmul.f32.gmra.mxu0 %v7491
  %v7510 = vpop.f32.mrf.mxu0
  %v7511 = vadd.f32 0.0, %v7510
  %7512 = vdwg.mxu0
  %v7514 = vrot.slane %v7511, 1
  %v7515 = vrot.slane %v7511, 2
  %v7516 = vrot.slane %v7511, 3
  %v7517 = vrot.slane %v7511, 4
  %v7522 = vadd.f32 %v3085, %v7511
  %v7523 = vadd.f32 %v3086, %v7514
  %v7524 = vadd.f32 %v3087, %v7515
  %v7525 = vadd.f32 %v3088, %v7516
  %v7526 = vadd.f32 %v3089, %v7517
  %v7527 = vxor.u32 %v7522, 2147483648
  %v7528 = vxor.u32 %v7523, 2147483648
  %v7529 = vxor.u32 %v7524, 2147483648
  %v7530 = vxor.u32 %v7525, 2147483648
  %v7531 = vxor.u32 %v7526, 2147483648
  %v7532 = vmul.f32 %v7527, 1.442695
  %v7533 = vpow.pop %v7532
  %v7534 = vmul.f32 %v7528, 1.442695
  %v7535 = vpow.pop %v7534
  %v7536 = vmul.f32 %v7529, 1.442695
  %v7537 = vpow.pop %v7536
  %v7538 = vmul.f32 %v7530, 1.442695
  %v7539 = vpow.pop %v7538
  %v7540 = vmul.f32 %v7531, 1.442695
  %v7541 = vpow.pop %v7540
  %v7542 = vadd.f32 %v7533, 1.0
  %v7543 = vadd.f32 %v7535, 1.0
  %v7544 = vadd.f32 %v7537, 1.0
  %v7545 = vadd.f32 %v7539, 1.0
  %v7546 = vadd.f32 %v7541, 1.0
  %v7547 = vrcp.pop %v7542
  %v7548 = vmul.f32 %v7542, %v7547
  %v7549 = vsub.f32 1.0, %v7548
  %v7550 = vmul.f32 %v7547, %v7549
  %v7551 = vadd.f32 %v7547, %v7550
  %vm7552 = vweird.f32 %v7542
  %vm7553 = vweird.f32 %v7547
  %vm7554 = vmor %vm7552, %vm7553
  %v7555 = vsel %vm7554, %v7547, %v7551
  %v7556 = vand.u32 2147483647, %v7542
  %vm7557 = vcmp.eq.f32.partialorder %v7556, 8.507059e+37
  %v7558 = vand.u32 %v7542, 2147483648
  %v7559 = vor.u32 1.1754944e-38, %v7558
  %v7560 = vsel %vm7557, %v7559, %v7555
  %v7561 = vmul.f32 1.0, %v7560
  %v7562 = vrcp.pop %v7543
  %v7563 = vmul.f32 %v7543, %v7562
  %v7564 = vsub.f32 1.0, %v7563
  %v7565 = vmul.f32 %v7562, %v7564
  %v7566 = vadd.f32 %v7562, %v7565
  %vm7567 = vweird.f32 %v7543
  %vm7568 = vweird.f32 %v7562
  %vm7569 = vmor %vm7567, %vm7568
  %v7570 = vsel %vm7569, %v7562, %v7566
  %v7571 = vand.u32 2147483647, %v7543
  %vm7572 = vcmp.eq.f32.partialorder %v7571, 8.507059e+37
  %v7573 = vand.u32 %v7543, 2147483648
  %v7574 = vor.u32 1.1754944e-38, %v7573
  %v7575 = vsel %vm7572, %v7574, %v7570
  %v7576 = vmul.f32 1.0, %v7575
  %v7577 = vrcp.pop %v7544
  %v7578 = vmul.f32 %v7544, %v7577
  %v7579 = vsub.f32 1.0, %v7578
  %v7580 = vmul.f32 %v7577, %v7579
  %v7581 = vadd.f32 %v7577, %v7580
  %vm7582 = vweird.f32 %v7544
  %vm7583 = vweird.f32 %v7577
  %vm7584 = vmor %vm7582, %vm7583
  %v7585 = vsel %vm7584, %v7577, %v7581
  %v7586 = vand.u32 2147483647, %v7544
  %vm7587 = vcmp.eq.f32.partialorder %v7586, 8.507059e+37
  %v7588 = vand.u32 %v7544, 2147483648
  %v7589 = vor.u32 1.1754944e-38, %v7588
  %v7590 = vsel %vm7587, %v7589, %v7585
  %v7591 = vmul.f32 1.0, %v7590
  %v7592 = vrcp.pop %v7545
  %v7593 = vmul.f32 %v7545, %v7592
  %v7594 = vsub.f32 1.0, %v7593
  %v7595 = vmul.f32 %v7592, %v7594
  %v7596 = vadd.f32 %v7592, %v7595
  %vm7597 = vweird.f32 %v7545
  %vm7598 = vweird.f32 %v7592
  %vm7599 = vmor %vm7597, %vm7598
  %v7600 = vsel %vm7599, %v7592, %v7596
  %v7601 = vand.u32 2147483647, %v7545
  %vm7602 = vcmp.eq.f32.partialorder %v7601, 8.507059e+37
  %v7603 = vand.u32 %v7545, 2147483648
  %v7604 = vor.u32 1.1754944e-38, %v7603
  %v7605 = vsel %vm7602, %v7604, %v7600
  %v7606 = vmul.f32 1.0, %v7605
  %v7607 = vrcp.pop %v7546
  %v7608 = vmul.f32 %v7546, %v7607
  %v7609 = vsub.f32 1.0, %v7608
  %v7610 = vmul.f32 %v7607, %v7609
  %v7611 = vadd.f32 %v7607, %v7610
  %vm7612 = vweird.f32 %v7546
  %vm7613 = vweird.f32 %v7607
  %vm7614 = vmor %vm7612, %vm7613
  %v7615 = vsel %vm7614, %v7607, %v7611
  %v7616 = vand.u32 2147483647, %v7546
  %vm7617 = vcmp.eq.f32.partialorder %v7616, 8.507059e+37
  %v7618 = vand.u32 %v7546, 2147483648
  %v7619 = vor.u32 1.1754944e-38, %v7618
  %v7620 = vsel %vm7617, %v7619, %v7615
  %v7621 = vmul.f32 1.0, %v7620
  %7622 = vst [vmem:[#allocation1] ss:$9 sm:$0xff] %v7317
  %s7623 = scalar_lea.vmem [#allocation1], 1
  %7624 = vst [vmem:[%s7623] ss:$9 sm:$0xff] %v7318
  %s7625 = scalar_lea.vmem [#allocation1], 2
  %7626 = vst [vmem:[%s7625] ss:$9 sm:$0xff] %v7319
  %s7627 = scalar_lea.vmem [#allocation1], 3
  %7628 = vst [vmem:[%s7627] ss:$9 sm:$0xff] %v7320
  %s7629 = scalar_lea.vmem [#allocation1], 4
  %7630 = vst [vmem:[%s7629] ss:$9 sm:$0xff] %v7321
  %v7631 = vld [vmem:[#allocation1] sm:$0xff]
  %v7632 = vsel %vm1324, %v7631, 0
  %7634 = vmatpush.msra.mxu0 0.0
  %7635 = vmatpush.msra.mxu0 0.0
  %7636 = vmatpush.msra.mxu0 0.0
  %7637 = vmatpush.msra.mxu0 0.0
  %7638 = vmatpush.msra.mxu0 0.0
  %7639 = vmatpush.msra.mxu0 0.0
  %7640 = vmatpush.msra.mxu0 0.0
  %7641 = vmatpush.msra.mxu0 0.0
  %7642 = vmatpush.msra.mxu0 0.0
  %7643 = vmatpush.msra.mxu0 0.0
  %7644 = vmatpush.msra.mxu0 0.0
  %7645 = vmatpush.msra.mxu0 0.0
  %7646 = vmatpush.msra.mxu0 0.0
  %7647 = vmatpush.msra.mxu0 0.0
  %7648 = vmatpush.msra.mxu0 0.0
  %7649 = vmatpush.msra.mxu0 %v3752
  %7650 = vmatmul.f32.gmra.mxu0 %v7632
  %v7651 = vpop.f32.mrf.mxu0
  %v7652 = vadd.f32 0.0, %v7651
  %7653 = vdwg.mxu0
  %v7655 = vrot.slane %v7652, 1
  %v7656 = vrot.slane %v7652, 2
  %v7657 = vrot.slane %v7652, 3
  %v7658 = vrot.slane %v7652, 4
  %v7663 = vadd.f32 %v3404, %v7652
  %v7664 = vadd.f32 %v3405, %v7655
  %v7665 = vadd.f32 %v3406, %v7656
  %v7666 = vadd.f32 %v3407, %v7657
  %v7667 = vadd.f32 %v3408, %v7658
  %v7668 = vtanh.pop %v7663
  %v7669 = vtanh.pop %v7664
  %v7670 = vtanh.pop %v7665
  %v7671 = vtanh.pop %v7666
  %v7672 = vtanh.pop %v7667
  %7673 = vst [vmem:[#allocation1] ss:$9 sm:$0xff] %v7317
  %s7674 = scalar_lea.vmem [#allocation1], 1
  %7675 = vst [vmem:[%s7674] ss:$9 sm:$0xff] %v7318
  %s7676 = scalar_lea.vmem [#allocation1], 2
  %7677 = vst [vmem:[%s7676] ss:$9 sm:$0xff] %v7319
  %s7678 = scalar_lea.vmem [#allocation1], 3
  %7679 = vst [vmem:[%s7678] ss:$9 sm:$0xff] %v7320
  %s7680 = scalar_lea.vmem [#allocation1], 4
  %7681 = vst [vmem:[%s7680] ss:$9 sm:$0xff] %v7321
  %v7682 = vld [vmem:[#allocation1] sm:$0xff]
  %v7683 = vsel %vm1324, %v7682, 0
  %7685 = vmatpush.msra.mxu0 0.0
  %7686 = vmatpush.msra.mxu0 0.0
  %7687 = vmatpush.msra.mxu0 0.0
  %7688 = vmatpush.msra.mxu0 0.0
  %7689 = vmatpush.msra.mxu0 0.0
  %7690 = vmatpush.msra.mxu0 0.0
  %7691 = vmatpush.msra.mxu0 0.0
  %7692 = vmatpush.msra.mxu0 0.0
  %7693 = vmatpush.msra.mxu0 0.0
  %7694 = vmatpush.msra.mxu0 0.0
  %7695 = vmatpush.msra.mxu0 0.0
  %7696 = vmatpush.msra.mxu0 0.0
  %7697 = vmatpush.msra.mxu0 0.0
  %7698 = vmatpush.msra.mxu0 0.0
  %7699 = vmatpush.msra.mxu0 0.0
  %7700 = vmatpush.msra.mxu0 %v3754
  %7701 = vmatmul.f32.gmra.mxu0 %v7683
  %v7702 = vpop.f32.mrf.mxu0
  %v7703 = vadd.f32 0.0, %v7702
  %7704 = vdwg.mxu0
  %v7706 = vrot.slane %v7703, 1
  %v7707 = vrot.slane %v7703, 2
  %v7708 = vrot.slane %v7703, 3
  %v7709 = vrot.slane %v7703, 4
  %v7714 = vadd.f32 %v3723, %v7703
  %v7715 = vadd.f32 %v3724, %v7706
  %v7716 = vadd.f32 %v3725, %v7707
  %v7717 = vadd.f32 %v3726, %v7708
  %v7718 = vadd.f32 %v3727, %v7709
  %v7719 = vxor.u32 %v7714, 2147483648
  %v7720 = vxor.u32 %v7715, 2147483648
  %v7721 = vxor.u32 %v7716, 2147483648
  %v7722 = vxor.u32 %v7717, 2147483648
  %v7723 = vxor.u32 %v7718, 2147483648
  %v7724 = vmul.f32 %v7719, 1.442695
  %v7725 = vpow.pop %v7724
  %v7726 = vmul.f32 %v7720, 1.442695
  %v7727 = vpow.pop %v7726
  %v7728 = vmul.f32 %v7721, 1.442695
  %v7729 = vpow.pop %v7728
  %v7730 = vmul.f32 %v7722, 1.442695
  %v7731 = vpow.pop %v7730
  %v7732 = vmul.f32 %v7723, 1.442695
  %v7733 = vpow.pop %v7732
  %v7734 = vadd.f32 %v7725, 1.0
  %v7735 = vadd.f32 %v7727, 1.0
  %v7736 = vadd.f32 %v7729, 1.0
  %v7737 = vadd.f32 %v7731, 1.0
  %v7738 = vadd.f32 %v7733, 1.0
  %v7739 = vrcp.pop %v7734
  %v7740 = vmul.f32 %v7734, %v7739
  %v7741 = vsub.f32 1.0, %v7740
  %v7742 = vmul.f32 %v7739, %v7741
  %v7743 = vadd.f32 %v7739, %v7742
  %vm7744 = vweird.f32 %v7734
  %vm7745 = vweird.f32 %v7739
  %vm7746 = vmor %vm7744, %vm7745
  %v7747 = vsel %vm7746, %v7739, %v7743
  %v7748 = vand.u32 2147483647, %v7734
  %vm7749 = vcmp.eq.f32.partialorder %v7748, 8.507059e+37
  %v7750 = vand.u32 %v7734, 2147483648
  %v7751 = vor.u32 1.1754944e-38, %v7750
  %v7752 = vsel %vm7749, %v7751, %v7747
  %v7753 = vmul.f32 1.0, %v7752
  %v7754 = vrcp.pop %v7735
  %v7755 = vmul.f32 %v7735, %v7754
  %v7756 = vsub.f32 1.0, %v7755
  %v7757 = vmul.f32 %v7754, %v7756
  %v7758 = vadd.f32 %v7754, %v7757
  %vm7759 = vweird.f32 %v7735
  %vm7760 = vweird.f32 %v7754
  %vm7761 = vmor %vm7759, %vm7760
  %v7762 = vsel %vm7761, %v7754, %v7758
  %v7763 = vand.u32 2147483647, %v7735
  %vm7764 = vcmp.eq.f32.partialorder %v7763, 8.507059e+37
  %v7765 = vand.u32 %v7735, 2147483648
  %v7766 = vor.u32 1.1754944e-38, %v7765
  %v7767 = vsel %vm7764, %v7766, %v7762
  %v7768 = vmul.f32 1.0, %v7767
  %v7769 = vrcp.pop %v7736
  %v7770 = vmul.f32 %v7736, %v7769
  %v7771 = vsub.f32 1.0, %v7770
  %v7772 = vmul.f32 %v7769, %v7771
  %v7773 = vadd.f32 %v7769, %v7772
  %vm7774 = vweird.f32 %v7736
  %vm7775 = vweird.f32 %v7769
  %vm7776 = vmor %vm7774, %vm7775
  %v7777 = vsel %vm7776, %v7769, %v7773
  %v7778 = vand.u32 2147483647, %v7736
  %vm7779 = vcmp.eq.f32.partialorder %v7778, 8.507059e+37
  %v7780 = vand.u32 %v7736, 2147483648
  %v7781 = vor.u32 1.1754944e-38, %v7780
  %v7782 = vsel %vm7779, %v7781, %v7777
  %v7783 = vmul.f32 1.0, %v7782
  %v7784 = vrcp.pop %v7737
  %v7785 = vmul.f32 %v7737, %v7784
  %v7786 = vsub.f32 1.0, %v7785
  %v7787 = vmul.f32 %v7784, %v7786
  %v7788 = vadd.f32 %v7784, %v7787
  %vm7789 = vweird.f32 %v7737
  %vm7790 = vweird.f32 %v7784
  %vm7791 = vmor %vm7789, %vm7790
  %v7792 = vsel %vm7791, %v7784, %v7788
  %v7793 = vand.u32 2147483647, %v7737
  %vm7794 = vcmp.eq.f32.partialorder %v7793, 8.507059e+37
  %v7795 = vand.u32 %v7737, 2147483648
  %v7796 = vor.u32 1.1754944e-38, %v7795
  %v7797 = vsel %vm7794, %v7796, %v7792
  %v7798 = vmul.f32 1.0, %v7797
  %v7799 = vrcp.pop %v7738
  %v7800 = vmul.f32 %v7738, %v7799
  %v7801 = vsub.f32 1.0, %v7800
  %v7802 = vmul.f32 %v7799, %v7801
  %v7803 = vadd.f32 %v7799, %v7802
  %vm7804 = vweird.f32 %v7738
  %vm7805 = vweird.f32 %v7799
  %vm7806 = vmor %vm7804, %vm7805
  %v7807 = vsel %vm7806, %v7799, %v7803
  %v7808 = vand.u32 2147483647, %v7738
  %vm7809 = vcmp.eq.f32.partialorder %v7808, 8.507059e+37
  %v7810 = vand.u32 %v7738, 2147483648
  %v7811 = vor.u32 1.1754944e-38, %v7810
  %v7812 = vsel %vm7809, %v7811, %v7807
  %v7813 = vmul.f32 1.0, %v7812
  %v7814 = vmul.f32 %v7561, %v7307
  %v7815 = vmul.f32 %v7576, %v7308
  %v7816 = vmul.f32 %v7591, %v7309
  %v7817 = vmul.f32 %v7606, %v7310
  %v7818 = vmul.f32 %v7621, %v7311
  %v7819 = vmul.f32 %v7420, %v7668
  %v7820 = vmul.f32 %v7435, %v7669
  %v7821 = vmul.f32 %v7450, %v7670
  %v7822 = vmul.f32 %v7465, %v7671
  %v7823 = vmul.f32 %v7480, %v7672
  %v7824 = vadd.f32 %v7814, %v7819
  %v7825 = vadd.f32 %v7815, %v7820
  %v7826 = vadd.f32 %v7816, %v7821
  %v7827 = vadd.f32 %v7817, %v7822
  %v7828 = vadd.f32 %v7818, %v7823
  %v7829 = vtanh.pop %v7824
  %v7830 = vtanh.pop %v7825
  %v7831 = vtanh.pop %v7826
  %v7832 = vtanh.pop %v7827
  %v7833 = vtanh.pop %v7828
  %v7834 = vmul.f32 %v7753, %v7829
  %v7835 = vmul.f32 %v7768, %v7830
  %v7836 = vmul.f32 %v7783, %v7831
  %v7837 = vmul.f32 %v7798, %v7832
  %v7838 = vmul.f32 %v7813, %v7833
  %7844 = vst [vmem:[#allocation1] ss:$9 sm:$0xff] %v7834
  %s7845 = scalar_lea.vmem [#allocation1], 1
  %7846 = vst [vmem:[%s7845] ss:$9 sm:$0xff] %v7835
  %s7847 = scalar_lea.vmem [#allocation1], 2
  %7848 = vst [vmem:[%s7847] ss:$9 sm:$0xff] %v7836
  %s7849 = scalar_lea.vmem [#allocation1], 3
  %7850 = vst [vmem:[%s7849] ss:$9 sm:$0xff] %v7837
  %s7851 = scalar_lea.vmem [#allocation1], 4
  %7852 = vst [vmem:[%s7851] ss:$9 sm:$0xff] %v7838
  %v7853 = vld [vmem:[#allocation1] sm:$0xff]
  %s7855 = scalar_lea.vmem [#allocation2], 56
  %7856 = vst.msk [vmem:[%s7855] sm:$0x1f] %vm4236, %v7853
  %7857 = vst [vmem:[#allocation1] ss:$9 sm:$0xff] %v7834
  %s7858 = scalar_lea.vmem [#allocation1], 1
  %7859 = vst [vmem:[%s7858] ss:$9 sm:$0xff] %v7835
  %s7860 = scalar_lea.vmem [#allocation1], 2
  %7861 = vst [vmem:[%s7860] ss:$9 sm:$0xff] %v7836
  %s7862 = scalar_lea.vmem [#allocation1], 3
  %7863 = vst [vmem:[%s7862] ss:$9 sm:$0xff] %v7837
  %s7864 = scalar_lea.vmem [#allocation1], 4
  %7865 = vst [vmem:[%s7864] ss:$9 sm:$0xff] %v7838
  %v7866 = vld [vmem:[#allocation1] sm:$0xff]
  %v7867 = vsel %vm1324, %v7866, 0
  %7869 = vmatpush.msra.mxu0 0.0
  %7870 = vmatpush.msra.mxu0 0.0
  %7871 = vmatpush.msra.mxu0 0.0
  %7872 = vmatpush.msra.mxu0 0.0
  %7873 = vmatpush.msra.mxu0 0.0
  %7874 = vmatpush.msra.mxu0 0.0
  %7875 = vmatpush.msra.mxu0 0.0
  %7876 = vmatpush.msra.mxu0 0.0
  %7877 = vmatpush.msra.mxu0 0.0
  %7878 = vmatpush.msra.mxu0 0.0
  %7879 = vmatpush.msra.mxu0 0.0
  %7880 = vmatpush.msra.mxu0 0.0
  %7881 = vmatpush.msra.mxu0 0.0
  %7882 = vmatpush.msra.mxu0 0.0
  %7883 = vmatpush.msra.mxu0 0.0
  %7884 = vmatpush.msra.mxu0 %v3748
  %7885 = vmatmul.f32.gmra.mxu0 %v7867
  %v7886 = vpop.f32.mrf.mxu0
  %v7887 = vadd.f32 0.0, %v7886
  %7888 = vdwg.mxu0
  %v7890 = vrot.slane %v7887, 1
  %v7891 = vrot.slane %v7887, 2
  %v7892 = vrot.slane %v7887, 3
  %v7893 = vrot.slane %v7887, 4
  %v7898 = vadd.f32 %v2771, %v7887
  %v7899 = vadd.f32 %v2772, %v7890
  %v7900 = vadd.f32 %v2773, %v7891
  %v7901 = vadd.f32 %v2774, %v7892
  %v7902 = vadd.f32 %v2775, %v7893
  %v7903 = vxor.u32 %v7898, 2147483648
  %v7904 = vxor.u32 %v7899, 2147483648
  %v7905 = vxor.u32 %v7900, 2147483648
  %v7906 = vxor.u32 %v7901, 2147483648
  %v7907 = vxor.u32 %v7902, 2147483648
  %v7908 = vmul.f32 %v7903, 1.442695
  %v7909 = vpow.pop %v7908
  %v7910 = vmul.f32 %v7904, 1.442695
  %v7911 = vpow.pop %v7910
  %v7912 = vmul.f32 %v7905, 1.442695
  %v7913 = vpow.pop %v7912
  %v7914 = vmul.f32 %v7906, 1.442695
  %v7915 = vpow.pop %v7914
  %v7916 = vmul.f32 %v7907, 1.442695
  %v7917 = vpow.pop %v7916
  %v7918 = vadd.f32 %v7909, 1.0
  %v7919 = vadd.f32 %v7911, 1.0
  %v7920 = vadd.f32 %v7913, 1.0
  %v7921 = vadd.f32 %v7915, 1.0
  %v7922 = vadd.f32 %v7917, 1.0
  %v7923 = vrcp.pop %v7918
  %v7924 = vmul.f32 %v7918, %v7923
  %v7925 = vsub.f32 1.0, %v7924
  %v7926 = vmul.f32 %v7923, %v7925
  %v7927 = vadd.f32 %v7923, %v7926
  %vm7928 = vweird.f32 %v7918
  %vm7929 = vweird.f32 %v7923
  %vm7930 = vmor %vm7928, %vm7929
  %v7931 = vsel %vm7930, %v7923, %v7927
  %v7932 = vand.u32 2147483647, %v7918
  %vm7933 = vcmp.eq.f32.partialorder %v7932, 8.507059e+37
  %v7934 = vand.u32 %v7918, 2147483648
  %v7935 = vor.u32 1.1754944e-38, %v7934
  %v7936 = vsel %vm7933, %v7935, %v7931
  %v7937 = vmul.f32 1.0, %v7936
  %v7938 = vrcp.pop %v7919
  %v7939 = vmul.f32 %v7919, %v7938
  %v7940 = vsub.f32 1.0, %v7939
  %v7941 = vmul.f32 %v7938, %v7940
  %v7942 = vadd.f32 %v7938, %v7941
  %vm7943 = vweird.f32 %v7919
  %vm7944 = vweird.f32 %v7938
  %vm7945 = vmor %vm7943, %vm7944
  %v7946 = vsel %vm7945, %v7938, %v7942
  %v7947 = vand.u32 2147483647, %v7919
  %vm7948 = vcmp.eq.f32.partialorder %v7947, 8.507059e+37
  %v7949 = vand.u32 %v7919, 2147483648
  %v7950 = vor.u32 1.1754944e-38, %v7949
  %v7951 = vsel %vm7948, %v7950, %v7946
  %v7952 = vmul.f32 1.0, %v7951
  %v7953 = vrcp.pop %v7920
  %v7954 = vmul.f32 %v7920, %v7953
  %v7955 = vsub.f32 1.0, %v7954
  %v7956 = vmul.f32 %v7953, %v7955
  %v7957 = vadd.f32 %v7953, %v7956
  %vm7958 = vweird.f32 %v7920
  %vm7959 = vweird.f32 %v7953
  %vm7960 = vmor %vm7958, %vm7959
  %v7961 = vsel %vm7960, %v7953, %v7957
  %v7962 = vand.u32 2147483647, %v7920
  %vm7963 = vcmp.eq.f32.partialorder %v7962, 8.507059e+37
  %v7964 = vand.u32 %v7920, 2147483648
  %v7965 = vor.u32 1.1754944e-38, %v7964
  %v7966 = vsel %vm7963, %v7965, %v7961
  %v7967 = vmul.f32 1.0, %v7966
  %v7968 = vrcp.pop %v7921
  %v7969 = vmul.f32 %v7921, %v7968
  %v7970 = vsub.f32 1.0, %v7969
  %v7971 = vmul.f32 %v7968, %v7970
  %v7972 = vadd.f32 %v7968, %v7971
  %vm7973 = vweird.f32 %v7921
  %vm7974 = vweird.f32 %v7968
  %vm7975 = vmor %vm7973, %vm7974
  %v7976 = vsel %vm7975, %v7968, %v7972
  %v7977 = vand.u32 2147483647, %v7921
  %vm7978 = vcmp.eq.f32.partialorder %v7977, 8.507059e+37
  %v7979 = vand.u32 %v7921, 2147483648
  %v7980 = vor.u32 1.1754944e-38, %v7979
  %v7981 = vsel %vm7978, %v7980, %v7976
  %v7982 = vmul.f32 1.0, %v7981
  %v7983 = vrcp.pop %v7922
  %v7984 = vmul.f32 %v7922, %v7983
  %v7985 = vsub.f32 1.0, %v7984
  %v7986 = vmul.f32 %v7983, %v7985
  %v7987 = vadd.f32 %v7983, %v7986
  %vm7988 = vweird.f32 %v7922
  %vm7989 = vweird.f32 %v7983
  %vm7990 = vmor %vm7988, %vm7989
  %v7991 = vsel %vm7990, %v7983, %v7987
  %v7992 = vand.u32 2147483647, %v7922
  %vm7993 = vcmp.eq.f32.partialorder %v7992, 8.507059e+37
  %v7994 = vand.u32 %v7922, 2147483648
  %v7995 = vor.u32 1.1754944e-38, %v7994
  %v7996 = vsel %vm7993, %v7995, %v7991
  %v7997 = vmul.f32 1.0, %v7996
  %7998 = vst [vmem:[#allocation1] ss:$9 sm:$0xff] %v7834
  %s7999 = scalar_lea.vmem [#allocation1], 1
  %8000 = vst [vmem:[%s7999] ss:$9 sm:$0xff] %v7835
  %s8001 = scalar_lea.vmem [#allocation1], 2
  %8002 = vst [vmem:[%s8001] ss:$9 sm:$0xff] %v7836
  %s8003 = scalar_lea.vmem [#allocation1], 3
  %8004 = vst [vmem:[%s8003] ss:$9 sm:$0xff] %v7837
  %s8005 = scalar_lea.vmem [#allocation1], 4
  %8006 = vst [vmem:[%s8005] ss:$9 sm:$0xff] %v7838
  %v8007 = vld [vmem:[#allocation1] sm:$0xff]
  %v8008 = vsel %vm1324, %v8007, 0
  %8010 = vmatpush.msra.mxu0 0.0
  %8011 = vmatpush.msra.mxu0 0.0
  %8012 = vmatpush.msra.mxu0 0.0
  %8013 = vmatpush.msra.mxu0 0.0
  %8014 = vmatpush.msra.mxu0 0.0
  %8015 = vmatpush.msra.mxu0 0.0
  %8016 = vmatpush.msra.mxu0 0.0
  %8017 = vmatpush.msra.mxu0 0.0
  %8018 = vmatpush.msra.mxu0 0.0
  %8019 = vmatpush.msra.mxu0 0.0
  %8020 = vmatpush.msra.mxu0 0.0
  %8021 = vmatpush.msra.mxu0 0.0
  %8022 = vmatpush.msra.mxu0 0.0
  %8023 = vmatpush.msra.mxu0 0.0
  %8024 = vmatpush.msra.mxu0 0.0
  %8025 = vmatpush.msra.mxu0 %v3750
  %8026 = vmatmul.f32.gmra.mxu0 %v8008
  %v8027 = vpop.f32.mrf.mxu0
  %v8028 = vadd.f32 0.0, %v8027
  %8029 = vdwg.mxu0
  %v8031 = vrot.slane %v8028, 1
  %v8032 = vrot.slane %v8028, 2
  %v8033 = vrot.slane %v8028, 3
  %v8034 = vrot.slane %v8028, 4
  %v8039 = vadd.f32 %v3090, %v8028
  %v8040 = vadd.f32 %v3091, %v8031
  %v8041 = vadd.f32 %v3092, %v8032
  %v8042 = vadd.f32 %v3093, %v8033
  %v8043 = vadd.f32 %v3094, %v8034
  %v8044 = vxor.u32 %v8039, 2147483648
  %v8045 = vxor.u32 %v8040, 2147483648
  %v8046 = vxor.u32 %v8041, 2147483648
  %v8047 = vxor.u32 %v8042, 2147483648
  %v8048 = vxor.u32 %v8043, 2147483648
  %v8049 = vmul.f32 %v8044, 1.442695
  %v8050 = vpow.pop %v8049
  %v8051 = vmul.f32 %v8045, 1.442695
  %v8052 = vpow.pop %v8051
  %v8053 = vmul.f32 %v8046, 1.442695
  %v8054 = vpow.pop %v8053
  %v8055 = vmul.f32 %v8047, 1.442695
  %v8056 = vpow.pop %v8055
  %v8057 = vmul.f32 %v8048, 1.442695
  %v8058 = vpow.pop %v8057
  %v8059 = vadd.f32 %v8050, 1.0
  %v8060 = vadd.f32 %v8052, 1.0
  %v8061 = vadd.f32 %v8054, 1.0
  %v8062 = vadd.f32 %v8056, 1.0
  %v8063 = vadd.f32 %v8058, 1.0
  %v8064 = vrcp.pop %v8059
  %v8065 = vmul.f32 %v8059, %v8064
  %v8066 = vsub.f32 1.0, %v8065
  %v8067 = vmul.f32 %v8064, %v8066
  %v8068 = vadd.f32 %v8064, %v8067
  %vm8069 = vweird.f32 %v8059
  %vm8070 = vweird.f32 %v8064
  %vm8071 = vmor %vm8069, %vm8070
  %v8072 = vsel %vm8071, %v8064, %v8068
  %v8073 = vand.u32 2147483647, %v8059
  %vm8074 = vcmp.eq.f32.partialorder %v8073, 8.507059e+37
  %v8075 = vand.u32 %v8059, 2147483648
  %v8076 = vor.u32 1.1754944e-38, %v8075
  %v8077 = vsel %vm8074, %v8076, %v8072
  %v8078 = vmul.f32 1.0, %v8077
  %v8079 = vrcp.pop %v8060
  %v8080 = vmul.f32 %v8060, %v8079
  %v8081 = vsub.f32 1.0, %v8080
  %v8082 = vmul.f32 %v8079, %v8081
  %v8083 = vadd.f32 %v8079, %v8082
  %vm8084 = vweird.f32 %v8060
  %vm8085 = vweird.f32 %v8079
  %vm8086 = vmor %vm8084, %vm8085
  %v8087 = vsel %vm8086, %v8079, %v8083
  %v8088 = vand.u32 2147483647, %v8060
  %vm8089 = vcmp.eq.f32.partialorder %v8088, 8.507059e+37
  %v8090 = vand.u32 %v8060, 2147483648
  %v8091 = vor.u32 1.1754944e-38, %v8090
  %v8092 = vsel %vm8089, %v8091, %v8087
  %v8093 = vmul.f32 1.0, %v8092
  %v8094 = vrcp.pop %v8061
  %v8095 = vmul.f32 %v8061, %v8094
  %v8096 = vsub.f32 1.0, %v8095
  %v8097 = vmul.f32 %v8094, %v8096
  %v8098 = vadd.f32 %v8094, %v8097
  %vm8099 = vweird.f32 %v8061
  %vm8100 = vweird.f32 %v8094
  %vm8101 = vmor %vm8099, %vm8100
  %v8102 = vsel %vm8101, %v8094, %v8098
  %v8103 = vand.u32 2147483647, %v8061
  %vm8104 = vcmp.eq.f32.partialorder %v8103, 8.507059e+37
  %v8105 = vand.u32 %v8061, 2147483648
  %v8106 = vor.u32 1.1754944e-38, %v8105
  %v8107 = vsel %vm8104, %v8106, %v8102
  %v8108 = vmul.f32 1.0, %v8107
  %v8109 = vrcp.pop %v8062
  %v8110 = vmul.f32 %v8062, %v8109
  %v8111 = vsub.f32 1.0, %v8110
  %v8112 = vmul.f32 %v8109, %v8111
  %v8113 = vadd.f32 %v8109, %v8112
  %vm8114 = vweird.f32 %v8062
  %vm8115 = vweird.f32 %v8109
  %vm8116 = vmor %vm8114, %vm8115
  %v8117 = vsel %vm8116, %v8109, %v8113
  %v8118 = vand.u32 2147483647, %v8062
  %vm8119 = vcmp.eq.f32.partialorder %v8118, 8.507059e+37
  %v8120 = vand.u32 %v8062, 2147483648
  %v8121 = vor.u32 1.1754944e-38, %v8120
  %v8122 = vsel %vm8119, %v8121, %v8117
  %v8123 = vmul.f32 1.0, %v8122
  %v8124 = vrcp.pop %v8063
  %v8125 = vmul.f32 %v8063, %v8124
  %v8126 = vsub.f32 1.0, %v8125
  %v8127 = vmul.f32 %v8124, %v8126
  %v8128 = vadd.f32 %v8124, %v8127
  %vm8129 = vweird.f32 %v8063
  %vm8130 = vweird.f32 %v8124
  %vm8131 = vmor %vm8129, %vm8130
  %v8132 = vsel %vm8131, %v8124, %v8128
  %v8133 = vand.u32 2147483647, %v8063
  %vm8134 = vcmp.eq.f32.partialorder %v8133, 8.507059e+37
  %v8135 = vand.u32 %v8063, 2147483648
  %v8136 = vor.u32 1.1754944e-38, %v8135
  %v8137 = vsel %vm8134, %v8136, %v8132
  %v8138 = vmul.f32 1.0, %v8137
  %8139 = vst [vmem:[#allocation1] ss:$9 sm:$0xff] %v7834
  %s8140 = scalar_lea.vmem [#allocation1], 1
  %8141 = vst [vmem:[%s8140] ss:$9 sm:$0xff] %v7835
  %s8142 = scalar_lea.vmem [#allocation1], 2
  %8143 = vst [vmem:[%s8142] ss:$9 sm:$0xff] %v7836
  %s8144 = scalar_lea.vmem [#allocation1], 3
  %8145 = vst [vmem:[%s8144] ss:$9 sm:$0xff] %v7837
  %s8146 = scalar_lea.vmem [#allocation1], 4
  %8147 = vst [vmem:[%s8146] ss:$9 sm:$0xff] %v7838
  %v8148 = vld [vmem:[#allocation1] sm:$0xff]
  %v8149 = vsel %vm1324, %v8148, 0
  %8151 = vmatpush.msra.mxu0 0.0
  %8152 = vmatpush.msra.mxu0 0.0
  %8153 = vmatpush.msra.mxu0 0.0
  %8154 = vmatpush.msra.mxu0 0.0
  %8155 = vmatpush.msra.mxu0 0.0
  %8156 = vmatpush.msra.mxu0 0.0
  %8157 = vmatpush.msra.mxu0 0.0
  %8158 = vmatpush.msra.mxu0 0.0
  %8159 = vmatpush.msra.mxu0 0.0
  %8160 = vmatpush.msra.mxu0 0.0
  %8161 = vmatpush.msra.mxu0 0.0
  %8162 = vmatpush.msra.mxu0 0.0
  %8163 = vmatpush.msra.mxu0 0.0
  %8164 = vmatpush.msra.mxu0 0.0
  %8165 = vmatpush.msra.mxu0 0.0
  %8166 = vmatpush.msra.mxu0 %v3752
  %8167 = vmatmul.f32.gmra.mxu0 %v8149
  %v8168 = vpop.f32.mrf.mxu0
  %v8169 = vadd.f32 0.0, %v8168
  %8170 = vdwg.mxu0
  %v8172 = vrot.slane %v8169, 1
  %v8173 = vrot.slane %v8169, 2
  %v8174 = vrot.slane %v8169, 3
  %v8175 = vrot.slane %v8169, 4
  %v8180 = vadd.f32 %v3409, %v8169
  %v8181 = vadd.f32 %v3410, %v8172
  %v8182 = vadd.f32 %v3411, %v8173
  %v8183 = vadd.f32 %v3412, %v8174
  %v8184 = vadd.f32 %v3413, %v8175
  %v8185 = vtanh.pop %v8180
  %v8186 = vtanh.pop %v8181
  %v8187 = vtanh.pop %v8182
  %v8188 = vtanh.pop %v8183
  %v8189 = vtanh.pop %v8184
  %8190 = vst [vmem:[#allocation1] ss:$9 sm:$0xff] %v7834
  %s8191 = scalar_lea.vmem [#allocation1], 1
  %8192 = vst [vmem:[%s8191] ss:$9 sm:$0xff] %v7835
  %s8193 = scalar_lea.vmem [#allocation1], 2
  %8194 = vst [vmem:[%s8193] ss:$9 sm:$0xff] %v7836
  %s8195 = scalar_lea.vmem [#allocation1], 3
  %8196 = vst [vmem:[%s8195] ss:$9 sm:$0xff] %v7837
  %s8197 = scalar_lea.vmem [#allocation1], 4
  %8198 = vst [vmem:[%s8197] ss:$9 sm:$0xff] %v7838
  %v8199 = vld [vmem:[#allocation1] sm:$0xff]
  %v8200 = vsel %vm1324, %v8199, 0
  %8202 = vmatpush.msra.mxu0 0.0
  %8203 = vmatpush.msra.mxu0 0.0
  %8204 = vmatpush.msra.mxu0 0.0
  %8205 = vmatpush.msra.mxu0 0.0
  %8206 = vmatpush.msra.mxu0 0.0
  %8207 = vmatpush.msra.mxu0 0.0
  %8208 = vmatpush.msra.mxu0 0.0
  %8209 = vmatpush.msra.mxu0 0.0
  %8210 = vmatpush.msra.mxu0 0.0
  %8211 = vmatpush.msra.mxu0 0.0
  %8212 = vmatpush.msra.mxu0 0.0
  %8213 = vmatpush.msra.mxu0 0.0
  %8214 = vmatpush.msra.mxu0 0.0
  %8215 = vmatpush.msra.mxu0 0.0
  %8216 = vmatpush.msra.mxu0 0.0
  %8217 = vmatpush.msra.mxu0 %v3754
  %8218 = vmatmul.f32.gmra.mxu0 %v8200
  %v8219 = vpop.f32.mrf.mxu0
  %v8220 = vadd.f32 0.0, %v8219
  %8221 = vdwg.mxu0
  %v8223 = vrot.slane %v8220, 1
  %v8224 = vrot.slane %v8220, 2
  %v8225 = vrot.slane %v8220, 3
  %v8226 = vrot.slane %v8220, 4
  %v8231 = vadd.f32 %v3728, %v8220
  %v8232 = vadd.f32 %v3729, %v8223
  %v8233 = vadd.f32 %v3730, %v8224
  %v8234 = vadd.f32 %v3731, %v8225
  %v8235 = vadd.f32 %v3732, %v8226
  %v8236 = vxor.u32 %v8231, 2147483648
  %v8237 = vxor.u32 %v8232, 2147483648
  %v8238 = vxor.u32 %v8233, 2147483648
  %v8239 = vxor.u32 %v8234, 2147483648
  %v8240 = vxor.u32 %v8235, 2147483648
  %v8241 = vmul.f32 %v8236, 1.442695
  %v8242 = vpow.pop %v8241
  %v8243 = vmul.f32 %v8237, 1.442695
  %v8244 = vpow.pop %v8243
  %v8245 = vmul.f32 %v8238, 1.442695
  %v8246 = vpow.pop %v8245
  %v8247 = vmul.f32 %v8239, 1.442695
  %v8248 = vpow.pop %v8247
  %v8249 = vmul.f32 %v8240, 1.442695
  %v8250 = vpow.pop %v8249
  %v8251 = vadd.f32 %v8242, 1.0
  %v8252 = vadd.f32 %v8244, 1.0
  %v8253 = vadd.f32 %v8246, 1.0
  %v8254 = vadd.f32 %v8248, 1.0
  %v8255 = vadd.f32 %v8250, 1.0
  %v8256 = vrcp.pop %v8251
  %v8257 = vmul.f32 %v8251, %v8256
  %v8258 = vsub.f32 1.0, %v8257
  %v8259 = vmul.f32 %v8256, %v8258
  %v8260 = vadd.f32 %v8256, %v8259
  %vm8261 = vweird.f32 %v8251
  %vm8262 = vweird.f32 %v8256
  %vm8263 = vmor %vm8261, %vm8262
  %v8264 = vsel %vm8263, %v8256, %v8260
  %v8265 = vand.u32 2147483647, %v8251
  %vm8266 = vcmp.eq.f32.partialorder %v8265, 8.507059e+37
  %v8267 = vand.u32 %v8251, 2147483648
  %v8268 = vor.u32 1.1754944e-38, %v8267
  %v8269 = vsel %vm8266, %v8268, %v8264
  %v8270 = vmul.f32 1.0, %v8269
  %v8271 = vrcp.pop %v8252
  %v8272 = vmul.f32 %v8252, %v8271
  %v8273 = vsub.f32 1.0, %v8272
  %v8274 = vmul.f32 %v8271, %v8273
  %v8275 = vadd.f32 %v8271, %v8274
  %vm8276 = vweird.f32 %v8252
  %vm8277 = vweird.f32 %v8271
  %vm8278 = vmor %vm8276, %vm8277
  %v8279 = vsel %vm8278, %v8271, %v8275
  %v8280 = vand.u32 2147483647, %v8252
  %vm8281 = vcmp.eq.f32.partialorder %v8280, 8.507059e+37
  %v8282 = vand.u32 %v8252, 2147483648
  %v8283 = vor.u32 1.1754944e-38, %v8282
  %v8284 = vsel %vm8281, %v8283, %v8279
  %v8285 = vmul.f32 1.0, %v8284
  %v8286 = vrcp.pop %v8253
  %v8287 = vmul.f32 %v8253, %v8286
  %v8288 = vsub.f32 1.0, %v8287
  %v8289 = vmul.f32 %v8286, %v8288
  %v8290 = vadd.f32 %v8286, %v8289
  %vm8291 = vweird.f32 %v8253
  %vm8292 = vweird.f32 %v8286
  %vm8293 = vmor %vm8291, %vm8292
  %v8294 = vsel %vm8293, %v8286, %v8290
  %v8295 = vand.u32 2147483647, %v8253
  %vm8296 = vcmp.eq.f32.partialorder %v8295, 8.507059e+37
  %v8297 = vand.u32 %v8253, 2147483648
  %v8298 = vor.u32 1.1754944e-38, %v8297
  %v8299 = vsel %vm8296, %v8298, %v8294
  %v8300 = vmul.f32 1.0, %v8299
  %v8301 = vrcp.pop %v8254
  %v8302 = vmul.f32 %v8254, %v8301
  %v8303 = vsub.f32 1.0, %v8302
  %v8304 = vmul.f32 %v8301, %v8303
  %v8305 = vadd.f32 %v8301, %v8304
  %vm8306 = vweird.f32 %v8254
  %vm8307 = vweird.f32 %v8301
  %vm8308 = vmor %vm8306, %vm8307
  %v8309 = vsel %vm8308, %v8301, %v8305
  %v8310 = vand.u32 2147483647, %v8254
  %vm8311 = vcmp.eq.f32.partialorder %v8310, 8.507059e+37
  %v8312 = vand.u32 %v8254, 2147483648
  %v8313 = vor.u32 1.1754944e-38, %v8312
  %v8314 = vsel %vm8311, %v8313, %v8309
  %v8315 = vmul.f32 1.0, %v8314
  %v8316 = vrcp.pop %v8255
  %v8317 = vmul.f32 %v8255, %v8316
  %v8318 = vsub.f32 1.0, %v8317
  %v8319 = vmul.f32 %v8316, %v8318
  %v8320 = vadd.f32 %v8316, %v8319
  %vm8321 = vweird.f32 %v8255
  %vm8322 = vweird.f32 %v8316
  %vm8323 = vmor %vm8321, %vm8322
  %v8324 = vsel %vm8323, %v8316, %v8320
  %v8325 = vand.u32 2147483647, %v8255
  %vm8326 = vcmp.eq.f32.partialorder %v8325, 8.507059e+37
  %v8327 = vand.u32 %v8255, 2147483648
  %v8328 = vor.u32 1.1754944e-38, %v8327
  %v8329 = vsel %vm8326, %v8328, %v8324
  %v8330 = vmul.f32 1.0, %v8329
  %v8331 = vmul.f32 %v8078, %v7824
  %v8332 = vmul.f32 %v8093, %v7825
  %v8333 = vmul.f32 %v8108, %v7826
  %v8334 = vmul.f32 %v8123, %v7827
  %v8335 = vmul.f32 %v8138, %v7828
  %v8336 = vmul.f32 %v7937, %v8185
  %v8337 = vmul.f32 %v7952, %v8186
  %v8338 = vmul.f32 %v7967, %v8187
  %v8339 = vmul.f32 %v7982, %v8188
  %v8340 = vmul.f32 %v7997, %v8189
  %v8341 = vadd.f32 %v8331, %v8336
  %v8342 = vadd.f32 %v8332, %v8337
  %v8343 = vadd.f32 %v8333, %v8338
  %v8344 = vadd.f32 %v8334, %v8339
  %v8345 = vadd.f32 %v8335, %v8340
  %v8346 = vtanh.pop %v8341
  %v8347 = vtanh.pop %v8342
  %v8348 = vtanh.pop %v8343
  %v8349 = vtanh.pop %v8344
  %v8350 = vtanh.pop %v8345
  %v8351 = vmul.f32 %v8270, %v8346
  %v8352 = vmul.f32 %v8285, %v8347
  %v8353 = vmul.f32 %v8300, %v8348
  %v8354 = vmul.f32 %v8315, %v8349
  %v8355 = vmul.f32 %v8330, %v8350
  %8361 = vst [vmem:[#allocation1] ss:$9 sm:$0xff] %v8351
  %s8362 = scalar_lea.vmem [#allocation1], 1
  %8363 = vst [vmem:[%s8362] ss:$9 sm:$0xff] %v8352
  %s8364 = scalar_lea.vmem [#allocation1], 2
  %8365 = vst [vmem:[%s8364] ss:$9 sm:$0xff] %v8353
  %s8366 = scalar_lea.vmem [#allocation1], 3
  %8367 = vst [vmem:[%s8366] ss:$9 sm:$0xff] %v8354
  %s8368 = scalar_lea.vmem [#allocation1], 4
  %8369 = vst [vmem:[%s8368] ss:$9 sm:$0xff] %v8355
  %v8370 = vld [vmem:[#allocation1] sm:$0xff]
  %s8372 = scalar_lea.vmem [#allocation2], 64
  %8373 = vst.msk [vmem:[%s8372] sm:$0x1f] %vm4236, %v8370
  %8374 = vst [vmem:[#allocation1] ss:$9 sm:$0xff] %v8351
  %s8375 = scalar_lea.vmem [#allocation1], 1
  %8376 = vst [vmem:[%s8375] ss:$9 sm:$0xff] %v8352
  %s8377 = scalar_lea.vmem [#allocation1], 2
  %8378 = vst [vmem:[%s8377] ss:$9 sm:$0xff] %v8353
  %s8379 = scalar_lea.vmem [#allocation1], 3
  %8380 = vst [vmem:[%s8379] ss:$9 sm:$0xff] %v8354
  %s8381 = scalar_lea.vmem [#allocation1], 4
  %8382 = vst [vmem:[%s8381] ss:$9 sm:$0xff] %v8355
  %v8383 = vld [vmem:[#allocation1] sm:$0xff]
  %v8384 = vsel %vm1324, %v8383, 0
  %8386 = vmatpush.msra.mxu0 0.0
  %8387 = vmatpush.msra.mxu0 0.0
  %8388 = vmatpush.msra.mxu0 0.0
  %8389 = vmatpush.msra.mxu0 0.0
  %8390 = vmatpush.msra.mxu0 0.0
  %8391 = vmatpush.msra.mxu0 0.0
  %8392 = vmatpush.msra.mxu0 0.0
  %8393 = vmatpush.msra.mxu0 0.0
  %8394 = vmatpush.msra.mxu0 0.0
  %8395 = vmatpush.msra.mxu0 0.0
  %8396 = vmatpush.msra.mxu0 0.0
  %8397 = vmatpush.msra.mxu0 0.0
  %8398 = vmatpush.msra.mxu0 0.0
  %8399 = vmatpush.msra.mxu0 0.0
  %8400 = vmatpush.msra.mxu0 0.0
  %8401 = vmatpush.msra.mxu0 %v3748
  %8402 = vmatmul.f32.gmra.mxu0 %v8384
  %v8403 = vpop.f32.mrf.mxu0
  %v8404 = vadd.f32 0.0, %v8403
  %8405 = vdwg.mxu0
  %v8407 = vrot.slane %v8404, 1
  %v8408 = vrot.slane %v8404, 2
  %v8409 = vrot.slane %v8404, 3
  %v8410 = vrot.slane %v8404, 4
  %v8415 = vadd.f32 %v2776, %v8404
  %v8416 = vadd.f32 %v2777, %v8407
  %v8417 = vadd.f32 %v2778, %v8408
  %v8418 = vadd.f32 %v2779, %v8409
  %v8419 = vadd.f32 %v2780, %v8410
  %v8420 = vxor.u32 %v8415, 2147483648
  %v8421 = vxor.u32 %v8416, 2147483648
  %v8422 = vxor.u32 %v8417, 2147483648
  %v8423 = vxor.u32 %v8418, 2147483648
  %v8424 = vxor.u32 %v8419, 2147483648
  %v8425 = vmul.f32 %v8420, 1.442695
  %v8426 = vpow.pop %v8425
  %v8427 = vmul.f32 %v8421, 1.442695
  %v8428 = vpow.pop %v8427
  %v8429 = vmul.f32 %v8422, 1.442695
  %v8430 = vpow.pop %v8429
  %v8431 = vmul.f32 %v8423, 1.442695
  %v8432 = vpow.pop %v8431
  %v8433 = vmul.f32 %v8424, 1.442695
  %v8434 = vpow.pop %v8433
  %v8435 = vadd.f32 %v8426, 1.0
  %v8436 = vadd.f32 %v8428, 1.0
  %v8437 = vadd.f32 %v8430, 1.0
  %v8438 = vadd.f32 %v8432, 1.0
  %v8439 = vadd.f32 %v8434, 1.0
  %v8440 = vrcp.pop %v8435
  %v8441 = vmul.f32 %v8435, %v8440
  %v8442 = vsub.f32 1.0, %v8441
  %v8443 = vmul.f32 %v8440, %v8442
  %v8444 = vadd.f32 %v8440, %v8443
  %vm8445 = vweird.f32 %v8435
  %vm8446 = vweird.f32 %v8440
  %vm8447 = vmor %vm8445, %vm8446
  %v8448 = vsel %vm8447, %v8440, %v8444
  %v8449 = vand.u32 2147483647, %v8435
  %vm8450 = vcmp.eq.f32.partialorder %v8449, 8.507059e+37
  %v8451 = vand.u32 %v8435, 2147483648
  %v8452 = vor.u32 1.1754944e-38, %v8451
  %v8453 = vsel %vm8450, %v8452, %v8448
  %v8454 = vmul.f32 1.0, %v8453
  %v8455 = vrcp.pop %v8436
  %v8456 = vmul.f32 %v8436, %v8455
  %v8457 = vsub.f32 1.0, %v8456
  %v8458 = vmul.f32 %v8455, %v8457
  %v8459 = vadd.f32 %v8455, %v8458
  %vm8460 = vweird.f32 %v8436
  %vm8461 = vweird.f32 %v8455
  %vm8462 = vmor %vm8460, %vm8461
  %v8463 = vsel %vm8462, %v8455, %v8459
  %v8464 = vand.u32 2147483647, %v8436
  %vm8465 = vcmp.eq.f32.partialorder %v8464, 8.507059e+37
  %v8466 = vand.u32 %v8436, 2147483648
  %v8467 = vor.u32 1.1754944e-38, %v8466
  %v8468 = vsel %vm8465, %v8467, %v8463
  %v8469 = vmul.f32 1.0, %v8468
  %v8470 = vrcp.pop %v8437
  %v8471 = vmul.f32 %v8437, %v8470
  %v8472 = vsub.f32 1.0, %v8471
  %v8473 = vmul.f32 %v8470, %v8472
  %v8474 = vadd.f32 %v8470, %v8473
  %vm8475 = vweird.f32 %v8437
  %vm8476 = vweird.f32 %v8470
  %vm8477 = vmor %vm8475, %vm8476
  %v8478 = vsel %vm8477, %v8470, %v8474
  %v8479 = vand.u32 2147483647, %v8437
  %vm8480 = vcmp.eq.f32.partialorder %v8479, 8.507059e+37
  %v8481 = vand.u32 %v8437, 2147483648
  %v8482 = vor.u32 1.1754944e-38, %v8481
  %v8483 = vsel %vm8480, %v8482, %v8478
  %v8484 = vmul.f32 1.0, %v8483
  %v8485 = vrcp.pop %v8438
  %v8486 = vmul.f32 %v8438, %v8485
  %v8487 = vsub.f32 1.0, %v8486
  %v8488 = vmul.f32 %v8485, %v8487
  %v8489 = vadd.f32 %v8485, %v8488
  %vm8490 = vweird.f32 %v8438
  %vm8491 = vweird.f32 %v8485
  %vm8492 = vmor %vm8490, %vm8491
  %v8493 = vsel %vm8492, %v8485, %v8489
  %v8494 = vand.u32 2147483647, %v8438
  %vm8495 = vcmp.eq.f32.partialorder %v8494, 8.507059e+37
  %v8496 = vand.u32 %v8438, 2147483648
  %v8497 = vor.u32 1.1754944e-38, %v8496
  %v8498 = vsel %vm8495, %v8497, %v8493
  %v8499 = vmul.f32 1.0, %v8498
  %v8500 = vrcp.pop %v8439
  %v8501 = vmul.f32 %v8439, %v8500
  %v8502 = vsub.f32 1.0, %v8501
  %v8503 = vmul.f32 %v8500, %v8502
  %v8504 = vadd.f32 %v8500, %v8503
  %vm8505 = vweird.f32 %v8439
  %vm8506 = vweird.f32 %v8500
  %vm8507 = vmor %vm8505, %vm8506
  %v8508 = vsel %vm8507, %v8500, %v8504
  %v8509 = vand.u32 2147483647, %v8439
  %vm8510 = vcmp.eq.f32.partialorder %v8509, 8.507059e+37
  %v8511 = vand.u32 %v8439, 2147483648
  %v8512 = vor.u32 1.1754944e-38, %v8511
  %v8513 = vsel %vm8510, %v8512, %v8508
  %v8514 = vmul.f32 1.0, %v8513
  %8515 = vst [vmem:[#allocation1] ss:$9 sm:$0xff] %v8351
  %s8516 = scalar_lea.vmem [#allocation1], 1
  %8517 = vst [vmem:[%s8516] ss:$9 sm:$0xff] %v8352
  %s8518 = scalar_lea.vmem [#allocation1], 2
  %8519 = vst [vmem:[%s8518] ss:$9 sm:$0xff] %v8353
  %s8520 = scalar_lea.vmem [#allocation1], 3
  %8521 = vst [vmem:[%s8520] ss:$9 sm:$0xff] %v8354
  %s8522 = scalar_lea.vmem [#allocation1], 4
  %8523 = vst [vmem:[%s8522] ss:$9 sm:$0xff] %v8355
  %v8524 = vld [vmem:[#allocation1] sm:$0xff]
  %v8525 = vsel %vm1324, %v8524, 0
  %8527 = vmatpush.msra.mxu0 0.0
  %8528 = vmatpush.msra.mxu0 0.0
  %8529 = vmatpush.msra.mxu0 0.0
  %8530 = vmatpush.msra.mxu0 0.0
  %8531 = vmatpush.msra.mxu0 0.0
  %8532 = vmatpush.msra.mxu0 0.0
  %8533 = vmatpush.msra.mxu0 0.0
  %8534 = vmatpush.msra.mxu0 0.0
  %8535 = vmatpush.msra.mxu0 0.0
  %8536 = vmatpush.msra.mxu0 0.0
  %8537 = vmatpush.msra.mxu0 0.0
  %8538 = vmatpush.msra.mxu0 0.0
  %8539 = vmatpush.msra.mxu0 0.0
  %8540 = vmatpush.msra.mxu0 0.0
  %8541 = vmatpush.msra.mxu0 0.0
  %8542 = vmatpush.msra.mxu0 %v3750
  %8543 = vmatmul.f32.gmra.mxu0 %v8525
  %v8544 = vpop.f32.mrf.mxu0
  %v8545 = vadd.f32 0.0, %v8544
  %8546 = vdwg.mxu0
  %v8548 = vrot.slane %v8545, 1
  %v8549 = vrot.slane %v8545, 2
  %v8550 = vrot.slane %v8545, 3
  %v8551 = vrot.slane %v8545, 4
  %v8556 = vadd.f32 %v3095, %v8545
  %v8557 = vadd.f32 %v3096, %v8548
  %v8558 = vadd.f32 %v3097, %v8549
  %v8559 = vadd.f32 %v3098, %v8550
  %v8560 = vadd.f32 %v3099, %v8551
  %v8561 = vxor.u32 %v8556, 2147483648
  %v8562 = vxor.u32 %v8557, 2147483648
  %v8563 = vxor.u32 %v8558, 2147483648
  %v8564 = vxor.u32 %v8559, 2147483648
  %v8565 = vxor.u32 %v8560, 2147483648
  %v8566 = vmul.f32 %v8561, 1.442695
  %v8567 = vpow.pop %v8566
  %v8568 = vmul.f32 %v8562, 1.442695
  %v8569 = vpow.pop %v8568
  %v8570 = vmul.f32 %v8563, 1.442695
  %v8571 = vpow.pop %v8570
  %v8572 = vmul.f32 %v8564, 1.442695
  %v8573 = vpow.pop %v8572
  %v8574 = vmul.f32 %v8565, 1.442695
  %v8575 = vpow.pop %v8574
  %v8576 = vadd.f32 %v8567, 1.0
  %v8577 = vadd.f32 %v8569, 1.0
  %v8578 = vadd.f32 %v8571, 1.0
  %v8579 = vadd.f32 %v8573, 1.0
  %v8580 = vadd.f32 %v8575, 1.0
  %v8581 = vrcp.pop %v8576
  %v8582 = vmul.f32 %v8576, %v8581
  %v8583 = vsub.f32 1.0, %v8582
  %v8584 = vmul.f32 %v8581, %v8583
  %v8585 = vadd.f32 %v8581, %v8584
  %vm8586 = vweird.f32 %v8576
  %vm8587 = vweird.f32 %v8581
  %vm8588 = vmor %vm8586, %vm8587
  %v8589 = vsel %vm8588, %v8581, %v8585
  %v8590 = vand.u32 2147483647, %v8576
  %vm8591 = vcmp.eq.f32.partialorder %v8590, 8.507059e+37
  %v8592 = vand.u32 %v8576, 2147483648
  %v8593 = vor.u32 1.1754944e-38, %v8592
  %v8594 = vsel %vm8591, %v8593, %v8589
  %v8595 = vmul.f32 1.0, %v8594
  %v8596 = vrcp.pop %v8577
  %v8597 = vmul.f32 %v8577, %v8596
  %v8598 = vsub.f32 1.0, %v8597
  %v8599 = vmul.f32 %v8596, %v8598
  %v8600 = vadd.f32 %v8596, %v8599
  %vm8601 = vweird.f32 %v8577
  %vm8602 = vweird.f32 %v8596
  %vm8603 = vmor %vm8601, %vm8602
  %v8604 = vsel %vm8603, %v8596, %v8600
  %v8605 = vand.u32 2147483647, %v8577
  %vm8606 = vcmp.eq.f32.partialorder %v8605, 8.507059e+37
  %v8607 = vand.u32 %v8577, 2147483648
  %v8608 = vor.u32 1.1754944e-38, %v8607
  %v8609 = vsel %vm8606, %v8608, %v8604
  %v8610 = vmul.f32 1.0, %v8609
  %v8611 = vrcp.pop %v8578
  %v8612 = vmul.f32 %v8578, %v8611
  %v8613 = vsub.f32 1.0, %v8612
  %v8614 = vmul.f32 %v8611, %v8613
  %v8615 = vadd.f32 %v8611, %v8614
  %vm8616 = vweird.f32 %v8578
  %vm8617 = vweird.f32 %v8611
  %vm8618 = vmor %vm8616, %vm8617
  %v8619 = vsel %vm8618, %v8611, %v8615
  %v8620 = vand.u32 2147483647, %v8578
  %vm8621 = vcmp.eq.f32.partialorder %v8620, 8.507059e+37
  %v8622 = vand.u32 %v8578, 2147483648
  %v8623 = vor.u32 1.1754944e-38, %v8622
  %v8624 = vsel %vm8621, %v8623, %v8619
  %v8625 = vmul.f32 1.0, %v8624
  %v8626 = vrcp.pop %v8579
  %v8627 = vmul.f32 %v8579, %v8626
  %v8628 = vsub.f32 1.0, %v8627
  %v8629 = vmul.f32 %v8626, %v8628
  %v8630 = vadd.f32 %v8626, %v8629
  %vm8631 = vweird.f32 %v8579
  %vm8632 = vweird.f32 %v8626
  %vm8633 = vmor %vm8631, %vm8632
  %v8634 = vsel %vm8633, %v8626, %v8630
  %v8635 = vand.u32 2147483647, %v8579
  %vm8636 = vcmp.eq.f32.partialorder %v8635, 8.507059e+37
  %v8637 = vand.u32 %v8579, 2147483648
  %v8638 = vor.u32 1.1754944e-38, %v8637
  %v8639 = vsel %vm8636, %v8638, %v8634
  %v8640 = vmul.f32 1.0, %v8639
  %v8641 = vrcp.pop %v8580
  %v8642 = vmul.f32 %v8580, %v8641
  %v8643 = vsub.f32 1.0, %v8642
  %v8644 = vmul.f32 %v8641, %v8643
  %v8645 = vadd.f32 %v8641, %v8644
  %vm8646 = vweird.f32 %v8580
  %vm8647 = vweird.f32 %v8641
  %vm8648 = vmor %vm8646, %vm8647
  %v8649 = vsel %vm8648, %v8641, %v8645
  %v8650 = vand.u32 2147483647, %v8580
  %vm8651 = vcmp.eq.f32.partialorder %v8650, 8.507059e+37
  %v8652 = vand.u32 %v8580, 2147483648
  %v8653 = vor.u32 1.1754944e-38, %v8652
  %v8654 = vsel %vm8651, %v8653, %v8649
  %v8655 = vmul.f32 1.0, %v8654
  %8656 = vst [vmem:[#allocation1] ss:$9 sm:$0xff] %v8351
  %s8657 = scalar_lea.vmem [#allocation1], 1
  %8658 = vst [vmem:[%s8657] ss:$9 sm:$0xff] %v8352
  %s8659 = scalar_lea.vmem [#allocation1], 2
  %8660 = vst [vmem:[%s8659] ss:$9 sm:$0xff] %v8353
  %s8661 = scalar_lea.vmem [#allocation1], 3
  %8662 = vst [vmem:[%s8661] ss:$9 sm:$0xff] %v8354
  %s8663 = scalar_lea.vmem [#allocation1], 4
  %8664 = vst [vmem:[%s8663] ss:$9 sm:$0xff] %v8355
  %v8665 = vld [vmem:[#allocation1] sm:$0xff]
  %v8666 = vsel %vm1324, %v8665, 0
  %8668 = vmatpush.msra.mxu0 0.0
  %8669 = vmatpush.msra.mxu0 0.0
  %8670 = vmatpush.msra.mxu0 0.0
  %8671 = vmatpush.msra.mxu0 0.0
  %8672 = vmatpush.msra.mxu0 0.0
  %8673 = vmatpush.msra.mxu0 0.0
  %8674 = vmatpush.msra.mxu0 0.0
  %8675 = vmatpush.msra.mxu0 0.0
  %8676 = vmatpush.msra.mxu0 0.0
  %8677 = vmatpush.msra.mxu0 0.0
  %8678 = vmatpush.msra.mxu0 0.0
  %8679 = vmatpush.msra.mxu0 0.0
  %8680 = vmatpush.msra.mxu0 0.0
  %8681 = vmatpush.msra.mxu0 0.0
  %8682 = vmatpush.msra.mxu0 0.0
  %8683 = vmatpush.msra.mxu0 %v3752
  %8684 = vmatmul.f32.gmra.mxu0 %v8666
  %v8685 = vpop.f32.mrf.mxu0
  %v8686 = vadd.f32 0.0, %v8685
  %8687 = vdwg.mxu0
  %v8689 = vrot.slane %v8686, 1
  %v8690 = vrot.slane %v8686, 2
  %v8691 = vrot.slane %v8686, 3
  %v8692 = vrot.slane %v8686, 4
  %v8697 = vadd.f32 %v3414, %v8686
  %v8698 = vadd.f32 %v3415, %v8689
  %v8699 = vadd.f32 %v3416, %v8690
  %v8700 = vadd.f32 %v3417, %v8691
  %v8701 = vadd.f32 %v3418, %v8692
  %v8702 = vtanh.pop %v8697
  %v8703 = vtanh.pop %v8698
  %v8704 = vtanh.pop %v8699
  %v8705 = vtanh.pop %v8700
  %v8706 = vtanh.pop %v8701
  %8707 = vst [vmem:[#allocation1] ss:$9 sm:$0xff] %v8351
  %s8708 = scalar_lea.vmem [#allocation1], 1
  %8709 = vst [vmem:[%s8708] ss:$9 sm:$0xff] %v8352
  %s8710 = scalar_lea.vmem [#allocation1], 2
  %8711 = vst [vmem:[%s8710] ss:$9 sm:$0xff] %v8353
  %s8712 = scalar_lea.vmem [#allocation1], 3
  %8713 = vst [vmem:[%s8712] ss:$9 sm:$0xff] %v8354
  %s8714 = scalar_lea.vmem [#allocation1], 4
  %8715 = vst [vmem:[%s8714] ss:$9 sm:$0xff] %v8355
  %v8716 = vld [vmem:[#allocation1] sm:$0xff]
  %v8717 = vsel %vm1324, %v8716, 0
  %8719 = vmatpush.msra.mxu0 0.0
  %8720 = vmatpush.msra.mxu0 0.0
  %8721 = vmatpush.msra.mxu0 0.0
  %8722 = vmatpush.msra.mxu0 0.0
  %8723 = vmatpush.msra.mxu0 0.0
  %8724 = vmatpush.msra.mxu0 0.0
  %8725 = vmatpush.msra.mxu0 0.0
  %8726 = vmatpush.msra.mxu0 0.0
  %8727 = vmatpush.msra.mxu0 0.0
  %8728 = vmatpush.msra.mxu0 0.0
  %8729 = vmatpush.msra.mxu0 0.0
  %8730 = vmatpush.msra.mxu0 0.0
  %8731 = vmatpush.msra.mxu0 0.0
  %8732 = vmatpush.msra.mxu0 0.0
  %8733 = vmatpush.msra.mxu0 0.0
  %8734 = vmatpush.msra.mxu0 %v3754
  %8735 = vmatmul.f32.gmra.mxu0 %v8717
  %v8736 = vpop.f32.mrf.mxu0
  %v8737 = vadd.f32 0.0, %v8736
  %8738 = vdwg.mxu0
  %v8740 = vrot.slane %v8737, 1
  %v8741 = vrot.slane %v8737, 2
  %v8742 = vrot.slane %v8737, 3
  %v8743 = vrot.slane %v8737, 4
  %v8748 = vadd.f32 %v3733, %v8737
  %v8749 = vadd.f32 %v3734, %v8740
  %v8750 = vadd.f32 %v3735, %v8741
  %v8751 = vadd.f32 %v3736, %v8742
  %v8752 = vadd.f32 %v3737, %v8743
  %v8753 = vxor.u32 %v8748, 2147483648
  %v8754 = vxor.u32 %v8749, 2147483648
  %v8755 = vxor.u32 %v8750, 2147483648
  %v8756 = vxor.u32 %v8751, 2147483648
  %v8757 = vxor.u32 %v8752, 2147483648
  %v8758 = vmul.f32 %v8753, 1.442695
  %v8759 = vpow.pop %v8758
  %v8760 = vmul.f32 %v8754, 1.442695
  %v8761 = vpow.pop %v8760
  %v8762 = vmul.f32 %v8755, 1.442695
  %v8763 = vpow.pop %v8762
  %v8764 = vmul.f32 %v8756, 1.442695
  %v8765 = vpow.pop %v8764
  %v8766 = vmul.f32 %v8757, 1.442695
  %v8767 = vpow.pop %v8766
  %v8768 = vadd.f32 %v8759, 1.0
  %v8769 = vadd.f32 %v8761, 1.0
  %v8770 = vadd.f32 %v8763, 1.0
  %v8771 = vadd.f32 %v8765, 1.0
  %v8772 = vadd.f32 %v8767, 1.0
  %v8773 = vrcp.pop %v8768
  %v8774 = vmul.f32 %v8768, %v8773
  %v8775 = vsub.f32 1.0, %v8774
  %v8776 = vmul.f32 %v8773, %v8775
  %v8777 = vadd.f32 %v8773, %v8776
  %vm8778 = vweird.f32 %v8768
  %vm8779 = vweird.f32 %v8773
  %vm8780 = vmor %vm8778, %vm8779
  %v8781 = vsel %vm8780, %v8773, %v8777
  %v8782 = vand.u32 2147483647, %v8768
  %vm8783 = vcmp.eq.f32.partialorder %v8782, 8.507059e+37
  %v8784 = vand.u32 %v8768, 2147483648
  %v8785 = vor.u32 1.1754944e-38, %v8784
  %v8786 = vsel %vm8783, %v8785, %v8781
  %v8787 = vmul.f32 1.0, %v8786
  %v8788 = vrcp.pop %v8769
  %v8789 = vmul.f32 %v8769, %v8788
  %v8790 = vsub.f32 1.0, %v8789
  %v8791 = vmul.f32 %v8788, %v8790
  %v8792 = vadd.f32 %v8788, %v8791
  %vm8793 = vweird.f32 %v8769
  %vm8794 = vweird.f32 %v8788
  %vm8795 = vmor %vm8793, %vm8794
  %v8796 = vsel %vm8795, %v8788, %v8792
  %v8797 = vand.u32 2147483647, %v8769
  %vm8798 = vcmp.eq.f32.partialorder %v8797, 8.507059e+37
  %v8799 = vand.u32 %v8769, 2147483648
  %v8800 = vor.u32 1.1754944e-38, %v8799
  %v8801 = vsel %vm8798, %v8800, %v8796
  %v8802 = vmul.f32 1.0, %v8801
  %v8803 = vrcp.pop %v8770
  %v8804 = vmul.f32 %v8770, %v8803
  %v8805 = vsub.f32 1.0, %v8804
  %v8806 = vmul.f32 %v8803, %v8805
  %v8807 = vadd.f32 %v8803, %v8806
  %vm8808 = vweird.f32 %v8770
  %vm8809 = vweird.f32 %v8803
  %vm8810 = vmor %vm8808, %vm8809
  %v8811 = vsel %vm8810, %v8803, %v8807
  %v8812 = vand.u32 2147483647, %v8770
  %vm8813 = vcmp.eq.f32.partialorder %v8812, 8.507059e+37
  %v8814 = vand.u32 %v8770, 2147483648
  %v8815 = vor.u32 1.1754944e-38, %v8814
  %v8816 = vsel %vm8813, %v8815, %v8811
  %v8817 = vmul.f32 1.0, %v8816
  %v8818 = vrcp.pop %v8771
  %v8819 = vmul.f32 %v8771, %v8818
  %v8820 = vsub.f32 1.0, %v8819
  %v8821 = vmul.f32 %v8818, %v8820
  %v8822 = vadd.f32 %v8818, %v8821
  %vm8823 = vweird.f32 %v8771
  %vm8824 = vweird.f32 %v8818
  %vm8825 = vmor %vm8823, %vm8824
  %v8826 = vsel %vm8825, %v8818, %v8822
  %v8827 = vand.u32 2147483647, %v8771
  %vm8828 = vcmp.eq.f32.partialorder %v8827, 8.507059e+37
  %v8829 = vand.u32 %v8771, 2147483648
  %v8830 = vor.u32 1.1754944e-38, %v8829
  %v8831 = vsel %vm8828, %v8830, %v8826
  %v8832 = vmul.f32 1.0, %v8831
  %v8833 = vrcp.pop %v8772
  %v8834 = vmul.f32 %v8772, %v8833
  %v8835 = vsub.f32 1.0, %v8834
  %v8836 = vmul.f32 %v8833, %v8835
  %v8837 = vadd.f32 %v8833, %v8836
  %vm8838 = vweird.f32 %v8772
  %vm8839 = vweird.f32 %v8833
  %vm8840 = vmor %vm8838, %vm8839
  %v8841 = vsel %vm8840, %v8833, %v8837
  %v8842 = vand.u32 2147483647, %v8772
  %vm8843 = vcmp.eq.f32.partialorder %v8842, 8.507059e+37
  %v8844 = vand.u32 %v8772, 2147483648
  %v8845 = vor.u32 1.1754944e-38, %v8844
  %v8846 = vsel %vm8843, %v8845, %v8841
  %v8847 = vmul.f32 1.0, %v8846
  %v8848 = vmul.f32 %v8595, %v8341
  %v8849 = vmul.f32 %v8610, %v8342
  %v8850 = vmul.f32 %v8625, %v8343
  %v8851 = vmul.f32 %v8640, %v8344
  %v8852 = vmul.f32 %v8655, %v8345
  %v8853 = vmul.f32 %v8454, %v8702
  %v8854 = vmul.f32 %v8469, %v8703
  %v8855 = vmul.f32 %v8484, %v8704
  %v8856 = vmul.f32 %v8499, %v8705
  %v8857 = vmul.f32 %v8514, %v8706
  %v8858 = vadd.f32 %v8848, %v8853
  %v8859 = vadd.f32 %v8849, %v8854
  %v8860 = vadd.f32 %v8850, %v8855
  %v8861 = vadd.f32 %v8851, %v8856
  %v8862 = vadd.f32 %v8852, %v8857
  %v8863 = vtanh.pop %v8858
  %v8864 = vtanh.pop %v8859
  %v8865 = vtanh.pop %v8860
  %v8866 = vtanh.pop %v8861
  %v8867 = vtanh.pop %v8862
  %v8868 = vmul.f32 %v8787, %v8863
  %v8869 = vmul.f32 %v8802, %v8864
  %v8870 = vmul.f32 %v8817, %v8865
  %v8871 = vmul.f32 %v8832, %v8866
  %v8872 = vmul.f32 %v8847, %v8867
  %8878 = vst [vmem:[#allocation1] ss:$9 sm:$0xff] %v8868
  %s8879 = scalar_lea.vmem [#allocation1], 1
  %8880 = vst [vmem:[%s8879] ss:$9 sm:$0xff] %v8869
  %s8881 = scalar_lea.vmem [#allocation1], 2
  %8882 = vst [vmem:[%s8881] ss:$9 sm:$0xff] %v8870
  %s8883 = scalar_lea.vmem [#allocation1], 3
  %8884 = vst [vmem:[%s8883] ss:$9 sm:$0xff] %v8871
  %s8885 = scalar_lea.vmem [#allocation1], 4
  %8886 = vst [vmem:[%s8885] ss:$9 sm:$0xff] %v8872
  %v8887 = vld [vmem:[#allocation1] sm:$0xff]
  %s8889 = scalar_lea.vmem [#allocation2], 72
  %8890 = vst.msk [vmem:[%s8889] sm:$0x1f] %vm4236, %v8887
  %8891 = vst [vmem:[#allocation1] ss:$9 sm:$0xff] %v8868
  %s8892 = scalar_lea.vmem [#allocation1], 1
  %8893 = vst [vmem:[%s8892] ss:$9 sm:$0xff] %v8869
  %s8894 = scalar_lea.vmem [#allocation1], 2
  %8895 = vst [vmem:[%s8894] ss:$9 sm:$0xff] %v8870
  %s8896 = scalar_lea.vmem [#allocation1], 3
  %8897 = vst [vmem:[%s8896] ss:$9 sm:$0xff] %v8871
  %s8898 = scalar_lea.vmem [#allocation1], 4
  %8899 = vst [vmem:[%s8898] ss:$9 sm:$0xff] %v8872
  %v8900 = vld [vmem:[#allocation1] sm:$0xff]
  %v8901 = vsel %vm1324, %v8900, 0
  %8903 = vmatpush.msra.mxu0 0.0
  %8904 = vmatpush.msra.mxu0 0.0
  %8905 = vmatpush.msra.mxu0 0.0
  %8906 = vmatpush.msra.mxu0 0.0
  %8907 = vmatpush.msra.mxu0 0.0
  %8908 = vmatpush.msra.mxu0 0.0
  %8909 = vmatpush.msra.mxu0 0.0
  %8910 = vmatpush.msra.mxu0 0.0
  %8911 = vmatpush.msra.mxu0 0.0
  %8912 = vmatpush.msra.mxu0 0.0
  %8913 = vmatpush.msra.mxu0 0.0
  %8914 = vmatpush.msra.mxu0 0.0
  %8915 = vmatpush.msra.mxu0 0.0
  %8916 = vmatpush.msra.mxu0 0.0
  %8917 = vmatpush.msra.mxu0 0.0
  %8918 = vmatpush.msra.mxu0 %v3748
  %8919 = vmatmul.f32.gmra.mxu0 %v8901
  %v8920 = vpop.f32.mrf.mxu0
  %v8921 = vadd.f32 0.0, %v8920
  %8922 = vdwg.mxu0
  %v8924 = vrot.slane %v8921, 1
  %v8925 = vrot.slane %v8921, 2
  %v8926 = vrot.slane %v8921, 3
  %v8927 = vrot.slane %v8921, 4
  %v8932 = vadd.f32 %v2781, %v8921
  %v8933 = vadd.f32 %v2782, %v8924
  %v8934 = vadd.f32 %v2783, %v8925
  %v8935 = vadd.f32 %v2784, %v8926
  %v8936 = vadd.f32 %v2785, %v8927
  %v8937 = vxor.u32 %v8932, 2147483648
  %v8938 = vxor.u32 %v8933, 2147483648
  %v8939 = vxor.u32 %v8934, 2147483648
  %v8940 = vxor.u32 %v8935, 2147483648
  %v8941 = vxor.u32 %v8936, 2147483648
  %v8942 = vmul.f32 %v8937, 1.442695
  %v8943 = vpow.pop %v8942
  %v8944 = vmul.f32 %v8938, 1.442695
  %v8945 = vpow.pop %v8944
  %v8946 = vmul.f32 %v8939, 1.442695
  %v8947 = vpow.pop %v8946
  %v8948 = vmul.f32 %v8940, 1.442695
  %v8949 = vpow.pop %v8948
  %v8950 = vmul.f32 %v8941, 1.442695
  %v8951 = vpow.pop %v8950
  %v8952 = vadd.f32 %v8943, 1.0
  %v8953 = vadd.f32 %v8945, 1.0
  %v8954 = vadd.f32 %v8947, 1.0
  %v8955 = vadd.f32 %v8949, 1.0
  %v8956 = vadd.f32 %v8951, 1.0
  %v8957 = vrcp.pop %v8952
  %v8958 = vmul.f32 %v8952, %v8957
  %v8959 = vsub.f32 1.0, %v8958
  %v8960 = vmul.f32 %v8957, %v8959
  %v8961 = vadd.f32 %v8957, %v8960
  %vm8962 = vweird.f32 %v8952
  %vm8963 = vweird.f32 %v8957
  %vm8964 = vmor %vm8962, %vm8963
  %v8965 = vsel %vm8964, %v8957, %v8961
  %v8966 = vand.u32 2147483647, %v8952
  %vm8967 = vcmp.eq.f32.partialorder %v8966, 8.507059e+37
  %v8968 = vand.u32 %v8952, 2147483648
  %v8969 = vor.u32 1.1754944e-38, %v8968
  %v8970 = vsel %vm8967, %v8969, %v8965
  %v8971 = vmul.f32 1.0, %v8970
  %v8972 = vrcp.pop %v8953
  %v8973 = vmul.f32 %v8953, %v8972
  %v8974 = vsub.f32 1.0, %v8973
  %v8975 = vmul.f32 %v8972, %v8974
  %v8976 = vadd.f32 %v8972, %v8975
  %vm8977 = vweird.f32 %v8953
  %vm8978 = vweird.f32 %v8972
  %vm8979 = vmor %vm8977, %vm8978
  %v8980 = vsel %vm8979, %v8972, %v8976
  %v8981 = vand.u32 2147483647, %v8953
  %vm8982 = vcmp.eq.f32.partialorder %v8981, 8.507059e+37
  %v8983 = vand.u32 %v8953, 2147483648
  %v8984 = vor.u32 1.1754944e-38, %v8983
  %v8985 = vsel %vm8982, %v8984, %v8980
  %v8986 = vmul.f32 1.0, %v8985
  %v8987 = vrcp.pop %v8954
  %v8988 = vmul.f32 %v8954, %v8987
  %v8989 = vsub.f32 1.0, %v8988
  %v8990 = vmul.f32 %v8987, %v8989
  %v8991 = vadd.f32 %v8987, %v8990
  %vm8992 = vweird.f32 %v8954
  %vm8993 = vweird.f32 %v8987
  %vm8994 = vmor %vm8992, %vm8993
  %v8995 = vsel %vm8994, %v8987, %v8991
  %v8996 = vand.u32 2147483647, %v8954
  %vm8997 = vcmp.eq.f32.partialorder %v8996, 8.507059e+37
  %v8998 = vand.u32 %v8954, 2147483648
  %v8999 = vor.u32 1.1754944e-38, %v8998
  %v9000 = vsel %vm8997, %v8999, %v8995
  %v9001 = vmul.f32 1.0, %v9000
  %v9002 = vrcp.pop %v8955
  %v9003 = vmul.f32 %v8955, %v9002
  %v9004 = vsub.f32 1.0, %v9003
  %v9005 = vmul.f32 %v9002, %v9004
  %v9006 = vadd.f32 %v9002, %v9005
  %vm9007 = vweird.f32 %v8955
  %vm9008 = vweird.f32 %v9002
  %vm9009 = vmor %vm9007, %vm9008
  %v9010 = vsel %vm9009, %v9002, %v9006
  %v9011 = vand.u32 2147483647, %v8955
  %vm9012 = vcmp.eq.f32.partialorder %v9011, 8.507059e+37
  %v9013 = vand.u32 %v8955, 2147483648
  %v9014 = vor.u32 1.1754944e-38, %v9013
  %v9015 = vsel %vm9012, %v9014, %v9010
  %v9016 = vmul.f32 1.0, %v9015
  %v9017 = vrcp.pop %v8956
  %v9018 = vmul.f32 %v8956, %v9017
  %v9019 = vsub.f32 1.0, %v9018
  %v9020 = vmul.f32 %v9017, %v9019
  %v9021 = vadd.f32 %v9017, %v9020
  %vm9022 = vweird.f32 %v8956
  %vm9023 = vweird.f32 %v9017
  %vm9024 = vmor %vm9022, %vm9023
  %v9025 = vsel %vm9024, %v9017, %v9021
  %v9026 = vand.u32 2147483647, %v8956
  %vm9027 = vcmp.eq.f32.partialorder %v9026, 8.507059e+37
  %v9028 = vand.u32 %v8956, 2147483648
  %v9029 = vor.u32 1.1754944e-38, %v9028
  %v9030 = vsel %vm9027, %v9029, %v9025
  %v9031 = vmul.f32 1.0, %v9030
  %9032 = vst [vmem:[#allocation1] ss:$9 sm:$0xff] %v8868
  %s9033 = scalar_lea.vmem [#allocation1], 1
  %9034 = vst [vmem:[%s9033] ss:$9 sm:$0xff] %v8869
  %s9035 = scalar_lea.vmem [#allocation1], 2
  %9036 = vst [vmem:[%s9035] ss:$9 sm:$0xff] %v8870
  %s9037 = scalar_lea.vmem [#allocation1], 3
  %9038 = vst [vmem:[%s9037] ss:$9 sm:$0xff] %v8871
  %s9039 = scalar_lea.vmem [#allocation1], 4
  %9040 = vst [vmem:[%s9039] ss:$9 sm:$0xff] %v8872
  %v9041 = vld [vmem:[#allocation1] sm:$0xff]
  %v9042 = vsel %vm1324, %v9041, 0
  %9044 = vmatpush.msra.mxu0 0.0
  %9045 = vmatpush.msra.mxu0 0.0
  %9046 = vmatpush.msra.mxu0 0.0
  %9047 = vmatpush.msra.mxu0 0.0
  %9048 = vmatpush.msra.mxu0 0.0
  %9049 = vmatpush.msra.mxu0 0.0
  %9050 = vmatpush.msra.mxu0 0.0
  %9051 = vmatpush.msra.mxu0 0.0
  %9052 = vmatpush.msra.mxu0 0.0
  %9053 = vmatpush.msra.mxu0 0.0
  %9054 = vmatpush.msra.mxu0 0.0
  %9055 = vmatpush.msra.mxu0 0.0
  %9056 = vmatpush.msra.mxu0 0.0
  %9057 = vmatpush.msra.mxu0 0.0
  %9058 = vmatpush.msra.mxu0 0.0
  %9059 = vmatpush.msra.mxu0 %v3750
  %9060 = vmatmul.f32.gmra.mxu0 %v9042
  %v9061 = vpop.f32.mrf.mxu0
  %v9062 = vadd.f32 0.0, %v9061
  %9063 = vdwg.mxu0
  %v9065 = vrot.slane %v9062, 1
  %v9066 = vrot.slane %v9062, 2
  %v9067 = vrot.slane %v9062, 3
  %v9068 = vrot.slane %v9062, 4
  %v9073 = vadd.f32 %v3100, %v9062
  %v9074 = vadd.f32 %v3101, %v9065
  %v9075 = vadd.f32 %v3102, %v9066
  %v9076 = vadd.f32 %v3103, %v9067
  %v9077 = vadd.f32 %v3104, %v9068
  %v9078 = vxor.u32 %v9073, 2147483648
  %v9079 = vxor.u32 %v9074, 2147483648
  %v9080 = vxor.u32 %v9075, 2147483648
  %v9081 = vxor.u32 %v9076, 2147483648
  %v9082 = vxor.u32 %v9077, 2147483648
  %v9083 = vmul.f32 %v9078, 1.442695
  %v9084 = vpow.pop %v9083
  %v9085 = vmul.f32 %v9079, 1.442695
  %v9086 = vpow.pop %v9085
  %v9087 = vmul.f32 %v9080, 1.442695
  %v9088 = vpow.pop %v9087
  %v9089 = vmul.f32 %v9081, 1.442695
  %v9090 = vpow.pop %v9089
  %v9091 = vmul.f32 %v9082, 1.442695
  %v9092 = vpow.pop %v9091
  %v9093 = vadd.f32 %v9084, 1.0
  %v9094 = vadd.f32 %v9086, 1.0
  %v9095 = vadd.f32 %v9088, 1.0
  %v9096 = vadd.f32 %v9090, 1.0
  %v9097 = vadd.f32 %v9092, 1.0
  %v9098 = vrcp.pop %v9093
  %v9099 = vmul.f32 %v9093, %v9098
  %v9100 = vsub.f32 1.0, %v9099
  %v9101 = vmul.f32 %v9098, %v9100
  %v9102 = vadd.f32 %v9098, %v9101
  %vm9103 = vweird.f32 %v9093
  %vm9104 = vweird.f32 %v9098
  %vm9105 = vmor %vm9103, %vm9104
  %v9106 = vsel %vm9105, %v9098, %v9102
  %v9107 = vand.u32 2147483647, %v9093
  %vm9108 = vcmp.eq.f32.partialorder %v9107, 8.507059e+37
  %v9109 = vand.u32 %v9093, 2147483648
  %v9110 = vor.u32 1.1754944e-38, %v9109
  %v9111 = vsel %vm9108, %v9110, %v9106
  %v9112 = vmul.f32 1.0, %v9111
  %v9113 = vrcp.pop %v9094
  %v9114 = vmul.f32 %v9094, %v9113
  %v9115 = vsub.f32 1.0, %v9114
  %v9116 = vmul.f32 %v9113, %v9115
  %v9117 = vadd.f32 %v9113, %v9116
  %vm9118 = vweird.f32 %v9094
  %vm9119 = vweird.f32 %v9113
  %vm9120 = vmor %vm9118, %vm9119
  %v9121 = vsel %vm9120, %v9113, %v9117
  %v9122 = vand.u32 2147483647, %v9094
  %vm9123 = vcmp.eq.f32.partialorder %v9122, 8.507059e+37
  %v9124 = vand.u32 %v9094, 2147483648
  %v9125 = vor.u32 1.1754944e-38, %v9124
  %v9126 = vsel %vm9123, %v9125, %v9121
  %v9127 = vmul.f32 1.0, %v9126
  %v9128 = vrcp.pop %v9095
  %v9129 = vmul.f32 %v9095, %v9128
  %v9130 = vsub.f32 1.0, %v9129
  %v9131 = vmul.f32 %v9128, %v9130
  %v9132 = vadd.f32 %v9128, %v9131
  %vm9133 = vweird.f32 %v9095
  %vm9134 = vweird.f32 %v9128
  %vm9135 = vmor %vm9133, %vm9134
  %v9136 = vsel %vm9135, %v9128, %v9132
  %v9137 = vand.u32 2147483647, %v9095
  %vm9138 = vcmp.eq.f32.partialorder %v9137, 8.507059e+37
  %v9139 = vand.u32 %v9095, 2147483648
  %v9140 = vor.u32 1.1754944e-38, %v9139
  %v9141 = vsel %vm9138, %v9140, %v9136
  %v9142 = vmul.f32 1.0, %v9141
  %v9143 = vrcp.pop %v9096
  %v9144 = vmul.f32 %v9096, %v9143
  %v9145 = vsub.f32 1.0, %v9144
  %v9146 = vmul.f32 %v9143, %v9145
  %v9147 = vadd.f32 %v9143, %v9146
  %vm9148 = vweird.f32 %v9096
  %vm9149 = vweird.f32 %v9143
  %vm9150 = vmor %vm9148, %vm9149
  %v9151 = vsel %vm9150, %v9143, %v9147
  %v9152 = vand.u32 2147483647, %v9096
  %vm9153 = vcmp.eq.f32.partialorder %v9152, 8.507059e+37
  %v9154 = vand.u32 %v9096, 2147483648
  %v9155 = vor.u32 1.1754944e-38, %v9154
  %v9156 = vsel %vm9153, %v9155, %v9151
  %v9157 = vmul.f32 1.0, %v9156
  %v9158 = vrcp.pop %v9097
  %v9159 = vmul.f32 %v9097, %v9158
  %v9160 = vsub.f32 1.0, %v9159
  %v9161 = vmul.f32 %v9158, %v9160
  %v9162 = vadd.f32 %v9158, %v9161
  %vm9163 = vweird.f32 %v9097
  %vm9164 = vweird.f32 %v9158
  %vm9165 = vmor %vm9163, %vm9164
  %v9166 = vsel %vm9165, %v9158, %v9162
  %v9167 = vand.u32 2147483647, %v9097
  %vm9168 = vcmp.eq.f32.partialorder %v9167, 8.507059e+37
  %v9169 = vand.u32 %v9097, 2147483648
  %v9170 = vor.u32 1.1754944e-38, %v9169
  %v9171 = vsel %vm9168, %v9170, %v9166
  %v9172 = vmul.f32 1.0, %v9171
  %9173 = vst [vmem:[#allocation1] ss:$9 sm:$0xff] %v8868
  %s9174 = scalar_lea.vmem [#allocation1], 1
  %9175 = vst [vmem:[%s9174] ss:$9 sm:$0xff] %v8869
  %s9176 = scalar_lea.vmem [#allocation1], 2
  %9177 = vst [vmem:[%s9176] ss:$9 sm:$0xff] %v8870
  %s9178 = scalar_lea.vmem [#allocation1], 3
  %9179 = vst [vmem:[%s9178] ss:$9 sm:$0xff] %v8871
  %s9180 = scalar_lea.vmem [#allocation1], 4
  %9181 = vst [vmem:[%s9180] ss:$9 sm:$0xff] %v8872
  %v9182 = vld [vmem:[#allocation1] sm:$0xff]
  %v9183 = vsel %vm1324, %v9182, 0
  %9185 = vmatpush.msra.mxu0 0.0
  %9186 = vmatpush.msra.mxu0 0.0
  %9187 = vmatpush.msra.mxu0 0.0
  %9188 = vmatpush.msra.mxu0 0.0
  %9189 = vmatpush.msra.mxu0 0.0
  %9190 = vmatpush.msra.mxu0 0.0
  %9191 = vmatpush.msra.mxu0 0.0
  %9192 = vmatpush.msra.mxu0 0.0
  %9193 = vmatpush.msra.mxu0 0.0
  %9194 = vmatpush.msra.mxu0 0.0
  %9195 = vmatpush.msra.mxu0 0.0
  %9196 = vmatpush.msra.mxu0 0.0
  %9197 = vmatpush.msra.mxu0 0.0
  %9198 = vmatpush.msra.mxu0 0.0
  %9199 = vmatpush.msra.mxu0 0.0
  %9200 = vmatpush.msra.mxu0 %v3752
  %9201 = vmatmul.f32.gmra.mxu0 %v9183
  %v9202 = vpop.f32.mrf.mxu0
  %v9203 = vadd.f32 0.0, %v9202
  %9204 = vdwg.mxu0
  %v9206 = vrot.slane %v9203, 1
  %v9207 = vrot.slane %v9203, 2
  %v9208 = vrot.slane %v9203, 3
  %v9209 = vrot.slane %v9203, 4
  %v9214 = vadd.f32 %v3419, %v9203
  %v9215 = vadd.f32 %v3420, %v9206
  %v9216 = vadd.f32 %v3421, %v9207
  %v9217 = vadd.f32 %v3422, %v9208
  %v9218 = vadd.f32 %v3423, %v9209
  %v9219 = vtanh.pop %v9214
  %v9220 = vtanh.pop %v9215
  %v9221 = vtanh.pop %v9216
  %v9222 = vtanh.pop %v9217
  %v9223 = vtanh.pop %v9218
  %9224 = vst [vmem:[#allocation1] ss:$9 sm:$0xff] %v8868
  %s9225 = scalar_lea.vmem [#allocation1], 1
  %9226 = vst [vmem:[%s9225] ss:$9 sm:$0xff] %v8869
  %s9227 = scalar_lea.vmem [#allocation1], 2
  %9228 = vst [vmem:[%s9227] ss:$9 sm:$0xff] %v8870
  %s9229 = scalar_lea.vmem [#allocation1], 3
  %9230 = vst [vmem:[%s9229] ss:$9 sm:$0xff] %v8871
  %s9231 = scalar_lea.vmem [#allocation1], 4
  %9232 = vst [vmem:[%s9231] ss:$9 sm:$0xff] %v8872
  %v9233 = vld [vmem:[#allocation1] sm:$0xff]
  %v9234 = vsel %vm1324, %v9233, 0
  %9236 = vmatpush.msra.mxu0 0.0
  %9237 = vmatpush.msra.mxu0 0.0
  %9238 = vmatpush.msra.mxu0 0.0
  %9239 = vmatpush.msra.mxu0 0.0
  %9240 = vmatpush.msra.mxu0 0.0
  %9241 = vmatpush.msra.mxu0 0.0
  %9242 = vmatpush.msra.mxu0 0.0
  %9243 = vmatpush.msra.mxu0 0.0
  %9244 = vmatpush.msra.mxu0 0.0
  %9245 = vmatpush.msra.mxu0 0.0
  %9246 = vmatpush.msra.mxu0 0.0
  %9247 = vmatpush.msra.mxu0 0.0
  %9248 = vmatpush.msra.mxu0 0.0
  %9249 = vmatpush.msra.mxu0 0.0
  %9250 = vmatpush.msra.mxu0 0.0
  %9251 = vmatpush.msra.mxu0 %v3754
  %9252 = vmatmul.f32.gmra.mxu0 %v9234
  %v9253 = vpop.f32.mrf.mxu0
  %v9254 = vadd.f32 0.0, %v9253
  %9255 = vdwg.mxu0
  %v9257 = vrot.slane %v9254, 1
  %v9258 = vrot.slane %v9254, 2
  %v9259 = vrot.slane %v9254, 3
  %v9260 = vrot.slane %v9254, 4
  %v9265 = vadd.f32 %v3738, %v9254
  %v9266 = vadd.f32 %v3739, %v9257
  %v9267 = vadd.f32 %v3740, %v9258
  %v9268 = vadd.f32 %v3741, %v9259
  %v9269 = vadd.f32 %v3742, %v9260
  %v9270 = vxor.u32 %v9265, 2147483648
  %v9271 = vxor.u32 %v9266, 2147483648
  %v9272 = vxor.u32 %v9267, 2147483648
  %v9273 = vxor.u32 %v9268, 2147483648
  %v9274 = vxor.u32 %v9269, 2147483648
  %v9275 = vmul.f32 %v9270, 1.442695
  %v9276 = vpow.pop %v9275
  %v9277 = vmul.f32 %v9271, 1.442695
  %v9278 = vpow.pop %v9277
  %v9279 = vmul.f32 %v9272, 1.442695
  %v9280 = vpow.pop %v9279
  %v9281 = vmul.f32 %v9273, 1.442695
  %v9282 = vpow.pop %v9281
  %v9283 = vmul.f32 %v9274, 1.442695
  %v9284 = vpow.pop %v9283
  %v9285 = vadd.f32 %v9276, 1.0
  %v9286 = vadd.f32 %v9278, 1.0
  %v9287 = vadd.f32 %v9280, 1.0
  %v9288 = vadd.f32 %v9282, 1.0
  %v9289 = vadd.f32 %v9284, 1.0
  %v9290 = vrcp.pop %v9285
  %v9291 = vmul.f32 %v9285, %v9290
  %v9292 = vsub.f32 1.0, %v9291
  %v9293 = vmul.f32 %v9290, %v9292
  %v9294 = vadd.f32 %v9290, %v9293
  %vm9295 = vweird.f32 %v9285
  %vm9296 = vweird.f32 %v9290
  %vm9297 = vmor %vm9295, %vm9296
  %v9298 = vsel %vm9297, %v9290, %v9294
  %v9299 = vand.u32 2147483647, %v9285
  %vm9300 = vcmp.eq.f32.partialorder %v9299, 8.507059e+37
  %v9301 = vand.u32 %v9285, 2147483648
  %v9302 = vor.u32 1.1754944e-38, %v9301
  %v9303 = vsel %vm9300, %v9302, %v9298
  %v9304 = vmul.f32 1.0, %v9303
  %v9305 = vrcp.pop %v9286
  %v9306 = vmul.f32 %v9286, %v9305
  %v9307 = vsub.f32 1.0, %v9306
  %v9308 = vmul.f32 %v9305, %v9307
  %v9309 = vadd.f32 %v9305, %v9308
  %vm9310 = vweird.f32 %v9286
  %vm9311 = vweird.f32 %v9305
  %vm9312 = vmor %vm9310, %vm9311
  %v9313 = vsel %vm9312, %v9305, %v9309
  %v9314 = vand.u32 2147483647, %v9286
  %vm9315 = vcmp.eq.f32.partialorder %v9314, 8.507059e+37
  %v9316 = vand.u32 %v9286, 2147483648
  %v9317 = vor.u32 1.1754944e-38, %v9316
  %v9318 = vsel %vm9315, %v9317, %v9313
  %v9319 = vmul.f32 1.0, %v9318
  %v9320 = vrcp.pop %v9287
  %v9321 = vmul.f32 %v9287, %v9320
  %v9322 = vsub.f32 1.0, %v9321
  %v9323 = vmul.f32 %v9320, %v9322
  %v9324 = vadd.f32 %v9320, %v9323
  %vm9325 = vweird.f32 %v9287
  %vm9326 = vweird.f32 %v9320
  %vm9327 = vmor %vm9325, %vm9326
  %v9328 = vsel %vm9327, %v9320, %v9324
  %v9329 = vand.u32 2147483647, %v9287
  %vm9330 = vcmp.eq.f32.partialorder %v9329, 8.507059e+37
  %v9331 = vand.u32 %v9287, 2147483648
  %v9332 = vor.u32 1.1754944e-38, %v9331
  %v9333 = vsel %vm9330, %v9332, %v9328
  %v9334 = vmul.f32 1.0, %v9333
  %v9335 = vrcp.pop %v9288
  %v9336 = vmul.f32 %v9288, %v9335
  %v9337 = vsub.f32 1.0, %v9336
  %v9338 = vmul.f32 %v9335, %v9337
  %v9339 = vadd.f32 %v9335, %v9338
  %vm9340 = vweird.f32 %v9288
  %vm9341 = vweird.f32 %v9335
  %vm9342 = vmor %vm9340, %vm9341
  %v9343 = vsel %vm9342, %v9335, %v9339
  %v9344 = vand.u32 2147483647, %v9288
  %vm9345 = vcmp.eq.f32.partialorder %v9344, 8.507059e+37
  %v9346 = vand.u32 %v9288, 2147483648
  %v9347 = vor.u32 1.1754944e-38, %v9346
  %v9348 = vsel %vm9345, %v9347, %v9343
  %v9349 = vmul.f32 1.0, %v9348
  %v9350 = vrcp.pop %v9289
  %v9351 = vmul.f32 %v9289, %v9350
  %v9352 = vsub.f32 1.0, %v9351
  %v9353 = vmul.f32 %v9350, %v9352
  %v9354 = vadd.f32 %v9350, %v9353
  %vm9355 = vweird.f32 %v9289
  %vm9356 = vweird.f32 %v9350
  %vm9357 = vmor %vm9355, %vm9356
  %v9358 = vsel %vm9357, %v9350, %v9354
  %v9359 = vand.u32 2147483647, %v9289
  %vm9360 = vcmp.eq.f32.partialorder %v9359, 8.507059e+37
  %v9361 = vand.u32 %v9289, 2147483648
  %v9362 = vor.u32 1.1754944e-38, %v9361
  %v9363 = vsel %vm9360, %v9362, %v9358
  %v9364 = vmul.f32 1.0, %v9363
  %v9365 = vmul.f32 %v9112, %v8858
  %v9366 = vmul.f32 %v9127, %v8859
  %v9367 = vmul.f32 %v9142, %v8860
  %v9368 = vmul.f32 %v9157, %v8861
  %v9369 = vmul.f32 %v9172, %v8862
  %v9370 = vmul.f32 %v8971, %v9219
  %v9371 = vmul.f32 %v8986, %v9220
  %v9372 = vmul.f32 %v9001, %v9221
  %v9373 = vmul.f32 %v9016, %v9222
  %v9374 = vmul.f32 %v9031, %v9223
  %v9375 = vadd.f32 %v9365, %v9370
  %v9376 = vadd.f32 %v9366, %v9371
  %v9377 = vadd.f32 %v9367, %v9372
  %v9378 = vadd.f32 %v9368, %v9373
  %v9379 = vadd.f32 %v9369, %v9374
  %v9380 = vtanh.pop %v9375
  %v9381 = vtanh.pop %v9376
  %v9382 = vtanh.pop %v9377
  %v9383 = vtanh.pop %v9378
  %v9384 = vtanh.pop %v9379
  %v9385 = vmul.f32 %v9304, %v9380
  %v9386 = vmul.f32 %v9319, %v9381
  %v9387 = vmul.f32 %v9334, %v9382
  %v9388 = vmul.f32 %v9349, %v9383
  %v9389 = vmul.f32 %v9364, %v9384
  %9395 = vst [vmem:[#allocation1] ss:$9 sm:$0xff] %v9385
  %s9396 = scalar_lea.vmem [#allocation1], 1
  %9397 = vst [vmem:[%s9396] ss:$9 sm:$0xff] %v9386
  %s9398 = scalar_lea.vmem [#allocation1], 2
  %9399 = vst [vmem:[%s9398] ss:$9 sm:$0xff] %v9387
  %s9400 = scalar_lea.vmem [#allocation1], 3
  %9401 = vst [vmem:[%s9400] ss:$9 sm:$0xff] %v9388
  %s9402 = scalar_lea.vmem [#allocation1], 4
  %9403 = vst [vmem:[%s9402] ss:$9 sm:$0xff] %v9389
  %v9404 = vld [vmem:[#allocation1] sm:$0xff]
  %s9406 = scalar_lea.vmem [#allocation2], 80
  %9407 = vst.msk [vmem:[%s9406] sm:$0x1f] %vm4236, %v9404
  %9408 = vst [vmem:[#allocation1] ss:$9 sm:$0xff] %v9385
  %s9409 = scalar_lea.vmem [#allocation1], 1
  %9410 = vst [vmem:[%s9409] ss:$9 sm:$0xff] %v9386
  %s9411 = scalar_lea.vmem [#allocation1], 2
  %9412 = vst [vmem:[%s9411] ss:$9 sm:$0xff] %v9387
  %s9413 = scalar_lea.vmem [#allocation1], 3
  %9414 = vst [vmem:[%s9413] ss:$9 sm:$0xff] %v9388
  %s9415 = scalar_lea.vmem [#allocation1], 4
  %9416 = vst [vmem:[%s9415] ss:$9 sm:$0xff] %v9389
  %v9417 = vld [vmem:[#allocation1] sm:$0xff]
  %v9418 = vsel %vm1324, %v9417, 0
  %9420 = vmatpush.msra.mxu0 0.0
  %9421 = vmatpush.msra.mxu0 0.0
  %9422 = vmatpush.msra.mxu0 0.0
  %9423 = vmatpush.msra.mxu0 0.0
  %9424 = vmatpush.msra.mxu0 0.0
  %9425 = vmatpush.msra.mxu0 0.0
  %9426 = vmatpush.msra.mxu0 0.0
  %9427 = vmatpush.msra.mxu0 0.0
  %9428 = vmatpush.msra.mxu0 0.0
  %9429 = vmatpush.msra.mxu0 0.0
  %9430 = vmatpush.msra.mxu0 0.0
  %9431 = vmatpush.msra.mxu0 0.0
  %9432 = vmatpush.msra.mxu0 0.0
  %9433 = vmatpush.msra.mxu0 0.0
  %9434 = vmatpush.msra.mxu0 0.0
  %9435 = vmatpush.msra.mxu0 %v3748
  %9436 = vmatmul.f32.gmra.mxu0 %v9418
  %v9437 = vpop.f32.mrf.mxu0
  %v9438 = vadd.f32 0.0, %v9437
  %9439 = vdwg.mxu0
  %v9441 = vrot.slane %v9438, 1
  %v9442 = vrot.slane %v9438, 2
  %v9443 = vrot.slane %v9438, 3
  %v9444 = vrot.slane %v9438, 4
  %v9449 = vadd.f32 %v2786, %v9438
  %v9450 = vadd.f32 %v2787, %v9441
  %v9451 = vadd.f32 %v2788, %v9442
  %v9452 = vadd.f32 %v2789, %v9443
  %v9453 = vadd.f32 %v2790, %v9444
  %v9454 = vxor.u32 %v9449, 2147483648
  %v9455 = vxor.u32 %v9450, 2147483648
  %v9456 = vxor.u32 %v9451, 2147483648
  %v9457 = vxor.u32 %v9452, 2147483648
  %v9458 = vxor.u32 %v9453, 2147483648
  %v9459 = vmul.f32 %v9454, 1.442695
  %v9460 = vpow.pop %v9459
  %v9461 = vmul.f32 %v9455, 1.442695
  %v9462 = vpow.pop %v9461
  %v9463 = vmul.f32 %v9456, 1.442695
  %v9464 = vpow.pop %v9463
  %v9465 = vmul.f32 %v9457, 1.442695
  %v9466 = vpow.pop %v9465
  %v9467 = vmul.f32 %v9458, 1.442695
  %v9468 = vpow.pop %v9467
  %v9469 = vadd.f32 %v9460, 1.0
  %v9470 = vadd.f32 %v9462, 1.0
  %v9471 = vadd.f32 %v9464, 1.0
  %v9472 = vadd.f32 %v9466, 1.0
  %v9473 = vadd.f32 %v9468, 1.0
  %v9474 = vrcp.pop %v9469
  %v9475 = vmul.f32 %v9469, %v9474
  %v9476 = vsub.f32 1.0, %v9475
  %v9477 = vmul.f32 %v9474, %v9476
  %v9478 = vadd.f32 %v9474, %v9477
  %vm9479 = vweird.f32 %v9469
  %vm9480 = vweird.f32 %v9474
  %vm9481 = vmor %vm9479, %vm9480
  %v9482 = vsel %vm9481, %v9474, %v9478
  %v9483 = vand.u32 2147483647, %v9469
  %vm9484 = vcmp.eq.f32.partialorder %v9483, 8.507059e+37
  %v9485 = vand.u32 %v9469, 2147483648
  %v9486 = vor.u32 1.1754944e-38, %v9485
  %v9487 = vsel %vm9484, %v9486, %v9482
  %v9488 = vmul.f32 1.0, %v9487
  %v9489 = vrcp.pop %v9470
  %v9490 = vmul.f32 %v9470, %v9489
  %v9491 = vsub.f32 1.0, %v9490
  %v9492 = vmul.f32 %v9489, %v9491
  %v9493 = vadd.f32 %v9489, %v9492
  %vm9494 = vweird.f32 %v9470
  %vm9495 = vweird.f32 %v9489
  %vm9496 = vmor %vm9494, %vm9495
  %v9497 = vsel %vm9496, %v9489, %v9493
  %v9498 = vand.u32 2147483647, %v9470
  %vm9499 = vcmp.eq.f32.partialorder %v9498, 8.507059e+37
  %v9500 = vand.u32 %v9470, 2147483648
  %v9501 = vor.u32 1.1754944e-38, %v9500
  %v9502 = vsel %vm9499, %v9501, %v9497
  %v9503 = vmul.f32 1.0, %v9502
  %v9504 = vrcp.pop %v9471
  %v9505 = vmul.f32 %v9471, %v9504
  %v9506 = vsub.f32 1.0, %v9505
  %v9507 = vmul.f32 %v9504, %v9506
  %v9508 = vadd.f32 %v9504, %v9507
  %vm9509 = vweird.f32 %v9471
  %vm9510 = vweird.f32 %v9504
  %vm9511 = vmor %vm9509, %vm9510
  %v9512 = vsel %vm9511, %v9504, %v9508
  %v9513 = vand.u32 2147483647, %v9471
  %vm9514 = vcmp.eq.f32.partialorder %v9513, 8.507059e+37
  %v9515 = vand.u32 %v9471, 2147483648
  %v9516 = vor.u32 1.1754944e-38, %v9515
  %v9517 = vsel %vm9514, %v9516, %v9512
  %v9518 = vmul.f32 1.0, %v9517
  %v9519 = vrcp.pop %v9472
  %v9520 = vmul.f32 %v9472, %v9519
  %v9521 = vsub.f32 1.0, %v9520
  %v9522 = vmul.f32 %v9519, %v9521
  %v9523 = vadd.f32 %v9519, %v9522
  %vm9524 = vweird.f32 %v9472
  %vm9525 = vweird.f32 %v9519
  %vm9526 = vmor %vm9524, %vm9525
  %v9527 = vsel %vm9526, %v9519, %v9523
  %v9528 = vand.u32 2147483647, %v9472
  %vm9529 = vcmp.eq.f32.partialorder %v9528, 8.507059e+37
  %v9530 = vand.u32 %v9472, 2147483648
  %v9531 = vor.u32 1.1754944e-38, %v9530
  %v9532 = vsel %vm9529, %v9531, %v9527
  %v9533 = vmul.f32 1.0, %v9532
  %v9534 = vrcp.pop %v9473
  %v9535 = vmul.f32 %v9473, %v9534
  %v9536 = vsub.f32 1.0, %v9535
  %v9537 = vmul.f32 %v9534, %v9536
  %v9538 = vadd.f32 %v9534, %v9537
  %vm9539 = vweird.f32 %v9473
  %vm9540 = vweird.f32 %v9534
  %vm9541 = vmor %vm9539, %vm9540
  %v9542 = vsel %vm9541, %v9534, %v9538
  %v9543 = vand.u32 2147483647, %v9473
  %vm9544 = vcmp.eq.f32.partialorder %v9543, 8.507059e+37
  %v9545 = vand.u32 %v9473, 2147483648
  %v9546 = vor.u32 1.1754944e-38, %v9545
  %v9547 = vsel %vm9544, %v9546, %v9542
  %v9548 = vmul.f32 1.0, %v9547
  %9549 = vst [vmem:[#allocation1] ss:$9 sm:$0xff] %v9385
  %s9550 = scalar_lea.vmem [#allocation1], 1
  %9551 = vst [vmem:[%s9550] ss:$9 sm:$0xff] %v9386
  %s9552 = scalar_lea.vmem [#allocation1], 2
  %9553 = vst [vmem:[%s9552] ss:$9 sm:$0xff] %v9387
  %s9554 = scalar_lea.vmem [#allocation1], 3
  %9555 = vst [vmem:[%s9554] ss:$9 sm:$0xff] %v9388
  %s9556 = scalar_lea.vmem [#allocation1], 4
  %9557 = vst [vmem:[%s9556] ss:$9 sm:$0xff] %v9389
  %v9558 = vld [vmem:[#allocation1] sm:$0xff]
  %v9559 = vsel %vm1324, %v9558, 0
  %9561 = vmatpush.msra.mxu0 0.0
  %9562 = vmatpush.msra.mxu0 0.0
  %9563 = vmatpush.msra.mxu0 0.0
  %9564 = vmatpush.msra.mxu0 0.0
  %9565 = vmatpush.msra.mxu0 0.0
  %9566 = vmatpush.msra.mxu0 0.0
  %9567 = vmatpush.msra.mxu0 0.0
  %9568 = vmatpush.msra.mxu0 0.0
  %9569 = vmatpush.msra.mxu0 0.0
  %9570 = vmatpush.msra.mxu0 0.0
  %9571 = vmatpush.msra.mxu0 0.0
  %9572 = vmatpush.msra.mxu0 0.0
  %9573 = vmatpush.msra.mxu0 0.0
  %9574 = vmatpush.msra.mxu0 0.0
  %9575 = vmatpush.msra.mxu0 0.0
  %9576 = vmatpush.msra.mxu0 %v3750
  %9577 = vmatmul.f32.gmra.mxu0 %v9559
  %v9578 = vpop.f32.mrf.mxu0
  %v9579 = vadd.f32 0.0, %v9578
  %9580 = vdwg.mxu0
  %v9582 = vrot.slane %v9579, 1
  %v9583 = vrot.slane %v9579, 2
  %v9584 = vrot.slane %v9579, 3
  %v9585 = vrot.slane %v9579, 4
  %v9590 = vadd.f32 %v3105, %v9579
  %v9591 = vadd.f32 %v3106, %v9582
  %v9592 = vadd.f32 %v3107, %v9583
  %v9593 = vadd.f32 %v3108, %v9584
  %v9594 = vadd.f32 %v3109, %v9585
  %v9595 = vxor.u32 %v9590, 2147483648
  %v9596 = vxor.u32 %v9591, 2147483648
  %v9597 = vxor.u32 %v9592, 2147483648
  %v9598 = vxor.u32 %v9593, 2147483648
  %v9599 = vxor.u32 %v9594, 2147483648
  %v9600 = vmul.f32 %v9595, 1.442695
  %v9601 = vpow.pop %v9600
  %v9602 = vmul.f32 %v9596, 1.442695
  %v9603 = vpow.pop %v9602
  %v9604 = vmul.f32 %v9597, 1.442695
  %v9605 = vpow.pop %v9604
  %v9606 = vmul.f32 %v9598, 1.442695
  %v9607 = vpow.pop %v9606
  %v9608 = vmul.f32 %v9599, 1.442695
  %v9609 = vpow.pop %v9608
  %v9610 = vadd.f32 %v9601, 1.0
  %v9611 = vadd.f32 %v9603, 1.0
  %v9612 = vadd.f32 %v9605, 1.0
  %v9613 = vadd.f32 %v9607, 1.0
  %v9614 = vadd.f32 %v9609, 1.0
  %v9615 = vrcp.pop %v9610
  %v9616 = vmul.f32 %v9610, %v9615
  %v9617 = vsub.f32 1.0, %v9616
  %v9618 = vmul.f32 %v9615, %v9617
  %v9619 = vadd.f32 %v9615, %v9618
  %vm9620 = vweird.f32 %v9610
  %vm9621 = vweird.f32 %v9615
  %vm9622 = vmor %vm9620, %vm9621
  %v9623 = vsel %vm9622, %v9615, %v9619
  %v9624 = vand.u32 2147483647, %v9610
  %vm9625 = vcmp.eq.f32.partialorder %v9624, 8.507059e+37
  %v9626 = vand.u32 %v9610, 2147483648
  %v9627 = vor.u32 1.1754944e-38, %v9626
  %v9628 = vsel %vm9625, %v9627, %v9623
  %v9629 = vmul.f32 1.0, %v9628
  %v9630 = vrcp.pop %v9611
  %v9631 = vmul.f32 %v9611, %v9630
  %v9632 = vsub.f32 1.0, %v9631
  %v9633 = vmul.f32 %v9630, %v9632
  %v9634 = vadd.f32 %v9630, %v9633
  %vm9635 = vweird.f32 %v9611
  %vm9636 = vweird.f32 %v9630
  %vm9637 = vmor %vm9635, %vm9636
  %v9638 = vsel %vm9637, %v9630, %v9634
  %v9639 = vand.u32 2147483647, %v9611
  %vm9640 = vcmp.eq.f32.partialorder %v9639, 8.507059e+37
  %v9641 = vand.u32 %v9611, 2147483648
  %v9642 = vor.u32 1.1754944e-38, %v9641
  %v9643 = vsel %vm9640, %v9642, %v9638
  %v9644 = vmul.f32 1.0, %v9643
  %v9645 = vrcp.pop %v9612
  %v9646 = vmul.f32 %v9612, %v9645
  %v9647 = vsub.f32 1.0, %v9646
  %v9648 = vmul.f32 %v9645, %v9647
  %v9649 = vadd.f32 %v9645, %v9648
  %vm9650 = vweird.f32 %v9612
  %vm9651 = vweird.f32 %v9645
  %vm9652 = vmor %vm9650, %vm9651
  %v9653 = vsel %vm9652, %v9645, %v9649
  %v9654 = vand.u32 2147483647, %v9612
  %vm9655 = vcmp.eq.f32.partialorder %v9654, 8.507059e+37
  %v9656 = vand.u32 %v9612, 2147483648
  %v9657 = vor.u32 1.1754944e-38, %v9656
  %v9658 = vsel %vm9655, %v9657, %v9653
  %v9659 = vmul.f32 1.0, %v9658
  %v9660 = vrcp.pop %v9613
  %v9661 = vmul.f32 %v9613, %v9660
  %v9662 = vsub.f32 1.0, %v9661
  %v9663 = vmul.f32 %v9660, %v9662
  %v9664 = vadd.f32 %v9660, %v9663
  %vm9665 = vweird.f32 %v9613
  %vm9666 = vweird.f32 %v9660
  %vm9667 = vmor %vm9665, %vm9666
  %v9668 = vsel %vm9667, %v9660, %v9664
  %v9669 = vand.u32 2147483647, %v9613
  %vm9670 = vcmp.eq.f32.partialorder %v9669, 8.507059e+37
  %v9671 = vand.u32 %v9613, 2147483648
  %v9672 = vor.u32 1.1754944e-38, %v9671
  %v9673 = vsel %vm9670, %v9672, %v9668
  %v9674 = vmul.f32 1.0, %v9673
  %v9675 = vrcp.pop %v9614
  %v9676 = vmul.f32 %v9614, %v9675
  %v9677 = vsub.f32 1.0, %v9676
  %v9678 = vmul.f32 %v9675, %v9677
  %v9679 = vadd.f32 %v9675, %v9678
  %vm9680 = vweird.f32 %v9614
  %vm9681 = vweird.f32 %v9675
  %vm9682 = vmor %vm9680, %vm9681
  %v9683 = vsel %vm9682, %v9675, %v9679
  %v9684 = vand.u32 2147483647, %v9614
  %vm9685 = vcmp.eq.f32.partialorder %v9684, 8.507059e+37
  %v9686 = vand.u32 %v9614, 2147483648
  %v9687 = vor.u32 1.1754944e-38, %v9686
  %v9688 = vsel %vm9685, %v9687, %v9683
  %v9689 = vmul.f32 1.0, %v9688
  %9690 = vst [vmem:[#allocation1] ss:$9 sm:$0xff] %v9385
  %s9691 = scalar_lea.vmem [#allocation1], 1
  %9692 = vst [vmem:[%s9691] ss:$9 sm:$0xff] %v9386
  %s9693 = scalar_lea.vmem [#allocation1], 2
  %9694 = vst [vmem:[%s9693] ss:$9 sm:$0xff] %v9387
  %s9695 = scalar_lea.vmem [#allocation1], 3
  %9696 = vst [vmem:[%s9695] ss:$9 sm:$0xff] %v9388
  %s9697 = scalar_lea.vmem [#allocation1], 4
  %9698 = vst [vmem:[%s9697] ss:$9 sm:$0xff] %v9389
  %v9699 = vld [vmem:[#allocation1] sm:$0xff]
  %v9700 = vsel %vm1324, %v9699, 0
  %9702 = vmatpush.msra.mxu0 0.0
  %9703 = vmatpush.msra.mxu0 0.0
  %9704 = vmatpush.msra.mxu0 0.0
  %9705 = vmatpush.msra.mxu0 0.0
  %9706 = vmatpush.msra.mxu0 0.0
  %9707 = vmatpush.msra.mxu0 0.0
  %9708 = vmatpush.msra.mxu0 0.0
  %9709 = vmatpush.msra.mxu0 0.0
  %9710 = vmatpush.msra.mxu0 0.0
  %9711 = vmatpush.msra.mxu0 0.0
  %9712 = vmatpush.msra.mxu0 0.0
  %9713 = vmatpush.msra.mxu0 0.0
  %9714 = vmatpush.msra.mxu0 0.0
  %9715 = vmatpush.msra.mxu0 0.0
  %9716 = vmatpush.msra.mxu0 0.0
  %9717 = vmatpush.msra.mxu0 %v3752
  %9718 = vmatmul.f32.gmra.mxu0 %v9700
  %v9719 = vpop.f32.mrf.mxu0
  %v9720 = vadd.f32 0.0, %v9719
  %9721 = vdwg.mxu0
  %v9723 = vrot.slane %v9720, 1
  %v9724 = vrot.slane %v9720, 2
  %v9725 = vrot.slane %v9720, 3
  %v9726 = vrot.slane %v9720, 4
  %v9731 = vadd.f32 %v3424, %v9720
  %v9732 = vadd.f32 %v3425, %v9723
  %v9733 = vadd.f32 %v3426, %v9724
  %v9734 = vadd.f32 %v3427, %v9725
  %v9735 = vadd.f32 %v3428, %v9726
  %v9736 = vtanh.pop %v9731
  %v9737 = vtanh.pop %v9732
  %v9738 = vtanh.pop %v9733
  %v9739 = vtanh.pop %v9734
  %v9740 = vtanh.pop %v9735
  %9741 = vst [vmem:[#allocation1] ss:$9 sm:$0xff] %v9385
  %s9742 = scalar_lea.vmem [#allocation1], 1
  %9743 = vst [vmem:[%s9742] ss:$9 sm:$0xff] %v9386
  %s9744 = scalar_lea.vmem [#allocation1], 2
  %9745 = vst [vmem:[%s9744] ss:$9 sm:$0xff] %v9387
  %s9746 = scalar_lea.vmem [#allocation1], 3
  %9747 = vst [vmem:[%s9746] ss:$9 sm:$0xff] %v9388
  %s9748 = scalar_lea.vmem [#allocation1], 4
  %9749 = vst [vmem:[%s9748] ss:$9 sm:$0xff] %v9389
  %v9750 = vld [vmem:[#allocation1] sm:$0xff]
  %v9751 = vsel %vm1324, %v9750, 0
  %9753 = vmatpush.msra.mxu0 0.0
  %9754 = vmatpush.msra.mxu0 0.0
  %9755 = vmatpush.msra.mxu0 0.0
  %9756 = vmatpush.msra.mxu0 0.0
  %9757 = vmatpush.msra.mxu0 0.0
  %9758 = vmatpush.msra.mxu0 0.0
  %9759 = vmatpush.msra.mxu0 0.0
  %9760 = vmatpush.msra.mxu0 0.0
  %9761 = vmatpush.msra.mxu0 0.0
  %9762 = vmatpush.msra.mxu0 0.0
  %9763 = vmatpush.msra.mxu0 0.0
  %9764 = vmatpush.msra.mxu0 0.0
  %9765 = vmatpush.msra.mxu0 0.0
  %9766 = vmatpush.msra.mxu0 0.0
  %9767 = vmatpush.msra.mxu0 0.0
  %9768 = vmatpush.msra.mxu0 %v3754
  %9769 = vmatmul.f32.gmra.mxu0 %v9751
  %v9770 = vpop.f32.mrf.mxu0
  %v9771 = vadd.f32 0.0, %v9770
  %9772 = vdwg.mxu0
  %v9774 = vrot.slane %v9771, 1
  %v9775 = vrot.slane %v9771, 2
  %v9776 = vrot.slane %v9771, 3
  %v9777 = vrot.slane %v9771, 4
  %v9782 = vadd.f32 %v3743, %v9771
  %v9783 = vadd.f32 %v3744, %v9774
  %v9784 = vadd.f32 %v3745, %v9775
  %v9785 = vadd.f32 %v3746, %v9776
  %v9786 = vadd.f32 %v3747, %v9777
  %v9787 = vxor.u32 %v9782, 2147483648
  %v9788 = vxor.u32 %v9783, 2147483648
  %v9789 = vxor.u32 %v9784, 2147483648
  %v9790 = vxor.u32 %v9785, 2147483648
  %v9791 = vxor.u32 %v9786, 2147483648
  %v9792 = vmul.f32 %v9787, 1.442695
  %v9793 = vpow.pop %v9792
  %v9794 = vmul.f32 %v9788, 1.442695
  %v9795 = vpow.pop %v9794
  %v9796 = vmul.f32 %v9789, 1.442695
  %v9797 = vpow.pop %v9796
  %v9798 = vmul.f32 %v9790, 1.442695
  %v9799 = vpow.pop %v9798
  %v9800 = vmul.f32 %v9791, 1.442695
  %v9801 = vpow.pop %v9800
  %v9802 = vadd.f32 %v9793, 1.0
  %v9803 = vadd.f32 %v9795, 1.0
  %v9804 = vadd.f32 %v9797, 1.0
  %v9805 = vadd.f32 %v9799, 1.0
  %v9806 = vadd.f32 %v9801, 1.0
  %v9807 = vrcp.pop %v9802
  %v9808 = vmul.f32 %v9802, %v9807
  %v9809 = vsub.f32 1.0, %v9808
  %v9810 = vmul.f32 %v9807, %v9809
  %v9811 = vadd.f32 %v9807, %v9810
  %vm9812 = vweird.f32 %v9802
  %vm9813 = vweird.f32 %v9807
  %vm9814 = vmor %vm9812, %vm9813
  %v9815 = vsel %vm9814, %v9807, %v9811
  %v9816 = vand.u32 2147483647, %v9802
  %vm9817 = vcmp.eq.f32.partialorder %v9816, 8.507059e+37
  %v9818 = vand.u32 %v9802, 2147483648
  %v9819 = vor.u32 1.1754944e-38, %v9818
  %v9820 = vsel %vm9817, %v9819, %v9815
  %v9821 = vmul.f32 1.0, %v9820
  %v9822 = vrcp.pop %v9803
  %v9823 = vmul.f32 %v9803, %v9822
  %v9824 = vsub.f32 1.0, %v9823
  %v9825 = vmul.f32 %v9822, %v9824
  %v9826 = vadd.f32 %v9822, %v9825
  %vm9827 = vweird.f32 %v9803
  %vm9828 = vweird.f32 %v9822
  %vm9829 = vmor %vm9827, %vm9828
  %v9830 = vsel %vm9829, %v9822, %v9826
  %v9831 = vand.u32 2147483647, %v9803
  %vm9832 = vcmp.eq.f32.partialorder %v9831, 8.507059e+37
  %v9833 = vand.u32 %v9803, 2147483648
  %v9834 = vor.u32 1.1754944e-38, %v9833
  %v9835 = vsel %vm9832, %v9834, %v9830
  %v9836 = vmul.f32 1.0, %v9835
  %v9837 = vrcp.pop %v9804
  %v9838 = vmul.f32 %v9804, %v9837
  %v9839 = vsub.f32 1.0, %v9838
  %v9840 = vmul.f32 %v9837, %v9839
  %v9841 = vadd.f32 %v9837, %v9840
  %vm9842 = vweird.f32 %v9804
  %vm9843 = vweird.f32 %v9837
  %vm9844 = vmor %vm9842, %vm9843
  %v9845 = vsel %vm9844, %v9837, %v9841
  %v9846 = vand.u32 2147483647, %v9804
  %vm9847 = vcmp.eq.f32.partialorder %v9846, 8.507059e+37
  %v9848 = vand.u32 %v9804, 2147483648
  %v9849 = vor.u32 1.1754944e-38, %v9848
  %v9850 = vsel %vm9847, %v9849, %v9845
  %v9851 = vmul.f32 1.0, %v9850
  %v9852 = vrcp.pop %v9805
  %v9853 = vmul.f32 %v9805, %v9852
  %v9854 = vsub.f32 1.0, %v9853
  %v9855 = vmul.f32 %v9852, %v9854
  %v9856 = vadd.f32 %v9852, %v9855
  %vm9857 = vweird.f32 %v9805
  %vm9858 = vweird.f32 %v9852
  %vm9859 = vmor %vm9857, %vm9858
  %v9860 = vsel %vm9859, %v9852, %v9856
  %v9861 = vand.u32 2147483647, %v9805
  %vm9862 = vcmp.eq.f32.partialorder %v9861, 8.507059e+37
  %v9863 = vand.u32 %v9805, 2147483648
  %v9864 = vor.u32 1.1754944e-38, %v9863
  %v9865 = vsel %vm9862, %v9864, %v9860
  %v9866 = vmul.f32 1.0, %v9865
  %v9867 = vrcp.pop %v9806
  %v9868 = vmul.f32 %v9806, %v9867
  %v9869 = vsub.f32 1.0, %v9868
  %v9870 = vmul.f32 %v9867, %v9869
  %v9871 = vadd.f32 %v9867, %v9870
  %vm9872 = vweird.f32 %v9806
  %vm9873 = vweird.f32 %v9867
  %vm9874 = vmor %vm9872, %vm9873
  %v9875 = vsel %vm9874, %v9867, %v9871
  %v9876 = vand.u32 2147483647, %v9806
  %vm9877 = vcmp.eq.f32.partialorder %v9876, 8.507059e+37
  %v9878 = vand.u32 %v9806, 2147483648
  %v9879 = vor.u32 1.1754944e-38, %v9878
  %v9880 = vsel %vm9877, %v9879, %v9875
  %v9881 = vmul.f32 1.0, %v9880
  %v9882 = vmul.f32 %v9629, %v9375
  %v9883 = vmul.f32 %v9644, %v9376
  %v9884 = vmul.f32 %v9659, %v9377
  %v9885 = vmul.f32 %v9674, %v9378
  %v9886 = vmul.f32 %v9689, %v9379
  %v9887 = vmul.f32 %v9488, %v9736
  %v9888 = vmul.f32 %v9503, %v9737
  %v9889 = vmul.f32 %v9518, %v9738
  %v9890 = vmul.f32 %v9533, %v9739
  %v9891 = vmul.f32 %v9548, %v9740
  %v9892 = vadd.f32 %v9882, %v9887
  %v9893 = vadd.f32 %v9883, %v9888
  %v9894 = vadd.f32 %v9884, %v9889
  %v9895 = vadd.f32 %v9885, %v9890
  %v9896 = vadd.f32 %v9886, %v9891
  %v9897 = vtanh.pop %v9892
  %v9898 = vtanh.pop %v9893
  %v9899 = vtanh.pop %v9894
  %v9900 = vtanh.pop %v9895
  %v9901 = vtanh.pop %v9896
  %v9902 = vmul.f32 %v9821, %v9897
  %v9903 = vmul.f32 %v9836, %v9898
  %v9904 = vmul.f32 %v9851, %v9899
  %v9905 = vmul.f32 %v9866, %v9900
  %v9906 = vmul.f32 %v9881, %v9901
  %9912 = vst [vmem:[#allocation1] ss:$9 sm:$0xff] %v9902
  %s9913 = scalar_lea.vmem [#allocation1], 1
  %9914 = vst [vmem:[%s9913] ss:$9 sm:$0xff] %v9903
  %s9915 = scalar_lea.vmem [#allocation1], 2
  %9916 = vst [vmem:[%s9915] ss:$9 sm:$0xff] %v9904
  %s9917 = scalar_lea.vmem [#allocation1], 3
  %9918 = vst [vmem:[%s9917] ss:$9 sm:$0xff] %v9905
  %s9919 = scalar_lea.vmem [#allocation1], 4
  %9920 = vst [vmem:[%s9919] ss:$9 sm:$0xff] %v9906
  %v9921 = vld [vmem:[#allocation1] sm:$0xff]
  %s9923 = scalar_lea.vmem [#allocation2], 88
  %9924 = vst.msk [vmem:[%s9923] sm:$0x1f] %vm4236, %v9921
  %9925 = vst [vmem:[#allocation1] ss:$9 sm:$0xff] %v9902
  %s9926 = scalar_lea.vmem [#allocation1], 1
  %9927 = vst [vmem:[%s9926] ss:$9 sm:$0xff] %v9903
  %s9928 = scalar_lea.vmem [#allocation1], 2
  %9929 = vst [vmem:[%s9928] ss:$9 sm:$0xff] %v9904
  %s9930 = scalar_lea.vmem [#allocation1], 3
  %9931 = vst [vmem:[%s9930] ss:$9 sm:$0xff] %v9905
  %s9932 = scalar_lea.vmem [#allocation1], 4
  %9933 = vst [vmem:[%s9932] ss:$9 sm:$0xff] %v9906
  %v9934 = vld [vmem:[#allocation1] sm:$0xff]
  %9936 = vst.msk [vmem:[%s20] sm:$0x1f] %vm4236, %v9934
  %9942 = vst [vmem:[#allocation1] ss:$9 sm:$0xff] %v9892
  %s9943 = scalar_lea.vmem [#allocation1], 1
  %9944 = vst [vmem:[%s9943] ss:$9 sm:$0xff] %v9893
  %s9945 = scalar_lea.vmem [#allocation1], 2
  %9946 = vst [vmem:[%s9945] ss:$9 sm:$0xff] %v9894
  %s9947 = scalar_lea.vmem [#allocation1], 3
  %9948 = vst [vmem:[%s9947] ss:$9 sm:$0xff] %v9895
  %s9949 = scalar_lea.vmem [#allocation1], 4
  %9950 = vst [vmem:[%s9949] ss:$9 sm:$0xff] %v9896
  %v9951 = vld [vmem:[#allocation1] sm:$0xff]
  %9953 = vst.msk [vmem:[%s21] sm:$0x1f] %vm4236, %v9951
  %v9954 = vld [vmem:[#allocation2] sm:$0x1f]
  %v9955 = vld [vmem:[#allocation2 + $0x8] sm:$0x1f]
  %v9956 = vld [vmem:[#allocation2 + $0x10] sm:$0x1f]
  %v9957 = vld [vmem:[#allocation2 + $0x18] sm:$0x1f]
  %v9958 = vld [vmem:[#allocation2 + $0x20] sm:$0x1f]
  %v9959 = vld [vmem:[#allocation2 + $0x28] sm:$0x1f]
  %v9960 = vld [vmem:[#allocation2 + $0x30] sm:$0x1f]
  %v9961 = vld [vmem:[#allocation2 + $0x38] sm:$0x1f]
  %v9962 = vld [vmem:[#allocation2 + $0x40] sm:$0x1f]
  %v9963 = vld [vmem:[#allocation2 + $0x48] sm:$0x1f]
  %v9964 = vld [vmem:[#allocation2 + $0x50] sm:$0x1f]
  %v9965 = vld [vmem:[#allocation2 + $0x58] sm:$0x1f]
  %v9978 = vrot.slane %v9954, 1
  %v9979 = vrot.slane %v9954, 2
  %v9980 = vrot.slane %v9954, 3
  %v9981 = vrot.slane %v9954, 4
  %v9982 = vrot.slane %v9955, 1
  %v9983 = vrot.slane %v9955, 2
  %v9984 = vrot.slane %v9955, 3
  %v9985 = vrot.slane %v9955, 4
  %v9986 = vrot.slane %v9956, 1
  %v9987 = vrot.slane %v9956, 2
  %v9988 = vrot.slane %v9956, 3
  %v9989 = vrot.slane %v9956, 4
  %v9990 = vrot.slane %v9957, 1
  %v9991 = vrot.slane %v9957, 2
  %v9992 = vrot.slane %v9957, 3
  %v9993 = vrot.slane %v9957, 4
  %v9994 = vrot.slane %v9958, 1
  %v9995 = vrot.slane %v9958, 2
  %v9996 = vrot.slane %v9958, 3
  %v9997 = vrot.slane %v9958, 4
  %v9998 = vrot.slane %v9959, 1
  %v9999 = vrot.slane %v9959, 2
  %v10000 = vrot.slane %v9959, 3
  %v10001 = vrot.slane %v9959, 4
  %v10002 = vrot.slane %v9960, 1
  %v10003 = vrot.slane %v9960, 2
  %v10004 = vrot.slane %v9960, 3
  %v10005 = vrot.slane %v9960, 4
  %v10006 = vrot.slane %v9961, 1
  %v10007 = vrot.slane %v9961, 2
  %v10008 = vrot.slane %v9961, 3
  %v10009 = vrot.slane %v9961, 4
  %v10010 = vrot.slane %v9962, 1
  %v10011 = vrot.slane %v9962, 2
  %v10012 = vrot.slane %v9962, 3
  %v10013 = vrot.slane %v9962, 4
  %v10014 = vrot.slane %v9963, 1
  %v10015 = vrot.slane %v9963, 2
  %v10016 = vrot.slane %v9963, 3
  %v10017 = vrot.slane %v9963, 4
  %v10018 = vrot.slane %v9964, 1
  %v10019 = vrot.slane %v9964, 2
  %v10020 = vrot.slane %v9964, 3
  %v10021 = vrot.slane %v9964, 4
  %v10022 = vrot.slane %v9965, 1
  %v10023 = vrot.slane %v9965, 2
  %v10024 = vrot.slane %v9965, 3
  %v10025 = vrot.slane %v9965, 4
  %v10026 = vld [vmem:[%s17] sm:$0xff]
  %v10027 = vld [vmem:[#allocation3] sm:$0x1]
  %v10029 = vperm.slane %v10027, 0
  %10031 = vst [vmem:[#allocation1] ss:$9 sm:$0xff] %v9954
  %s10032 = scalar_lea.vmem [#allocation1], 1
  %10033 = vst [vmem:[%s10032] ss:$9 sm:$0xff] %v9978
  %s10034 = scalar_lea.vmem [#allocation1], 2
  %10035 = vst [vmem:[%s10034] ss:$9 sm:$0xff] %v9979
  %s10036 = scalar_lea.vmem [#allocation1], 3
  %10037 = vst [vmem:[%s10036] ss:$9 sm:$0xff] %v9980
  %s10038 = scalar_lea.vmem [#allocation1], 4
  %10039 = vst [vmem:[%s10038] ss:$9 sm:$0xff] %v9981
  %s10040 = scalar_lea.vmem [#allocation1], 5
  %10041 = vst [vmem:[%s10040] ss:$9 sm:$0xff] %v9955
  %s10042 = scalar_lea.vmem [#allocation1], 6
  %10043 = vst [vmem:[%s10042] ss:$9 sm:$0xff] %v9982
  %s10044 = scalar_lea.vmem [#allocation1], 7
  %10045 = vst [vmem:[%s10044] ss:$9 sm:$0xff] %v9983
  %v10046 = vld [vmem:[#allocation1] sm:$0xff]
  %10047 = vst [vmem:[#allocation1] ss:$9 sm:$0xff] %v9984
  %10048 = vst [vmem:[%s10032] ss:$9 sm:$0xff] %v9985
  %10049 = vst [vmem:[%s10034] ss:$9 sm:$0xff] %v9956
  %10050 = vst [vmem:[%s10036] ss:$9 sm:$0xff] %v9986
  %10051 = vst [vmem:[%s10038] ss:$9 sm:$0xff] %v9987
  %10052 = vst [vmem:[%s10040] ss:$9 sm:$0xff] %v9988
  %10053 = vst [vmem:[%s10042] ss:$9 sm:$0xff] %v9989
  %10054 = vst [vmem:[%s10044] ss:$9 sm:$0xff] %v9957
  %v10055 = vld [vmem:[#allocation1] sm:$0xff]
  %10056 = vst [vmem:[#allocation1] ss:$9 sm:$0xff] %v9990
  %10057 = vst [vmem:[%s10032] ss:$9 sm:$0xff] %v9991
  %10058 = vst [vmem:[%s10034] ss:$9 sm:$0xff] %v9992
  %10059 = vst [vmem:[%s10036] ss:$9 sm:$0xff] %v9993
  %10060 = vst [vmem:[%s10038] ss:$9 sm:$0xff] %v9958
  %10061 = vst [vmem:[%s10040] ss:$9 sm:$0xff] %v9994
  %10062 = vst [vmem:[%s10042] ss:$9 sm:$0xff] %v9995
  %10063 = vst [vmem:[%s10044] ss:$9 sm:$0xff] %v9996
  %v10064 = vld [vmem:[#allocation1] sm:$0xff]
  %10065 = vst [vmem:[#allocation1] ss:$9 sm:$0xff] %v9997
  %10066 = vst [vmem:[%s10032] ss:$9 sm:$0xff] %v9959
  %10067 = vst [vmem:[%s10034] ss:$9 sm:$0xff] %v9998
  %10068 = vst [vmem:[%s10036] ss:$9 sm:$0xff] %v9999
  %10069 = vst [vmem:[%s10038] ss:$9 sm:$0xff] %v10000
  %10070 = vst [vmem:[%s10040] ss:$9 sm:$0xff] %v10001
  %10071 = vst [vmem:[%s10042] ss:$9 sm:$0xff] %v9960
  %10072 = vst [vmem:[%s10044] ss:$9 sm:$0xff] %v10002
  %v10073 = vld [vmem:[#allocation1] sm:$0xff]
  %10074 = vst [vmem:[#allocation1] ss:$9 sm:$0xff] %v10003
  %10075 = vst [vmem:[%s10032] ss:$9 sm:$0xff] %v10004
  %10076 = vst [vmem:[%s10034] ss:$9 sm:$0xff] %v10005
  %10077 = vst [vmem:[%s10036] ss:$9 sm:$0xff] %v9961
  %10078 = vst [vmem:[%s10038] ss:$9 sm:$0xff] %v10006
  %10079 = vst [vmem:[%s10040] ss:$9 sm:$0xff] %v10007
  %10080 = vst [vmem:[%s10042] ss:$9 sm:$0xff] %v10008
  %10081 = vst [vmem:[%s10044] ss:$9 sm:$0xff] %v10009
  %v10082 = vld [vmem:[#allocation1] sm:$0xff]
  %10083 = vst [vmem:[#allocation1] ss:$9 sm:$0xff] %v9962
  %10084 = vst [vmem:[%s10032] ss:$9 sm:$0xff] %v10010
  %10085 = vst [vmem:[%s10034] ss:$9 sm:$0xff] %v10011
  %10086 = vst [vmem:[%s10036] ss:$9 sm:$0xff] %v10012
  %10087 = vst [vmem:[%s10038] ss:$9 sm:$0xff] %v10013
  %10088 = vst [vmem:[%s10040] ss:$9 sm:$0xff] %v9963
  %10089 = vst [vmem:[%s10042] ss:$9 sm:$0xff] %v10014
  %10090 = vst [vmem:[%s10044] ss:$9 sm:$0xff] %v10015
  %v10091 = vld [vmem:[#allocation1] sm:$0xff]
  %10092 = vst [vmem:[#allocation1] ss:$9 sm:$0xff] %v10016
  %10093 = vst [vmem:[%s10032] ss:$9 sm:$0xff] %v10017
  %10094 = vst [vmem:[%s10034] ss:$9 sm:$0xff] %v9964
  %10095 = vst [vmem:[%s10036] ss:$9 sm:$0xff] %v10018
  %10096 = vst [vmem:[%s10038] ss:$9 sm:$0xff] %v10019
  %10097 = vst [vmem:[%s10040] ss:$9 sm:$0xff] %v10020
  %10098 = vst [vmem:[%s10042] ss:$9 sm:$0xff] %v10021
  %10099 = vst [vmem:[%s10044] ss:$9 sm:$0xff] %v9965
  %v10100 = vld [vmem:[#allocation1] sm:$0xff]
  %10101 = vst [vmem:[#allocation1] ss:$9 sm:$0xff] %v10022
  %10102 = vst [vmem:[%s10032] ss:$9 sm:$0xff] %v10023
  %10103 = vst [vmem:[%s10034] ss:$9 sm:$0xff] %v10024
  %10104 = vst [vmem:[%s10036] ss:$9 sm:$0xff] %v10025
  %v10105 = vld [vmem:[#allocation1] sm:$0xff]
  %v10106 = vsel %vm1324, %v10046, 0
  %v10108 = vsel %vm1324, %v10055, 0
  %v10110 = vsel %vm1324, %v10064, 0
  %v10112 = vsel %vm1324, %v10073, 0
  %v10114 = vsel %vm1324, %v10082, 0
  %v10116 = vsel %vm1324, %v10091, 0
  %v10118 = vsel %vm1324, %v10100, 0
  %v10120 = vsel %vm1324, %v10105, 0
  %10122 = vmatpush.msra.mxu0 0.0
  %10123 = vmatpush.msra.mxu0 0.0
  %10124 = vmatpush.msra.mxu0 0.0
  %10125 = vmatpush.msra.mxu0 0.0
  %10126 = vmatpush.msra.mxu0 0.0
  %10127 = vmatpush.msra.mxu0 0.0
  %10128 = vmatpush.msra.mxu0 0.0
  %10129 = vmatpush.msra.mxu0 0.0
  %10130 = vmatpush.msra.mxu0 0.0
  %10131 = vmatpush.msra.mxu0 0.0
  %10132 = vmatpush.msra.mxu0 0.0
  %10133 = vmatpush.msra.mxu0 0.0
  %10134 = vmatpush.msra.mxu0 0.0
  %10135 = vmatpush.msra.mxu0 0.0
  %10136 = vmatpush.msra.mxu0 0.0
  %10137 = vmatpush.msra.mxu0 %v10026
  %10138 = vmatmul.f32.gmra.mxu0 %v10106
  %v10139 = vpop.f32.mrf.mxu0
  %v10140 = vadd.f32 %v10029, %v10139
  %10141 = vmatmul.f32.gmra.mxu0 %v10108
  %v10142 = vpop.f32.mrf.mxu0
  %v10143 = vadd.f32 %v10029, %v10142
  %10144 = vmatmul.f32.gmra.mxu0 %v10110
  %v10145 = vpop.f32.mrf.mxu0
  %v10146 = vadd.f32 %v10029, %v10145
  %10147 = vmatmul.f32.gmra.mxu0 %v10112
  %v10148 = vpop.f32.mrf.mxu0
  %v10149 = vadd.f32 %v10029, %v10148
  %10150 = vmatmul.f32.gmra.mxu0 %v10114
  %v10151 = vpop.f32.mrf.mxu0
  %v10152 = vadd.f32 %v10029, %v10151
  %10153 = vmatmul.f32.gmra.mxu0 %v10116
  %v10154 = vpop.f32.mrf.mxu0
  %v10155 = vadd.f32 %v10029, %v10154
  %10156 = vmatmul.f32.gmra.mxu0 %v10118
  %v10157 = vpop.f32.mrf.mxu0
  %v10158 = vadd.f32 %v10029, %v10157
  %10159 = vmatmul.f32.gmra.mxu0 %v10120
  %v10160 = vpop.f32.mrf.mxu0
  %v10161 = vadd.f32 %v10029, %v10160
  %10162 = vdwg.mxu0
  %v10171 = vrot.slane %v10140, 1
  %v10172 = vrot.slane %v10140, 2
  %v10173 = vrot.slane %v10140, 3
  %v10174 = vrot.slane %v10140, 4
  %v10175 = vrot.slane %v10140, 5
  %v10176 = vrot.slane %v10140, 6
  %v10177 = vrot.slane %v10140, 7
  %v10178 = vrot.slane %v10143, 1
  %v10179 = vrot.slane %v10143, 2
  %v10180 = vrot.slane %v10143, 3
  %v10181 = vrot.slane %v10143, 4
  %v10182 = vrot.slane %v10143, 5
  %v10183 = vrot.slane %v10143, 6
  %v10184 = vrot.slane %v10143, 7
  %v10185 = vrot.slane %v10146, 1
  %v10186 = vrot.slane %v10146, 2
  %v10187 = vrot.slane %v10146, 3
  %v10188 = vrot.slane %v10146, 4
  %v10189 = vrot.slane %v10146, 5
  %v10190 = vrot.slane %v10146, 6
  %v10191 = vrot.slane %v10146, 7
  %v10192 = vrot.slane %v10149, 1
  %v10193 = vrot.slane %v10149, 2
  %v10194 = vrot.slane %v10149, 3
  %v10195 = vrot.slane %v10149, 4
  %v10196 = vrot.slane %v10149, 5
  %v10197 = vrot.slane %v10149, 6
  %v10198 = vrot.slane %v10149, 7
  %v10199 = vrot.slane %v10152, 1
  %v10200 = vrot.slane %v10152, 2
  %v10201 = vrot.slane %v10152, 3
  %v10202 = vrot.slane %v10152, 4
  %v10203 = vrot.slane %v10152, 5
  %v10204 = vrot.slane %v10152, 6
  %v10205 = vrot.slane %v10152, 7
  %v10206 = vrot.slane %v10155, 1
  %v10207 = vrot.slane %v10155, 2
  %v10208 = vrot.slane %v10155, 3
  %v10209 = vrot.slane %v10155, 4
  %v10210 = vrot.slane %v10155, 5
  %v10211 = vrot.slane %v10155, 6
  %v10212 = vrot.slane %v10155, 7
  %v10213 = vrot.slane %v10158, 1
  %v10214 = vrot.slane %v10158, 2
  %v10215 = vrot.slane %v10158, 3
  %v10216 = vrot.slane %v10158, 4
  %v10217 = vrot.slane %v10158, 5
  %v10218 = vrot.slane %v10158, 6
  %v10219 = vrot.slane %v10158, 7
  %v10220 = vrot.slane %v10161, 1
  %v10221 = vrot.slane %v10161, 2
  %v10222 = vrot.slane %v10161, 3
  %10223 = vst [vmem:[#allocation1] ss:$9 sm:$0xff] %v10140
  %s10224 = scalar_lea.vmem [#allocation1], 1
  %10225 = vst [vmem:[%s10224] ss:$9 sm:$0xff] %v10171
  %s10226 = scalar_lea.vmem [#allocation1], 2
  %10227 = vst [vmem:[%s10226] ss:$9 sm:$0xff] %v10172
  %s10228 = scalar_lea.vmem [#allocation1], 3
  %10229 = vst [vmem:[%s10228] ss:$9 sm:$0xff] %v10173
  %s10230 = scalar_lea.vmem [#allocation1], 4
  %10231 = vst [vmem:[%s10230] ss:$9 sm:$0xff] %v10174
  %v10232 = vld [vmem:[#allocation1] sm:$0xff]
  %10233 = vst [vmem:[#allocation1] ss:$9 sm:$0xff] %v10175
  %10234 = vst [vmem:[%s10224] ss:$9 sm:$0xff] %v10176
  %10235 = vst [vmem:[%s10226] ss:$9 sm:$0xff] %v10177
  %10236 = vst [vmem:[%s10228] ss:$9 sm:$0xff] %v10143
  %10237 = vst [vmem:[%s10230] ss:$9 sm:$0xff] %v10178
  %v10238 = vld [vmem:[#allocation1] sm:$0xff]
  %10239 = vst [vmem:[#allocation1] ss:$9 sm:$0xff] %v10179
  %10240 = vst [vmem:[%s10224] ss:$9 sm:$0xff] %v10180
  %10241 = vst [vmem:[%s10226] ss:$9 sm:$0xff] %v10181
  %10242 = vst [vmem:[%s10228] ss:$9 sm:$0xff] %v10182
  %10243 = vst [vmem:[%s10230] ss:$9 sm:$0xff] %v10183
  %v10244 = vld [vmem:[#allocation1] sm:$0xff]
  %10245 = vst [vmem:[#allocation1] ss:$9 sm:$0xff] %v10184
  %10246 = vst [vmem:[%s10224] ss:$9 sm:$0xff] %v10146
  %10247 = vst [vmem:[%s10226] ss:$9 sm:$0xff] %v10185
  %10248 = vst [vmem:[%s10228] ss:$9 sm:$0xff] %v10186
  %10249 = vst [vmem:[%s10230] ss:$9 sm:$0xff] %v10187
  %v10250 = vld [vmem:[#allocation1] sm:$0xff]
  %10251 = vst [vmem:[#allocation1] ss:$9 sm:$0xff] %v10188
  %10252 = vst [vmem:[%s10224] ss:$9 sm:$0xff] %v10189
  %10253 = vst [vmem:[%s10226] ss:$9 sm:$0xff] %v10190
  %10254 = vst [vmem:[%s10228] ss:$9 sm:$0xff] %v10191
  %10255 = vst [vmem:[%s10230] ss:$9 sm:$0xff] %v10149
  %v10256 = vld [vmem:[#allocation1] sm:$0xff]
  %10257 = vst [vmem:[#allocation1] ss:$9 sm:$0xff] %v10192
  %10258 = vst [vmem:[%s10224] ss:$9 sm:$0xff] %v10193
  %10259 = vst [vmem:[%s10226] ss:$9 sm:$0xff] %v10194
  %10260 = vst [vmem:[%s10228] ss:$9 sm:$0xff] %v10195
  %10261 = vst [vmem:[%s10230] ss:$9 sm:$0xff] %v10196
  %v10262 = vld [vmem:[#allocation1] sm:$0xff]
  %10263 = vst [vmem:[#allocation1] ss:$9 sm:$0xff] %v10197
  %10264 = vst [vmem:[%s10224] ss:$9 sm:$0xff] %v10198
  %10265 = vst [vmem:[%s10226] ss:$9 sm:$0xff] %v10152
  %10266 = vst [vmem:[%s10228] ss:$9 sm:$0xff] %v10199
  %10267 = vst [vmem:[%s10230] ss:$9 sm:$0xff] %v10200
  %v10268 = vld [vmem:[#allocation1] sm:$0xff]
  %10269 = vst [vmem:[#allocation1] ss:$9 sm:$0xff] %v10201
  %10270 = vst [vmem:[%s10224] ss:$9 sm:$0xff] %v10202
  %10271 = vst [vmem:[%s10226] ss:$9 sm:$0xff] %v10203
  %10272 = vst [vmem:[%s10228] ss:$9 sm:$0xff] %v10204
  %10273 = vst [vmem:[%s10230] ss:$9 sm:$0xff] %v10205
  %v10274 = vld [vmem:[#allocation1] sm:$0xff]
  %10275 = vst [vmem:[#allocation1] ss:$9 sm:$0xff] %v10155
  %10276 = vst [vmem:[%s10224] ss:$9 sm:$0xff] %v10206
  %10277 = vst [vmem:[%s10226] ss:$9 sm:$0xff] %v10207
  %10278 = vst [vmem:[%s10228] ss:$9 sm:$0xff] %v10208
  %10279 = vst [vmem:[%s10230] ss:$9 sm:$0xff] %v10209
  %v10280 = vld [vmem:[#allocation1] sm:$0xff]
  %10281 = vst [vmem:[#allocation1] ss:$9 sm:$0xff] %v10210
  %10282 = vst [vmem:[%s10224] ss:$9 sm:$0xff] %v10211
  %10283 = vst [vmem:[%s10226] ss:$9 sm:$0xff] %v10212
  %10284 = vst [vmem:[%s10228] ss:$9 sm:$0xff] %v10158
  %10285 = vst [vmem:[%s10230] ss:$9 sm:$0xff] %v10213
  %v10286 = vld [vmem:[#allocation1] sm:$0xff]
  %10287 = vst [vmem:[#allocation1] ss:$9 sm:$0xff] %v10214
  %10288 = vst [vmem:[%s10224] ss:$9 sm:$0xff] %v10215
  %10289 = vst [vmem:[%s10226] ss:$9 sm:$0xff] %v10216
  %10290 = vst [vmem:[%s10228] ss:$9 sm:$0xff] %v10217
  %10291 = vst [vmem:[%s10230] ss:$9 sm:$0xff] %v10218
  %v10292 = vld [vmem:[#allocation1] sm:$0xff]
  %10293 = vst [vmem:[#allocation1] ss:$9 sm:$0xff] %v10219
  %10294 = vst [vmem:[%s10224] ss:$9 sm:$0xff] %v10161
  %10295 = vst [vmem:[%s10226] ss:$9 sm:$0xff] %v10220
  %10296 = vst [vmem:[%s10228] ss:$9 sm:$0xff] %v10221
  %10297 = vst [vmem:[%s10230] ss:$9 sm:$0xff] %v10222
  %v10298 = vld [vmem:[#allocation1] sm:$0xff]
  %vm10311 = vcmask 4096
  %10312 = vst.msk [vmem:[%s19] sm:$0x1f] %vm10311, %v10232
  %10313 = vst.msk [vmem:[%s19 + $0x8] sm:$0x1f] %vm10311, %v10238
  %10314 = vst.msk [vmem:[%s19 + $0x10] sm:$0x1f] %vm10311, %v10244
  %10315 = vst.msk [vmem:[%s19 + $0x18] sm:$0x1f] %vm10311, %v10250
  %10316 = vst.msk [vmem:[%s19 + $0x20] sm:$0x1f] %vm10311, %v10256
  %10317 = vst.msk [vmem:[%s19 + $0x28] sm:$0x1f] %vm10311, %v10262
  %10318 = vst.msk [vmem:[%s19 + $0x30] sm:$0x1f] %vm10311, %v10268
  %10319 = vst.msk [vmem:[%s19 + $0x38] sm:$0x1f] %vm10311, %v10274
  %10320 = vst.msk [vmem:[%s19 + $0x40] sm:$0x1f] %vm10311, %v10280
  %10321 = vst.msk [vmem:[%s19 + $0x48] sm:$0x1f] %vm10311, %v10286
  %10322 = vst.msk [vmem:[%s19 + $0x50] sm:$0x1f] %vm10311, %v10292
  %10323 = vst.msk [vmem:[%s19 + $0x58] sm:$0x1f] %vm10311, %v10298
  // Predicated region
  $region78: #{tpu_custom_call.1} parent=0 // pred_check
    _
  $region79: #{tpu_custom_call.1} parent=0 // pred_check_branch
    %10325 = sbr.rel (0) target = $region81
  $region80: #{tpu_custom_call.1} parent=0 // pred_region
    _
  $region81: #{tpu_custom_call.1} parent=0 // pred_fallthru
    _
  // Predicated region
  $region82: #{tpu_custom_call.1} parent=0 // pred_check
    _
  $region83: #{tpu_custom_call.1} parent=0 // pred_check_branch
    %10327 = sbr.rel (0) target = $region85
  $region84: #{tpu_custom_call.1} parent=0 // pred_region
    _
  $region85: #{tpu_custom_call.1} parent=0 // pred_fallthru
    _
  // Predicated region
  $region86: #{tpu_custom_call.1} parent=0 // pred_check
    _
  $region87: #{tpu_custom_call.1} parent=0 // pred_check_branch
    %10329 = sbr.rel (0) target = $region89
  $region88: #{tpu_custom_call.1} parent=0 // pred_region
    _
  $region89: #{tpu_custom_call.1} parent=0 // pred_fallthru
    _
  // Predicated region
  $region90: #{tpu_custom_call.1} parent=0 // pred_check
    _
  $region91: #{tpu_custom_call.1} parent=0 // pred_check_branch
    %10331 = sbr.rel (0) target = $region93
  $region92: #{tpu_custom_call.1} parent=0 // pred_region
    _
  $region93: #{tpu_custom_call.1} parent=0 // pred_fallthru
    _
  // Predicated region
  $region94: #{tpu_custom_call.1} parent=0 // pred_check
    _
  $region95: #{tpu_custom_call.1} parent=0 // pred_check_branch
    %10333 = sbr.rel (0) target = $region97
  $region96: #{tpu_custom_call.1} parent=0 // pred_region
    _
  $region97: #{tpu_custom_call.1} parent=0 // pred_fallthru
    _
  // Predicated region
  $region98: #{tpu_custom_call.1} parent=0 // pred_check
    _
  $region99: #{tpu_custom_call.1} parent=0 // pred_check_branch
    %10335 = sbr.rel (0) target = $region101
  $region100: #{tpu_custom_call.1} parent=0 // pred_region
    _
  $region101: #{tpu_custom_call.1} parent=0 // pred_fallthru
    _

</llo_original>
